<compile_context>
chip_gen: v7x
topology: tpu7x:2x2x1
jax: 0.10.0
libtpu: 0.0.40
codegen_flags: <defaults>
</compile_context>

<pallas_src>
import functools
import math

import numpy as np
import jax
import jax.numpy as jnp
from jax.experimental import pallas as pl
from jax.experimental.pallas import tpu as pltpu


BOND_MAPPING = {'NOBOND': 0, 'SINGLE': 1, 'DOUBLE': 2, 'TRIPLE': 3, 'AROMATIC': 4}

_LINEAR_VMEM_LIMIT = 32 * 1024 * 1024   # row-tiled matmul kernels
_DEFAULT_BLOCK_ROWS = 4096              # row tile for the flattened linears


# ----------------------------------------------------------------------------
# Small shared helpers
# ----------------------------------------------------------------------------

def _ln_tail(x, g, b, eps):
    """LayerNorm over the last axis with affine params g, b (broadcasting)."""
    mu = jnp.mean(x, axis=-1, keepdims=True)
    xc = x - mu
    var = jnp.mean(xc * xc, axis=-1, keepdims=True)
    return xc * jax.lax.rsqrt(var + eps) * g + b


def _vmem_capacity_bytes():
    try:
        return int(pltpu.get_tpu_info().vmem_capacity_bytes)
    except Exception:
        return 64 * 1024 * 1024          # conservative default (v7x per-core VMEM)


def _row_tile(M, block_rows=_DEFAULT_BLOCK_ROWS):
    """Row tile for the flattened linears: as large as comfortably fits, but at
    least 2 programs when there is enough work (v7x dual TensorCores)."""
    if M > block_rows:
        return block_rows
    if M >= 16 and M % 16 == 0:
        return M // 2
    return M


# ----------------------------------------------------------------------------
# Row-tiled linear / 2-layer MLP kernels
# ----------------------------------------------------------------------------

def _linear_kernel(x_ref, w_ref, b_ref, o_ref, *, relu):
    y = jnp.dot(x_ref[...], w_ref[...], preferred_element_type=jnp.float32)
    y = y + b_ref[...]
    if relu:
        y = jnp.maximum(y, 0.0)
    o_ref[...] = y


def pallas_linear(x, w, b, relu=False):
    """x: (..., K) @ w: (K, N) + b: (N,), row-tiled over the flattened lead dims."""
    lead = x.shape[:-1]
    K = x.shape[-1]
    N = w.shape[1]
    x2 = x.reshape(-1, K)
    M = x2.shape[0]
    tm = _row_tile(M)
    out = pl.pallas_call(
        functools.partial(_linear_kernel, relu=relu),
        grid=(pl.cdiv(M, tm),),
        in_specs=[pl.BlockSpec((tm, K), lambda i: (i, 0)),
                  pl.BlockSpec((K, N), lambda i: (0, 0)),
                  pl.BlockSpec((1, N), lambda i: (0, 0))],
        out_specs=pl.BlockSpec((tm, N), lambda i: (i, 0)),
        out_shape=jax.ShapeDtypeStruct((M, N), jnp.float32),
        compiler_params=pltpu.CompilerParams(
            dimension_semantics=("parallel",),
            vmem_limit_bytes=_LINEAR_VMEM_LIMIT),
    )(x2, w, b.reshape(1, N))
    return out.reshape(*lead, N)


def _mlp2_kernel(x_ref, w1_ref, b1_ref, w2_ref, b2_ref, o_ref, *, relu1, relu2):
    h = jnp.dot(x_ref[...], w1_ref[...], preferred_element_type=jnp.float32) + b1_ref[...]
    if relu1:
        h = jnp.maximum(h, 0.0)
    y = jnp.dot(h, w2_ref[...], preferred_element_type=jnp.float32) + b2_ref[...]
    if relu2:
        y = jnp.maximum(y, 0.0)
    o_ref[...] = y


def _mlp2_masked_kernel(x_ref, m_ref, w1_ref, b1_ref, w2_ref, b2_ref, o_ref,
                        *, relu1, relu2):
    h = jnp.dot(x_ref[...], w1_ref[...], preferred_element_type=jnp.float32) + b1_ref[...]
    if relu1:
        h = jnp.maximum(h, 0.0)
    y = jnp.dot(h, w2_ref[...], preferred_element_type=jnp.float32) + b2_ref[...]
    if relu2:
        y = jnp.maximum(y, 0.0)
    o_ref[...] = y * m_ref[...]


def pallas_mlp2(x, p1, p2, relu1, relu2, row_mask=None):
    """Two fused matmuls (Linear -> [ReLU] -> Linear -> [ReLU]) with optional
    per-row mask applied in the epilogue (PlaceHolder masking)."""
    lead = x.shape[:-1]
    K = x.shape[-1]
    H = p1['w'].shape[1]
    N = p2['w'].shape[1]
    x2 = x.reshape(-1, K)
    M = x2.shape[0]
    tm = _row_tile(M)
    weight_specs = [pl.BlockSpec((K, H), lambda i: (0, 0)),
                    pl.BlockSpec((1, H), lambda i: (0, 0)),
                    pl.BlockSpec((H, N), lambda i: (0, 0)),
                    pl.BlockSpec((1, N), lambda i: (0, 0))]
    weight_args = (p1['w'], p1['b'].reshape(1, H), p2['w'], p2['b'].reshape(1, N))
    if row_mask is None:
        kern = functools.partial(_mlp2_kernel, relu1=relu1, relu2=relu2)
        in_specs = [pl.BlockSpec((tm, K), lambda i: (i, 0))] + weight_specs
        args = (x2,) + weight_args
    else:
        kern = functools.partial(_mlp2_masked_kernel, relu1=relu1, relu2=relu2)
        in_specs = [pl.BlockSpec((tm, K), lambda i: (i, 0)),
                    pl.BlockSpec((tm, 1), lambda i: (i, 0))] + weight_specs
        args = (x2, row_mask.reshape(M, 1)) + weight_args
    out = pl.pallas_call(
        kern,
        grid=(pl.cdiv(M, tm),),
        in_specs=in_specs,
        out_specs=pl.BlockSpec((tm, N), lambda i: (i, 0)),
        out_shape=jax.ShapeDtypeStruct((M, N), jnp.float32),
        compiler_params=pltpu.CompilerParams(
            dimension_semantics=("parallel",),
            vmem_limit_bytes=_LINEAR_VMEM_LIMIT),
    )(*args)
    return out.reshape(*lead, N)


# ----------------------------------------------------------------------------
# Fused NodeEdgeBlock + residual + LN + FFN + LN kernel
# ----------------------------------------------------------------------------

def _attn_fused_kernel(qkvq_ref, qkvf_ref, e_ref, x_ref, kmask_ref, qmask_ref,
                       yfilm_ref,
                       w_e_ref, b_e_ref, w_eo_ref, b_eo_ref, w_xo_ref, b_xo_ref,
                       wx1_ref, bx1_ref, wx2_ref, bx2_ref,
                       we1_ref, be1_ref, we2_ref, be2_ref,
                       lnx_ref, lne_ref,
                       xo_ref, eo_ref, *, dx, de, inv_sqrt_df, eps):
    tq = qkvq_ref.shape[1]
    n = qkvf_ref.shape[1]

    qkv_q = qkvq_ref[0]                              # (tq, 3dx)
    qkv_f = qkvf_ref[0]                              # (n, 3dx)
    Q = qkv_q[:, :dx]                                # (tq, dx)
    K = qkv_f[:, dx:2 * dx]                          # (n, dx)
    V = qkv_f[:, 2 * dx:]                            # (n, dx)
    E_in = e_ref[0]                                  # (tq, n, de)
    kmask = kmask_ref[0]                             # (1, n)
    qmask = qmask_ref[0]                             # (tq, 1)
    yf = yfilm_ref[0]                                # (1, 4dx)

    # fused e_mul|e_add edge projection (read E once, no pre-mask: masked keys
    # get -1e30 logits on the node path; newE is re-masked before the residual)
    E12 = jnp.dot(E_in.reshape(tq * n, de), w_e_ref[...],
                  preferred_element_type=jnp.float32) + b_e_ref[...]
    E12 = E12.reshape(tq, n, 2 * dx)

    # per-channel (head-flattened) attention logits with edge FiLM
    Y = (Q[:, None, :] * K[None, :, :]) * inv_sqrt_df
    Y = Y * (E12[:, :, :dx] + 1.0) + E12[:, :, dx:]  # (tq, n, dx)

    # ---- node path first so the softmax temporaries die early --------------
    Ym = jnp.where(kmask[:, :, None] > 0.5, Y, jnp.float32(-1e30))
    mx = jnp.max(Ym, axis=1, keepdims=True)          # (tq, 1, dx)
    p = jnp.exp(Ym - mx)
    s = jnp.sum(p, axis=1)                           # (tq, dx)
    wv = jnp.sum(p * V[None, :, :], axis=1) / s      # exact divide for parity

    newX = yf[:, 2 * dx:3 * dx] + (yf[:, 3 * dx:] + 1.0) * wv
    newX = jnp.dot(newX, w_xo_ref[...],
                   preferred_element_type=jnp.float32) + b_xo_ref[...]
    newX = newX * qmask
    x1 = _ln_tail(x_ref[0] + newX, lnx_ref[0:1, :], lnx_ref[1:2, :], eps)   # normX1
    hX = jnp.maximum(
        jnp.dot(x1, wx1_ref[...], preferred_element_type=jnp.float32) + bx1_ref[...],
        0.0)
    ffX = jnp.dot(hX, wx2_ref[...], preferred_element_type=jnp.float32) + bx2_ref[...]
    xo_ref[0] = _ln_tail(x1 + ffX, lnx_ref[2:3, :], lnx_ref[3:4, :], eps)   # normX2

    # ---- edge path: y-FiLM + e_out + mask + residual + normE1 + FFN + normE2
    newE = yf[:, 0:dx][:, None, :] + (yf[:, dx:2 * dx][:, None, :] + 1.0) * Y
    newE = jnp.dot(newE.reshape(tq * n, dx), w_eo_ref[...],
                   preferred_element_type=jnp.float32) + b_eo_ref[...]
    emask = (qmask * kmask)[:, :, None]               # (tq, n, 1)
    newE = newE.reshape(tq, n, de) * emask
    e1 = _ln_tail(E_in + newE, lne_ref[0:1, :], lne_ref[1:2, :], eps)       # normE1
    hE = jnp.maximum(
        jnp.dot(e1.reshape(tq * n, de), we1_ref[...],
                preferred_element_type=jnp.float32) + be1_ref[...],
        0.0)
    ffE = jnp.dot(hE, we2_ref[...], preferred_element_type=jnp.float32) + be2_ref[...]
    eo_ref[0] = _ln_tail(e1 + ffE.reshape(tq, n, de),
                         lne_ref[2:3, :], lne_ref[3:4, :], eps)             # normE2


def _choose_tq(n, bs, dx, de, dff_e, dff_x):
    """Query-tile size derived from the VMEM budget of this generation
    (64 MiB on v7x, 128 MiB on v5e/v6e).  n must be a multiple of 8."""
    vmem = _vmem_capacity_bytes()
    budget = int(vmem * 0.45)
    # footprint that does not scale with tq: full-n K/V block (double buffered)
    # plus all broadcast weights
    fixed = 4 * (2 * n * 3 * dx
                 + 2 * dx * dff_x + 2 * de * dff_e
                 + de * 2 * dx + dx * de + dx * dx + 8 * (dx + de))
    # per (query, key) pair: E in/out blocks (double buffered) plus the peak
    # live set of (tq, n, *) temporaries, phase-max over logits/node/edge phases
    per_pair = 4 * (4 * de + max(3 * dx, dx + 3 * de + dff_e))
    # per query row: QKV tile (double buffered), X in/out, X-FFN hidden
    per_row = 4 * (12 * dx + 4 * dx + dff_x)
    cap = max(8, (budget - fixed) // max(n * per_pair + per_row, 1))

    tq = 8
    t = 8
    while t <= min(cap, n):
        if n % t == 0:
            tq = t
        t += 8
    # keep >=2 programs on the parallel grid so v7x's two TensorCores get work
    if bs * (n // tq) < 2 and n >= 16:
        for t in range(8 * ((n // 2) // 8), 7, -8):
            if n % t == 0:
                tq = t
                break
    return max(8, min(tq, n))


def node_edge_attention_fused(QKV, E_in, X_in, node_mask_f, yfilm, lp,
                              n_head, eps=1e-5):
    """Fused NodeEdgeBlock hot path + residual + LN + feed-forward + LN for both
    the X and E streams.  Returns (normX2(...), normE2(...))."""
    bs, n, dx3 = QKV.shape
    dx = dx3 // 3
    de = E_in.shape[-1]
    dff_x = lp['linX1']['w'].shape[1]
    dff_e = lp['linE1']['w'].shape[1]
    df = dx // n_head
    tq = _choose_tq(n, bs, dx, de, dff_e, dff_x)
    n_qt = n // tq

    sa = lp['self_attn']
    kmask = node_mask_f.reshape(bs, 1, n).astype(jnp.float32)
    qmask = node_mask_f.reshape(bs, n, 1).astype(jnp.float32)

    def _bcast(shape):
        zeros = (0,) * len(shape)
        return pl.BlockSpec(shape, lambda b, qi, _z=zeros: _z)

    in_specs = [
        pl.BlockSpec((1, tq, 3 * dx), lambda b, qi: (b, qi, 0)),      # QKV (query tile)
        pl.BlockSpec((1, n, 3 * dx), lambda b, qi: (b, 0, 0)),        # QKV (full; K/V)
        pl.BlockSpec((1, tq, n, de), lambda b, qi: (b, qi, 0, 0)),    # E (also residual)
        pl.BlockSpec((1, tq, dx), lambda b, qi: (b, qi, 0)),          # X (residual)
        pl.BlockSpec((1, 1, n), lambda b, qi: (b, 0, 0)),             # key mask
        pl.BlockSpec((1, tq, 1), lambda b, qi: (b, qi, 0)),           # query mask
        pl.BlockSpec((1, 1, 4 * dx), lambda b, qi: (b, 0, 0)),        # y-FiLM vector
        _bcast((de, 2 * dx)), _bcast((1, 2 * dx)),                    # e_mul|e_add
        _bcast((dx, de)), _bcast((1, de)),                            # e_out
        _bcast((dx, dx)), _bcast((1, dx)),                            # x_out
        _bcast((dx, dff_x)), _bcast((1, dff_x)),                      # linX1
        _bcast((dff_x, dx)), _bcast((1, dx)),                         # linX2
        _bcast((de, dff_e)), _bcast((1, dff_e)),                      # linE1
        _bcast((dff_e, de)), _bcast((1, de)),                         # linE2
        _bcast((4, dx)), _bcast((4, de)),                             # LN stacks
    ]
    out_specs = (pl.BlockSpec((1, tq, dx), lambda b, qi: (b, qi, 0)),
                 pl.BlockSpec((1, tq, n, de), lambda b, qi: (b, qi, 0, 0)))

    vmem = _vmem_capacity_bytes()
    kern = functools.partial(_attn_fused_kernel, dx=dx, de=de,
                             inv_sqrt_df=1.0 / math.sqrt(df), eps=eps)
    Xn, En = pl.pallas_call(
        kern,
        grid=(bs, n_qt),
        in_specs=in_specs,
        out_specs=out_specs,
        out_shape=(jax.ShapeDtypeStruct((bs, n, dx), jnp.float32),
                   jax.ShapeDtypeStruct((bs, n, n, de), jnp.float32)),
        compiler_params=pltpu.CompilerParams(
            dimension_semantics=("parallel", "parallel"),
            vmem_limit_bytes=min(int(vmem * 0.75), 100 * 1024 * 1024)),
    )(QKV, QKV, E_in, X_in, kmask, qmask, yfilm,
      lp['w_e'], lp['b_e'].reshape(1, -1),
      sa['e_out']['w'], sa['e_out']['b'].reshape(1, -1),
      sa['x_out']['w'], sa['x_out']['b'].reshape(1, -1),
      lp['linX1']['w'], lp['linX1']['b'].reshape(1, -1),
      lp['linX2']['w'], lp['linX2']['b'].reshape(1, -1),
      lp['linE1']['w'], lp['linE1']['b'].reshape(1, -1),
      lp['linE2']['w'], lp['linE2']['b'].reshape(1, -1),
      lp['lnx'], lp['lne'])
    return Xn, En


# ----------------------------------------------------------------------------
# Plain-XLA helpers (tiny y-path / global pooling, bs rows only)
# ----------------------------------------------------------------------------

def _dense(p, x, relu=False):
    y = x @ p['w'] + p['b']
    return jnp.maximum(y, 0.0) if relu else y


def xtoy(p, X, x_mask):
    """Masked node->global pooling (mean/min/max/var) + Linear(4*dx, dy)."""
    mask = jnp.broadcast_to(x_mask, X.shape)
    imask = 1.0 - mask
    denom = jnp.sum(mask, axis=1)
    m = jnp.sum(X, axis=1) / denom
    mi = jnp.min(X + 1e5 * imask, axis=1)
    ma = jnp.max(X - 1e5 * imask, axis=1)
    std = jnp.sum(((X - m[:, None, :]) * mask) ** 2, axis=1) / denom
    z = jnp.concatenate([m, mi, ma, std], axis=-1)
    return _dense(p, z)


def etoy(p, E, e_mask1, e_mask2):
    """Masked edge->global pooling + Linear(4*de, dy)."""
    mask = jnp.broadcast_to(e_mask1 * e_mask2, E.shape)
    imask = 1.0 - mask
    divide = jnp.sum(mask, axis=(1, 2))
    m = jnp.sum(E, axis=(1, 2)) / divide
    mi = jnp.min(jnp.min(E + 1e5 * imask, axis=2), axis=1)
    ma = jnp.max(jnp.max(E - 1e5 * imask, axis=2), axis=1)
    std = jnp.sum(((E - m[:, None, None, :]) * mask) ** 2, axis=(1, 2)) / divide
    z = jnp.concatenate([m, mi, ma, std], axis=-1)
    return _dense(p, z)


# ----------------------------------------------------------------------------
# Transformer layer + full dense forward
# ----------------------------------------------------------------------------

def transformer_layer(lp, X, E, y, node_mask_f, n_head, eps=1e-5):
    sa = lp['self_attn']
    x_mask = node_mask_f[:, :, None]
    e_mask1 = x_mask[:, :, None, :]
    e_mask2 = x_mask[:, None, :, :]

    # tiny y projections (bs rows): one packed FiLM matmul in plain XLA
    yfilm = (y @ lp['w_film'] + lp['b_film'])[:, None, :]

    # fused Q|K|V projection (single lane-dense matmul over bs*n rows)
    QKV = pallas_linear(X, lp['w_qkv'], lp['b_qkv'])

    # fused: edge-FiLM logits, masked online softmax, e_out/x_out, residuals,
    # normX1/normE1, X/E feed-forward, normX2/normE2 — one Pallas kernel
    Xo, Eo = node_edge_attention_fused(QKV, E, X, node_mask_f, yfilm, lp,
                                       n_head, eps=eps)

    # global-feature update (uses the layer inputs X, E, y); bs rows -> plain XLA
    new_y = (_dense(sa['y_y'], y)
             + xtoy(sa['x_y'], X, x_mask)
             + etoy(sa['e_y'], E, e_mask1, e_mask2))
    new_y = _dense(sa['y_out'][1], _dense(sa['y_out'][0], new_y, relu=True))
    yn = _ln_tail(y + new_y, lp['norm_y1']['g'], lp['norm_y1']['b'], eps)
    ffy = _dense(lp['lin_y2'], _dense(lp['lin_y1'], yn, relu=True))
    yo = _ln_tail(yn + ffy, lp['norm_y2']['g'], lp['norm_y2']['b'], eps)
    return Xo, Eo, yo


@functools.partial(jax.jit, static_argnames=("n_head", "out_dim_X"))
def _forward_dense(params, X, E, node_mask_f, y, n_head, out_dim_X):
    bs, n, _ = X.shape
    x_mask = node_mask_f[:, :, None]
    e_rowmask = (x_mask[:, :, None, :] * x_mask[:, None, :, :]).reshape(bs * n * n, 1)
    x_rowmask = x_mask.reshape(bs * n, 1)

    X_to_out = X[..., :out_dim_X]          # addition=True, project=False

    # input MLPs (two fused matmuls each) with the PlaceHolder mask in the
    # epilogue.  The (new_E + new_E^T)/2 symmetrisation is skipped: get_adj
    # asserts a symmetric adjacency and mlp_in_E is per-edge, so it is exact.
    Eh = pallas_mlp2(E, params['mlp_in_E'][0], params['mlp_in_E'][1],
                     relu1=True, relu2=True, row_mask=e_rowmask)
    Xh = pallas_mlp2(X, params['mlp_in_X'][0], params['mlp_in_X'][1],
                     relu1=True, relu2=True, row_mask=x_rowmask)
    yh = _dense(params['mlp_in_y'][1],
                _dense(params['mlp_in_y'][0], y, relu=True), relu=True)

    for lp in params['layers']:
        Xh, Eh, yh = transformer_layer(lp, Xh, Eh, yh, node_mask_f, n_head)

    Xo = pallas_mlp2(Xh, params['mlp_out_X'][0], params['mlp_out_X'][1],
                     relu1=True, relu2=False)
    return Xo + X_to_out


# ----------------------------------------------------------------------------
# One-time parameter packing (hoists all per-layer concatenations out of jit)
# ----------------------------------------------------------------------------

def pack_params(params):
    packed = {k: v for k, v in params.items() if k != 'layers'}
    packed['layers'] = []
    for lp in params['layers']:
        sa = lp['self_attn']
        new = dict(lp)
        new['w_qkv'] = jnp.concatenate([sa['q']['w'], sa['k']['w'], sa['v']['w']], axis=1)
        new['b_qkv'] = jnp.concatenate([sa['q']['b'], sa['k']['b'], sa['v']['b']])
        new['w_e'] = jnp.concatenate([sa['e_mul']['w'], sa['e_add']['w']], axis=1)
        new['b_e'] = jnp.concatenate([sa['e_mul']['b'], sa['e_add']['b']])
        new['w_film'] = jnp.concatenate([sa['y_e_add']['w'], sa['y_e_mul']['w'],
                                         sa['y_x_add']['w'], sa['y_x_mul']['w']], axis=1)
        new['b_film'] = jnp.concatenate([sa['y_e_add']['b'], sa['y_e_mul']['b'],
                                         sa['y_x_add']['b'], sa['y_x_mul']['b']])
        new['lnx'] = jnp.stack([lp['normX1']['g'], lp['normX1']['b'],
                                lp['normX2']['g'], lp['normX2']['b']])
        new['lne'] = jnp.stack([lp['normE1']['g'], lp['normE1']['b'],
                                lp['normE2']['g'], lp['normE2']['b']])
        packed['layers'].append(new)
    return packed


# ----------------------------------------------------------------------------
# Host-side glue (ragged -> dense packing, adjacency construction)
# ----------------------------------------------------------------------------

def get_adj_np(batch_mask, covalent_bonds, bond_types, n, bs):
    d = bond_types.shape[1]
    adj = np.zeros((bs, n, n, d), np.float32)
    node_mask = np.zeros((bs, n), np.float32)
    one_hot_no_bond = np.zeros((d,), np.float32)
    one_hot_no_bond[BOND_MAPPING['NOBOND']] = 1.0
    for i in range(bs):
        mask = batch_mask == i
        num_atoms = int(mask.sum())
        node_mask[i, :num_atoms] = 1.0
        mask_cov = mask[covalent_bonds[0]] & mask[covalent_bonds[1]]
        adj[i, :num_atoms, :num_atoms] = one_hot_no_bond
        shift = int(covalent_bonds[0][mask_cov].min()) if mask_cov.any() else 0
        adj[i, covalent_bonds[0][mask_cov] - shift,
               covalent_bonds[1][mask_cov] - shift] = bond_types[mask_cov]
    adj[:, np.arange(n), np.arange(n)] = 0.0
    assert (adj.transpose(0, 2, 1, 3) == adj).all(), 'Adjacency matrix is not symmetric.'
    return adj, node_mask


def graph_transformer_forward(params, coords, X_block, batch_mask, covalent_bonds,
                              E_covalent, y, hidden_dims, out_dim_X):
    # coords is accepted for signature fidelity but unused by the reference forward.
    del coords
    batch_mask = np.asarray(batch_mask)
    bs = int(np.unique(batch_mask).shape[0])
    n_bins = np.bincount(batch_mask)
    n = int(n_bins.max())
    n_pad = max(8, -(-n // 8) * 8)   # pad so attention query tiles stay (8,128)-legal

    Xb = np.asarray(X_block, np.float32)
    X = np.zeros((bs, n_pad, Xb.shape[1]), np.float32)
    for i in range(bs):
        X[i, :n_bins[i]] = Xb[batch_mask == i]

    E, node_mask = get_adj_np(batch_mask, np.asarray(covalent_bonds),
                              np.asarray(E_covalent, np.float32), n_pad, bs)

    Xo = _forward_dense(params, jnp.asarray(X), jnp.asarray(E),
                        jnp.asarray(node_mask), jnp.asarray(y, jnp.float32),
                        n_head=hidden_dims['n_head'], out_dim_X=out_dim_X)

    # X = X[node_mask]  (gather valid nodes back into ragged layout)
    flat = Xo.reshape(bs * n_pad, -1)
    idx = np.nonzero(node_mask.reshape(-1) > 0.5)[0]
    return flat[jnp.asarray(idx)]


# ----------------------------------------------------------------------------
# Deterministic parameter init
# ----------------------------------------------------------------------------

class _Init:
    def __init__(self, seed=0):
        self.key = jax.random.PRNGKey(seed)

    def linear(self, din, dout):
        self.key, k1, k2 = jax.random.split(self.key, 3)
        bound = 1.0 / math.sqrt(din)
        w = jax.random.uniform(k1, (din, dout), jnp.float32, -bound, bound)
        b = jax.random.uniform(k2, (dout,), jnp.float32, -bound, bound)
        return {'w': w, 'b': b}

    def layernorm(self, d):
        return {'g': jnp.ones((d,), jnp.float32), 'b': jnp.zeros((d,), jnp.float32)}


def init_graph_transformer_params(n_layers, in_x, in_e, in_y, hmlp, hdims, out_x):
    init = _Init(0)
    dx, de, dy = hdims['dx'], hdims['de'], hdims['dy']
    p = {
        'mlp_in_X': [init.linear(in_x, hmlp['X']), init.linear(hmlp['X'], dx)],
        'mlp_in_E': [init.linear(in_e, hmlp['E']), init.linear(hmlp['E'], de)],
        'mlp_in_y': [init.linear(in_y, hmlp['y']), init.linear(hmlp['y'], dy)],
        'layers': [],
    }
    for _ in range(n_layers):
        sa = {}
        for name in ['q', 'k', 'v']:
            sa[name] = init.linear(dx, dx)
        sa['e_add'] = init.linear(de, dx)
        sa['e_mul'] = init.linear(de, dx)
        for name in ['y_e_mul', 'y_e_add', 'y_x_mul', 'y_x_add']:
            sa[name] = init.linear(dy, dx)
        sa['y_y'] = init.linear(dy, dy)
        sa['x_y'] = init.linear(4 * dx, dy)
        sa['e_y'] = init.linear(4 * de, dy)
        sa['x_out'] = init.linear(dx, dx)
        sa['e_out'] = init.linear(dx, de)
        sa['y_out'] = [init.linear(dy, dy), init.linear(dy, dy)]
        lp = {'self_attn': sa,
              'linX1': init.linear(dx, hdims['dim_ffX']),
              'linX2': init.linear(hdims['dim_ffX'], dx),
              'linE1': init.linear(de, hdims['dim_ffE']),
              'linE2': init.linear(hdims['dim_ffE'], de),
              'lin_y1': init.linear(dy, hdims['dim_ffy']),
              'lin_y2': init.linear(hdims['dim_ffy'], dy),
              'normX1': init.layernorm(dx), 'normX2': init.layernorm(dx),
              'normE1': init.layernorm(de), 'normE2': init.layernorm(de),
              'norm_y1': init.layernorm(dy), 'norm_y2': init.layernorm(dy)}
        p['layers'].append(lp)
    p['mlp_out_X'] = [init.linear(dx, hmlp['X']), init.linear(hmlp['X'], out_x)]
    return p


# ----------------------------------------------------------------------------
# Demo
# ----------------------------------------------------------------------------

if __name__ == "__main__":
    key = jax.random.PRNGKey(0)

    n_layers = 2
    input_dims_node = 8
    input_dim_edge = len(BOND_MAPPING)          # 5 bond classes
    input_dims_global = 4
    hidden_mlp_dims = {'X': 32, 'E': 16, 'y': 32}
    hidden_dims = {'dx': 32, 'de': 16, 'dy': 16, 'n_head': 4,
                   'dim_ffX': 64, 'dim_ffE': 32,
                   'dim_ffy': 2048}             # XEyTransformerLayer default dim_ffy
    output_node_nf = 8                          # <= input_dims_node (addition mode)

    # two molecules: 5 atoms + 8 atoms
    batch_mask = np.array([0] * 5 + [1] * 8, dtype=np.int32)
    m = batch_mask.shape[0]
    bs = 2

    k1, k2, k3 = jax.random.split(key, 3)
    coords = jax.random.normal(k1, (m, 3), jnp.float32)           # unused in forward
    X_block = jax.random.normal(k2, (m, input_dims_node), jnp.float32)
    y = jax.random.normal(k3, (bs, input_dims_global), jnp.float32)

    # covalent bonds: chains within each molecule, both directions, symmetric types
    src, dst, types = [], [], []
    def add_bond(a, b, t):
        src.extend([a, b]); dst.extend([b, a]); types.extend([t, t])
    for a in range(0, 4):
        add_bond(a, a + 1, 1 + (a % 3))
    for a in range(5, 12):
        add_bond(a, a + 1, 1 + (a % 4))
    covalent_bonds = np.array([src, dst], dtype=np.int32)
    E_covalent = np.zeros((len(types), input_dim_edge), np.float32)
    E_covalent[np.arange(len(types)), np.array(types)] = 1.0

    params = init_graph_transformer_params(
        n_layers, input_dims_node, input_dim_edge, input_dims_global,
        hidden_mlp_dims, hidden_dims, output_node_nf)
    params = pack_params(params)                # one-time weight packing (out of jit)

    out = graph_transformer_forward(params, coords, X_block, batch_mask,
                                    covalent_bonds, E_covalent, y,
                                    hidden_dims, output_node_nf)
    out = jax.block_until_ready(out)
    assert out.shape == (m, output_node_nf), out.shape
    assert bool(jnp.all(jnp.isfinite(out)))
    # TODO(synk): Xtoy/Etoy source was not provided; masked DiGress/MiDi variants assumed.
    print("KERNEL_OK")
</pallas_src>

<mosaic_0001>
module attributes {stable_mosaic.version = 11 : i64} {
  func.func @_mlp2_masked_kernel(%arg0: i32, %arg1: memref<8x8xf32, #tpu.memory_space<vmem>>, %arg2: memref<8x1xf32, #tpu.memory_space<vmem>>, %arg3: memref<8x32xf32, #tpu.memory_space<vmem>>, %arg4: memref<1x32xf32, #tpu.memory_space<vmem>>, %arg5: memref<32x32xf32, #tpu.memory_space<vmem>>, %arg6: memref<1x32xf32, #tpu.memory_space<vmem>>, %arg7: memref<8x32xf32, #tpu.memory_space<vmem>>) attributes {dimension_semantics = [#tpu.dimension_semantics<parallel>], iteration_bounds = array<i64: 2>, scalar_prefetch = 0 : i64, scratch_operands = 0 : i64, tpu.core_type = #tpu.core_type<tc>, window_params = [{transform_indices = @transform_0, window_bounds = array<i64: 8, 8>}, {transform_indices = @transform_1, window_bounds = array<i64: 8, 1>}, {pipeline_mode = #tpu.pipeline_mode<synchronous>, transform_indices = @transform_2, window_bounds = array<i64: 8, 32>}, {pipeline_mode = #tpu.pipeline_mode<synchronous>, transform_indices = @transform_3, window_bounds = array<i64: 1, 32>}, {pipeline_mode = #tpu.pipeline_mode<synchronous>, transform_indices = @transform_4, window_bounds = array<i64: 32, 32>}, {pipeline_mode = #tpu.pipeline_mode<synchronous>, transform_indices = @transform_5, window_bounds = array<i64: 1, 32>}, {transform_indices = @transform_6, window_bounds = array<i64: 8, 32>}]} {
    %c0 = arith.constant 0 : index
    %c0_0 = arith.constant 0 : index
    %0 = vector.load %arg1[%c0, %c0_0] : memref<8x8xf32, #tpu.memory_space<vmem>>, vector<8x8xf32>
    %c0_1 = arith.constant 0 : index
    %c0_2 = arith.constant 0 : index
    %1 = vector.load %arg3[%c0_1, %c0_2] : memref<8x32xf32, #tpu.memory_space<vmem>>, vector<8x32xf32>
    %cst = arith.constant dense<0.000000e+00> : vector<8x32xf32>
    %2 = tpu.matmul %0, %1, %cst {dimension_numbers = #tpu.dot_dimension_numbers<[1], [0], [0], [1], [0, 0, 1, 1], [], []>} : vector<8x8xf32>, vector<8x32xf32>, vector<8x32xf32> -> vector<8x32xf32>
    %c0_3 = arith.constant 0 : index
    %c0_4 = arith.constant 0 : index
    %3 = vector.load %arg4[%c0_3, %c0_4] : memref<1x32xf32, #tpu.memory_space<vmem>>, vector<1x32xf32>
    %4 = vector.broadcast %3 : vector<1x32xf32> to vector<8x32xf32>
    %5 = arith.addf %2, %4 : vector<8x32xf32>
    %cst_5 = arith.constant 0.000000e+00 : f32
    %6 = vector.broadcast %cst_5 : f32 to vector<8x32xf32>
    %7 = arith.maximumf %5, %6 : vector<8x32xf32>
    %c0_6 = arith.constant 0 : index
    %c0_7 = arith.constant 0 : index
    %8 = vector.load %arg5[%c0_6, %c0_7] : memref<32x32xf32, #tpu.memory_space<vmem>>, vector<32x32xf32>
    %cst_8 = arith.constant dense<0.000000e+00> : vector<8x32xf32>
    %9 = tpu.matmul %7, %8, %cst_8 {dimension_numbers = #tpu.dot_dimension_numbers<[1], [0], [0], [1], [0, 0, 1, 1], [], []>} : vector<8x32xf32>, vector<32x32xf32>, vector<8x32xf32> -> vector<8x32xf32>
    %c0_9 = arith.constant 0 : index
    %c0_10 = arith.constant 0 : index
    %10 = vector.load %arg6[%c0_9, %c0_10] : memref<1x32xf32, #tpu.memory_space<vmem>>, vector<1x32xf32>
    %11 = vector.broadcast %10 : vector<1x32xf32> to vector<8x32xf32>
    %12 = arith.addf %9, %11 : vector<8x32xf32>
    %cst_11 = arith.constant 0.000000e+00 : f32
    %13 = vector.broadcast %cst_11 : f32 to vector<8x32xf32>
    %14 = arith.maximumf %12, %13 : vector<8x32xf32>
    %c0_12 = arith.constant 0 : index
    %c0_13 = arith.constant 0 : index
    %15 = vector.load %arg2[%c0_12, %c0_13] : memref<8x1xf32, #tpu.memory_space<vmem>>, vector<8x1xf32>
    %16 = vector.broadcast %15 : vector<8x1xf32> to vector<8x32xf32>
    %17 = arith.mulf %14, %16 : vector<8x32xf32>
    %c0_14 = arith.constant 0 : index
    %c0_15 = arith.constant 0 : index
    %18 = vector.load %arg7[%c0_14, %c0_15] : memref<8x32xf32, #tpu.memory_space<vmem>>, vector<8x32xf32>
    tpu.vector_store %arg7[%c0_14, %c0_15], %17 {strides = array<i32>} : memref<8x32xf32, #tpu.memory_space<vmem>>, vector<8x32xf32>,
    return
  }
  func.func @transform_0(%arg0: i32) -> (i32, i32) {
    %c0_i32 = arith.constant 0 : i32
    %c0_i32_0 = arith.constant 0 : i32
    return %arg0, %c0_i32 : i32, i32
  }
  func.func @transform_1(%arg0: i32) -> (i32, i32) {
    %c0_i32 = arith.constant 0 : i32
    %c0_i32_0 = arith.constant 0 : i32
    return %arg0, %c0_i32 : i32, i32
  }
  func.func @transform_2(%arg0: i32) -> (i32, i32) {
    %c0_i32 = arith.constant 0 : i32
    %c0_i32_0 = arith.constant 0 : i32
    %c0_i32_1 = arith.constant 0 : i32
    return %c0_i32, %c0_i32_0 : i32, i32
  }
  func.func @transform_3(%arg0: i32) -> (i32, i32) {
    %c0_i32 = arith.constant 0 : i32
    %c0_i32_0 = arith.constant 0 : i32
    %c0_i32_1 = arith.constant 0 : i32
    return %c0_i32, %c0_i32_0 : i32, i32
  }
  func.func @transform_4(%arg0: i32) -> (i32, i32) {
    %c0_i32 = arith.constant 0 : i32
    %c0_i32_0 = arith.constant 0 : i32
    %c0_i32_1 = arith.constant 0 : i32
    return %c0_i32, %c0_i32_0 : i32, i32
  }
  func.func @transform_5(%arg0: i32) -> (i32, i32) {
    %c0_i32 = arith.constant 0 : i32
    %c0_i32_0 = arith.constant 0 : i32
    %c0_i32_1 = arith.constant 0 : i32
    return %c0_i32, %c0_i32_0 : i32, i32
  }
  func.func @transform_6(%arg0: i32) -> (i32, i32) {
    %c0_i32 = arith.constant 0 : i32
    %c0_i32_0 = arith.constant 0 : i32
    return %arg0, %c0_i32 : i32, i32
  }
}

module attributes {stable_mosaic.version = 11 : i64} {
  func.func @_mlp2_masked_kernel(%arg0: i32, %arg1: memref<64x5xf32, #tpu.memory_space<vmem>>, %arg2: memref<64x1xf32, #tpu.memory_space<vmem>>, %arg3: memref<5x16xf32, #tpu.memory_space<vmem>>, %arg4: memref<1x16xf32, #tpu.memory_space<vmem>>, %arg5: memref<16x16xf32, #tpu.memory_space<vmem>>, %arg6: memref<1x16xf32, #tpu.memory_space<vmem>>, %arg7: memref<64x16xf32, #tpu.memory_space<vmem>>) attributes {dimension_semantics = [#tpu.dimension_semantics<parallel>], iteration_bounds = array<i64: 2>, scalar_prefetch = 0 : i64, scratch_operands = 0 : i64, tpu.core_type = #tpu.core_type<tc>, window_params = [{transform_indices = @transform_0, window_bounds = array<i64: 64, 5>}, {transform_indices = @transform_1, window_bounds = array<i64: 64, 1>}, {pipeline_mode = #tpu.pipeline_mode<synchronous>, transform_indices = @transform_2, window_bounds = array<i64: 5, 16>}, {pipeline_mode = #tpu.pipeline_mode<synchronous>, transform_indices = @transform_3, window_bounds = array<i64: 1, 16>}, {pipeline_mode = #tpu.pipeline_mode<synchronous>, transform_indices = @transform_4, window_bounds = array<i64: 16, 16>}, {pipeline_mode = #tpu.pipeline_mode<synchronous>, transform_indices = @transform_5, window_bounds = array<i64: 1, 16>}, {transform_indices = @transform_6, window_bounds = array<i64: 64, 16>}]} {
    %c0 = arith.constant 0 : index
    %c0_0 = arith.constant 0 : index
    %0 = vector.load %arg1[%c0, %c0_0] : memref<64x5xf32, #tpu.memory_space<vmem>>, vector<64x5xf32>
    %c0_1 = arith.constant 0 : index
    %c0_2 = arith.constant 0 : index
    %1 = vector.load %arg3[%c0_1, %c0_2] : memref<5x16xf32, #tpu.memory_space<vmem>>, vector<5x16xf32>
    %cst = arith.constant dense<0.000000e+00> : vector<64x16xf32>
    %2 = tpu.matmul %0, %1, %cst {dimension_numbers = #tpu.dot_dimension_numbers<[1], [0], [0], [1], [0, 0, 1, 1], [], []>} : vector<64x5xf32>, vector<5x16xf32>, vector<64x16xf32> -> vector<64x16xf32>
    %c0_3 = arith.constant 0 : index
    %c0_4 = arith.constant 0 : index
    %3 = vector.load %arg4[%c0_3, %c0_4] : memref<1x16xf32, #tpu.memory_space<vmem>>, vector<1x16xf32>
    %4 = vector.broadcast %3 : vector<1x16xf32> to vector<64x16xf32>
    %5 = arith.addf %2, %4 : vector<64x16xf32>
    %cst_5 = arith.constant 0.000000e+00 : f32
    %6 = vector.broadcast %cst_5 : f32 to vector<64x16xf32>
    %7 = arith.maximumf %5, %6 : vector<64x16xf32>
    %c0_6 = arith.constant 0 : index
    %c0_7 = arith.constant 0 : index
    %8 = vector.load %arg5[%c0_6, %c0_7] : memref<16x16xf32, #tpu.memory_space<vmem>>, vector<16x16xf32>
    %cst_8 = arith.constant dense<0.000000e+00> : vector<64x16xf32>
    %9 = tpu.matmul %7, %8, %cst_8 {dimension_numbers = #tpu.dot_dimension_numbers<[1], [0], [0], [1], [0, 0, 1, 1], [], []>} : vector<64x16xf32>, vector<16x16xf32>, vector<64x16xf32> -> vector<64x16xf32>
    %c0_9 = arith.constant 0 : index
    %c0_10 = arith.constant 0 : index
    %10 = vector.load %arg6[%c0_9, %c0_10] : memref<1x16xf32, #tpu.memory_space<vmem>>, vector<1x16xf32>
    %11 = vector.broadcast %10 : vector<1x16xf32> to vector<64x16xf32>
    %12 = arith.addf %9, %11 : vector<64x16xf32>
    %cst_11 = arith.constant 0.000000e+00 : f32
    %13 = vector.broadcast %cst_11 : f32 to vector<64x16xf32>
    %14 = arith.maximumf %12, %13 : vector<64x16xf32>
    %c0_12 = arith.constant 0 : index
    %c0_13 = arith.constant 0 : index
    %15 = vector.load %arg2[%c0_12, %c0_13] : memref<64x1xf32, #tpu.memory_space<vmem>>, vector<64x1xf32>
    %16 = vector.broadcast %15 : vector<64x1xf32> to vector<64x16xf32>
    %17 = arith.mulf %14, %16 : vector<64x16xf32>
    %c0_14 = arith.constant 0 : index
    %c0_15 = arith.constant 0 : index
    %18 = vector.load %arg7[%c0_14, %c0_15] : memref<64x16xf32, #tpu.memory_space<vmem>>, vector<64x16xf32>
    tpu.vector_store %arg7[%c0_14, %c0_15], %17 {strides = array<i32>} : memref<64x16xf32, #tpu.memory_space<vmem>>, vector<64x16xf32>,
    return
  }
  func.func @transform_0(%arg0: i32) -> (i32, i32) {
    %c0_i32 = arith.constant 0 : i32
    %c0_i32_0 = arith.constant 0 : i32
    return %arg0, %c0_i32 : i32, i32
  }
  func.func @transform_1(%arg0: i32) -> (i32, i32) {
    %c0_i32 = arith.constant 0 : i32
    %c0_i32_0 = arith.constant 0 : i32
    return %arg0, %c0_i32 : i32, i32
  }
  func.func @transform_2(%arg0: i32) -> (i32, i32) {
    %c0_i32 = arith.constant 0 : i32
    %c0_i32_0 = arith.constant 0 : i32
    %c0_i32_1 = arith.constant 0 : i32
    return %c0_i32, %c0_i32_0 : i32, i32
  }
  func.func @transform_3(%arg0: i32) -> (i32, i32) {
    %c0_i32 = arith.constant 0 : i32
    %c0_i32_0 = arith.constant 0 : i32
    %c0_i32_1 = arith.constant 0 : i32
    return %c0_i32, %c0_i32_0 : i32, i32
  }
  func.func @transform_4(%arg0: i32) -> (i32, i32) {
    %c0_i32 = arith.constant 0 : i32
    %c0_i32_0 = arith.constant 0 : i32
    %c0_i32_1 = arith.constant 0 : i32
    return %c0_i32, %c0_i32_0 : i32, i32
  }
  func.func @transform_5(%arg0: i32) -> (i32, i32) {
    %c0_i32 = arith.constant 0 : i32
    %c0_i32_0 = arith.constant 0 : i32
    %c0_i32_1 = arith.constant 0 : i32
    return %c0_i32, %c0_i32_0 : i32, i32
  }
  func.func @transform_6(%arg0: i32) -> (i32, i32) {
    %c0_i32 = arith.constant 0 : i32
    %c0_i32_0 = arith.constant 0 : i32
    return %arg0, %c0_i32 : i32, i32
  }
}

module attributes {stable_mosaic.version = 11 : i64} {
  func.func @_linear_kernel(%arg0: i32, %arg1: memref<8x32xf32, #tpu.memory_space<vmem>>, %arg2: memref<32x96xf32, #tpu.memory_space<vmem>>, %arg3: memref<1x96xf32, #tpu.memory_space<vmem>>, %arg4: memref<8x96xf32, #tpu.memory_space<vmem>>) attributes {dimension_semantics = [#tpu.dimension_semantics<parallel>], iteration_bounds = array<i64: 2>, scalar_prefetch = 0 : i64, scratch_operands = 0 : i64, tpu.core_type = #tpu.core_type<tc>, window_params = [{transform_indices = @transform_0, window_bounds = array<i64: 8, 32>}, {pipeline_mode = #tpu.pipeline_mode<synchronous>, transform_indices = @transform_1, window_bounds = array<i64: 32, 96>}, {pipeline_mode = #tpu.pipeline_mode<synchronous>, transform_indices = @transform_2, window_bounds = array<i64: 1, 96>}, {transform_indices = @transform_3, window_bounds = array<i64: 8, 96>}]} {
    %c0 = arith.constant 0 : index
    %c0_0 = arith.constant 0 : index
    %0 = vector.load %arg1[%c0, %c0_0] : memref<8x32xf32, #tpu.memory_space<vmem>>, vector<8x32xf32>
    %c0_1 = arith.constant 0 : index
    %c0_2 = arith.constant 0 : index
    %1 = vector.load %arg2[%c0_1, %c0_2] : memref<32x96xf32, #tpu.memory_space<vmem>>, vector<32x96xf32>
    %cst = arith.constant dense<0.000000e+00> : vector<8x96xf32>
    %2 = tpu.matmul %0, %1, %cst {dimension_numbers = #tpu.dot_dimension_numbers<[1], [0], [0], [1], [0, 0, 1, 1], [], []>} : vector<8x32xf32>, vector<32x96xf32>, vector<8x96xf32> -> vector<8x96xf32>
    %c0_3 = arith.constant 0 : index
    %c0_4 = arith.constant 0 : index
    %3 = vector.load %arg3[%c0_3, %c0_4] : memref<1x96xf32, #tpu.memory_space<vmem>>, vector<1x96xf32>
    %4 = vector.broadcast %3 : vector<1x96xf32> to vector<8x96xf32>
    %5 = arith.addf %2, %4 : vector<8x96xf32>
    %c0_5 = arith.constant 0 : index
    %c0_6 = arith.constant 0 : index
    %6 = vector.load %arg4[%c0_5, %c0_6] : memref<8x96xf32, #tpu.memory_space<vmem>>, vector<8x96xf32>
    tpu.vector_store %arg4[%c0_5, %c0_6], %5 {strides = array<i32>} : memref<8x96xf32, #tpu.memory_space<vmem>>, vector<8x96xf32>,
    return
  }
  func.func @transform_0(%arg0: i32) -> (i32, i32) {
    %c0_i32 = arith.constant 0 : i32
    %c0_i32_0 = arith.constant 0 : i32
    return %arg0, %c0_i32 : i32, i32
  }
  func.func @transform_1(%arg0: i32) -> (i32, i32) {
    %c0_i32 = arith.constant 0 : i32
    %c0_i32_0 = arith.constant 0 : i32
    %c0_i32_1 = arith.constant 0 : i32
    return %c0_i32, %c0_i32_0 : i32, i32
  }
  func.func @transform_2(%arg0: i32) -> (i32, i32) {
    %c0_i32 = arith.constant 0 : i32
    %c0_i32_0 = arith.constant 0 : i32
    %c0_i32_1 = arith.constant 0 : i32
    return %c0_i32, %c0_i32_0 : i32, i32
  }
  func.func @transform_3(%arg0: i32) -> (i32, i32) {
    %c0_i32 = arith.constant 0 : i32
    %c0_i32_0 = arith.constant 0 : i32
    return %arg0, %c0_i32 : i32, i32
  }
}

module attributes {stable_mosaic.version = 11 : i64} {
  func.func @_attn_fused_kernel(%arg0: i32, %arg1: i32, %arg2: memref<1x8x96xf32, #tpu.memory_space<vmem>>, %arg3: memref<1x8x96xf32, #tpu.memory_space<vmem>>, %arg4: memref<1x8x8x16xf32, #tpu.memory_space<vmem>>, %arg5: memref<1x8x32xf32, #tpu.memory_space<vmem>>, %arg6: memref<1x1x8xf32, #tpu.memory_space<vmem>>, %arg7: memref<1x8x1xf32, #tpu.memory_space<vmem>>, %arg8: memref<1x1x128xf32, #tpu.memory_space<vmem>>, %arg9: memref<16x64xf32, #tpu.memory_space<vmem>>, %arg10: memref<1x64xf32, #tpu.memory_space<vmem>>, %arg11: memref<32x16xf32, #tpu.memory_space<vmem>>, %arg12: memref<1x16xf32, #tpu.memory_space<vmem>>, %arg13: memref<32x32xf32, #tpu.memory_space<vmem>>, %arg14: memref<1x32xf32, #tpu.memory_space<vmem>>, %arg15: memref<32x64xf32, #tpu.memory_space<vmem>>, %arg16: memref<1x64xf32, #tpu.memory_space<vmem>>, %arg17: memref<64x32xf32, #tpu.memory_space<vmem>>, %arg18: memref<1x32xf32, #tpu.memory_space<vmem>>, %arg19: memref<16x32xf32, #tpu.memory_space<vmem>>, %arg20: memref<1x32xf32, #tpu.memory_space<vmem>>, %arg21: memref<32x16xf32, #tpu.memory_space<vmem>>, %arg22: memref<1x16xf32, #tpu.memory_space<vmem>>, %arg23: memref<4x32xf32, #tpu.memory_space<vmem>>, %arg24: memref<4x16xf32, #tpu.memory_space<vmem>>, %arg25: memref<1x8x32xf32, #tpu.memory_space<vmem>>, %arg26: memref<1x8x8x16xf32, #tpu.memory_space<vmem>>) attributes {dimension_semantics = [#tpu.dimension_semantics<parallel>, #tpu.dimension_semantics<parallel>], iteration_bounds = array<i64: 2, 1>, scalar_prefetch = 0 : i64, scratch_operands = 0 : i64, tpu.core_type = #tpu.core_type<tc>, window_params = [{transform_indices = @transform_0, window_bounds = array<i64: 1, 8, 96>}, {transform_indices = @transform_1, window_bounds = array<i64: 1, 8, 96>}, {transform_indices = @transform_2, window_bounds = array<i64: 1, 8, 8, 16>}, {transform_indices = @transform_3, window_bounds = array<i64: 1, 8, 32>}, {transform_indices = @transform_4, window_bounds = array<i64: 1, 1, 8>}, {transform_indices = @transform_5, window_bounds = array<i64: 1, 8, 1>}, {transform_indices = @transform_6, window_bounds = array<i64: 1, 1, 128>}, {pipeline_mode = #tpu.pipeline_mode<synchronous>, transform_indices = @transform_7, window_bounds = array<i64: 16, 64>}, {pipeline_mode = #tpu.pipeline_mode<synchronous>, transform_indices = @transform_8, window_bounds = array<i64: 1, 64>}, {pipeline_mode = #tpu.pipeline_mode<synchronous>, transform_indices = @transform_9, window_bounds = array<i64: 32, 16>}, {pipeline_mode = #tpu.pipeline_mode<synchronous>, transform_indices = @transform_10, window_bounds = array<i64: 1, 16>}, {pipeline_mode = #tpu.pipeline_mode<synchronous>, transform_indices = @transform_11, window_bounds = array<i64: 32, 32>}, {pipeline_mode = #tpu.pipeline_mode<synchronous>, transform_indices = @transform_12, window_bounds = array<i64: 1, 32>}, {pipeline_mode = #tpu.pipeline_mode<synchronous>, transform_indices = @transform_13, window_bounds = array<i64: 32, 64>}, {pipeline_mode = #tpu.pipeline_mode<synchronous>, transform_indices = @transform_14, window_bounds = array<i64: 1, 64>}, {pipeline_mode = #tpu.pipeline_mode<synchronous>, transform_indices = @transform_15, window_bounds = array<i64: 64, 32>}, {pipeline_mode = #tpu.pipeline_mode<synchronous>, transform_indices = @transform_16, window_bounds = array<i64: 1, 32>}, {pipeline_mode = #tpu.pipeline_mode<synchronous>, transform_indices = @transform_17, window_bounds = array<i64: 16, 32>}, {pipeline_mode = #tpu.pipeline_mode<synchronous>, transform_indices = @transform_18, window_bounds = array<i64: 1, 32>}, {pipeline_mode = #tpu.pipeline_mode<synchronous>, transform_indices = @transform_19, window_bounds = array<i64: 32, 16>}, {pipeline_mode = #tpu.pipeline_mode<synchronous>, transform_indices = @transform_20, window_bounds = array<i64: 1, 16>}, {pipeline_mode = #tpu.pipeline_mode<synchronous>, transform_indices = @transform_21, window_bounds = array<i64: 4, 32>}, {pipeline_mode = #tpu.pipeline_mode<synchronous>, transform_indices = @transform_22, window_bounds = array<i64: 4, 16>}, {transform_indices = @transform_23, window_bounds = array<i64: 1, 8, 32>}, {transform_indices = @transform_24, window_bounds = array<i64: 1, 8, 8, 16>}]} {
    %c0 = arith.constant 0 : index
    %c0_0 = arith.constant 0 : index
    %c0_1 = arith.constant 0 : index
    %0 = vector.load %arg2[%c0, %c0_0, %c0_1] : memref<1x8x96xf32, #tpu.memory_space<vmem>>, vector<1x8x96xf32>
    %1 = vector.shape_cast %0 : vector<1x8x96xf32> to vector<8x96xf32>
    %c0_2 = arith.constant 0 : index
    %c0_3 = arith.constant 0 : index
    %c0_4 = arith.constant 0 : index
    %2 = vector.load %arg3[%c0_2, %c0_3, %c0_4] : memref<1x8x96xf32, #tpu.memory_space<vmem>>, vector<1x8x96xf32>
    %3 = vector.shape_cast %2 : vector<1x8x96xf32> to vector<8x96xf32>
    %4 = vector.extract_strided_slice %1 {offsets = [0, 0], sizes = [8, 32], strides = [1, 1]} : vector<8x96xf32> to vector<8x32xf32>
    %5 = vector.extract_strided_slice %3 {offsets = [0, 32], sizes = [8, 32], strides = [1, 1]} : vector<8x96xf32> to vector<8x32xf32>
    %6 = vector.extract_strided_slice %3 {offsets = [0, 64], sizes = [8, 32], strides = [1, 1]} : vector<8x96xf32> to vector<8x32xf32>
    %c0_5 = arith.constant 0 : index
    %c0_6 = arith.constant 0 : index
    %c0_7 = arith.constant 0 : index
    %c0_8 = arith.constant 0 : index
    %7 = vector.load %arg4[%c0_5, %c0_6, %c0_7, %c0_8] : memref<1x8x8x16xf32, #tpu.memory_space<vmem>>, vector<1x8x8x16xf32>
    %8 = vector.shape_cast %7 : vector<1x8x8x16xf32> to vector<8x8x16xf32>
    %c0_9 = arith.constant 0 : index
    %c0_10 = arith.constant 0 : index
    %c0_11 = arith.constant 0 : index
    %9 = vector.load %arg6[%c0_9, %c0_10, %c0_11] : memref<1x1x8xf32, #tpu.memory_space<vmem>>, vector<1x1x8xf32>
    %10 = vector.shape_cast %9 : vector<1x1x8xf32> to vector<1x8xf32>
    %c0_12 = arith.constant 0 : index
    %c0_13 = arith.constant 0 : index
    %c0_14 = arith.constant 0 : index
    %11 = vector.load %arg7[%c0_12, %c0_13, %c0_14] : memref<1x8x1xf32, #tpu.memory_space<vmem>>, vector<1x8x1xf32>
    %12 = vector.shape_cast %11 : vector<1x8x1xf32> to vector<8x1xf32>
    %c0_15 = arith.constant 0 : index
    %c0_16 = arith.constant 0 : index
    %c0_17 = arith.constant 0 : index
    %13 = vector.load %arg8[%c0_15, %c0_16, %c0_17] : memref<1x1x128xf32, #tpu.memory_space<vmem>>, vector<1x1x128xf32>
    %14 = vector.shape_cast %13 : vector<1x1x128xf32> to vector<1x128xf32>
    %15 = vector.shape_cast %8 : vector<8x8x16xf32> to vector<64x16xf32>
    %c0_18 = arith.constant 0 : index
    %c0_19 = arith.constant 0 : index
    %16 = vector.load %arg9[%c0_18, %c0_19] : memref<16x64xf32, #tpu.memory_space<vmem>>, vector<16x64xf32>
    %cst = arith.constant dense<0.000000e+00> : vector<64x64xf32>
    %17 = tpu.matmul %15, %16, %cst {dimension_numbers = #tpu.dot_dimension_numbers<[1], [0], [0], [1], [0, 0, 1, 1], [], []>} : vector<64x16xf32>, vector<16x64xf32>, vector<64x64xf32> -> vector<64x64xf32>
    %c0_20 = arith.constant 0 : index
    %c0_21 = arith.constant 0 : index
    %18 = vector.load %arg10[%c0_20, %c0_21] : memref<1x64xf32, #tpu.memory_space<vmem>>, vector<1x64xf32>
    %19 = vector.broadcast %18 : vector<1x64xf32> to vector<64x64xf32>
    %20 = arith.addf %17, %19 : vector<64x64xf32>
    %21 = vector.shape_cast %20 : vector<64x64xf32> to vector<8x8x64xf32>
    %22 = vector.shape_cast %4 : vector<8x32xf32> to vector<8x1x32xf32>
    %23 = vector.shape_cast %5 : vector<8x32xf32> to vector<1x8x32xf32>
    %24 = vector.broadcast %22 : vector<8x1x32xf32> to vector<8x8x32xf32>
    %25 = vector.broadcast %23 : vector<1x8x32xf32> to vector<8x8x32xf32>
    %26 = arith.mulf %24, %25 : vector<8x8x32xf32>
    %cst_22 = arith.constant 0.353553385 : f32
    %27 = vector.broadcast %cst_22 : f32 to vector<8x8x32xf32>
    %28 = arith.mulf %26, %27 : vector<8x8x32xf32>
    %29 = vector.extract_strided_slice %21 {offsets = [0, 0, 0], sizes = [8, 8, 32], strides = [1, 1, 1]} : vector<8x8x64xf32> to vector<8x8x32xf32>
    %cst_23 = arith.constant 1.000000e+00 : f32
    %30 = vector.broadcast %cst_23 : f32 to vector<8x8x32xf32>
    %31 = arith.addf %29, %30 : vector<8x8x32xf32>
    %32 = arith.mulf %28, %31 : vector<8x8x32xf32>
    %33 = vector.extract_strided_slice %21 {offsets = [0, 0, 32], sizes = [8, 8, 32], strides = [1, 1, 1]} : vector<8x8x64xf32> to vector<8x8x32xf32>
    %34 = arith.addf %32, %33 : vector<8x8x32xf32>
    %35 = vector.shape_cast %10 : vector<1x8xf32> to vector<1x8x1xf32>
    %cst_24 = arith.constant 5.000000e-01 : f32
    %36 = vector.broadcast %cst_24 : f32 to vector<1x8x1xf32>
    %37 = arith.cmpf ogt, %35, %36 : vector<1x8x1xf32>
    %cst_25 = arith.constant -1.000000e+30 : f32
    %38 = vector.shape_cast %37 : vector<1x8x1xi1> to vector<1x8x1xi1>
    %39 = vector.broadcast %38 : vector<1x8x1xi1> to vector<8x8x32xi1>
    %40 = vector.broadcast %cst_25 : f32 to vector<8x8x32xf32>
    %41 = arith.select %39, %34, %40 : vector<8x8x32xi1>, vector<8x8x32xf32>
    %cst_26 = arith.constant dense<0xFF800000> : vector<8x32xf32>
    %42 = vector.multi_reduction <maximumf>, %41, %cst_26 [1] : vector<8x8x32xf32> to vector<8x32xf32>
    %43 = vector.shape_cast %42 : vector<8x32xf32> to vector<8x1x32xf32>
    %44 = vector.broadcast %43 : vector<8x1x32xf32> to vector<8x8x32xf32>
    %45 = arith.subf %41, %44 : vector<8x8x32xf32>
    %46 = math.exp %45 : vector<8x8x32xf32>
    %cst_27 = arith.constant dense<0.000000e+00> : vector<8x32xf32>
    %47 = vector.multi_reduction <add>, %46, %cst_27 [1] : vector<8x8x32xf32> to vector<8x32xf32>
    %48 = vector.shape_cast %6 : vector<8x32xf32> to vector<1x8x32xf32>
    %49 = vector.broadcast %48 : vector<1x8x32xf32> to vector<8x8x32xf32>
    %50 = arith.mulf %46, %49 : vector<8x8x32xf32>
    %cst_28 = arith.constant dense<0.000000e+00> : vector<8x32xf32>
    %51 = vector.multi_reduction <add>, %50, %cst_28 [1] : vector<8x8x32xf32> to vector<8x32xf32>
    %52 = arith.divf %51, %47 : vector<8x32xf32>
    %53 = vector.extract_strided_slice %14 {offsets = [0, 64], sizes = [1, 32], strides = [1, 1]} : vector<1x128xf32> to vector<1x32xf32>
    %54 = vector.extract_strided_slice %14 {offsets = [0, 96], sizes = [1, 32], strides = [1, 1]} : vector<1x128xf32> to vector<1x32xf32>
    %cst_29 = arith.constant 1.000000e+00 : f32
    %55 = vector.broadcast %cst_29 : f32 to vector<1x32xf32>
    %56 = arith.addf %54, %55 : vector<1x32xf32>
    %57 = vector.broadcast %56 : vector<1x32xf32> to vector<8x32xf32>
    %58 = arith.mulf %57, %52 : vector<8x32xf32>
    %59 = vector.broadcast %53 : vector<1x32xf32> to vector<8x32xf32>
    %60 = arith.addf %59, %58 : vector<8x32xf32>
    %c0_30 = arith.constant 0 : index
    %c0_31 = arith.constant 0 : index
    %61 = vector.load %arg13[%c0_30, %c0_31] : memref<32x32xf32, #tpu.memory_space<vmem>>, vector<32x32xf32>
    %cst_32 = arith.constant dense<0.000000e+00> : vector<8x32xf32>
    %62 = tpu.matmul %60, %61, %cst_32 {dimension_numbers = #tpu.dot_dimension_numbers<[1], [0], [0], [1], [0, 0, 1, 1], [], []>} : vector<8x32xf32>, vector<32x32xf32>, vector<8x32xf32> -> vector<8x32xf32>
    %c0_33 = arith.constant 0 : index
    %c0_34 = arith.constant 0 : index
    %63 = vector.load %arg14[%c0_33, %c0_34] : memref<1x32xf32, #tpu.memory_space<vmem>>, vector<1x32xf32>
    %64 = vector.broadcast %63 : vector<1x32xf32> to vector<8x32xf32>
    %65 = arith.addf %62, %64 : vector<8x32xf32>
    %66 = vector.broadcast %12 : vector<8x1xf32> to vector<8x32xf32>
    %67 = arith.mulf %65, %66 : vector<8x32xf32>
    %c0_35 = arith.constant 0 : index
    %c0_36 = arith.constant 0 : index
    %c0_37 = arith.constant 0 : index
    %68 = vector.load %arg5[%c0_35, %c0_36, %c0_37] : memref<1x8x32xf32, #tpu.memory_space<vmem>>, vector<1x8x32xf32>
    %69 = vector.shape_cast %68 : vector<1x8x32xf32> to vector<8x32xf32>
    %70 = arith.addf %69, %67 : vector<8x32xf32>
    %c0_38 = arith.constant 0 : index
    %c0_39 = arith.constant 0 : index
    %71 = vector.load %arg23[%c0_38, %c0_39] : memref<4x32xf32, #tpu.memory_space<vmem>>, vector<1x32xf32>
    %c1 = arith.constant 1 : index
    %c0_40 = arith.constant 0 : index
    %72 = vector.load %arg23[%c1, %c0_40] : memref<4x32xf32, #tpu.memory_space<vmem>>, vector<1x32xf32>
    %cst_41 = arith.constant dense<0.000000e+00> : vector<8xf32>
    %73 = vector.multi_reduction <add>, %70, %cst_41 [1] : vector<8x32xf32> to vector<8xf32>
    %74 = vector.shape_cast %73 : vector<8xf32> to vector<8x1xf32>
    %cst_42 = arith.constant 3.200000e+01 : f32
    %75 = vector.broadcast %cst_42 : f32 to vector<8x1xf32>
    %76 = arith.divf %74, %75 : vector<8x1xf32>
    %77 = vector.broadcast %76 : vector<8x1xf32> to vector<8x32xf32>
    %78 = arith.subf %70, %77 : vector<8x32xf32>
    %79 = arith.mulf %78, %78 : vector<8x32xf32>
    %cst_43 = arith.constant dense<0.000000e+00> : vector<8xf32>
    %80 = vector.multi_reduction <add>, %79, %cst_43 [1] : vector<8x32xf32> to vector<8xf32>
    %81 = vector.shape_cast %80 : vector<8xf32> to vector<8x1xf32>
    %cst_44 = arith.constant 3.200000e+01 : f32
    %82 = vector.broadcast %cst_44 : f32 to vector<8x1xf32>
    %83 = arith.divf %81, %82 : vector<8x1xf32>
    %cst_45 = arith.constant 9.99999974E-6 : f32
    %84 = vector.broadcast %cst_45 : f32 to vector<8x1xf32>
    %85 = arith.addf %83, %84 : vector<8x1xf32>
    %86 = math.rsqrt %85 : vector<8x1xf32>
    %87 = vector.broadcast %86 : vector<8x1xf32> to vector<8x32xf32>
    %88 = arith.mulf %78, %87 : vector<8x32xf32>
    %89 = vector.broadcast %71 : vector<1x32xf32> to vector<8x32xf32>
    %90 = arith.mulf %88, %89 : vector<8x32xf32>
    %91 = vector.broadcast %72 : vector<1x32xf32> to vector<8x32xf32>
    %92 = arith.addf %90, %91 : vector<8x32xf32>
    %c0_46 = arith.constant 0 : index
    %c0_47 = arith.constant 0 : index
    %93 = vector.load %arg15[%c0_46, %c0_47] : memref<32x64xf32, #tpu.memory_space<vmem>>, vector<32x64xf32>
    %cst_48 = arith.constant dense<0.000000e+00> : vector<8x64xf32>
    %94 = tpu.matmul %92, %93, %cst_48 {dimension_numbers = #tpu.dot_dimension_numbers<[1], [0], [0], [1], [0, 0, 1, 1], [], []>} : vector<8x32xf32>, vector<32x64xf32>, vector<8x64xf32> -> vector<8x64xf32>
    %c0_49 = arith.constant 0 : index
    %c0_50 = arith.constant 0 : index
    %95 = vector.load %arg16[%c0_49, %c0_50] : memref<1x64xf32, #tpu.memory_space<vmem>>, vector<1x64xf32>
    %96 = vector.broadcast %95 : vector<1x64xf32> to vector<8x64xf32>
    %97 = arith.addf %94, %96 : vector<8x64xf32>
    %cst_51 = arith.constant 0.000000e+00 : f32
    %98 = vector.broadcast %cst_51 : f32 to vector<8x64xf32>
    %99 = arith.maximumf %97, %98 : vector<8x64xf32>
    %c0_52 = arith.constant 0 : index
    %c0_53 = arith.constant 0 : index
    %100 = vector.load %arg17[%c0_52, %c0_53] : memref<64x32xf32, #tpu.memory_space<vmem>>, vector<64x32xf32>
    %cst_54 = arith.constant dense<0.000000e+00> : vector<8x32xf32>
    %101 = tpu.matmul %99, %100, %cst_54 {dimension_numbers = #tpu.dot_dimension_numbers<[1], [0], [0], [1], [0, 0, 1, 1], [], []>} : vector<8x64xf32>, vector<64x32xf32>, vector<8x32xf32> -> vector<8x32xf32>
    %c0_55 = arith.constant 0 : index
    %c0_56 = arith.constant 0 : index
    %102 = vector.load %arg18[%c0_55, %c0_56] : memref<1x32xf32, #tpu.memory_space<vmem>>, vector<1x32xf32>
    %103 = vector.broadcast %102 : vector<1x32xf32> to vector<8x32xf32>
    %104 = arith.addf %101, %103 : vector<8x32xf32>
    %105 = arith.addf %92, %104 : vector<8x32xf32>
    %c2 = arith.constant 2 : index
    %c0_57 = arith.constant 0 : index
    %106 = vector.load %arg23[%c2, %c0_57] : memref<4x32xf32, #tpu.memory_space<vmem>>, vector<1x32xf32>
    %c3 = arith.constant 3 : index
    %c0_58 = arith.constant 0 : index
    %107 = vector.load %arg23[%c3, %c0_58] : memref<4x32xf32, #tpu.memory_space<vmem>>, vector<1x32xf32>
    %cst_59 = arith.constant dense<0.000000e+00> : vector<8xf32>
    %108 = vector.multi_reduction <add>, %105, %cst_59 [1] : vector<8x32xf32> to vector<8xf32>
    %109 = vector.shape_cast %108 : vector<8xf32> to vector<8x1xf32>
    %cst_60 = arith.constant 3.200000e+01 : f32
    %110 = vector.broadcast %cst_60 : f32 to vector<8x1xf32>
    %111 = arith.divf %109, %110 : vector<8x1xf32>
    %112 = vector.broadcast %111 : vector<8x1xf32> to vector<8x32xf32>
    %113 = arith.subf %105, %112 : vector<8x32xf32>
    %114 = arith.mulf %113, %113 : vector<8x32xf32>
    %cst_61 = arith.constant dense<0.000000e+00> : vector<8xf32>
    %115 = vector.multi_reduction <add>, %114, %cst_61 [1] : vector<8x32xf32> to vector<8xf32>
    %116 = vector.shape_cast %115 : vector<8xf32> to vector<8x1xf32>
    %cst_62 = arith.constant 3.200000e+01 : f32
    %117 = vector.broadcast %cst_62 : f32 to vector<8x1xf32>
    %118 = arith.divf %116, %117 : vector<8x1xf32>
    %cst_63 = arith.constant 9.99999974E-6 : f32
    %119 = vector.broadcast %cst_63 : f32 to vector<8x1xf32>
    %120 = arith.addf %118, %119 : vector<8x1xf32>
    %121 = math.rsqrt %120 : vector<8x1xf32>
    %122 = vector.broadcast %121 : vector<8x1xf32> to vector<8x32xf32>
    %123 = arith.mulf %113, %122 : vector<8x32xf32>
    %124 = vector.broadcast %106 : vector<1x32xf32> to vector<8x32xf32>
    %125 = arith.mulf %123, %124 : vector<8x32xf32>
    %126 = vector.broadcast %107 : vector<1x32xf32> to vector<8x32xf32>
    %127 = arith.addf %125, %126 : vector<8x32xf32>
    %c0_64 = arith.constant 0 : index
    %c0_65 = arith.constant 0 : index
    %c0_66 = arith.constant 0 : index
    %128 = vector.load %arg25[%c0_64, %c0_65, %c0_66] : memref<1x8x32xf32, #tpu.memory_space<vmem>>, vector<1x8x32xf32>
    %129 = vector.shape_cast %128 : vector<1x8x32xf32> to vector<8x32xf32>
    %130 = vector.shape_cast %127 : vector<8x32xf32> to vector<1x8x32xf32>
    tpu.vector_store %arg25[%c0_64, %c0_65, %c0_66], %130 {strides = array<i32>} : memref<1x8x32xf32, #tpu.memory_space<vmem>>, vector<1x8x32xf32>,
    %131 = vector.extract_strided_slice %14 {offsets = [0, 0], sizes = [1, 32], strides = [1, 1]} : vector<1x128xf32> to vector<1x32xf32>
    %132 = vector.shape_cast %131 : vector<1x32xf32> to vector<1x1x32xf32>
    %133 = vector.extract_strided_slice %14 {offsets = [0, 32], sizes = [1, 32], strides = [1, 1]} : vector<1x128xf32> to vector<1x32xf32>
    %134 = vector.shape_cast %133 : vector<1x32xf32> to vector<1x1x32xf32>
    %cst_67 = arith.constant 1.000000e+00 : f32
    %135 = vector.broadcast %cst_67 : f32 to vector<1x1x32xf32>
    %136 = arith.addf %134, %135 : vector<1x1x32xf32>
    %137 = vector.broadcast %136 : vector<1x1x32xf32> to vector<8x8x32xf32>
    %138 = arith.mulf %137, %34 : vector<8x8x32xf32>
    %139 = vector.broadcast %132 : vector<1x1x32xf32> to vector<8x8x32xf32>
    %140 = arith.addf %139, %138 : vector<8x8x32xf32>
    %141 = vector.shape_cast %140 : vector<8x8x32xf32> to vector<64x32xf32>
    %c0_68 = arith.constant 0 : index
    %c0_69 = arith.constant 0 : index
    %142 = vector.load %arg11[%c0_68, %c0_69] : memref<32x16xf32, #tpu.memory_space<vmem>>, vector<32x16xf32>
    %cst_70 = arith.constant dense<0.000000e+00> : vector<64x16xf32>
    %143 = tpu.matmul %141, %142, %cst_70 {dimension_numbers = #tpu.dot_dimension_numbers<[1], [0], [0], [1], [0, 0, 1, 1], [], []>} : vector<64x32xf32>, vector<32x16xf32>, vector<64x16xf32> -> vector<64x16xf32>
    %c0_71 = arith.constant 0 : index
    %c0_72 = arith.constant 0 : index
    %144 = vector.load %arg12[%c0_71, %c0_72] : memref<1x16xf32, #tpu.memory_space<vmem>>, vector<1x16xf32>
    %145 = vector.broadcast %144 : vector<1x16xf32> to vector<64x16xf32>
    %146 = arith.addf %143, %145 : vector<64x16xf32>
    %147 = vector.broadcast %12 : vector<8x1xf32> to vector<8x8xf32>
    %148 = vector.broadcast %10 : vector<1x8xf32> to vector<8x8xf32>
    %149 = arith.mulf %147, %148 : vector<8x8xf32>
    %150 = vector.shape_cast %149 : vector<8x8xf32> to vector<8x8x1xf32>
    %151 = vector.shape_cast %146 : vector<64x16xf32> to vector<8x8x16xf32>
    %152 = vector.broadcast %150 : vector<8x8x1xf32> to vector<8x8x16xf32>
    %153 = arith.mulf %151, %152 : vector<8x8x16xf32>
    %154 = arith.addf %8, %153 : vector<8x8x16xf32>
    %c0_73 = arith.constant 0 : index
    %c0_74 = arith.constant 0 : index
    %155 = vector.load %arg24[%c0_73, %c0_74] : memref<4x16xf32, #tpu.memory_space<vmem>>, vector<1x16xf32>
    %c1_75 = arith.constant 1 : index
    %c0_76 = arith.constant 0 : index
    %156 = vector.load %arg24[%c1_75, %c0_76] : memref<4x16xf32, #tpu.memory_space<vmem>>, vector<1x16xf32>
    %cst_77 = arith.constant dense<0.000000e+00> : vector<8x8xf32>
    %157 = vector.multi_reduction <add>, %154, %cst_77 [2] : vector<8x8x16xf32> to vector<8x8xf32>
    %158 = vector.shape_cast %157 : vector<8x8xf32> to vector<8x8x1xf32>
    %cst_78 = arith.constant 1.600000e+01 : f32
    %159 = vector.broadcast %cst_78 : f32 to vector<8x8x1xf32>
    %160 = arith.divf %158, %159 : vector<8x8x1xf32>
    %161 = vector.broadcast %160 : vector<8x8x1xf32> to vector<8x8x16xf32>
    %162 = arith.subf %154, %161 : vector<8x8x16xf32>
    %163 = arith.mulf %162, %162 : vector<8x8x16xf32>
    %cst_79 = arith.constant dense<0.000000e+00> : vector<8x8xf32>
    %164 = vector.multi_reduction <add>, %163, %cst_79 [2] : vector<8x8x16xf32> to vector<8x8xf32>
    %165 = vector.shape_cast %164 : vector<8x8xf32> to vector<8x8x1xf32>
    %cst_80 = arith.constant 1.600000e+01 : f32
    %166 = vector.broadcast %cst_80 : f32 to vector<8x8x1xf32>
    %167 = arith.divf %165, %166 : vector<8x8x1xf32>
    %cst_81 = arith.constant 9.99999974E-6 : f32
    %168 = vector.broadcast %cst_81 : f32 to vector<8x8x1xf32>
    %169 = arith.addf %167, %168 : vector<8x8x1xf32>
    %170 = math.rsqrt %169 : vector<8x8x1xf32>
    %171 = vector.broadcast %170 : vector<8x8x1xf32> to vector<8x8x16xf32>
    %172 = arith.mulf %162, %171 : vector<8x8x16xf32>
    %173 = vector.shape_cast %155 : vector<1x16xf32> to vector<1x1x16xf32>
    %174 = vector.broadcast %173 : vector<1x1x16xf32> to vector<8x8x16xf32>
    %175 = arith.mulf %172, %174 : vector<8x8x16xf32>
    %176 = vector.shape_cast %156 : vector<1x16xf32> to vector<1x1x16xf32>
    %177 = vector.broadcast %176 : vector<1x1x16xf32> to vector<8x8x16xf32>
    %178 = arith.addf %175, %177 : vector<8x8x16xf32>
    %179 = vector.shape_cast %178 : vector<8x8x16xf32> to vector<64x16xf32>
    %c0_82 = arith.constant 0 : index
    %c0_83 = arith.constant 0 : index
    %180 = vector.load %arg19[%c0_82, %c0_83] : memref<16x32xf32, #tpu.memory_space<vmem>>, vector<16x32xf32>
    %cst_84 = arith.constant dense<0.000000e+00> : vector<64x32xf32>
    %181 = tpu.matmul %179, %180, %cst_84 {dimension_numbers = #tpu.dot_dimension_numbers<[1], [0], [0], [1], [0, 0, 1, 1], [], []>} : vector<64x16xf32>, vector<16x32xf32>, vector<64x32xf32> -> vector<64x32xf32>
    %c0_85 = arith.constant 0 : index
    %c0_86 = arith.constant 0 : index
    %182 = vector.load %arg20[%c0_85, %c0_86] : memref<1x32xf32, #tpu.memory_space<vmem>>, vector<1x32xf32>
    %183 = vector.broadcast %182 : vector<1x32xf32> to vector<64x32xf32>
    %184 = arith.addf %181, %183 : vector<64x32xf32>
    %cst_87 = arith.constant 0.000000e+00 : f32
    %185 = vector.broadcast %cst_87 : f32 to vector<64x32xf32>
    %186 = arith.maximumf %184, %185 : vector<64x32xf32>
    %c0_88 = arith.constant 0 : index
    %c0_89 = arith.constant 0 : index
    %187 = vector.load %arg21[%c0_88, %c0_89] : memref<32x16xf32, #tpu.memory_space<vmem>>, vector<32x16xf32>
    %cst_90 = arith.constant dense<0.000000e+00> : vector<64x16xf32>
    %188 = tpu.matmul %186, %187, %cst_90 {dimension_numbers = #tpu.dot_dimension_numbers<[1], [0], [0], [1], [0, 0, 1, 1], [], []>} : vector<64x32xf32>, vector<32x16xf32>, vector<64x16xf32> -> vector<64x16xf32>
    %c0_91 = arith.constant 0 : index
    %c0_92 = arith.constant 0 : index
    %189 = vector.load %arg22[%c0_91, %c0_92] : memref<1x16xf32, #tpu.memory_space<vmem>>, vector<1x16xf32>
    %190 = vector.broadcast %189 : vector<1x16xf32> to vector<64x16xf32>
    %191 = arith.addf %188, %190 : vector<64x16xf32>
    %192 = vector.shape_cast %191 : vector<64x16xf32> to vector<8x8x16xf32>
    %193 = arith.addf %178, %192 : vector<8x8x16xf32>
    %c2_93 = arith.constant 2 : index
    %c0_94 = arith.constant 0 : index
    %194 = vector.load %arg24[%c2_93, %c0_94] : memref<4x16xf32, #tpu.memory_space<vmem>>, vector<1x16xf32>
    %c3_95 = arith.constant 3 : index
    %c0_96 = arith.constant 0 : index
    %195 = vector.load %arg24[%c3_95, %c0_96] : memref<4x16xf32, #tpu.memory_space<vmem>>, vector<1x16xf32>
    %cst_97 = arith.constant dense<0.000000e+00> : vector<8x8xf32>
    %196 = vector.multi_reduction <add>, %193, %cst_97 [2] : vector<8x8x16xf32> to vector<8x8xf32>
    %197 = vector.shape_cast %196 : vector<8x8xf32> to vector<8x8x1xf32>
    %cst_98 = arith.constant 1.600000e+01 : f32
    %198 = vector.broadcast %cst_98 : f32 to vector<8x8x1xf32>
    %199 = arith.divf %197, %198 : vector<8x8x1xf32>
    %200 = vector.broadcast %199 : vector<8x8x1xf32> to vector<8x8x16xf32>
    %201 = arith.subf %193, %200 : vector<8x8x16xf32>
    %202 = arith.mulf %201, %201 : vector<8x8x16xf32>
    %cst_99 = arith.constant dense<0.000000e+00> : vector<8x8xf32>
    %203 = vector.multi_reduction <add>, %202, %cst_99 [2] : vector<8x8x16xf32> to vector<8x8xf32>
    %204 = vector.shape_cast %203 : vector<8x8xf32> to vector<8x8x1xf32>
    %cst_100 = arith.constant 1.600000e+01 : f32
    %205 = vector.broadcast %cst_100 : f32 to vector<8x8x1xf32>
    %206 = arith.divf %204, %205 : vector<8x8x1xf32>
    %cst_101 = arith.constant 9.99999974E-6 : f32
    %207 = vector.broadcast %cst_101 : f32 to vector<8x8x1xf32>
    %208 = arith.addf %206, %207 : vector<8x8x1xf32>
    %209 = math.rsqrt %208 : vector<8x8x1xf32>
    %210 = vector.broadcast %209 : vector<8x8x1xf32> to vector<8x8x16xf32>
    %211 = arith.mulf %201, %210 : vector<8x8x16xf32>
    %212 = vector.shape_cast %194 : vector<1x16xf32> to vector<1x1x16xf32>
    %213 = vector.broadcast %212 : vector<1x1x16xf32> to vector<8x8x16xf32>
    %214 = arith.mulf %211, %213 : vector<8x8x16xf32>
    %215 = vector.shape_cast %195 : vector<1x16xf32> to vector<1x1x16xf32>
    %216 = vector.broadcast %215 : vector<1x1x16xf32> to vector<8x8x16xf32>
    %217 = arith.addf %214, %216 : vector<8x8x16xf32>
    %c0_102 = arith.constant 0 : index
    %c0_103 = arith.constant 0 : index
    %c0_104 = arith.constant 0 : index
    %c0_105 = arith.constant 0 : index
    %218 = vector.load %arg26[%c0_102, %c0_103, %c0_104, %c0_105] : memref<1x8x8x16xf32, #tpu.memory_space<vmem>>, vector<1x8x8x16xf32>
    %219 = vector.shape_cast %218 : vector<1x8x8x16xf32> to vector<8x8x16xf32>
    %220 = vector.shape_cast %217 : vector<8x8x16xf32> to vector<1x8x8x16xf32>
    tpu.vector_store %arg26[%c0_102, %c0_103, %c0_104, %c0_105], %220 {strides = array<i32>} : memref<1x8x8x16xf32, #tpu.memory_space<vmem>>, vector<1x8x8x16xf32>,
    return
  }
  func.func @transform_0(%arg0: i32, %arg1: i32) -> (i32, i32, i32) {
    %c0_i32 = arith.constant 0 : i32
    %c0_i32_0 = arith.constant 0 : i32
    return %arg0, %arg1, %c0_i32 : i32, i32, i32
  }
  func.func @transform_1(%arg0: i32, %arg1: i32) -> (i32, i32, i32) {
    %c0_i32 = arith.constant 0 : i32
    %c0_i32_0 = arith.constant 0 : i32
    %c0_i32_1 = arith.constant 0 : i32
    return %arg0, %c0_i32, %c0_i32_0 : i32, i32, i32
  }
  func.func @transform_2(%arg0: i32, %arg1: i32) -> (i32, i32, i32, i32) {
    %c0_i32 = arith.constant 0 : i32
    %c0_i32_0 = arith.constant 0 : i32
    %c0_i32_1 = arith.constant 0 : i32
    return %arg0, %arg1, %c0_i32, %c0_i32_0 : i32, i32, i32, i32
  }
  func.func @transform_3(%arg0: i32, %arg1: i32) -> (i32, i32, i32) {
    %c0_i32 = arith.constant 0 : i32
    %c0_i32_0 = arith.constant 0 : i32
    return %arg0, %arg1, %c0_i32 : i32, i32, i32
  }
  func.func @transform_4(%arg0: i32, %arg1: i32) -> (i32, i32, i32) {
    %c0_i32 = arith.constant 0 : i32
    %c0_i32_0 = arith.constant 0 : i32
    %c0_i32_1 = arith.constant 0 : i32
    return %arg0, %c0_i32, %c0_i32_0 : i32, i32, i32
  }
  func.func @transform_5(%arg0: i32, %arg1: i32) -> (i32, i32, i32) {
    %c0_i32 = arith.constant 0 : i32
    %c0_i32_0 = arith.constant 0 : i32
    return %arg0, %arg1, %c0_i32 : i32, i32, i32
  }
  func.func @transform_6(%arg0: i32, %arg1: i32) -> (i32, i32, i32) {
    %c0_i32 = arith.constant 0 : i32
    %c0_i32_0 = arith.constant 0 : i32
    %c0_i32_1 = arith.constant 0 : i32
    return %arg0, %c0_i32, %c0_i32_0 : i32, i32, i32
  }
  func.func @transform_7(%arg0: i32, %arg1: i32) -> (i32, i32) {
    %c0_i32 = arith.constant 0 : i32
    %c0_i32_0 = arith.constant 0 : i32
    %c0_i32_1 = arith.constant 0 : i32
    return %c0_i32, %c0_i32_0 : i32, i32
  }
  func.func @transform_8(%arg0: i32, %arg1: i32) -> (i32, i32) {
    %c0_i32 = arith.constant 0 : i32
    %c0_i32_0 = arith.constant 0 : i32
    %c0_i32_1 = arith.constant 0 : i32
    return %c0_i32, %c0_i32_0 : i32, i32
  }
  func.func @transform_9(%arg0: i32, %arg1: i32) -> (i32, i32) {
    %c0_i32 = arith.constant 0 : i32
    %c0_i32_0 = arith.constant 0 : i32
    %c0_i32_1 = arith.constant 0 : i32
    return %c0_i32, %c0_i32_0 : i32, i32
  }
  func.func @transform_10(%arg0: i32, %arg1: i32) -> (i32, i32) {
    %c0_i32 = arith.constant 0 : i32
    %c0_i32_0 = arith.constant 0 : i32
    %c0_i32_1 = arith.constant 0 : i32
    return %c0_i32, %c0_i32_0 : i32, i32
  }
  func.func @transform_11(%arg0: i32, %arg1: i32) -> (i32, i32) {
    %c0_i32 = arith.constant 0 : i32
    %c0_i32_0 = arith.constant 0 : i32
    %c0_i32_1 = arith.constant 0 : i32
    return %c0_i32, %c0_i32_0 : i32, i32
  }
  func.func @transform_12(%arg0: i32, %arg1: i32) -> (i32, i32) {
    %c0_i32 = arith.constant 0 : i32
    %c0_i32_0 = arith.constant 0 : i32
    %c0_i32_1 = arith.constant 0 : i32
    return %c0_i32, %c0_i32_0 : i32, i32
  }
  func.func @transform_13(%arg0: i32, %arg1: i32) -> (i32, i32) {
    %c0_i32 = arith.constant 0 : i32
    %c0_i32_0 = arith.constant 0 : i32
    %c0_i32_1 = arith.constant 0 : i32
    return %c0_i32, %c0_i32_0 : i32, i32
  }
  func.func @transform_14(%arg0: i32, %arg1: i32) -> (i32, i32) {
    %c0_i32 = arith.constant 0 : i32
    %c0_i32_0 = arith.constant 0 : i32
    %c0_i32_1 = arith.constant 0 : i32
    return %c0_i32, %c0_i32_0 : i32, i32
  }
  func.func @transform_15(%arg0: i32, %arg1: i32) -> (i32, i32) {
    %c0_i32 = arith.constant 0 : i32
    %c0_i32_0 = arith.constant 0 : i32
    %c0_i32_1 = arith.constant 0 : i32
    return %c0_i32, %c0_i32_0 : i32, i32
  }
  func.func @transform_16(%arg0: i32, %arg1: i32) -> (i32, i32) {
    %c0_i32 = arith.constant 0 : i32
    %c0_i32_0 = arith.constant 0 : i32
    %c0_i32_1 = arith.constant 0 : i32
    return %c0_i32, %c0_i32_0 : i32, i32
  }
  func.func @transform_17(%arg0: i32, %arg1: i32) -> (i32, i32) {
    %c0_i32 = arith.constant 0 : i32
    %c0_i32_0 = arith.constant 0 : i32
    %c0_i32_1 = arith.constant 0 : i32
    return %c0_i32, %c0_i32_0 : i32, i32
  }
  func.func @transform_18(%arg0: i32, %arg1: i32) -> (i32, i32) {
    %c0_i32 = arith.constant 0 : i32
    %c0_i32_0 = arith.constant 0 : i32
    %c0_i32_1 = arith.constant 0 : i32
    return %c0_i32, %c0_i32_0 : i32, i32
  }
  func.func @transform_19(%arg0: i32, %arg1: i32) -> (i32, i32) {
    %c0_i32 = arith.constant 0 : i32
    %c0_i32_0 = arith.constant 0 : i32
    %c0_i32_1 = arith.constant 0 : i32
    return %c0_i32, %c0_i32_0 : i32, i32
  }
  func.func @transform_20(%arg0: i32, %arg1: i32) -> (i32, i32) {
    %c0_i32 = arith.constant 0 : i32
    %c0_i32_0 = arith.constant 0 : i32
    %c0_i32_1 = arith.constant 0 : i32
    return %c0_i32, %c0_i32_0 : i32, i32
  }
  func.func @transform_21(%arg0: i32, %arg1: i32) -> (i32, i32) {
    %c0_i32 = arith.constant 0 : i32
    %c0_i32_0 = arith.constant 0 : i32
    %c0_i32_1 = arith.constant 0 : i32
    return %c0_i32, %c0_i32_0 : i32, i32
  }
  func.func @transform_22(%arg0: i32, %arg1: i32) -> (i32, i32) {
    %c0_i32 = arith.constant 0 : i32
    %c0_i32_0 = arith.constant 0 : i32
    %c0_i32_1 = arith.constant 0 : i32
    return %c0_i32, %c0_i32_0 : i32, i32
  }
  func.func @transform_23(%arg0: i32, %arg1: i32) -> (i32, i32, i32) {
    %c0_i32 = arith.constant 0 : i32
    %c0_i32_0 = arith.constant 0 : i32
    return %arg0, %arg1, %c0_i32 : i32, i32, i32
  }
  func.func @transform_24(%arg0: i32, %arg1: i32) -> (i32, i32, i32, i32) {
    %c0_i32 = arith.constant 0 : i32
    %c0_i32_0 = arith.constant 0 : i32
    %c0_i32_1 = arith.constant 0 : i32
    return %arg0, %arg1, %c0_i32, %c0_i32_0 : i32, i32, i32, i32
  }
}

module attributes {stable_mosaic.version = 11 : i64} {
  func.func @_attn_fused_kernel(%arg0: i32, %arg1: i32, %arg2: memref<1x8x96xf32, #tpu.memory_space<vmem>>, %arg3: memref<1x8x96xf32, #tpu.memory_space<vmem>>, %arg4: memref<1x8x8x16xf32, #tpu.memory_space<vmem>>, %arg5: memref<1x8x32xf32, #tpu.memory_space<vmem>>, %arg6: memref<1x1x8xf32, #tpu.memory_space<vmem>>, %arg7: memref<1x8x1xf32, #tpu.memory_space<vmem>>, %arg8: memref<1x1x128xf32, #tpu.memory_space<vmem>>, %arg9: memref<16x64xf32, #tpu.memory_space<vmem>>, %arg10: memref<1x64xf32, #tpu.memory_space<vmem>>, %arg11: memref<32x16xf32, #tpu.memory_space<vmem>>, %arg12: memref<1x16xf32, #tpu.memory_space<vmem>>, %arg13: memref<32x32xf32, #tpu.memory_space<vmem>>, %arg14: memref<1x32xf32, #tpu.memory_space<vmem>>, %arg15: memref<32x64xf32, #tpu.memory_space<vmem>>, %arg16: memref<1x64xf32, #tpu.memory_space<vmem>>, %arg17: memref<64x32xf32, #tpu.memory_space<vmem>>, %arg18: memref<1x32xf32, #tpu.memory_space<vmem>>, %arg19: memref<16x32xf32, #tpu.memory_space<vmem>>, %arg20: memref<1x32xf32, #tpu.memory_space<vmem>>, %arg21: memref<32x16xf32, #tpu.memory_space<vmem>>, %arg22: memref<1x16xf32, #tpu.memory_space<vmem>>, %arg23: memref<4x32xf32, #tpu.memory_space<vmem>>, %arg24: memref<4x16xf32, #tpu.memory_space<vmem>>, %arg25: memref<1x8x32xf32, #tpu.memory_space<vmem>>, %arg26: memref<1x8x8x16xf32, #tpu.memory_space<vmem>>) attributes {dimension_semantics = [#tpu.dimension_semantics<parallel>, #tpu.dimension_semantics<parallel>], iteration_bounds = array<i64: 2, 1>, scalar_prefetch = 0 : i64, scratch_operands = 0 : i64, tpu.core_type = #tpu.core_type<tc>, window_params = [{transform_indices = @transform_0, window_bounds = array<i64: 1, 8, 96>}, {transform_indices = @transform_1, window_bounds = array<i64: 1, 8, 96>}, {transform_indices = @transform_2, window_bounds = array<i64: 1, 8, 8, 16>}, {transform_indices = @transform_3, window_bounds = array<i64: 1, 8, 32>}, {transform_indices = @transform_4, window_bounds = array<i64: 1, 1, 8>}, {transform_indices = @transform_5, window_bounds = array<i64: 1, 8, 1>}, {transform_indices = @transform_6, window_bounds = array<i64: 1, 1, 128>}, {pipeline_mode = #tpu.pipeline_mode<synchronous>, transform_indices = @transform_7, window_bounds = array<i64: 16, 64>}, {pipeline_mode = #tpu.pipeline_mode<synchronous>, transform_indices = @transform_8, window_bounds = array<i64: 1, 64>}, {pipeline_mode = #tpu.pipeline_mode<synchronous>, transform_indices = @transform_9, window_bounds = array<i64: 32, 16>}, {pipeline_mode = #tpu.pipeline_mode<synchronous>, transform_indices = @transform_10, window_bounds = array<i64: 1, 16>}, {pipeline_mode = #tpu.pipeline_mode<synchronous>, transform_indices = @transform_11, window_bounds = array<i64: 32, 32>}, {pipeline_mode = #tpu.pipeline_mode<synchronous>, transform_indices = @transform_12, window_bounds = array<i64: 1, 32>}, {pipeline_mode = #tpu.pipeline_mode<synchronous>, transform_indices = @transform_13, window_bounds = array<i64: 32, 64>}, {pipeline_mode = #tpu.pipeline_mode<synchronous>, transform_indices = @transform_14, window_bounds = array<i64: 1, 64>}, {pipeline_mode = #tpu.pipeline_mode<synchronous>, transform_indices = @transform_15, window_bounds = array<i64: 64, 32>}, {pipeline_mode = #tpu.pipeline_mode<synchronous>, transform_indices = @transform_16, window_bounds = array<i64: 1, 32>}, {pipeline_mode = #tpu.pipeline_mode<synchronous>, transform_indices = @transform_17, window_bounds = array<i64: 16, 32>}, {pipeline_mode = #tpu.pipeline_mode<synchronous>, transform_indices = @transform_18, window_bounds = array<i64: 1, 32>}, {pipeline_mode = #tpu.pipeline_mode<synchronous>, transform_indices = @transform_19, window_bounds = array<i64: 32, 16>}, {pipeline_mode = #tpu.pipeline_mode<synchronous>, transform_indices = @transform_20, window_bounds = array<i64: 1, 16>}, {pipeline_mode = #tpu.pipeline_mode<synchronous>, transform_indices = @transform_21, window_bounds = array<i64: 4, 32>}, {pipeline_mode = #tpu.pipeline_mode<synchronous>, transform_indices = @transform_22, window_bounds = array<i64: 4, 16>}, {transform_indices = @transform_23, window_bounds = array<i64: 1, 8, 32>}, {transform_indices = @transform_24, window_bounds = array<i64: 1, 8, 8, 16>}]} {
    %c0 = arith.constant 0 : index
    %c0_0 = arith.constant 0 : index
    %c0_1 = arith.constant 0 : index
    %0 = vector.load %arg2[%c0, %c0_0, %c0_1] : memref<1x8x96xf32, #tpu.memory_space<vmem>>, vector<1x8x96xf32>
    %1 = vector.shape_cast %0 : vector<1x8x96xf32> to vector<8x96xf32>
    %c0_2 = arith.constant 0 : index
    %c0_3 = arith.constant 0 : index
    %c0_4 = arith.constant 0 : index
    %2 = vector.load %arg3[%c0_2, %c0_3, %c0_4] : memref<1x8x96xf32, #tpu.memory_space<vmem>>, vector<1x8x96xf32>
    %3 = vector.shape_cast %2 : vector<1x8x96xf32> to vector<8x96xf32>
    %4 = vector.extract_strided_slice %1 {offsets = [0, 0], sizes = [8, 32], strides = [1, 1]} : vector<8x96xf32> to vector<8x32xf32>
    %5 = vector.extract_strided_slice %3 {offsets = [0, 32], sizes = [8, 32], strides = [1, 1]} : vector<8x96xf32> to vector<8x32xf32>
    %6 = vector.extract_strided_slice %3 {offsets = [0, 64], sizes = [8, 32], strides = [1, 1]} : vector<8x96xf32> to vector<8x32xf32>
    %c0_5 = arith.constant 0 : index
    %c0_6 = arith.constant 0 : index
    %c0_7 = arith.constant 0 : index
    %c0_8 = arith.constant 0 : index
    %7 = vector.load %arg4[%c0_5, %c0_6, %c0_7, %c0_8] : memref<1x8x8x16xf32, #tpu.memory_space<vmem>>, vector<1x8x8x16xf32>
    %8 = vector.shape_cast %7 : vector<1x8x8x16xf32> to vector<8x8x16xf32>
    %c0_9 = arith.constant 0 : index
    %c0_10 = arith.constant 0 : index
    %c0_11 = arith.constant 0 : index
    %9 = vector.load %arg6[%c0_9, %c0_10, %c0_11] : memref<1x1x8xf32, #tpu.memory_space<vmem>>, vector<1x1x8xf32>
    %10 = vector.shape_cast %9 : vector<1x1x8xf32> to vector<1x8xf32>
    %c0_12 = arith.constant 0 : index
    %c0_13 = arith.constant 0 : index
    %c0_14 = arith.constant 0 : index
    %11 = vector.load %arg7[%c0_12, %c0_13, %c0_14] : memref<1x8x1xf32, #tpu.memory_space<vmem>>, vector<1x8x1xf32>
    %12 = vector.shape_cast %11 : vector<1x8x1xf32> to vector<8x1xf32>
    %c0_15 = arith.constant 0 : index
    %c0_16 = arith.constant 0 : index
    %c0_17 = arith.constant 0 : index
    %13 = vector.load %arg8[%c0_15, %c0_16, %c0_17] : memref<1x1x128xf32, #tpu.memory_space<vmem>>, vector<1x1x128xf32>
    %14 = vector.shape_cast %13 : vector<1x1x128xf32> to vector<1x128xf32>
    %15 = vector.shape_cast %8 : vector<8x8x16xf32> to vector<64x16xf32>
    %c0_18 = arith.constant 0 : index
    %c0_19 = arith.constant 0 : index
    %16 = vector.load %arg9[%c0_18, %c0_19] : memref<16x64xf32, #tpu.memory_space<vmem>>, vector<16x64xf32>
    %cst = arith.constant dense<0.000000e+00> : vector<64x64xf32>
    %17 = tpu.matmul %15, %16, %cst {dimension_numbers = #tpu.dot_dimension_numbers<[1], [0], [0], [1], [0, 0, 1, 1], [], []>} : vector<64x16xf32>, vector<16x64xf32>, vector<64x64xf32> -> vector<64x64xf32>
    %c0_20 = arith.constant 0 : index
    %c0_21 = arith.constant 0 : index
    %18 = vector.load %arg10[%c0_20, %c0_21] : memref<1x64xf32, #tpu.memory_space<vmem>>, vector<1x64xf32>
    %19 = vector.broadcast %18 : vector<1x64xf32> to vector<64x64xf32>
    %20 = arith.addf %17, %19 : vector<64x64xf32>
    %21 = vector.shape_cast %20 : vector<64x64xf32> to vector<8x8x64xf32>
    %22 = vector.shape_cast %4 : vector<8x32xf32> to vector<8x1x32xf32>
    %23 = vector.shape_cast %5 : vector<8x32xf32> to vector<1x8x32xf32>
    %24 = vector.broadcast %22 : vector<8x1x32xf32> to vector<8x8x32xf32>
    %25 = vector.broadcast %23 : vector<1x8x32xf32> to vector<8x8x32xf32>
    %26 = arith.mulf %24, %25 : vector<8x8x32xf32>
    %cst_22 = arith.constant 0.353553385 : f32
    %27 = vector.broadcast %cst_22 : f32 to vector<8x8x32xf32>
    %28 = arith.mulf %26, %27 : vector<8x8x32xf32>
    %29 = vector.extract_strided_slice %21 {offsets = [0, 0, 0], sizes = [8, 8, 32], strides = [1, 1, 1]} : vector<8x8x64xf32> to vector<8x8x32xf32>
    %cst_23 = arith.constant 1.000000e+00 : f32
    %30 = vector.broadcast %cst_23 : f32 to vector<8x8x32xf32>
    %31 = arith.addf %29, %30 : vector<8x8x32xf32>
    %32 = arith.mulf %28, %31 : vector<8x8x32xf32>
    %33 = vector.extract_strided_slice %21 {offsets = [0, 0, 32], sizes = [8, 8, 32], strides = [1, 1, 1]} : vector<8x8x64xf32> to vector<8x8x32xf32>
    %34 = arith.addf %32, %33 : vector<8x8x32xf32>
    %35 = vector.shape_cast %10 : vector<1x8xf32> to vector<1x8x1xf32>
    %cst_24 = arith.constant 5.000000e-01 : f32
    %36 = vector.broadcast %cst_24 : f32 to vector<1x8x1xf32>
    %37 = arith.cmpf ogt, %35, %36 : vector<1x8x1xf32>
    %cst_25 = arith.constant -1.000000e+30 : f32
    %38 = vector.shape_cast %37 : vector<1x8x1xi1> to vector<1x8x1xi1>
    %39 = vector.broadcast %38 : vector<1x8x1xi1> to vector<8x8x32xi1>
    %40 = vector.broadcast %cst_25 : f32 to vector<8x8x32xf32>
    %41 = arith.select %39, %34, %40 : vector<8x8x32xi1>, vector<8x8x32xf32>
    %cst_26 = arith.constant dense<0xFF800000> : vector<8x32xf32>
    %42 = vector.multi_reduction <maximumf>, %41, %cst_26 [1] : vector<8x8x32xf32> to vector<8x32xf32>
    %43 = vector.shape_cast %42 : vector<8x32xf32> to vector<8x1x32xf32>
    %44 = vector.broadcast %43 : vector<8x1x32xf32> to vector<8x8x32xf32>
    %45 = arith.subf %41, %44 : vector<8x8x32xf32>
    %46 = math.exp %45 : vector<8x8x32xf32>
    %cst_27 = arith.constant dense<0.000000e+00> : vector<8x32xf32>
    %47 = vector.multi_reduction <add>, %46, %cst_27 [1] : vector<8x8x32xf32> to vector<8x32xf32>
    %48 = vector.shape_cast %6 : vector<8x32xf32> to vector<1x8x32xf32>
    %49 = vector.broadcast %48 : vector<1x8x32xf32> to vector<8x8x32xf32>
    %50 = arith.mulf %46, %49 : vector<8x8x32xf32>
    %cst_28 = arith.constant dense<0.000000e+00> : vector<8x32xf32>
    %51 = vector.multi_reduction <add>, %50, %cst_28 [1] : vector<8x8x32xf32> to vector<8x32xf32>
    %52 = arith.divf %51, %47 : vector<8x32xf32>
    %53 = vector.extract_strided_slice %14 {offsets = [0, 64], sizes = [1, 32], strides = [1, 1]} : vector<1x128xf32> to vector<1x32xf32>
    %54 = vector.extract_strided_slice %14 {offsets = [0, 96], sizes = [1, 32], strides = [1, 1]} : vector<1x128xf32> to vector<1x32xf32>
    %cst_29 = arith.constant 1.000000e+00 : f32
    %55 = vector.broadcast %cst_29 : f32 to vector<1x32xf32>
    %56 = arith.addf %54, %55 : vector<1x32xf32>
    %57 = vector.broadcast %56 : vector<1x32xf32> to vector<8x32xf32>
    %58 = arith.mulf %57, %52 : vector<8x32xf32>
    %59 = vector.broadcast %53 : vector<1x32xf32> to vector<8x32xf32>
    %60 = arith.addf %59, %58 : vector<8x32xf32>
    %c0_30 = arith.constant 0 : index
    %c0_31 = arith.constant 0 : index
    %61 = vector.load %arg13[%c0_30, %c0_31] : memref<32x32xf32, #tpu.memory_space<vmem>>, vector<32x32xf32>
    %cst_32 = arith.constant dense<0.000000e+00> : vector<8x32xf32>
    %62 = tpu.matmul %60, %61, %cst_32 {dimension_numbers = #tpu.dot_dimension_numbers<[1], [0], [0], [1], [0, 0, 1, 1], [], []>} : vector<8x32xf32>, vector<32x32xf32>, vector<8x32xf32> -> vector<8x32xf32>
    %c0_33 = arith.constant 0 : index
    %c0_34 = arith.constant 0 : index
    %63 = vector.load %arg14[%c0_33, %c0_34] : memref<1x32xf32, #tpu.memory_space<vmem>>, vector<1x32xf32>
    %64 = vector.broadcast %63 : vector<1x32xf32> to vector<8x32xf32>
    %65 = arith.addf %62, %64 : vector<8x32xf32>
    %66 = vector.broadcast %12 : vector<8x1xf32> to vector<8x32xf32>
    %67 = arith.mulf %65, %66 : vector<8x32xf32>
    %c0_35 = arith.constant 0 : index
    %c0_36 = arith.constant 0 : index
    %c0_37 = arith.constant 0 : index
    %68 = vector.load %arg5[%c0_35, %c0_36, %c0_37] : memref<1x8x32xf32, #tpu.memory_space<vmem>>, vector<1x8x32xf32>
    %69 = vector.shape_cast %68 : vector<1x8x32xf32> to vector<8x32xf32>
    %70 = arith.addf %69, %67 : vector<8x32xf32>
    %c0_38 = arith.constant 0 : index
    %c0_39 = arith.constant 0 : index
    %71 = vector.load %arg23[%c0_38, %c0_39] : memref<4x32xf32, #tpu.memory_space<vmem>>, vector<1x32xf32>
    %c1 = arith.constant 1 : index
    %c0_40 = arith.constant 0 : index
    %72 = vector.load %arg23[%c1, %c0_40] : memref<4x32xf32, #tpu.memory_space<vmem>>, vector<1x32xf32>
    %cst_41 = arith.constant dense<0.000000e+00> : vector<8xf32>
    %73 = vector.multi_reduction <add>, %70, %cst_41 [1] : vector<8x32xf32> to vector<8xf32>
    %74 = vector.shape_cast %73 : vector<8xf32> to vector<8x1xf32>
    %cst_42 = arith.constant 3.200000e+01 : f32
    %75 = vector.broadcast %cst_42 : f32 to vector<8x1xf32>
    %76 = arith.divf %74, %75 : vector<8x1xf32>
    %77 = vector.broadcast %76 : vector<8x1xf32> to vector<8x32xf32>
    %78 = arith.subf %70, %77 : vector<8x32xf32>
    %79 = arith.mulf %78, %78 : vector<8x32xf32>
    %cst_43 = arith.constant dense<0.000000e+00> : vector<8xf32>
    %80 = vector.multi_reduction <add>, %79, %cst_43 [1] : vector<8x32xf32> to vector<8xf32>
    %81 = vector.shape_cast %80 : vector<8xf32> to vector<8x1xf32>
    %cst_44 = arith.constant 3.200000e+01 : f32
    %82 = vector.broadcast %cst_44 : f32 to vector<8x1xf32>
    %83 = arith.divf %81, %82 : vector<8x1xf32>
    %cst_45 = arith.constant 9.99999974E-6 : f32
    %84 = vector.broadcast %cst_45 : f32 to vector<8x1xf32>
    %85 = arith.addf %83, %84 : vector<8x1xf32>
    %86 = math.rsqrt %85 : vector<8x1xf32>
    %87 = vector.broadcast %86 : vector<8x1xf32> to vector<8x32xf32>
    %88 = arith.mulf %78, %87 : vector<8x32xf32>
    %89 = vector.broadcast %71 : vector<1x32xf32> to vector<8x32xf32>
    %90 = arith.mulf %88, %89 : vector<8x32xf32>
    %91 = vector.broadcast %72 : vector<1x32xf32> to vector<8x32xf32>
    %92 = arith.addf %90, %91 : vector<8x32xf32>
    %c0_46 = arith.constant 0 : index
    %c0_47 = arith.constant 0 : index
    %93 = vector.load %arg15[%c0_46, %c0_47] : memref<32x64xf32, #tpu.memory_space<vmem>>, vector<32x64xf32>
    %cst_48 = arith.constant dense<0.000000e+00> : vector<8x64xf32>
    %94 = tpu.matmul %92, %93, %cst_48 {dimension_numbers = #tpu.dot_dimension_numbers<[1], [0], [0], [1], [0, 0, 1, 1], [], []>} : vector<8x32xf32>, vector<32x64xf32>, vector<8x64xf32> -> vector<8x64xf32>
    %c0_49 = arith.constant 0 : index
    %c0_50 = arith.constant 0 : index
    %95 = vector.load %arg16[%c0_49, %c0_50] : memref<1x64xf32, #tpu.memory_space<vmem>>, vector<1x64xf32>
    %96 = vector.broadcast %95 : vector<1x64xf32> to vector<8x64xf32>
    %97 = arith.addf %94, %96 : vector<8x64xf32>
    %cst_51 = arith.constant 0.000000e+00 : f32
    %98 = vector.broadcast %cst_51 : f32 to vector<8x64xf32>
    %99 = arith.maximumf %97, %98 : vector<8x64xf32>
    %c0_52 = arith.constant 0 : index
    %c0_53 = arith.constant 0 : index
    %100 = vector.load %arg17[%c0_52, %c0_53] : memref<64x32xf32, #tpu.memory_space<vmem>>, vector<64x32xf32>
    %cst_54 = arith.constant dense<0.000000e+00> : vector<8x32xf32>
    %101 = tpu.matmul %99, %100, %cst_54 {dimension_numbers = #tpu.dot_dimension_numbers<[1], [0], [0], [1], [0, 0, 1, 1], [], []>} : vector<8x64xf32>, vector<64x32xf32>, vector<8x32xf32> -> vector<8x32xf32>
    %c0_55 = arith.constant 0 : index
    %c0_56 = arith.constant 0 : index
    %102 = vector.load %arg18[%c0_55, %c0_56] : memref<1x32xf32, #tpu.memory_space<vmem>>, vector<1x32xf32>
    %103 = vector.broadcast %102 : vector<1x32xf32> to vector<8x32xf32>
    %104 = arith.addf %101, %103 : vector<8x32xf32>
    %105 = arith.addf %92, %104 : vector<8x32xf32>
    %c2 = arith.constant 2 : index
    %c0_57 = arith.constant 0 : index
    %106 = vector.load %arg23[%c2, %c0_57] : memref<4x32xf32, #tpu.memory_space<vmem>>, vector<1x32xf32>
    %c3 = arith.constant 3 : index
    %c0_58 = arith.constant 0 : index
    %107 = vector.load %arg23[%c3, %c0_58] : memref<4x32xf32, #tpu.memory_space<vmem>>, vector<1x32xf32>
    %cst_59 = arith.constant dense<0.000000e+00> : vector<8xf32>
    %108 = vector.multi_reduction <add>, %105, %cst_59 [1] : vector<8x32xf32> to vector<8xf32>
    %109 = vector.shape_cast %108 : vector<8xf32> to vector<8x1xf32>
    %cst_60 = arith.constant 3.200000e+01 : f32
    %110 = vector.broadcast %cst_60 : f32 to vector<8x1xf32>
    %111 = arith.divf %109, %110 : vector<8x1xf32>
    %112 = vector.broadcast %111 : vector<8x1xf32> to vector<8x32xf32>
    %113 = arith.subf %105, %112 : vector<8x32xf32>
    %114 = arith.mulf %113, %113 : vector<8x32xf32>
    %cst_61 = arith.constant dense<0.000000e+00> : vector<8xf32>
    %115 = vector.multi_reduction <add>, %114, %cst_61 [1] : vector<8x32xf32> to vector<8xf32>
    %116 = vector.shape_cast %115 : vector<8xf32> to vector<8x1xf32>
    %cst_62 = arith.constant 3.200000e+01 : f32
    %117 = vector.broadcast %cst_62 : f32 to vector<8x1xf32>
    %118 = arith.divf %116, %117 : vector<8x1xf32>
    %cst_63 = arith.constant 9.99999974E-6 : f32
    %119 = vector.broadcast %cst_63 : f32 to vector<8x1xf32>
    %120 = arith.addf %118, %119 : vector<8x1xf32>
    %121 = math.rsqrt %120 : vector<8x1xf32>
    %122 = vector.broadcast %121 : vector<8x1xf32> to vector<8x32xf32>
    %123 = arith.mulf %113, %122 : vector<8x32xf32>
    %124 = vector.broadcast %106 : vector<1x32xf32> to vector<8x32xf32>
    %125 = arith.mulf %123, %124 : vector<8x32xf32>
    %126 = vector.broadcast %107 : vector<1x32xf32> to vector<8x32xf32>
    %127 = arith.addf %125, %126 : vector<8x32xf32>
    %c0_64 = arith.constant 0 : index
    %c0_65 = arith.constant 0 : index
    %c0_66 = arith.constant 0 : index
    %128 = vector.load %arg25[%c0_64, %c0_65, %c0_66] : memref<1x8x32xf32, #tpu.memory_space<vmem>>, vector<1x8x32xf32>
    %129 = vector.shape_cast %128 : vector<1x8x32xf32> to vector<8x32xf32>
    %130 = vector.shape_cast %127 : vector<8x32xf32> to vector<1x8x32xf32>
    tpu.vector_store %arg25[%c0_64, %c0_65, %c0_66], %130 {strides = array<i32>} : memref<1x8x32xf32, #tpu.memory_space<vmem>>, vector<1x8x32xf32>,
    %131 = vector.extract_strided_slice %14 {offsets = [0, 0], sizes = [1, 32], strides = [1, 1]} : vector<1x128xf32> to vector<1x32xf32>
    %132 = vector.shape_cast %131 : vector<1x32xf32> to vector<1x1x32xf32>
    %133 = vector.extract_strided_slice %14 {offsets = [0, 32], sizes = [1, 32], strides = [1, 1]} : vector<1x128xf32> to vector<1x32xf32>
    %134 = vector.shape_cast %133 : vector<1x32xf32> to vector<1x1x32xf32>
    %cst_67 = arith.constant 1.000000e+00 : f32
    %135 = vector.broadcast %cst_67 : f32 to vector<1x1x32xf32>
    %136 = arith.addf %134, %135 : vector<1x1x32xf32>
    %137 = vector.broadcast %136 : vector<1x1x32xf32> to vector<8x8x32xf32>
    %138 = arith.mulf %137, %34 : vector<8x8x32xf32>
    %139 = vector.broadcast %132 : vector<1x1x32xf32> to vector<8x8x32xf32>
    %140 = arith.addf %139, %138 : vector<8x8x32xf32>
    %141 = vector.shape_cast %140 : vector<8x8x32xf32> to vector<64x32xf32>
    %c0_68 = arith.constant 0 : index
    %c0_69 = arith.constant 0 : index
    %142 = vector.load %arg11[%c0_68, %c0_69] : memref<32x16xf32, #tpu.memory_space<vmem>>, vector<32x16xf32>
    %cst_70 = arith.constant dense<0.000000e+00> : vector<64x16xf32>
    %143 = tpu.matmul %141, %142, %cst_70 {dimension_numbers = #tpu.dot_dimension_numbers<[1], [0], [0], [1], [0, 0, 1, 1], [], []>} : vector<64x32xf32>, vector<32x16xf32>, vector<64x16xf32> -> vector<64x16xf32>
    %c0_71 = arith.constant 0 : index
    %c0_72 = arith.constant 0 : index
    %144 = vector.load %arg12[%c0_71, %c0_72] : memref<1x16xf32, #tpu.memory_space<vmem>>, vector<1x16xf32>
    %145 = vector.broadcast %144 : vector<1x16xf32> to vector<64x16xf32>
    %146 = arith.addf %143, %145 : vector<64x16xf32>
    %147 = vector.broadcast %12 : vector<8x1xf32> to vector<8x8xf32>
    %148 = vector.broadcast %10 : vector<1x8xf32> to vector<8x8xf32>
    %149 = arith.mulf %147, %148 : vector<8x8xf32>
    %150 = vector.shape_cast %149 : vector<8x8xf32> to vector<8x8x1xf32>
    %151 = vector.shape_cast %146 : vector<64x16xf32> to vector<8x8x16xf32>
    %152 = vector.broadcast %150 : vector<8x8x1xf32> to vector<8x8x16xf32>
    %153 = arith.mulf %151, %152 : vector<8x8x16xf32>
    %154 = arith.addf %8, %153 : vector<8x8x16xf32>
    %c0_73 = arith.constant 0 : index
    %c0_74 = arith.constant 0 : index
    %155 = vector.load %arg24[%c0_73, %c0_74] : memref<4x16xf32, #tpu.memory_space<vmem>>, vector<1x16xf32>
    %c1_75 = arith.constant 1 : index
    %c0_76 = arith.constant 0 : index
    %156 = vector.load %arg24[%c1_75, %c0_76] : memref<4x16xf32, #tpu.memory_space<vmem>>, vector<1x16xf32>
    %cst_77 = arith.constant dense<0.000000e+00> : vector<8x8xf32>
    %157 = vector.multi_reduction <add>, %154, %cst_77 [2] : vector<8x8x16xf32> to vector<8x8xf32>
    %158 = vector.shape_cast %157 : vector<8x8xf32> to vector<8x8x1xf32>
    %cst_78 = arith.constant 1.600000e+01 : f32
    %159 = vector.broadcast %cst_78 : f32 to vector<8x8x1xf32>
    %160 = arith.divf %158, %159 : vector<8x8x1xf32>
    %161 = vector.broadcast %160 : vector<8x8x1xf32> to vector<8x8x16xf32>
    %162 = arith.subf %154, %161 : vector<8x8x16xf32>
    %163 = arith.mulf %162, %162 : vector<8x8x16xf32>
    %cst_79 = arith.constant dense<0.000000e+00> : vector<8x8xf32>
    %164 = vector.multi_reduction <add>, %163, %cst_79 [2] : vector<8x8x16xf32> to vector<8x8xf32>
    %165 = vector.shape_cast %164 : vector<8x8xf32> to vector<8x8x1xf32>
    %cst_80 = arith.constant 1.600000e+01 : f32
    %166 = vector.broadcast %cst_80 : f32 to vector<8x8x1xf32>
    %167 = arith.divf %165, %166 : vector<8x8x1xf32>
    %cst_81 = arith.constant 9.99999974E-6 : f32
    %168 = vector.broadcast %cst_81 : f32 to vector<8x8x1xf32>
    %169 = arith.addf %167, %168 : vector<8x8x1xf32>
    %170 = math.rsqrt %169 : vector<8x8x1xf32>
    %171 = vector.broadcast %170 : vector<8x8x1xf32> to vector<8x8x16xf32>
    %172 = arith.mulf %162, %171 : vector<8x8x16xf32>
    %173 = vector.shape_cast %155 : vector<1x16xf32> to vector<1x1x16xf32>
    %174 = vector.broadcast %173 : vector<1x1x16xf32> to vector<8x8x16xf32>
    %175 = arith.mulf %172, %174 : vector<8x8x16xf32>
    %176 = vector.shape_cast %156 : vector<1x16xf32> to vector<1x1x16xf32>
    %177 = vector.broadcast %176 : vector<1x1x16xf32> to vector<8x8x16xf32>
    %178 = arith.addf %175, %177 : vector<8x8x16xf32>
    %179 = vector.shape_cast %178 : vector<8x8x16xf32> to vector<64x16xf32>
    %c0_82 = arith.constant 0 : index
    %c0_83 = arith.constant 0 : index
    %180 = vector.load %arg19[%c0_82, %c0_83] : memref<16x32xf32, #tpu.memory_space<vmem>>, vector<16x32xf32>
    %cst_84 = arith.constant dense<0.000000e+00> : vector<64x32xf32>
    %181 = tpu.matmul %179, %180, %cst_84 {dimension_numbers = #tpu.dot_dimension_numbers<[1], [0], [0], [1], [0, 0, 1, 1], [], []>} : vector<64x16xf32>, vector<16x32xf32>, vector<64x32xf32> -> vector<64x32xf32>
    %c0_85 = arith.constant 0 : index
    %c0_86 = arith.constant 0 : index
    %182 = vector.load %arg20[%c0_85, %c0_86] : memref<1x32xf32, #tpu.memory_space<vmem>>, vector<1x32xf32>
    %183 = vector.broadcast %182 : vector<1x32xf32> to vector<64x32xf32>
    %184 = arith.addf %181, %183 : vector<64x32xf32>
    %cst_87 = arith.constant 0.000000e+00 : f32
    %185 = vector.broadcast %cst_87 : f32 to vector<64x32xf32>
    %186 = arith.maximumf %184, %185 : vector<64x32xf32>
    %c0_88 = arith.constant 0 : index
    %c0_89 = arith.constant 0 : index
    %187 = vector.load %arg21[%c0_88, %c0_89] : memref<32x16xf32, #tpu.memory_space<vmem>>, vector<32x16xf32>
    %cst_90 = arith.constant dense<0.000000e+00> : vector<64x16xf32>
    %188 = tpu.matmul %186, %187, %cst_90 {dimension_numbers = #tpu.dot_dimension_numbers<[1], [0], [0], [1], [0, 0, 1, 1], [], []>} : vector<64x32xf32>, vector<32x16xf32>, vector<64x16xf32> -> vector<64x16xf32>
    %c0_91 = arith.constant 0 : index
    %c0_92 = arith.constant 0 : index
    %189 = vector.load %arg22[%c0_91, %c0_92] : memref<1x16xf32, #tpu.memory_space<vmem>>, vector<1x16xf32>
    %190 = vector.broadcast %189 : vector<1x16xf32> to vector<64x16xf32>
    %191 = arith.addf %188, %190 : vector<64x16xf32>
    %192 = vector.shape_cast %191 : vector<64x16xf32> to vector<8x8x16xf32>
    %193 = arith.addf %178, %192 : vector<8x8x16xf32>
    %c2_93 = arith.constant 2 : index
    %c0_94 = arith.constant 0 : index
    %194 = vector.load %arg24[%c2_93, %c0_94] : memref<4x16xf32, #tpu.memory_space<vmem>>, vector<1x16xf32>
    %c3_95 = arith.constant 3 : index
    %c0_96 = arith.constant 0 : index
    %195 = vector.load %arg24[%c3_95, %c0_96] : memref<4x16xf32, #tpu.memory_space<vmem>>, vector<1x16xf32>
    %cst_97 = arith.constant dense<0.000000e+00> : vector<8x8xf32>
    %196 = vector.multi_reduction <add>, %193, %cst_97 [2] : vector<8x8x16xf32> to vector<8x8xf32>
    %197 = vector.shape_cast %196 : vector<8x8xf32> to vector<8x8x1xf32>
    %cst_98 = arith.constant 1.600000e+01 : f32
    %198 = vector.broadcast %cst_98 : f32 to vector<8x8x1xf32>
    %199 = arith.divf %197, %198 : vector<8x8x1xf32>
    %200 = vector.broadcast %199 : vector<8x8x1xf32> to vector<8x8x16xf32>
    %201 = arith.subf %193, %200 : vector<8x8x16xf32>
    %202 = arith.mulf %201, %201 : vector<8x8x16xf32>
    %cst_99 = arith.constant dense<0.000000e+00> : vector<8x8xf32>
    %203 = vector.multi_reduction <add>, %202, %cst_99 [2] : vector<8x8x16xf32> to vector<8x8xf32>
    %204 = vector.shape_cast %203 : vector<8x8xf32> to vector<8x8x1xf32>
    %cst_100 = arith.constant 1.600000e+01 : f32
    %205 = vector.broadcast %cst_100 : f32 to vector<8x8x1xf32>
    %206 = arith.divf %204, %205 : vector<8x8x1xf32>
    %cst_101 = arith.constant 9.99999974E-6 : f32
    %207 = vector.broadcast %cst_101 : f32 to vector<8x8x1xf32>
    %208 = arith.addf %206, %207 : vector<8x8x1xf32>
    %209 = math.rsqrt %208 : vector<8x8x1xf32>
    %210 = vector.broadcast %209 : vector<8x8x1xf32> to vector<8x8x16xf32>
    %211 = arith.mulf %201, %210 : vector<8x8x16xf32>
    %212 = vector.shape_cast %194 : vector<1x16xf32> to vector<1x1x16xf32>
    %213 = vector.broadcast %212 : vector<1x1x16xf32> to vector<8x8x16xf32>
    %214 = arith.mulf %211, %213 : vector<8x8x16xf32>
    %215 = vector.shape_cast %195 : vector<1x16xf32> to vector<1x1x16xf32>
    %216 = vector.broadcast %215 : vector<1x1x16xf32> to vector<8x8x16xf32>
    %217 = arith.addf %214, %216 : vector<8x8x16xf32>
    %c0_102 = arith.constant 0 : index
    %c0_103 = arith.constant 0 : index
    %c0_104 = arith.constant 0 : index
    %c0_105 = arith.constant 0 : index
    %218 = vector.load %arg26[%c0_102, %c0_103, %c0_104, %c0_105] : memref<1x8x8x16xf32, #tpu.memory_space<vmem>>, vector<1x8x8x16xf32>
    %219 = vector.shape_cast %218 : vector<1x8x8x16xf32> to vector<8x8x16xf32>
    %220 = vector.shape_cast %217 : vector<8x8x16xf32> to vector<1x8x8x16xf32>
    tpu.vector_store %arg26[%c0_102, %c0_103, %c0_104, %c0_105], %220 {strides = array<i32>} : memref<1x8x8x16xf32, #tpu.memory_space<vmem>>, vector<1x8x8x16xf32>,
    return
  }
  func.func @transform_0(%arg0: i32, %arg1: i32) -> (i32, i32, i32) {
    %c0_i32 = arith.constant 0 : i32
    %c0_i32_0 = arith.constant 0 : i32
    return %arg0, %arg1, %c0_i32 : i32, i32, i32
  }
  func.func @transform_1(%arg0: i32, %arg1: i32) -> (i32, i32, i32) {
    %c0_i32 = arith.constant 0 : i32
    %c0_i32_0 = arith.constant 0 : i32
    %c0_i32_1 = arith.constant 0 : i32
    return %arg0, %c0_i32, %c0_i32_0 : i32, i32, i32
  }
  func.func @transform_2(%arg0: i32, %arg1: i32) -> (i32, i32, i32, i32) {
    %c0_i32 = arith.constant 0 : i32
    %c0_i32_0 = arith.constant 0 : i32
    %c0_i32_1 = arith.constant 0 : i32
    return %arg0, %arg1, %c0_i32, %c0_i32_0 : i32, i32, i32, i32
  }
  func.func @transform_3(%arg0: i32, %arg1: i32) -> (i32, i32, i32) {
    %c0_i32 = arith.constant 0 : i32
    %c0_i32_0 = arith.constant 0 : i32
    return %arg0, %arg1, %c0_i32 : i32, i32, i32
  }
  func.func @transform_4(%arg0: i32, %arg1: i32) -> (i32, i32, i32) {
    %c0_i32 = arith.constant 0 : i32
    %c0_i32_0 = arith.constant 0 : i32
    %c0_i32_1 = arith.constant 0 : i32
    return %arg0, %c0_i32, %c0_i32_0 : i32, i32, i32
  }
  func.func @transform_5(%arg0: i32, %arg1: i32) -> (i32, i32, i32) {
    %c0_i32 = arith.constant 0 : i32
    %c0_i32_0 = arith.constant 0 : i32
    return %arg0, %arg1, %c0_i32 : i32, i32, i32
  }
  func.func @transform_6(%arg0: i32, %arg1: i32) -> (i32, i32, i32) {
    %c0_i32 = arith.constant 0 : i32
    %c0_i32_0 = arith.constant 0 : i32
    %c0_i32_1 = arith.constant 0 : i32
    return %arg0, %c0_i32, %c0_i32_0 : i32, i32, i32
  }
  func.func @transform_7(%arg0: i32, %arg1: i32) -> (i32, i32) {
    %c0_i32 = arith.constant 0 : i32
    %c0_i32_0 = arith.constant 0 : i32
    %c0_i32_1 = arith.constant 0 : i32
    return %c0_i32, %c0_i32_0 : i32, i32
  }
  func.func @transform_8(%arg0: i32, %arg1: i32) -> (i32, i32) {
    %c0_i32 = arith.constant 0 : i32
    %c0_i32_0 = arith.constant 0 : i32
    %c0_i32_1 = arith.constant 0 : i32
    return %c0_i32, %c0_i32_0 : i32, i32
  }
  func.func @transform_9(%arg0: i32, %arg1: i32) -> (i32, i32) {
    %c0_i32 = arith.constant 0 : i32
    %c0_i32_0 = arith.constant 0 : i32
    %c0_i32_1 = arith.constant 0 : i32
    return %c0_i32, %c0_i32_0 : i32, i32
  }
  func.func @transform_10(%arg0: i32, %arg1: i32) -> (i32, i32) {
    %c0_i32 = arith.constant 0 : i32
    %c0_i32_0 = arith.constant 0 : i32
    %c0_i32_1 = arith.constant 0 : i32
    return %c0_i32, %c0_i32_0 : i32, i32
  }
  func.func @transform_11(%arg0: i32, %arg1: i32) -> (i32, i32) {
    %c0_i32 = arith.constant 0 : i32
    %c0_i32_0 = arith.constant 0 : i32
    %c0_i32_1 = arith.constant 0 : i32
    return %c0_i32, %c0_i32_0 : i32, i32
  }
  func.func @transform_12(%arg0: i32, %arg1: i32) -> (i32, i32) {
    %c0_i32 = arith.constant 0 : i32
    %c0_i32_0 = arith.constant 0 : i32
    %c0_i32_1 = arith.constant 0 : i32
    return %c0_i32, %c0_i32_0 : i32, i32
  }
  func.func @transform_13(%arg0: i32, %arg1: i32) -> (i32, i32) {
    %c0_i32 = arith.constant 0 : i32
    %c0_i32_0 = arith.constant 0 : i32
    %c0_i32_1 = arith.constant 0 : i32
    return %c0_i32, %c0_i32_0 : i32, i32
  }
  func.func @transform_14(%arg0: i32, %arg1: i32) -> (i32, i32) {
    %c0_i32 = arith.constant 0 : i32
    %c0_i32_0 = arith.constant 0 : i32
    %c0_i32_1 = arith.constant 0 : i32
    return %c0_i32, %c0_i32_0 : i32, i32
  }
  func.func @transform_15(%arg0: i32, %arg1: i32) -> (i32, i32) {
    %c0_i32 = arith.constant 0 : i32
    %c0_i32_0 = arith.constant 0 : i32
    %c0_i32_1 = arith.constant 0 : i32
    return %c0_i32, %c0_i32_0 : i32, i32
  }
  func.func @transform_16(%arg0: i32, %arg1: i32) -> (i32, i32) {
    %c0_i32 = arith.constant 0 : i32
    %c0_i32_0 = arith.constant 0 : i32
    %c0_i32_1 = arith.constant 0 : i32
    return %c0_i32, %c0_i32_0 : i32, i32
  }
  func.func @transform_17(%arg0: i32, %arg1: i32) -> (i32, i32) {
    %c0_i32 = arith.constant 0 : i32
    %c0_i32_0 = arith.constant 0 : i32
    %c0_i32_1 = arith.constant 0 : i32
    return %c0_i32, %c0_i32_0 : i32, i32
  }
  func.func @transform_18(%arg0: i32, %arg1: i32) -> (i32, i32) {
    %c0_i32 = arith.constant 0 : i32
    %c0_i32_0 = arith.constant 0 : i32
    %c0_i32_1 = arith.constant 0 : i32
    return %c0_i32, %c0_i32_0 : i32, i32
  }
  func.func @transform_19(%arg0: i32, %arg1: i32) -> (i32, i32) {
    %c0_i32 = arith.constant 0 : i32
    %c0_i32_0 = arith.constant 0 : i32
    %c0_i32_1 = arith.constant 0 : i32
    return %c0_i32, %c0_i32_0 : i32, i32
  }
  func.func @transform_20(%arg0: i32, %arg1: i32) -> (i32, i32) {
    %c0_i32 = arith.constant 0 : i32
    %c0_i32_0 = arith.constant 0 : i32
    %c0_i32_1 = arith.constant 0 : i32
    return %c0_i32, %c0_i32_0 : i32, i32
  }
  func.func @transform_21(%arg0: i32, %arg1: i32) -> (i32, i32) {
    %c0_i32 = arith.constant 0 : i32
    %c0_i32_0 = arith.constant 0 : i32
    %c0_i32_1 = arith.constant 0 : i32
    return %c0_i32, %c0_i32_0 : i32, i32
  }
  func.func @transform_22(%arg0: i32, %arg1: i32) -> (i32, i32) {
    %c0_i32 = arith.constant 0 : i32
    %c0_i32_0 = arith.constant 0 : i32
    %c0_i32_1 = arith.constant 0 : i32
    return %c0_i32, %c0_i32_0 : i32, i32
  }
  func.func @transform_23(%arg0: i32, %arg1: i32) -> (i32, i32, i32) {
    %c0_i32 = arith.constant 0 : i32
    %c0_i32_0 = arith.constant 0 : i32
    return %arg0, %arg1, %c0_i32 : i32, i32, i32
  }
  func.func @transform_24(%arg0: i32, %arg1: i32) -> (i32, i32, i32, i32) {
    %c0_i32 = arith.constant 0 : i32
    %c0_i32_0 = arith.constant 0 : i32
    %c0_i32_1 = arith.constant 0 : i32
    return %arg0, %arg1, %c0_i32, %c0_i32_0 : i32, i32, i32, i32
  }
}

module attributes {stable_mosaic.version = 11 : i64} {
  func.func @_mlp2_kernel(%arg0: i32, %arg1: memref<8x32xf32, #tpu.memory_space<vmem>>, %arg2: memref<32x32xf32, #tpu.memory_space<vmem>>, %arg3: memref<1x32xf32, #tpu.memory_space<vmem>>, %arg4: memref<32x8xf32, #tpu.memory_space<vmem>>, %arg5: memref<1x8xf32, #tpu.memory_space<vmem>>, %arg6: memref<8x8xf32, #tpu.memory_space<vmem>>) attributes {dimension_semantics = [#tpu.dimension_semantics<parallel>], iteration_bounds = array<i64: 2>, scalar_prefetch = 0 : i64, scratch_operands = 0 : i64, tpu.core_type = #tpu.core_type<tc>, window_params = [{transform_indices = @transform_0, window_bounds = array<i64: 8, 32>}, {pipeline_mode = #tpu.pipeline_mode<synchronous>, transform_indices = @transform_1, window_bounds = array<i64: 32, 32>}, {pipeline_mode = #tpu.pipeline_mode<synchronous>, transform_indices = @transform_2, window_bounds = array<i64: 1, 32>}, {pipeline_mode = #tpu.pipeline_mode<synchronous>, transform_indices = @transform_3, window_bounds = array<i64: 32, 8>}, {pipeline_mode = #tpu.pipeline_mode<synchronous>, transform_indices = @transform_4, window_bounds = array<i64: 1, 8>}, {transform_indices = @transform_5, window_bounds = array<i64: 8, 8>}]} {
    %c0 = arith.constant 0 : index
    %c0_0 = arith.constant 0 : index
    %0 = vector.load %arg1[%c0, %c0_0] : memref<8x32xf32, #tpu.memory_space<vmem>>, vector<8x32xf32>
    %c0_1 = arith.constant 0 : index
    %c0_2 = arith.constant 0 : index
    %1 = vector.load %arg2[%c0_1, %c0_2] : memref<32x32xf32, #tpu.memory_space<vmem>>, vector<32x32xf32>
    %cst = arith.constant dense<0.000000e+00> : vector<8x32xf32>
    %2 = tpu.matmul %0, %1, %cst {dimension_numbers = #tpu.dot_dimension_numbers<[1], [0], [0], [1], [0, 0, 1, 1], [], []>} : vector<8x32xf32>, vector<32x32xf32>, vector<8x32xf32> -> vector<8x32xf32>
    %c0_3 = arith.constant 0 : index
    %c0_4 = arith.constant 0 : index
    %3 = vector.load %arg3[%c0_3, %c0_4] : memref<1x32xf32, #tpu.memory_space<vmem>>, vector<1x32xf32>
    %4 = vector.broadcast %3 : vector<1x32xf32> to vector<8x32xf32>
    %5 = arith.addf %2, %4 : vector<8x32xf32>
    %cst_5 = arith.constant 0.000000e+00 : f32
    %6 = vector.broadcast %cst_5 : f32 to vector<8x32xf32>
    %7 = arith.maximumf %5, %6 : vector<8x32xf32>
    %c0_6 = arith.constant 0 : index
    %c0_7 = arith.constant 0 : index
    %8 = vector.load %arg4[%c0_6, %c0_7] : memref<32x8xf32, #tpu.memory_space<vmem>>, vector<32x8xf32>
    %cst_8 = arith.constant dense<0.000000e+00> : vector<8x8xf32>
    %9 = tpu.matmul %7, %8, %cst_8 {dimension_numbers = #tpu.dot_dimension_numbers<[1], [0], [0], [1], [0, 0, 1, 1], [], []>} : vector<8x32xf32>, vector<32x8xf32>, vector<8x8xf32> -> vector<8x8xf32>
    %c0_9 = arith.constant 0 : index
    %c0_10 = arith.constant 0 : index
    %10 = vector.load %arg5[%c0_9, %c0_10] : memref<1x8xf32, #tpu.memory_space<vmem>>, vector<1x8xf32>
    %11 = vector.broadcast %10 : vector<1x8xf32> to vector<8x8xf32>
    %12 = arith.addf %9, %11 : vector<8x8xf32>
    %c0_11 = arith.constant 0 : index
    %c0_12 = arith.constant 0 : index
    %13 = vector.load %arg6[%c0_11, %c0_12] : memref<8x8xf32, #tpu.memory_space<vmem>>, vector<8x8xf32>
    tpu.vector_store %arg6[%c0_11, %c0_12], %12 {strides = array<i32>} : memref<8x8xf32, #tpu.memory_space<vmem>>, vector<8x8xf32>,
    return
  }
  func.func @transform_0(%arg0: i32) -> (i32, i32) {
    %c0_i32 = arith.constant 0 : i32
    %c0_i32_0 = arith.constant 0 : i32
    return %arg0, %c0_i32 : i32, i32
  }
  func.func @transform_1(%arg0: i32) -> (i32, i32) {
    %c0_i32 = arith.constant 0 : i32
    %c0_i32_0 = arith.constant 0 : i32
    %c0_i32_1 = arith.constant 0 : i32
    return %c0_i32, %c0_i32_0 : i32, i32
  }
  func.func @transform_2(%arg0: i32) -> (i32, i32) {
    %c0_i32 = arith.constant 0 : i32
    %c0_i32_0 = arith.constant 0 : i32
    %c0_i32_1 = arith.constant 0 : i32
    return %c0_i32, %c0_i32_0 : i32, i32
  }
  func.func @transform_3(%arg0: i32) -> (i32, i32) {
    %c0_i32 = arith.constant 0 : i32
    %c0_i32_0 = arith.constant 0 : i32
    %c0_i32_1 = arith.constant 0 : i32
    return %c0_i32, %c0_i32_0 : i32, i32
  }
  func.func @transform_4(%arg0: i32) -> (i32, i32) {
    %c0_i32 = arith.constant 0 : i32
    %c0_i32_0 = arith.constant 0 : i32
    %c0_i32_1 = arith.constant 0 : i32
    return %c0_i32, %c0_i32_0 : i32, i32
  }
  func.func @transform_5(%arg0: i32) -> (i32, i32) {
    %c0_i32 = arith.constant 0 : i32
    %c0_i32_0 = arith.constant 0 : i32
    return %arg0, %c0_i32 : i32, i32
  }
}

</mosaic_0001>

<llo_original>
// kernel: div.8
$region0: #{div.8}
  #allocation0 [shape = 's32[1]{0}', space=sflag, size = 0x4, scoped, tag = 'scoped memory for div.8']
  %s0 = inlined_call_operand.vmem [shape: f32[2,32], index: 0, kind: input, shape index: {}]
  %s1 = inlined_call_operand.vmem [shape: f32[2,32], index: 1, kind: input, shape index: {}]
  %s2 = inlined_call_operand.vmem [shape: f32[2,32], index: 2, kind: output, shape index: {}]
  %v3 = vld [vmem:[%s0] sm:$0x3]
  %v4 = vld [vmem:[%s1] sm:$0x3]
  %5 = xla_tuple %v3, %v4
  %6 = xla_tuple %5
  %v7 = vrcp.pop %v4
  %v8 = vmul.f32 %v3, %v7
  %9 = xla_tuple %v8
  %10 = vst [vmem:[%s2] sm:$0x3] %v8

// kernel: div.9
$region0: #{div.9}
  #allocation0 [shape = 's32[1]{0}', space=sflag, size = 0x4, scoped, tag = 'scoped memory for div.9']
  %s0 = inlined_call_operand.vmem [shape: f32[2,32], index: 0, kind: input, shape index: {}]
  %s1 = inlined_call_operand.vmem [shape: f32[2,32], index: 1, kind: input, shape index: {}]
  %s2 = inlined_call_operand.vmem [shape: bf16[2,32], index: 2, kind: output, shape index: {}]
  %v3 = vld [vmem:[%s0] sm:$0x3]
  %v4 = vld [vmem:[%s1] sm:$0x3]
  %5 = xla_tuple %v3, %v4
  %6 = xla_tuple %5
  %v7 = vrcp.pop %v4
  %v8 = vmul.f32 %v3, %v7
  %9 = xla_tuple %v8
  %v10 = vpack.c.bf16 0.0, %v8
  %11 = vst [vmem:[%s2] sm:$0x1] %v10

// kernel: div.10
$region0: #{div.10}
  #allocation0 [shape = 's32[1]{0}', space=sflag, size = 0x4, scoped, tag = 'scoped memory for div.10']
  %s0 = inlined_call_operand.vmem [shape: f32[2,16], index: 0, kind: input, shape index: {}]
  %s1 = inlined_call_operand.vmem [shape: f32[2,16], index: 1, kind: input, shape index: {}]
  %s2 = inlined_call_operand.vmem [shape: f32[2,16], index: 2, kind: output, shape index: {}]
  %v3 = vld [vmem:[%s0] sm:$0x3]
  %v4 = vld [vmem:[%s1] sm:$0x3]
  %5 = xla_tuple %v3, %v4
  %6 = xla_tuple %5
  %v7 = vrcp.pop %v4
  %v8 = vmul.f32 %v3, %v7
  %9 = xla_tuple %v8
  %10 = vst [vmem:[%s2] sm:$0x3] %v8

// kernel: div.11
$region0: #{div.11}
  #allocation0 [shape = 's32[1]{0}', space=sflag, size = 0x4, scoped, tag = 'scoped memory for div.11']
  %s0 = inlined_call_operand.vmem [shape: f32[2,16], index: 0, kind: input, shape index: {}]
  %s1 = inlined_call_operand.vmem [shape: f32[2,16], index: 1, kind: input, shape index: {}]
  %s2 = inlined_call_operand.vmem [shape: bf16[2,16], index: 2, kind: output, shape index: {}]
  %v3 = vld [vmem:[%s0] sm:$0x3]
  %v4 = vld [vmem:[%s1] sm:$0x3]
  %5 = xla_tuple %v3, %v4
  %6 = xla_tuple %5
  %v7 = vrcp.pop %v4
  %v8 = vmul.f32 %v3, %v7
  %9 = xla_tuple %v8
  %v10 = vpack.c.bf16 0.0, %v8
  %11 = vst [vmem:[%s2] sm:$0x1] %v10

// kernel: _forward_dense.8
$region0: #{_forward_dense.8}
  #allocation0 [shape = 'u32[]', space=smem, size = 0x4, offset = 0x4, fixed_abs, tag = 'smem constant byte address 0x4 - core index']
  #allocation1 [shape = 'u32[144,128]{1,0:T(1,128)}', space=vmem, size = 0x12000, scoped, tag = 'internal scratch']
  %s0 = inlined_call_operand.vmem [shape: f32[16,8], index: 0, kind: input, shape index: {}]
  %s1 = inlined_call_operand.vmem [shape: f32[16,1], index: 1, kind: input, shape index: {}]
  %s2 = inlined_call_operand.vmem [shape: f32[8,32], index: 2, kind: input, shape index: {}]
  %s3 = inlined_call_operand.vmem [shape: f32[1,32], index: 3, kind: input, shape index: {}]
  %s4 = inlined_call_operand.vmem [shape: f32[32,32], index: 4, kind: input, shape index: {}]
  %s5 = inlined_call_operand.vmem [shape: f32[1,32], index: 5, kind: input, shape index: {}]
  %s6 = inlined_call_operand.vmem [shape: f32[16,32], index: 6, kind: output, shape index: {}]
  %s7 = sld [smem:[#allocation0]]
  $region57: #{_forward_dense.8} parent=0
    _
  %s9 = ssub.s32 1, %s7
  %s10 = scalar_select 0, %s9, %s7
  loop: start=0, step=1, limit=4
  $region2: #{_forward_dense.8} parent=0 // loop_pre_header
    _
  $region3: #{_forward_dense.8} parent=0 // loop_header
    %s12 = sphi 0, %s16
    %p13 = scmp.ge.s32.totalorder %s12, 4
    %s22 = sphi 0, %s24
    %s25 = sphi 0, %s22
    %s26 = sphi 0, %s25
    %s42 = sphi 0, %s26
    %s48 = sphi 0, %s50
    %s51 = sphi 0, %s48
    %s52 = sphi 0, %s51
    %s68 = sphi 0, %s52
    %s72 = sphi 0, %s72
    %s74 = sphi 0, %s72
    %s75 = sphi 0, %s74
    %s89 = sphi 0, %s75
    %s93 = sphi 0, %s93
    %s95 = sphi 0, %s93
    %s96 = sphi 0, %s95
    %s110 = sphi 0, %s96
    %s114 = sphi 0, %s114
    %s116 = sphi 0, %s114
    %s117 = sphi 0, %s116
    %s131 = sphi 0, %s117
    %s135 = sphi 0, %s135
    %s137 = sphi 0, %s135
    %s138 = sphi 0, %s137
    %s152 = sphi 0, %s138
    %s158 = sphi 0, %s160
    %s161 = sphi 0, %s158
    %s162 = sphi 0, %s161
    %s178 = sphi 0, %s162
  $region4: #{_forward_dense.8} parent=0 // loop_header_branch
    %15 = sbr.rel (%p13) target = $region8
  $region5: #{_forward_dense.8} parent=0 // loop_body
    %s17 = ssub.s32 %s12, 1
    %s18 = ssub.s32 %s12, 2
    %s19 = sadd.s32 %s12, 1
    %s20 = ssub.s32 %s12, %s19
    %p21 = scmp.eq.s32.totalorder %s20, 0
    %s23 = sadd.s32 %s22, 1
    %s24 = scalar_select %p21, %s22, %s23
    %p27 = pneg %p21
    %p28 = scmp.eq.s32.totalorder %s12, 1
    %p29 = por %p27, %p28
    %p30 = scmp.ne.s32.totalorder %s22, %s25
    %p31 = scmp.eq.s32.totalorder %s12, 0
    %p32 = por %p30, %p31
    %p33 = scmp.ne.s32.totalorder %s22, %s25
    %p34 = scmp.eq.s32.totalorder %s17, 1
    %p35 = por %p33, %p34
    %p36 = scmp.ne.s32.totalorder %s25, %s26
    %p37 = scmp.eq.s32.totalorder %s17, 0
    %p38 = por %p36, %p37
    %p39 = scmp.ne.s32.totalorder %s25, %s26
    %p40 = scmp.eq.s32.totalorder %s18, 1
    %p41 = por %p39, %p40
    %p43 = scmp.ne.s32.totalorder %s26, %s42
    %p44 = scmp.eq.s32.totalorder %s18, 0
    %p45 = por %p43, %p44
    %s46 = ssub.s32 %s12, %s19
    %p47 = scmp.eq.s32.totalorder %s46, 0
    %s49 = sadd.s32 %s48, 1
    %s50 = scalar_select %p47, %s48, %s49
    %p53 = pneg %p47
    %p54 = scmp.eq.s32.totalorder %s12, 1
    %p55 = por %p53, %p54
    %p56 = scmp.ne.s32.totalorder %s48, %s51
    %p57 = scmp.eq.s32.totalorder %s12, 0
    %p58 = por %p56, %p57
    %p59 = scmp.ne.s32.totalorder %s48, %s51
    %p60 = scmp.eq.s32.totalorder %s17, 1
    %p61 = por %p59, %p60
    %p62 = scmp.ne.s32.totalorder %s51, %s52
    %p63 = scmp.eq.s32.totalorder %s17, 0
    %p64 = por %p62, %p63
    %p65 = scmp.ne.s32.totalorder %s51, %s52
    %p66 = scmp.eq.s32.totalorder %s18, 1
    %p67 = por %p65, %p66
    %p69 = scmp.ne.s32.totalorder %s52, %s68
    %p70 = scmp.eq.s32.totalorder %s18, 0
    %p71 = por %p69, %p70
    %s73 = sadd.s32 %s72, 1
    %p76 = scmp.eq.s32.totalorder %s12, 1
    %p77 = scmp.ne.s32.totalorder %s72, %s74
    %p78 = scmp.eq.s32.totalorder %s12, 0
    %p79 = por %p77, %p78
    %p80 = scmp.ne.s32.totalorder %s72, %s74
    %p81 = scmp.eq.s32.totalorder %s17, 1
    %p82 = por %p80, %p81
    %p83 = scmp.ne.s32.totalorder %s74, %s75
    %p84 = scmp.eq.s32.totalorder %s17, 0
    %p85 = por %p83, %p84
    %p86 = scmp.ne.s32.totalorder %s74, %s75
    %p87 = scmp.eq.s32.totalorder %s18, 1
    %p88 = por %p86, %p87
    %p90 = scmp.ne.s32.totalorder %s75, %s89
    %p91 = scmp.eq.s32.totalorder %s18, 0
    %p92 = por %p90, %p91
    %s94 = sadd.s32 %s93, 1
    %p97 = scmp.eq.s32.totalorder %s12, 1
    %p98 = scmp.ne.s32.totalorder %s93, %s95
    %p99 = scmp.eq.s32.totalorder %s12, 0
    %p100 = por %p98, %p99
    %p101 = scmp.ne.s32.totalorder %s93, %s95
    %p102 = scmp.eq.s32.totalorder %s17, 1
    %p103 = por %p101, %p102
    %p104 = scmp.ne.s32.totalorder %s95, %s96
    %p105 = scmp.eq.s32.totalorder %s17, 0
    %p106 = por %p104, %p105
    %p107 = scmp.ne.s32.totalorder %s95, %s96
    %p108 = scmp.eq.s32.totalorder %s18, 1
    %p109 = por %p107, %p108
    %p111 = scmp.ne.s32.totalorder %s96, %s110
    %p112 = scmp.eq.s32.totalorder %s18, 0
    %p113 = por %p111, %p112
    %s115 = sadd.s32 %s114, 1
    %p118 = scmp.eq.s32.totalorder %s12, 1
    %p119 = scmp.ne.s32.totalorder %s114, %s116
    %p120 = scmp.eq.s32.totalorder %s12, 0
    %p121 = por %p119, %p120
    %p122 = scmp.ne.s32.totalorder %s114, %s116
    %p123 = scmp.eq.s32.totalorder %s17, 1
    %p124 = por %p122, %p123
    %p125 = scmp.ne.s32.totalorder %s116, %s117
    %p126 = scmp.eq.s32.totalorder %s17, 0
    %p127 = por %p125, %p126
    %p128 = scmp.ne.s32.totalorder %s116, %s117
    %p129 = scmp.eq.s32.totalorder %s18, 1
    %p130 = por %p128, %p129
    %p132 = scmp.ne.s32.totalorder %s117, %s131
    %p133 = scmp.eq.s32.totalorder %s18, 0
    %p134 = por %p132, %p133
    %s136 = sadd.s32 %s135, 1
    %p139 = scmp.eq.s32.totalorder %s12, 1
    %p140 = scmp.ne.s32.totalorder %s135, %s137
    %p141 = scmp.eq.s32.totalorder %s12, 0
    %p142 = por %p140, %p141
    %p143 = scmp.ne.s32.totalorder %s135, %s137
    %p144 = scmp.eq.s32.totalorder %s17, 1
    %p145 = por %p143, %p144
    %p146 = scmp.ne.s32.totalorder %s137, %s138
    %p147 = scmp.eq.s32.totalorder %s17, 0
    %p148 = por %p146, %p147
    %p149 = scmp.ne.s32.totalorder %s137, %s138
    %p150 = scmp.eq.s32.totalorder %s18, 1
    %p151 = por %p149, %p150
    %p153 = scmp.ne.s32.totalorder %s138, %s152
    %p154 = scmp.eq.s32.totalorder %s18, 0
    %p155 = por %p153, %p154
    %s156 = ssub.s32 %s12, %s19
    %p157 = scmp.eq.s32.totalorder %s156, 0
    %s159 = sadd.s32 %s158, 1
    %s160 = scalar_select %p157, %s158, %s159
    %p163 = pneg %p157
    %p164 = scmp.eq.s32.totalorder %s12, 1
    %p165 = por %p163, %p164
    %p166 = scmp.ne.s32.totalorder %s158, %s161
    %p167 = scmp.eq.s32.totalorder %s12, 0
    %p168 = por %p166, %p167
    %p169 = scmp.ne.s32.totalorder %s158, %s161
    %p170 = scmp.eq.s32.totalorder %s17, 1
    %p171 = por %p169, %p170
    %p172 = scmp.ne.s32.totalorder %s161, %s162
    %p173 = scmp.eq.s32.totalorder %s17, 0
    %p174 = por %p172, %p173
    %p175 = scmp.ne.s32.totalorder %s161, %s162
    %p176 = scmp.eq.s32.totalorder %s18, 1
    %p177 = por %p175, %p176
    %p179 = scmp.ne.s32.totalorder %s162, %s178
    %p180 = scmp.eq.s32.totalorder %s18, 0
    %p181 = por %p179, %p180
    %p182 = scmp.le.s32.totalorder 1, %s12
    %p183 = scmp.lt.s32.totalorder %s12, 3
    %p184 = pnand %p182, %p183
    %p185 = pneg %p184
    // Predicated region
    $region9: #{_forward_dense.8} parent=5 // pred_check
      _
    $region10: #{_forward_dense.8} parent=5 // pred_check_branch
      %187 = sbr.rel (%p184) target = $region12
    $region11: #{_forward_dense.8} parent=5 // pred_region
      %s188 = ssub.s32 %s12, 1
      // Predicated region
      $region13: #{_forward_dense.8} parent=11 // pred_check
        %p189 = pneg %p85
      $region14: #{_forward_dense.8} parent=11 // pred_check_branch
        %191 = sbr.rel (%p189) target = $region16
      $region15: #{_forward_dense.8} parent=11 // pred_region
        _
      $region16: #{_forward_dense.8} parent=11 // pred_fallthru
        _
      // Predicated region
      $region17: #{_forward_dense.8} parent=11 // pred_check
        %p192 = pneg %p106
      $region18: #{_forward_dense.8} parent=11 // pred_check_branch
        %194 = sbr.rel (%p192) target = $region20
      $region19: #{_forward_dense.8} parent=11 // pred_region
        _
      $region20: #{_forward_dense.8} parent=11 // pred_fallthru
        _
      // Predicated region
      $region21: #{_forward_dense.8} parent=11 // pred_check
        %p195 = pneg %p127
      $region22: #{_forward_dense.8} parent=11 // pred_check_branch
        %197 = sbr.rel (%p195) target = $region24
      $region23: #{_forward_dense.8} parent=11 // pred_region
        _
      $region24: #{_forward_dense.8} parent=11 // pred_fallthru
        _
      // Predicated region
      $region25: #{_forward_dense.8} parent=11 // pred_check
        %p198 = pneg %p148
      $region26: #{_forward_dense.8} parent=11 // pred_check_branch
        %200 = sbr.rel (%p198) target = $region28
      $region27: #{_forward_dense.8} parent=11 // pred_region
        _
      $region28: #{_forward_dense.8} parent=11 // pred_fallthru
        _
    $region12: #{_forward_dense.8} parent=5 // pred_fallthru
      _
    %p201 = scmp.lt.s32.totalorder %s12, 2
    // Predicated region
    $region29: #{_forward_dense.8} parent=5 // pred_check
      %p202 = pneg %p201
    $region30: #{_forward_dense.8} parent=5 // pred_check_branch
      %204 = sbr.rel (%p202) target = $region32
    $region31: #{_forward_dense.8} parent=5 // pred_region
      // Predicated region
      $region33: #{_forward_dense.8} parent=31 // pred_check
        %p205 = pneg %p32
      $region34: #{_forward_dense.8} parent=31 // pred_check_branch
        %207 = sbr.rel (%p205) target = $region36
      $region35: #{_forward_dense.8} parent=31 // pred_region
        %p208 = scmp.lt.s32.totalorder %s12, 1
        %s209 = scalar_select %p208, %s12, 1
        %s210 = smul.addr %s209, 8
        %s211 = scalar_lea.vmem %s0, %s210
      $region36: #{_forward_dense.8} parent=31 // pred_fallthru
        _
      // Predicated region
      $region37: #{_forward_dense.8} parent=31 // pred_check
        %p212 = pneg %p58
      $region38: #{_forward_dense.8} parent=31 // pred_check_branch
        %214 = sbr.rel (%p212) target = $region40
      $region39: #{_forward_dense.8} parent=31 // pred_region
        %p215 = scmp.lt.s32.totalorder %s12, 1
        %s216 = scalar_select %p215, %s12, 1
        %s217 = smul.addr %s216, 8
        %s218 = scalar_lea.vmem %s1, %s217
      $region40: #{_forward_dense.8} parent=31 // pred_fallthru
        _
    $region32: #{_forward_dense.8} parent=5 // pred_fallthru
      _
    %p219 = scmp.le.s32.totalorder 1, %s12
    %p220 = scmp.lt.s32.totalorder %s12, 3
    %p221 = pnand %p219, %p220
    %p222 = pneg %p221
    // Predicated region
    $region41: #{_forward_dense.8} parent=5 // pred_check
      _
    $region42: #{_forward_dense.8} parent=5 // pred_check_branch
      %224 = sbr.rel (%p221) target = $region44
    $region43: #{_forward_dense.8} parent=5 // pred_region
      %s225 = ssub.s32 %s12, 1
      %p226 = scmp.lt.s32.totalorder %s17, 1
      %s227 = scalar_select %p226, %s17, 1
      %s228 = smul.addr %s227, 8
      %s229 = scalar_lea.vmem %s0, %s228
      %p230 = pneg %p38
      %p231 = pneg %p35
      %p232 = scmp.lt.s32.totalorder %s17, 1
      %s233 = scalar_select %p232, %s17, 1
      %s234 = smul.addr %s233, 8
      %s235 = scalar_lea.vmem %s1, %s234
      %p236 = pneg %p64
      %p237 = pneg %p61
      %p238 = pneg %p85
      %p239 = pneg %p82
      %p240 = pneg %p106
      %p241 = pneg %p103
      %p242 = pneg %p127
      %p243 = pneg %p124
      %p244 = pneg %p148
      %p245 = pneg %p145
      %p246 = pneg %p174
      %p247 = pneg %p171
      %p248 = scmp.lt.s32.totalorder %s17, 1
      %s249 = scalar_select %p248, %s17, 1
      %s250 = smul.addr %s249, 8
      %s251 = scalar_lea.vmem %s6, %s250
      %p252 = scmp.lt.s32.totalorder %s17, 1
      %s253 = scalar_select %p252, %s17, 1
      %s254 = smul.addr %s253, 8
      %s255 = scalar_lea.vmem %s0, %s254
      %p256 = scmp.lt.s32.totalorder %s17, 1
      %s257 = scalar_select %p256, %s17, 1
      %s258 = smul.addr %s257, 8
      %s259 = scalar_lea.vmem %s1, %s258
      %p260 = scmp.lt.s32.totalorder %s17, 1
      %s261 = scalar_select %p260, %s17, 1
      %s262 = smul.addr %s261, 8
      %s263 = scalar_lea.vmem %s6, %s262
      %v264 = vld [vmem:[%s255] sm:$0xff]
      %v265 = vld [vmem:[%s2] sm:$0xff]
      %v266 = vld [vmem:[%s3] sm:$0x1]
      %v268 = vlaneseq
      %v269 = vshrl.u32 %v268, 7
      %v270 = vsub.s32 0, %v269
      %v271 = vrot.slane %v266, %v270
      %vm273 = vcmask 64512
      %v275 = vsel %vm273, %v264, 0
      %277 = vmatprep.subr.mxu0 0.0
      %278 = vmatpush1.msra.mxu0 %v265
      %279 = vmatprep.subr.mxu0 0.0
      %280 = vmatpush1.msra.mxu0 0.0
      %281 = vmatprep.subr.mxu0 0.0
      %282 = vmatpush1.msra.mxu0 0.0
      %283 = vmatprep.subr.mxu0 0.0
      %284 = vmatpush1.msra.mxu0 0.0
      %285 = vmatprep.subr.mxu0 0.0
      %286 = vmatpush1.msra.mxu0 0.0
      %287 = vmatprep.subr.mxu0 0.0
      %288 = vmatpush1.msra.mxu0 0.0
      %289 = vmatprep.subr.mxu0 0.0
      %290 = vmatpush1.msra.mxu0 0.0
      %291 = vmatprep.subr.mxu0 0.0
      %292 = vmatpush1.msra.mxu0 0.0
      %293 = vmatprep.subr.mxu0 0.0
      %294 = vmatpush1.msra.mxu0 0.0
      %295 = vmatprep.subr.mxu0 0.0
      %296 = vmatpush1.msra.mxu0 0.0
      %297 = vmatprep.subr.mxu0 0.0
      %298 = vmatpush1.msra.mxu0 0.0
      %299 = vmatprep.subr.mxu0 0.0
      %300 = vmatpush1.msra.mxu0 0.0
      %301 = vmatprep.subr.mxu0 0.0
      %302 = vmatpush1.msra.mxu0 0.0
      %303 = vmatprep.subr.mxu0 0.0
      %304 = vmatpush1.msra.mxu0 0.0
      %305 = vmatprep.subr.mxu0 0.0
      %306 = vmatpush1.msra.mxu0 0.0
      %307 = vmatprep.subr.mxu0 0.0
      %308 = vmatpush1.msra.mxu0 0.0
      %309 = vmatprep.subr.mxu0 0.0
      %310 = vmatpush1.msra.mxu0 0.0
      %311 = vmatprep.subr.mxu0 0.0
      %312 = vmatpush1.msra.mxu0 0.0
      %313 = vmatprep.subr.mxu0 0.0
      %314 = vmatpush1.msra.mxu0 0.0
      %315 = vmatprep.subr.mxu0 0.0
      %316 = vmatpush1.msra.mxu0 0.0
      %317 = vmatprep.subr.mxu0 0.0
      %318 = vmatpush1.msra.mxu0 0.0
      %319 = vmatprep.subr.mxu0 0.0
      %320 = vmatpush1.msra.mxu0 0.0
      %321 = vmatprep.subr.mxu0 0.0
      %322 = vmatpush1.msra.mxu0 0.0
      %323 = vmatprep.subr.mxu0 0.0
      %324 = vmatpush1.msra.mxu0 0.0
      %325 = vmatprep.subr.mxu0 0.0
      %326 = vmatpush1.msra.mxu0 0.0
      %327 = vmatprep.subr.mxu0 0.0
      %328 = vmatpush1.msra.mxu0 0.0
      %329 = vmatprep.subr.mxu0 0.0
      %330 = vmatpush1.msra.mxu0 0.0
      %331 = vmatprep.subr.mxu0 0.0
      %332 = vmatpush1.msra.mxu0 0.0
      %333 = vmatprep.subr.mxu0 0.0
      %334 = vmatpush1.msra.mxu0 0.0
      %335 = vmatprep.subr.mxu0 0.0
      %336 = vmatpush1.msra.mxu0 0.0
      %337 = vmatprep.subr.mxu0 0.0
      %338 = vmatpush1.msra.mxu0 0.0
      %339 = vmatprep.subr.mxu0 0.0
      %340 = vmatpush1.msra.mxu0 0.0
      %341 = vmatprep.mubr.f32.mxu0 0.0
      %342 = vmatmul.mubr.f32.gmra.mrb[0].mxu0 %v275
      %v343 = vpop.f32.mrb[0].mxu0
      %v344 = vadd.f32 %v271, %v343
      %v345 = vpop.f32.mrb[0].mxu0
      %346 = vdwg.mxu0
      %v347 = vmax.f32 %v344, 0.0
      %v348 = vld [vmem:[%s4] sm:$0xff]
      %v349 = vld [vmem:[%s4 + $0x8] sm:$0xff]
      %v350 = vld [vmem:[%s4 + $0x10] sm:$0xff]
      %v351 = vld [vmem:[%s4 + $0x18] sm:$0xff]
      %v352 = vld [vmem:[%s5] sm:$0x1]
      %v354 = vlaneseq
      %v355 = vshrl.u32 %v354, 7
      %v356 = vsub.s32 0, %v355
      %v357 = vrot.slane %v352, %v356
      %vm359 = vcmask 261120
      %v361 = vsel %vm359, %v347, 0
      %363 = vmatprep.subr.mxu0 0.0
      %364 = vmatpush1.msra.mxu0 %v348
      %365 = vmatprep.subr.mxu0 0.0
      %366 = vmatpush1.msra.mxu0 %v349
      %367 = vmatprep.subr.mxu0 0.0
      %368 = vmatpush1.msra.mxu0 %v350
      %369 = vmatprep.subr.mxu0 0.0
      %370 = vmatpush1.msra.mxu0 %v351
      %371 = vmatprep.subr.mxu0 0.0
      %372 = vmatpush1.msra.mxu0 0.0
      %373 = vmatprep.subr.mxu0 0.0
      %374 = vmatpush1.msra.mxu0 0.0
      %375 = vmatprep.subr.mxu0 0.0
      %376 = vmatpush1.msra.mxu0 0.0
      %377 = vmatprep.subr.mxu0 0.0
      %378 = vmatpush1.msra.mxu0 0.0
      %379 = vmatprep.subr.mxu0 0.0
      %380 = vmatpush1.msra.mxu0 0.0
      %381 = vmatprep.subr.mxu0 0.0
      %382 = vmatpush1.msra.mxu0 0.0
      %383 = vmatprep.subr.mxu0 0.0
      %384 = vmatpush1.msra.mxu0 0.0
      %385 = vmatprep.subr.mxu0 0.0
      %386 = vmatpush1.msra.mxu0 0.0
      %387 = vmatprep.subr.mxu0 0.0
      %388 = vmatpush1.msra.mxu0 0.0
      %389 = vmatprep.subr.mxu0 0.0
      %390 = vmatpush1.msra.mxu0 0.0
      %391 = vmatprep.subr.mxu0 0.0
      %392 = vmatpush1.msra.mxu0 0.0
      %393 = vmatprep.subr.mxu0 0.0
      %394 = vmatpush1.msra.mxu0 0.0
      %395 = vmatprep.subr.mxu0 0.0
      %396 = vmatpush1.msra.mxu0 0.0
      %397 = vmatprep.subr.mxu0 0.0
      %398 = vmatpush1.msra.mxu0 0.0
      %399 = vmatprep.subr.mxu0 0.0
      %400 = vmatpush1.msra.mxu0 0.0
      %401 = vmatprep.subr.mxu0 0.0
      %402 = vmatpush1.msra.mxu0 0.0
      %403 = vmatprep.subr.mxu0 0.0
      %404 = vmatpush1.msra.mxu0 0.0
      %405 = vmatprep.subr.mxu0 0.0
      %406 = vmatpush1.msra.mxu0 0.0
      %407 = vmatprep.subr.mxu0 0.0
      %408 = vmatpush1.msra.mxu0 0.0
      %409 = vmatprep.subr.mxu0 0.0
      %410 = vmatpush1.msra.mxu0 0.0
      %411 = vmatprep.subr.mxu0 0.0
      %412 = vmatpush1.msra.mxu0 0.0
      %413 = vmatprep.subr.mxu0 0.0
      %414 = vmatpush1.msra.mxu0 0.0
      %415 = vmatprep.subr.mxu0 0.0
      %416 = vmatpush1.msra.mxu0 0.0
      %417 = vmatprep.subr.mxu0 0.0
      %418 = vmatpush1.msra.mxu0 0.0
      %419 = vmatprep.subr.mxu0 0.0
      %420 = vmatpush1.msra.mxu0 0.0
      %421 = vmatprep.subr.mxu0 0.0
      %422 = vmatpush1.msra.mxu0 0.0
      %423 = vmatprep.subr.mxu0 0.0
      %424 = vmatpush1.msra.mxu0 0.0
      %425 = vmatprep.subr.mxu0 0.0
      %426 = vmatpush1.msra.mxu0 0.0
      %427 = vmatprep.mubr.f32.mxu0 0.0
      %428 = vmatmul.mubr.f32.gmra.mrb[0].mxu0 %v361
      %v429 = vpop.f32.mrb[0].mxu0
      %v430 = vadd.f32 %v357, %v429
      %v431 = vpop.f32.mrb[0].mxu0
      %432 = vdwg.mxu0
      %v433 = vmax.f32 %v430, 0.0
      %v434 = vld [vmem:[%s259] sm:$0xff]
      %436 = vset.pattern.permute.xlu0 0
      %437 = vperm.xlu0 %436, %v434
      %v438 = vpop.permute.xlu0 %437
      %v440 = vmul.f32 %v433, %v438
      %441 = vst.msk [vmem:[%s263] sm:$0xff] %vm359, %v440
      %p442 = scmp.lt.s32.totalorder %s17, 1
      %s443 = scalar_select %p442, %s17, 1
      %s444 = smul.addr %s443, 8
      %s445 = scalar_lea.vmem %s6, %s444
      // Predicated region
      $region45: #{_forward_dense.8} parent=43 // pred_check
        %p446 = pneg %p171
      $region46: #{_forward_dense.8} parent=43 // pred_check_branch
        %448 = sbr.rel (%p446) target = $region48
      $region47: #{_forward_dense.8} parent=43 // pred_region
        _
      $region48: #{_forward_dense.8} parent=43 // pred_fallthru
        _
    $region44: #{_forward_dense.8} parent=5 // pred_fallthru
      _
    %p449 = scmp.le.s32.totalorder 2, %s12
    // Predicated region
    $region49: #{_forward_dense.8} parent=5 // pred_check
      %p450 = pneg %p449
    $region50: #{_forward_dense.8} parent=5 // pred_check_branch
      %452 = sbr.rel (%p450) target = $region52
    $region51: #{_forward_dense.8} parent=5 // pred_region
      %s453 = ssub.s32 %s12, 2
      // Predicated region
      $region53: #{_forward_dense.8} parent=51 // pred_check
        %p454 = pneg %p177
      $region54: #{_forward_dense.8} parent=51 // pred_check_branch
        %456 = sbr.rel (%p454) target = $region56
      $region55: #{_forward_dense.8} parent=51 // pred_region
        %p457 = scmp.lt.s32.totalorder %s18, 1
        %s458 = scalar_select %p457, %s18, 1
        %s459 = smul.addr %s458, 8
        %s460 = scalar_lea.vmem %s6, %s459
      $region56: #{_forward_dense.8} parent=51 // pred_fallthru
        _
    $region52: #{_forward_dense.8} parent=5 // pred_fallthru
      _
  $region6: #{_forward_dense.8} parent=0 // loop_footer
    %s16 = sadd.s32 1, %s12
  $region7: #{_forward_dense.8} parent=0 // loop_footer_branch
    %11 = sbr.rel target = $region3
  $region8: #{_forward_dense.8} parent=0 // loop_exit
    _

// kernel: _forward_dense.7
$region0: #{_forward_dense.7}
  #allocation0 [shape = 'u32[]', space=smem, size = 0x4, offset = 0x4, fixed_abs, tag = 'smem constant byte address 0x4 - core index']
  #allocation1 [shape = 'u32[144,128]{1,0:T(1,128)}', space=vmem, size = 0x12000, scoped, tag = 'internal scratch']
  %s0 = inlined_call_operand.vmem [shape: f32[128,5], index: 0, kind: input, shape index: {}]
  %s1 = inlined_call_operand.vmem [shape: f32[128,1], index: 1, kind: input, shape index: {}]
  %s2 = inlined_call_operand.vmem [shape: f32[5,16], index: 2, kind: input, shape index: {}]
  %s3 = inlined_call_operand.vmem [shape: f32[1,16], index: 3, kind: input, shape index: {}]
  %s4 = inlined_call_operand.vmem [shape: f32[16,16], index: 4, kind: input, shape index: {}]
  %s5 = inlined_call_operand.vmem [shape: f32[1,16], index: 5, kind: input, shape index: {}]
  %s6 = inlined_call_operand.vmem [shape: f32[128,16], index: 6, kind: output, shape index: {}]
  %s7 = sld [smem:[#allocation0]]
  $region57: #{_forward_dense.7} parent=0
    _
  %s9 = ssub.s32 1, %s7
  %s10 = scalar_select 0, %s9, %s7
  loop: start=0, step=1, limit=4
  $region2: #{_forward_dense.7} parent=0 // loop_pre_header
    _
  $region3: #{_forward_dense.7} parent=0 // loop_header
    %s12 = sphi 0, %s16
    %p13 = scmp.ge.s32.totalorder %s12, 4
    %s22 = sphi 0, %s24
    %s25 = sphi 0, %s22
    %s26 = sphi 0, %s25
    %s42 = sphi 0, %s26
    %s48 = sphi 0, %s50
    %s51 = sphi 0, %s48
    %s52 = sphi 0, %s51
    %s68 = sphi 0, %s52
    %s72 = sphi 0, %s72
    %s74 = sphi 0, %s72
    %s75 = sphi 0, %s74
    %s89 = sphi 0, %s75
    %s93 = sphi 0, %s93
    %s95 = sphi 0, %s93
    %s96 = sphi 0, %s95
    %s110 = sphi 0, %s96
    %s114 = sphi 0, %s114
    %s116 = sphi 0, %s114
    %s117 = sphi 0, %s116
    %s131 = sphi 0, %s117
    %s135 = sphi 0, %s135
    %s137 = sphi 0, %s135
    %s138 = sphi 0, %s137
    %s152 = sphi 0, %s138
    %s158 = sphi 0, %s160
    %s161 = sphi 0, %s158
    %s162 = sphi 0, %s161
    %s178 = sphi 0, %s162
  $region4: #{_forward_dense.7} parent=0 // loop_header_branch
    %15 = sbr.rel (%p13) target = $region8
  $region5: #{_forward_dense.7} parent=0 // loop_body
    %s17 = ssub.s32 %s12, 1
    %s18 = ssub.s32 %s12, 2
    %s19 = sadd.s32 %s12, 1
    %s20 = ssub.s32 %s12, %s19
    %p21 = scmp.eq.s32.totalorder %s20, 0
    %s23 = sadd.s32 %s22, 1
    %s24 = scalar_select %p21, %s22, %s23
    %p27 = pneg %p21
    %p28 = scmp.eq.s32.totalorder %s12, 1
    %p29 = por %p27, %p28
    %p30 = scmp.ne.s32.totalorder %s22, %s25
    %p31 = scmp.eq.s32.totalorder %s12, 0
    %p32 = por %p30, %p31
    %p33 = scmp.ne.s32.totalorder %s22, %s25
    %p34 = scmp.eq.s32.totalorder %s17, 1
    %p35 = por %p33, %p34
    %p36 = scmp.ne.s32.totalorder %s25, %s26
    %p37 = scmp.eq.s32.totalorder %s17, 0
    %p38 = por %p36, %p37
    %p39 = scmp.ne.s32.totalorder %s25, %s26
    %p40 = scmp.eq.s32.totalorder %s18, 1
    %p41 = por %p39, %p40
    %p43 = scmp.ne.s32.totalorder %s26, %s42
    %p44 = scmp.eq.s32.totalorder %s18, 0
    %p45 = por %p43, %p44
    %s46 = ssub.s32 %s12, %s19
    %p47 = scmp.eq.s32.totalorder %s46, 0
    %s49 = sadd.s32 %s48, 1
    %s50 = scalar_select %p47, %s48, %s49
    %p53 = pneg %p47
    %p54 = scmp.eq.s32.totalorder %s12, 1
    %p55 = por %p53, %p54
    %p56 = scmp.ne.s32.totalorder %s48, %s51
    %p57 = scmp.eq.s32.totalorder %s12, 0
    %p58 = por %p56, %p57
    %p59 = scmp.ne.s32.totalorder %s48, %s51
    %p60 = scmp.eq.s32.totalorder %s17, 1
    %p61 = por %p59, %p60
    %p62 = scmp.ne.s32.totalorder %s51, %s52
    %p63 = scmp.eq.s32.totalorder %s17, 0
    %p64 = por %p62, %p63
    %p65 = scmp.ne.s32.totalorder %s51, %s52
    %p66 = scmp.eq.s32.totalorder %s18, 1
    %p67 = por %p65, %p66
    %p69 = scmp.ne.s32.totalorder %s52, %s68
    %p70 = scmp.eq.s32.totalorder %s18, 0
    %p71 = por %p69, %p70
    %s73 = sadd.s32 %s72, 1
    %p76 = scmp.eq.s32.totalorder %s12, 1
    %p77 = scmp.ne.s32.totalorder %s72, %s74
    %p78 = scmp.eq.s32.totalorder %s12, 0
    %p79 = por %p77, %p78
    %p80 = scmp.ne.s32.totalorder %s72, %s74
    %p81 = scmp.eq.s32.totalorder %s17, 1
    %p82 = por %p80, %p81
    %p83 = scmp.ne.s32.totalorder %s74, %s75
    %p84 = scmp.eq.s32.totalorder %s17, 0
    %p85 = por %p83, %p84
    %p86 = scmp.ne.s32.totalorder %s74, %s75
    %p87 = scmp.eq.s32.totalorder %s18, 1
    %p88 = por %p86, %p87
    %p90 = scmp.ne.s32.totalorder %s75, %s89
    %p91 = scmp.eq.s32.totalorder %s18, 0
    %p92 = por %p90, %p91
    %s94 = sadd.s32 %s93, 1
    %p97 = scmp.eq.s32.totalorder %s12, 1
    %p98 = scmp.ne.s32.totalorder %s93, %s95
    %p99 = scmp.eq.s32.totalorder %s12, 0
    %p100 = por %p98, %p99
    %p101 = scmp.ne.s32.totalorder %s93, %s95
    %p102 = scmp.eq.s32.totalorder %s17, 1
    %p103 = por %p101, %p102
    %p104 = scmp.ne.s32.totalorder %s95, %s96
    %p105 = scmp.eq.s32.totalorder %s17, 0
    %p106 = por %p104, %p105
    %p107 = scmp.ne.s32.totalorder %s95, %s96
    %p108 = scmp.eq.s32.totalorder %s18, 1
    %p109 = por %p107, %p108
    %p111 = scmp.ne.s32.totalorder %s96, %s110
    %p112 = scmp.eq.s32.totalorder %s18, 0
    %p113 = por %p111, %p112
    %s115 = sadd.s32 %s114, 1
    %p118 = scmp.eq.s32.totalorder %s12, 1
    %p119 = scmp.ne.s32.totalorder %s114, %s116
    %p120 = scmp.eq.s32.totalorder %s12, 0
    %p121 = por %p119, %p120
    %p122 = scmp.ne.s32.totalorder %s114, %s116
    %p123 = scmp.eq.s32.totalorder %s17, 1
    %p124 = por %p122, %p123
    %p125 = scmp.ne.s32.totalorder %s116, %s117
    %p126 = scmp.eq.s32.totalorder %s17, 0
    %p127 = por %p125, %p126
    %p128 = scmp.ne.s32.totalorder %s116, %s117
    %p129 = scmp.eq.s32.totalorder %s18, 1
    %p130 = por %p128, %p129
    %p132 = scmp.ne.s32.totalorder %s117, %s131
    %p133 = scmp.eq.s32.totalorder %s18, 0
    %p134 = por %p132, %p133
    %s136 = sadd.s32 %s135, 1
    %p139 = scmp.eq.s32.totalorder %s12, 1
    %p140 = scmp.ne.s32.totalorder %s135, %s137
    %p141 = scmp.eq.s32.totalorder %s12, 0
    %p142 = por %p140, %p141
    %p143 = scmp.ne.s32.totalorder %s135, %s137
    %p144 = scmp.eq.s32.totalorder %s17, 1
    %p145 = por %p143, %p144
    %p146 = scmp.ne.s32.totalorder %s137, %s138
    %p147 = scmp.eq.s32.totalorder %s17, 0
    %p148 = por %p146, %p147
    %p149 = scmp.ne.s32.totalorder %s137, %s138
    %p150 = scmp.eq.s32.totalorder %s18, 1
    %p151 = por %p149, %p150
    %p153 = scmp.ne.s32.totalorder %s138, %s152
    %p154 = scmp.eq.s32.totalorder %s18, 0
    %p155 = por %p153, %p154
    %s156 = ssub.s32 %s12, %s19
    %p157 = scmp.eq.s32.totalorder %s156, 0
    %s159 = sadd.s32 %s158, 1
    %s160 = scalar_select %p157, %s158, %s159
    %p163 = pneg %p157
    %p164 = scmp.eq.s32.totalorder %s12, 1
    %p165 = por %p163, %p164
    %p166 = scmp.ne.s32.totalorder %s158, %s161
    %p167 = scmp.eq.s32.totalorder %s12, 0
    %p168 = por %p166, %p167
    %p169 = scmp.ne.s32.totalorder %s158, %s161
    %p170 = scmp.eq.s32.totalorder %s17, 1
    %p171 = por %p169, %p170
    %p172 = scmp.ne.s32.totalorder %s161, %s162
    %p173 = scmp.eq.s32.totalorder %s17, 0
    %p174 = por %p172, %p173
    %p175 = scmp.ne.s32.totalorder %s161, %s162
    %p176 = scmp.eq.s32.totalorder %s18, 1
    %p177 = por %p175, %p176
    %p179 = scmp.ne.s32.totalorder %s162, %s178
    %p180 = scmp.eq.s32.totalorder %s18, 0
    %p181 = por %p179, %p180
    %p182 = scmp.le.s32.totalorder 1, %s12
    %p183 = scmp.lt.s32.totalorder %s12, 3
    %p184 = pnand %p182, %p183
    %p185 = pneg %p184
    // Predicated region
    $region9: #{_forward_dense.7} parent=5 // pred_check
      _
    $region10: #{_forward_dense.7} parent=5 // pred_check_branch
      %187 = sbr.rel (%p184) target = $region12
    $region11: #{_forward_dense.7} parent=5 // pred_region
      %s188 = ssub.s32 %s12, 1
      // Predicated region
      $region13: #{_forward_dense.7} parent=11 // pred_check
        %p189 = pneg %p85
      $region14: #{_forward_dense.7} parent=11 // pred_check_branch
        %191 = sbr.rel (%p189) target = $region16
      $region15: #{_forward_dense.7} parent=11 // pred_region
        _
      $region16: #{_forward_dense.7} parent=11 // pred_fallthru
        _
      // Predicated region
      $region17: #{_forward_dense.7} parent=11 // pred_check
        %p192 = pneg %p106
      $region18: #{_forward_dense.7} parent=11 // pred_check_branch
        %194 = sbr.rel (%p192) target = $region20
      $region19: #{_forward_dense.7} parent=11 // pred_region
        _
      $region20: #{_forward_dense.7} parent=11 // pred_fallthru
        _
      // Predicated region
      $region21: #{_forward_dense.7} parent=11 // pred_check
        %p195 = pneg %p127
      $region22: #{_forward_dense.7} parent=11 // pred_check_branch
        %197 = sbr.rel (%p195) target = $region24
      $region23: #{_forward_dense.7} parent=11 // pred_region
        _
      $region24: #{_forward_dense.7} parent=11 // pred_fallthru
        _
      // Predicated region
      $region25: #{_forward_dense.7} parent=11 // pred_check
        %p198 = pneg %p148
      $region26: #{_forward_dense.7} parent=11 // pred_check_branch
        %200 = sbr.rel (%p198) target = $region28
      $region27: #{_forward_dense.7} parent=11 // pred_region
        _
      $region28: #{_forward_dense.7} parent=11 // pred_fallthru
        _
    $region12: #{_forward_dense.7} parent=5 // pred_fallthru
      _
    %p201 = scmp.lt.s32.totalorder %s12, 2
    // Predicated region
    $region29: #{_forward_dense.7} parent=5 // pred_check
      %p202 = pneg %p201
    $region30: #{_forward_dense.7} parent=5 // pred_check_branch
      %204 = sbr.rel (%p202) target = $region32
    $region31: #{_forward_dense.7} parent=5 // pred_region
      // Predicated region
      $region33: #{_forward_dense.7} parent=31 // pred_check
        %p205 = pneg %p32
      $region34: #{_forward_dense.7} parent=31 // pred_check_branch
        %207 = sbr.rel (%p205) target = $region36
      $region35: #{_forward_dense.7} parent=31 // pred_region
        %s208 = smul.u32 8, %s12
        %p209 = scmp.lt.s32.totalorder %s208, 15
        %s210 = scalar_select %p209, %s208, 15
        %s211 = smul.addr %s210, 8
        %s212 = scalar_lea.vmem %s0, %s211
        %s213 = smul.u32 8, %s12
      $region36: #{_forward_dense.7} parent=31 // pred_fallthru
        _
      // Predicated region
      $region37: #{_forward_dense.7} parent=31 // pred_check
        %p214 = pneg %p58
      $region38: #{_forward_dense.7} parent=31 // pred_check_branch
        %216 = sbr.rel (%p214) target = $region40
      $region39: #{_forward_dense.7} parent=31 // pred_region
        %s217 = smul.u32 8, %s12
        %p218 = scmp.lt.s32.totalorder %s217, 15
        %s219 = scalar_select %p218, %s217, 15
        %s220 = smul.addr %s219, 8
        %s221 = scalar_lea.vmem %s1, %s220
        %s222 = smul.u32 8, %s12
      $region40: #{_forward_dense.7} parent=31 // pred_fallthru
        _
    $region32: #{_forward_dense.7} parent=5 // pred_fallthru
      _
    %p223 = scmp.le.s32.totalorder 1, %s12
    %p224 = scmp.lt.s32.totalorder %s12, 3
    %p225 = pnand %p223, %p224
    %p226 = pneg %p225
    // Predicated region
    $region41: #{_forward_dense.7} parent=5 // pred_check
      _
    $region42: #{_forward_dense.7} parent=5 // pred_check_branch
      %228 = sbr.rel (%p225) target = $region44
    $region43: #{_forward_dense.7} parent=5 // pred_region
      %s229 = ssub.s32 %s12, 1
      %s230 = smul.u32 8, %s17
      %p231 = scmp.lt.s32.totalorder %s230, 15
      %s232 = scalar_select %p231, %s230, 15
      %s233 = smul.addr %s232, 8
      %s234 = scalar_lea.vmem %s0, %s233
      %p235 = pneg %p38
      %p236 = pneg %p35
      %s237 = smul.u32 8, %s17
      %p238 = scmp.lt.s32.totalorder %s237, 15
      %s239 = scalar_select %p238, %s237, 15
      %s240 = smul.addr %s239, 8
      %s241 = scalar_lea.vmem %s1, %s240
      %p242 = pneg %p64
      %p243 = pneg %p61
      %p244 = pneg %p85
      %p245 = pneg %p82
      %p246 = pneg %p106
      %p247 = pneg %p103
      %p248 = pneg %p127
      %p249 = pneg %p124
      %p250 = pneg %p148
      %p251 = pneg %p145
      %p252 = pneg %p174
      %p253 = pneg %p171
      %s254 = smul.u32 8, %s17
      %p255 = scmp.lt.s32.totalorder %s254, 15
      %s256 = scalar_select %p255, %s254, 15
      %s257 = smul.addr %s256, 8
      %s258 = scalar_lea.vmem %s6, %s257
      %s259 = smul.u32 8, %s17
      %p260 = scmp.lt.s32.totalorder %s259, 15
      %s261 = scalar_select %p260, %s259, 15
      %s262 = smul.addr %s261, 8
      %s263 = scalar_lea.vmem %s0, %s262
      %s264 = smul.u32 8, %s17
      %s265 = smul.u32 8, %s17
      %p266 = scmp.lt.s32.totalorder %s265, 15
      %s267 = scalar_select %p266, %s265, 15
      %s268 = smul.addr %s267, 8
      %s269 = scalar_lea.vmem %s1, %s268
      %s270 = smul.u32 8, %s17
      %s271 = smul.u32 8, %s17
      %p272 = scmp.lt.s32.totalorder %s271, 15
      %s273 = scalar_select %p272, %s271, 15
      %s274 = smul.addr %s273, 8
      %s275 = scalar_lea.vmem %s6, %s274
      %s276 = smul.u32 8, %s17
      %v277 = vld [vmem:[%s263] sm:$0xff]
      %v278 = vld [vmem:[%s263 + $0x8] sm:$0xff]
      %v279 = vld [vmem:[%s263 + $0x10] sm:$0xff]
      %v280 = vld [vmem:[%s263 + $0x18] sm:$0xff]
      %v281 = vld [vmem:[%s263 + $0x20] sm:$0xff]
      %v282 = vld [vmem:[%s263 + $0x28] sm:$0xff]
      %v283 = vld [vmem:[%s263 + $0x30] sm:$0xff]
      %v284 = vld [vmem:[%s263 + $0x38] sm:$0xff]
      %v285 = vld [vmem:[%s2] sm:$0x1f]
      %v286 = vld [vmem:[%s3] sm:$0x1]
      %v288 = vlaneseq
      %v289 = vshrl.u32 %v288, 7
      %v290 = vsub.s32 0, %v289
      %v291 = vrot.slane %v286, %v290
      %vm293 = vcmask 39936
      %v295 = vsel %vm293, %v277, 0
      %v298 = vsel %vm293, %v278, 0
      %v301 = vsel %vm293, %v279, 0
      %v304 = vsel %vm293, %v280, 0
      %v307 = vsel %vm293, %v281, 0
      %v310 = vsel %vm293, %v282, 0
      %v313 = vsel %vm293, %v283, 0
      %v316 = vsel %vm293, %v284, 0
      %vm318 = vcmask 1044480
      %v320 = vsel %vm318, %v285, 0
      %322 = vmatprep.subr.mxu0 0.0
      %323 = vmatpush1.msra.mxu0 %v320
      %324 = vmatprep.subr.mxu0 0.0
      %325 = vmatpush1.msra.mxu0 0.0
      %326 = vmatprep.subr.mxu0 0.0
      %327 = vmatpush1.msra.mxu0 0.0
      %328 = vmatprep.subr.mxu0 0.0
      %329 = vmatpush1.msra.mxu0 0.0
      %330 = vmatprep.subr.mxu0 0.0
      %331 = vmatpush1.msra.mxu0 0.0
      %332 = vmatprep.subr.mxu0 0.0
      %333 = vmatpush1.msra.mxu0 0.0
      %334 = vmatprep.subr.mxu0 0.0
      %335 = vmatpush1.msra.mxu0 0.0
      %336 = vmatprep.subr.mxu0 0.0
      %337 = vmatpush1.msra.mxu0 0.0
      %338 = vmatprep.subr.mxu0 0.0
      %339 = vmatpush1.msra.mxu0 0.0
      %340 = vmatprep.subr.mxu0 0.0
      %341 = vmatpush1.msra.mxu0 0.0
      %342 = vmatprep.subr.mxu0 0.0
      %343 = vmatpush1.msra.mxu0 0.0
      %344 = vmatprep.subr.mxu0 0.0
      %345 = vmatpush1.msra.mxu0 0.0
      %346 = vmatprep.subr.mxu0 0.0
      %347 = vmatpush1.msra.mxu0 0.0
      %348 = vmatprep.subr.mxu0 0.0
      %349 = vmatpush1.msra.mxu0 0.0
      %350 = vmatprep.subr.mxu0 0.0
      %351 = vmatpush1.msra.mxu0 0.0
      %352 = vmatprep.subr.mxu0 0.0
      %353 = vmatpush1.msra.mxu0 0.0
      %354 = vmatprep.subr.mxu0 0.0
      %355 = vmatpush1.msra.mxu0 0.0
      %356 = vmatprep.subr.mxu0 0.0
      %357 = vmatpush1.msra.mxu0 0.0
      %358 = vmatprep.subr.mxu0 0.0
      %359 = vmatpush1.msra.mxu0 0.0
      %360 = vmatprep.subr.mxu0 0.0
      %361 = vmatpush1.msra.mxu0 0.0
      %362 = vmatprep.subr.mxu0 0.0
      %363 = vmatpush1.msra.mxu0 0.0
      %364 = vmatprep.subr.mxu0 0.0
      %365 = vmatpush1.msra.mxu0 0.0
      %366 = vmatprep.subr.mxu0 0.0
      %367 = vmatpush1.msra.mxu0 0.0
      %368 = vmatprep.subr.mxu0 0.0
      %369 = vmatpush1.msra.mxu0 0.0
      %370 = vmatprep.subr.mxu0 0.0
      %371 = vmatpush1.msra.mxu0 0.0
      %372 = vmatprep.subr.mxu0 0.0
      %373 = vmatpush1.msra.mxu0 0.0
      %374 = vmatprep.subr.mxu0 0.0
      %375 = vmatpush1.msra.mxu0 0.0
      %376 = vmatprep.subr.mxu0 0.0
      %377 = vmatpush1.msra.mxu0 0.0
      %378 = vmatprep.subr.mxu0 0.0
      %379 = vmatpush1.msra.mxu0 0.0
      %380 = vmatprep.subr.mxu0 0.0
      %381 = vmatpush1.msra.mxu0 0.0
      %382 = vmatprep.subr.mxu0 0.0
      %383 = vmatpush1.msra.mxu0 0.0
      %384 = vmatprep.subr.mxu0 0.0
      %385 = vmatpush1.msra.mxu0 0.0
      %386 = vmatprep.mubr.f32.mxu0 0.0
      %387 = vmatmul.mubr.f32.gmra.mrb[0].mxu0 %v295
      %v388 = vpop.f32.mrb[0].mxu0
      %v389 = vadd.f32 %v291, %v388
      %v390 = vpop.f32.mrb[0].mxu0
      %391 = vmatprep.mubr.f32.mxu0 0.0
      %392 = vmatmul.mubr.f32.gmra.mrb[0].mxu0 %v298
      %v393 = vpop.f32.mrb[0].mxu0
      %v394 = vadd.f32 %v291, %v393
      %v395 = vpop.f32.mrb[0].mxu0
      %396 = vmatprep.mubr.f32.mxu0 0.0
      %397 = vmatmul.mubr.f32.gmra.mrb[0].mxu0 %v301
      %v398 = vpop.f32.mrb[0].mxu0
      %v399 = vadd.f32 %v291, %v398
      %v400 = vpop.f32.mrb[0].mxu0
      %401 = vmatprep.mubr.f32.mxu0 0.0
      %402 = vmatmul.mubr.f32.gmra.mrb[0].mxu0 %v304
      %v403 = vpop.f32.mrb[0].mxu0
      %v404 = vadd.f32 %v291, %v403
      %v405 = vpop.f32.mrb[0].mxu0
      %406 = vmatprep.mubr.f32.mxu0 0.0
      %407 = vmatmul.mubr.f32.gmra.mrb[0].mxu0 %v307
      %v408 = vpop.f32.mrb[0].mxu0
      %v409 = vadd.f32 %v291, %v408
      %v410 = vpop.f32.mrb[0].mxu0
      %411 = vmatprep.mubr.f32.mxu0 0.0
      %412 = vmatmul.mubr.f32.gmra.mrb[0].mxu0 %v310
      %v413 = vpop.f32.mrb[0].mxu0
      %v414 = vadd.f32 %v291, %v413
      %v415 = vpop.f32.mrb[0].mxu0
      %416 = vmatprep.mubr.f32.mxu0 0.0
      %417 = vmatmul.mubr.f32.gmra.mrb[0].mxu0 %v313
      %v418 = vpop.f32.mrb[0].mxu0
      %v419 = vadd.f32 %v291, %v418
      %v420 = vpop.f32.mrb[0].mxu0
      %421 = vmatprep.mubr.f32.mxu0 0.0
      %422 = vmatmul.mubr.f32.gmra.mrb[0].mxu0 %v316
      %v423 = vpop.f32.mrb[0].mxu0
      %v424 = vadd.f32 %v291, %v423
      %v425 = vpop.f32.mrb[0].mxu0
      %426 = vdwg.mxu0
      %v427 = vmax.f32 %v389, 0.0
      %v428 = vmax.f32 %v394, 0.0
      %v429 = vmax.f32 %v399, 0.0
      %v430 = vmax.f32 %v404, 0.0
      %v431 = vmax.f32 %v409, 0.0
      %v432 = vmax.f32 %v414, 0.0
      %v433 = vmax.f32 %v419, 0.0
      %v434 = vmax.f32 %v424, 0.0
      %v435 = vld [vmem:[%s4] sm:$0xff]
      %v436 = vld [vmem:[%s4 + $0x8] sm:$0xff]
      %v437 = vld [vmem:[%s5] sm:$0x1]
      %v439 = vlaneseq
      %v440 = vshrl.u32 %v439, 7
      %v441 = vsub.s32 0, %v440
      %v442 = vrot.slane %v437, %v441
      %vm444 = vcmask 130048
      %v446 = vsel %vm444, %v427, 0
      %v449 = vsel %vm444, %v428, 0
      %v452 = vsel %vm444, %v429, 0
      %v455 = vsel %vm444, %v430, 0
      %v458 = vsel %vm444, %v431, 0
      %v461 = vsel %vm444, %v432, 0
      %v464 = vsel %vm444, %v433, 0
      %v467 = vsel %vm444, %v434, 0
      %469 = vmatprep.subr.mxu0 0.0
      %470 = vmatpush1.msra.mxu0 %v435
      %471 = vmatprep.subr.mxu0 0.0
      %472 = vmatpush1.msra.mxu0 %v436
      %473 = vmatprep.subr.mxu0 0.0
      %474 = vmatpush1.msra.mxu0 0.0
      %475 = vmatprep.subr.mxu0 0.0
      %476 = vmatpush1.msra.mxu0 0.0
      %477 = vmatprep.subr.mxu0 0.0
      %478 = vmatpush1.msra.mxu0 0.0
      %479 = vmatprep.subr.mxu0 0.0
      %480 = vmatpush1.msra.mxu0 0.0
      %481 = vmatprep.subr.mxu0 0.0
      %482 = vmatpush1.msra.mxu0 0.0
      %483 = vmatprep.subr.mxu0 0.0
      %484 = vmatpush1.msra.mxu0 0.0
      %485 = vmatprep.subr.mxu0 0.0
      %486 = vmatpush1.msra.mxu0 0.0
      %487 = vmatprep.subr.mxu0 0.0
      %488 = vmatpush1.msra.mxu0 0.0
      %489 = vmatprep.subr.mxu0 0.0
      %490 = vmatpush1.msra.mxu0 0.0
      %491 = vmatprep.subr.mxu0 0.0
      %492 = vmatpush1.msra.mxu0 0.0
      %493 = vmatprep.subr.mxu0 0.0
      %494 = vmatpush1.msra.mxu0 0.0
      %495 = vmatprep.subr.mxu0 0.0
      %496 = vmatpush1.msra.mxu0 0.0
      %497 = vmatprep.subr.mxu0 0.0
      %498 = vmatpush1.msra.mxu0 0.0
      %499 = vmatprep.subr.mxu0 0.0
      %500 = vmatpush1.msra.mxu0 0.0
      %501 = vmatprep.subr.mxu0 0.0
      %502 = vmatpush1.msra.mxu0 0.0
      %503 = vmatprep.subr.mxu0 0.0
      %504 = vmatpush1.msra.mxu0 0.0
      %505 = vmatprep.subr.mxu0 0.0
      %506 = vmatpush1.msra.mxu0 0.0
      %507 = vmatprep.subr.mxu0 0.0
      %508 = vmatpush1.msra.mxu0 0.0
      %509 = vmatprep.subr.mxu0 0.0
      %510 = vmatpush1.msra.mxu0 0.0
      %511 = vmatprep.subr.mxu0 0.0
      %512 = vmatpush1.msra.mxu0 0.0
      %513 = vmatprep.subr.mxu0 0.0
      %514 = vmatpush1.msra.mxu0 0.0
      %515 = vmatprep.subr.mxu0 0.0
      %516 = vmatpush1.msra.mxu0 0.0
      %517 = vmatprep.subr.mxu0 0.0
      %518 = vmatpush1.msra.mxu0 0.0
      %519 = vmatprep.subr.mxu0 0.0
      %520 = vmatpush1.msra.mxu0 0.0
      %521 = vmatprep.subr.mxu0 0.0
      %522 = vmatpush1.msra.mxu0 0.0
      %523 = vmatprep.subr.mxu0 0.0
      %524 = vmatpush1.msra.mxu0 0.0
      %525 = vmatprep.subr.mxu0 0.0
      %526 = vmatpush1.msra.mxu0 0.0
      %527 = vmatprep.subr.mxu0 0.0
      %528 = vmatpush1.msra.mxu0 0.0
      %529 = vmatprep.subr.mxu0 0.0
      %530 = vmatpush1.msra.mxu0 0.0
      %531 = vmatprep.subr.mxu0 0.0
      %532 = vmatpush1.msra.mxu0 0.0
      %533 = vmatprep.mubr.f32.mxu0 0.0
      %534 = vmatmul.mubr.f32.gmra.mrb[0].mxu0 %v446
      %v535 = vpop.f32.mrb[0].mxu0
      %v536 = vadd.f32 %v442, %v535
      %v537 = vpop.f32.mrb[0].mxu0
      %538 = vmatprep.mubr.f32.mxu0 0.0
      %539 = vmatmul.mubr.f32.gmra.mrb[0].mxu0 %v449
      %v540 = vpop.f32.mrb[0].mxu0
      %v541 = vadd.f32 %v442, %v540
      %v542 = vpop.f32.mrb[0].mxu0
      %543 = vmatprep.mubr.f32.mxu0 0.0
      %544 = vmatmul.mubr.f32.gmra.mrb[0].mxu0 %v452
      %v545 = vpop.f32.mrb[0].mxu0
      %v546 = vadd.f32 %v442, %v545
      %v547 = vpop.f32.mrb[0].mxu0
      %548 = vmatprep.mubr.f32.mxu0 0.0
      %549 = vmatmul.mubr.f32.gmra.mrb[0].mxu0 %v455
      %v550 = vpop.f32.mrb[0].mxu0
      %v551 = vadd.f32 %v442, %v550
      %v552 = vpop.f32.mrb[0].mxu0
      %553 = vmatprep.mubr.f32.mxu0 0.0
      %554 = vmatmul.mubr.f32.gmra.mrb[0].mxu0 %v458
      %v555 = vpop.f32.mrb[0].mxu0
      %v556 = vadd.f32 %v442, %v555
      %v557 = vpop.f32.mrb[0].mxu0
      %558 = vmatprep.mubr.f32.mxu0 0.0
      %559 = vmatmul.mubr.f32.gmra.mrb[0].mxu0 %v461
      %v560 = vpop.f32.mrb[0].mxu0
      %v561 = vadd.f32 %v442, %v560
      %v562 = vpop.f32.mrb[0].mxu0
      %563 = vmatprep.mubr.f32.mxu0 0.0
      %564 = vmatmul.mubr.f32.gmra.mrb[0].mxu0 %v464
      %v565 = vpop.f32.mrb[0].mxu0
      %v566 = vadd.f32 %v442, %v565
      %v567 = vpop.f32.mrb[0].mxu0
      %568 = vmatprep.mubr.f32.mxu0 0.0
      %569 = vmatmul.mubr.f32.gmra.mrb[0].mxu0 %v467
      %v570 = vpop.f32.mrb[0].mxu0
      %v571 = vadd.f32 %v442, %v570
      %v572 = vpop.f32.mrb[0].mxu0
      %573 = vdwg.mxu0
      %v574 = vmax.f32 %v536, 0.0
      %v575 = vmax.f32 %v541, 0.0
      %v576 = vmax.f32 %v546, 0.0
      %v577 = vmax.f32 %v551, 0.0
      %v578 = vmax.f32 %v556, 0.0
      %v579 = vmax.f32 %v561, 0.0
      %v580 = vmax.f32 %v566, 0.0
      %v581 = vmax.f32 %v571, 0.0
      %v582 = vld [vmem:[%s269] sm:$0xff]
      %v583 = vld [vmem:[%s269 + $0x8] sm:$0xff]
      %v584 = vld [vmem:[%s269 + $0x10] sm:$0xff]
      %v585 = vld [vmem:[%s269 + $0x18] sm:$0xff]
      %v586 = vld [vmem:[%s269 + $0x20] sm:$0xff]
      %v587 = vld [vmem:[%s269 + $0x28] sm:$0xff]
      %v588 = vld [vmem:[%s269 + $0x30] sm:$0xff]
      %v589 = vld [vmem:[%s269 + $0x38] sm:$0xff]
      %591 = vset.pattern.permute.xlu0 0
      %592 = vperm.xlu0 %591, %v582
      %v593 = vpop.permute.xlu0 %592
      %596 = vset.pattern.permute.xlu0 0
      %597 = vperm.xlu0 %596, %v583
      %v598 = vpop.permute.xlu0 %597
      %601 = vset.pattern.permute.xlu0 0
      %602 = vperm.xlu0 %601, %v584
      %v603 = vpop.permute.xlu0 %602
      %606 = vset.pattern.permute.xlu0 0
      %607 = vperm.xlu0 %606, %v585
      %v608 = vpop.permute.xlu0 %607
      %611 = vset.pattern.permute.xlu0 0
      %612 = vperm.xlu0 %611, %v586
      %v613 = vpop.permute.xlu0 %612
      %616 = vset.pattern.permute.xlu0 0
      %617 = vperm.xlu0 %616, %v587
      %v618 = vpop.permute.xlu0 %617
      %621 = vset.pattern.permute.xlu0 0
      %622 = vperm.xlu0 %621, %v588
      %v623 = vpop.permute.xlu0 %622
      %626 = vset.pattern.permute.xlu0 0
      %627 = vperm.xlu0 %626, %v589
      %v628 = vpop.permute.xlu0 %627
      %v630 = vmul.f32 %v574, %v593
      %v631 = vmul.f32 %v575, %v598
      %v632 = vmul.f32 %v576, %v603
      %v633 = vmul.f32 %v577, %v608
      %v634 = vmul.f32 %v578, %v613
      %v635 = vmul.f32 %v579, %v618
      %v636 = vmul.f32 %v580, %v623
      %v637 = vmul.f32 %v581, %v628
      %638 = vst.msk [vmem:[%s275] sm:$0xff] %vm444, %v630
      %639 = vst.msk [vmem:[%s275 + $0x8] sm:$0xff] %vm444, %v631
      %640 = vst.msk [vmem:[%s275 + $0x10] sm:$0xff] %vm444, %v632
      %641 = vst.msk [vmem:[%s275 + $0x18] sm:$0xff] %vm444, %v633
      %642 = vst.msk [vmem:[%s275 + $0x20] sm:$0xff] %vm444, %v634
      %643 = vst.msk [vmem:[%s275 + $0x28] sm:$0xff] %vm444, %v635
      %644 = vst.msk [vmem:[%s275 + $0x30] sm:$0xff] %vm444, %v636
      %645 = vst.msk [vmem:[%s275 + $0x38] sm:$0xff] %vm444, %v637
      %s646 = smul.u32 8, %s17
      %p647 = scmp.lt.s32.totalorder %s646, 15
      %s648 = scalar_select %p647, %s646, 15
      %s649 = smul.addr %s648, 8
      %s650 = scalar_lea.vmem %s6, %s649
      // Predicated region
      $region45: #{_forward_dense.7} parent=43 // pred_check
        %p651 = pneg %p171
      $region46: #{_forward_dense.7} parent=43 // pred_check_branch
        %653 = sbr.rel (%p651) target = $region48
      $region47: #{_forward_dense.7} parent=43 // pred_region
        %s654 = smul.u32 8, %s17
      $region48: #{_forward_dense.7} parent=43 // pred_fallthru
        _
    $region44: #{_forward_dense.7} parent=5 // pred_fallthru
      _
    %p655 = scmp.le.s32.totalorder 2, %s12
    // Predicated region
    $region49: #{_forward_dense.7} parent=5 // pred_check
      %p656 = pneg %p655
    $region50: #{_forward_dense.7} parent=5 // pred_check_branch
      %658 = sbr.rel (%p656) target = $region52
    $region51: #{_forward_dense.7} parent=5 // pred_region
      %s659 = ssub.s32 %s12, 2
      // Predicated region
      $region53: #{_forward_dense.7} parent=51 // pred_check
        %p660 = pneg %p177
      $region54: #{_forward_dense.7} parent=51 // pred_check_branch
        %662 = sbr.rel (%p660) target = $region56
      $region55: #{_forward_dense.7} parent=51 // pred_region
        %s663 = smul.u32 8, %s18
        %p664 = scmp.lt.s32.totalorder %s663, 15
        %s665 = scalar_select %p664, %s663, 15
        %s666 = smul.addr %s665, 8
        %s667 = scalar_lea.vmem %s6, %s666
      $region56: #{_forward_dense.7} parent=51 // pred_fallthru
        _
    $region52: #{_forward_dense.7} parent=5 // pred_fallthru
      _
  $region6: #{_forward_dense.7} parent=0 // loop_footer
    %s16 = sadd.s32 1, %s12
  $region7: #{_forward_dense.7} parent=0 // loop_footer_branch
    %11 = sbr.rel target = $region3
  $region8: #{_forward_dense.7} parent=0 // loop_exit
    _

// kernel: _forward_dense.9
$region0: #{_forward_dense.9}
  #allocation0 [shape = 'u32[]', space=smem, size = 0x4, offset = 0x4, fixed_abs, tag = 'smem constant byte address 0x4 - core index']
  #allocation1 [shape = 'u32[144,128]{1,0:T(1,128)}', space=vmem, size = 0x12000, scoped, tag = 'internal scratch']
  %s0 = inlined_call_operand.vmem [shape: f32[16,32], index: 0, kind: input, shape index: {}]
  %s1 = inlined_call_operand.vmem [shape: f32[32,96], index: 1, kind: input, shape index: {}]
  %s2 = inlined_call_operand.vmem [shape: f32[1,96], index: 2, kind: input, shape index: {}]
  %s3 = inlined_call_operand.vmem [shape: f32[16,96], index: 3, kind: output, shape index: {}]
  %s4 = sld [smem:[#allocation0]]
  $region45: #{_forward_dense.9} parent=0
    _
  %s6 = ssub.s32 1, %s4
  %s7 = scalar_select 0, %s6, %s4
  loop: start=0, step=1, limit=4
  $region2: #{_forward_dense.9} parent=0 // loop_pre_header
    _
  $region3: #{_forward_dense.9} parent=0 // loop_header
    %s9 = sphi 0, %s13
    %p10 = scmp.ge.s32.totalorder %s9, 4
    %s19 = sphi 0, %s21
    %s22 = sphi 0, %s19
    %s23 = sphi 0, %s22
    %s39 = sphi 0, %s23
    %s43 = sphi 0, %s43
    %s45 = sphi 0, %s43
    %s46 = sphi 0, %s45
    %s60 = sphi 0, %s46
    %s64 = sphi 0, %s64
    %s66 = sphi 0, %s64
    %s67 = sphi 0, %s66
    %s81 = sphi 0, %s67
    %s87 = sphi 0, %s89
    %s90 = sphi 0, %s87
    %s91 = sphi 0, %s90
    %s107 = sphi 0, %s91
  $region4: #{_forward_dense.9} parent=0 // loop_header_branch
    %12 = sbr.rel (%p10) target = $region8
  $region5: #{_forward_dense.9} parent=0 // loop_body
    %s14 = ssub.s32 %s9, 1
    %s15 = ssub.s32 %s9, 2
    %s16 = sadd.s32 %s9, 1
    %s17 = ssub.s32 %s9, %s16
    %p18 = scmp.eq.s32.totalorder %s17, 0
    %s20 = sadd.s32 %s19, 1
    %s21 = scalar_select %p18, %s19, %s20
    %p24 = pneg %p18
    %p25 = scmp.eq.s32.totalorder %s9, 1
    %p26 = por %p24, %p25
    %p27 = scmp.ne.s32.totalorder %s19, %s22
    %p28 = scmp.eq.s32.totalorder %s9, 0
    %p29 = por %p27, %p28
    %p30 = scmp.ne.s32.totalorder %s19, %s22
    %p31 = scmp.eq.s32.totalorder %s14, 1
    %p32 = por %p30, %p31
    %p33 = scmp.ne.s32.totalorder %s22, %s23
    %p34 = scmp.eq.s32.totalorder %s14, 0
    %p35 = por %p33, %p34
    %p36 = scmp.ne.s32.totalorder %s22, %s23
    %p37 = scmp.eq.s32.totalorder %s15, 1
    %p38 = por %p36, %p37
    %p40 = scmp.ne.s32.totalorder %s23, %s39
    %p41 = scmp.eq.s32.totalorder %s15, 0
    %p42 = por %p40, %p41
    %s44 = sadd.s32 %s43, 1
    %p47 = scmp.eq.s32.totalorder %s9, 1
    %p48 = scmp.ne.s32.totalorder %s43, %s45
    %p49 = scmp.eq.s32.totalorder %s9, 0
    %p50 = por %p48, %p49
    %p51 = scmp.ne.s32.totalorder %s43, %s45
    %p52 = scmp.eq.s32.totalorder %s14, 1
    %p53 = por %p51, %p52
    %p54 = scmp.ne.s32.totalorder %s45, %s46
    %p55 = scmp.eq.s32.totalorder %s14, 0
    %p56 = por %p54, %p55
    %p57 = scmp.ne.s32.totalorder %s45, %s46
    %p58 = scmp.eq.s32.totalorder %s15, 1
    %p59 = por %p57, %p58
    %p61 = scmp.ne.s32.totalorder %s46, %s60
    %p62 = scmp.eq.s32.totalorder %s15, 0
    %p63 = por %p61, %p62
    %s65 = sadd.s32 %s64, 1
    %p68 = scmp.eq.s32.totalorder %s9, 1
    %p69 = scmp.ne.s32.totalorder %s64, %s66
    %p70 = scmp.eq.s32.totalorder %s9, 0
    %p71 = por %p69, %p70
    %p72 = scmp.ne.s32.totalorder %s64, %s66
    %p73 = scmp.eq.s32.totalorder %s14, 1
    %p74 = por %p72, %p73
    %p75 = scmp.ne.s32.totalorder %s66, %s67
    %p76 = scmp.eq.s32.totalorder %s14, 0
    %p77 = por %p75, %p76
    %p78 = scmp.ne.s32.totalorder %s66, %s67
    %p79 = scmp.eq.s32.totalorder %s15, 1
    %p80 = por %p78, %p79
    %p82 = scmp.ne.s32.totalorder %s67, %s81
    %p83 = scmp.eq.s32.totalorder %s15, 0
    %p84 = por %p82, %p83
    %s85 = ssub.s32 %s9, %s16
    %p86 = scmp.eq.s32.totalorder %s85, 0
    %s88 = sadd.s32 %s87, 1
    %s89 = scalar_select %p86, %s87, %s88
    %p92 = pneg %p86
    %p93 = scmp.eq.s32.totalorder %s9, 1
    %p94 = por %p92, %p93
    %p95 = scmp.ne.s32.totalorder %s87, %s90
    %p96 = scmp.eq.s32.totalorder %s9, 0
    %p97 = por %p95, %p96
    %p98 = scmp.ne.s32.totalorder %s87, %s90
    %p99 = scmp.eq.s32.totalorder %s14, 1
    %p100 = por %p98, %p99
    %p101 = scmp.ne.s32.totalorder %s90, %s91
    %p102 = scmp.eq.s32.totalorder %s14, 0
    %p103 = por %p101, %p102
    %p104 = scmp.ne.s32.totalorder %s90, %s91
    %p105 = scmp.eq.s32.totalorder %s15, 1
    %p106 = por %p104, %p105
    %p108 = scmp.ne.s32.totalorder %s91, %s107
    %p109 = scmp.eq.s32.totalorder %s15, 0
    %p110 = por %p108, %p109
    %p111 = scmp.le.s32.totalorder 1, %s9
    %p112 = scmp.lt.s32.totalorder %s9, 3
    %p113 = pnand %p111, %p112
    %p114 = pneg %p113
    // Predicated region
    $region9: #{_forward_dense.9} parent=5 // pred_check
      _
    $region10: #{_forward_dense.9} parent=5 // pred_check_branch
      %116 = sbr.rel (%p113) target = $region12
    $region11: #{_forward_dense.9} parent=5 // pred_region
      %s117 = ssub.s32 %s9, 1
      // Predicated region
      $region13: #{_forward_dense.9} parent=11 // pred_check
        %p118 = pneg %p56
      $region14: #{_forward_dense.9} parent=11 // pred_check_branch
        %120 = sbr.rel (%p118) target = $region16
      $region15: #{_forward_dense.9} parent=11 // pred_region
        _
      $region16: #{_forward_dense.9} parent=11 // pred_fallthru
        _
      // Predicated region
      $region17: #{_forward_dense.9} parent=11 // pred_check
        %p121 = pneg %p77
      $region18: #{_forward_dense.9} parent=11 // pred_check_branch
        %123 = sbr.rel (%p121) target = $region20
      $region19: #{_forward_dense.9} parent=11 // pred_region
        _
      $region20: #{_forward_dense.9} parent=11 // pred_fallthru
        _
    $region12: #{_forward_dense.9} parent=5 // pred_fallthru
      _
    %p124 = scmp.lt.s32.totalorder %s9, 2
    // Predicated region
    $region21: #{_forward_dense.9} parent=5 // pred_check
      %p125 = pneg %p124
    $region22: #{_forward_dense.9} parent=5 // pred_check_branch
      %127 = sbr.rel (%p125) target = $region24
    $region23: #{_forward_dense.9} parent=5 // pred_region
      // Predicated region
      $region25: #{_forward_dense.9} parent=23 // pred_check
        %p128 = pneg %p29
      $region26: #{_forward_dense.9} parent=23 // pred_check_branch
        %130 = sbr.rel (%p128) target = $region28
      $region27: #{_forward_dense.9} parent=23 // pred_region
        %p131 = scmp.lt.s32.totalorder %s9, 1
        %s132 = scalar_select %p131, %s9, 1
        %s133 = smul.addr %s132, 8
        %s134 = scalar_lea.vmem %s0, %s133
      $region28: #{_forward_dense.9} parent=23 // pred_fallthru
        _
    $region24: #{_forward_dense.9} parent=5 // pred_fallthru
      _
    %p135 = scmp.le.s32.totalorder 1, %s9
    %p136 = scmp.lt.s32.totalorder %s9, 3
    %p137 = pnand %p135, %p136
    %p138 = pneg %p137
    // Predicated region
    $region29: #{_forward_dense.9} parent=5 // pred_check
      _
    $region30: #{_forward_dense.9} parent=5 // pred_check_branch
      %140 = sbr.rel (%p137) target = $region32
    $region31: #{_forward_dense.9} parent=5 // pred_region
      %s141 = ssub.s32 %s9, 1
      %p142 = scmp.lt.s32.totalorder %s14, 1
      %s143 = scalar_select %p142, %s14, 1
      %s144 = smul.addr %s143, 8
      %s145 = scalar_lea.vmem %s0, %s144
      %p146 = pneg %p35
      %p147 = pneg %p32
      %p148 = pneg %p56
      %p149 = pneg %p53
      %p150 = pneg %p77
      %p151 = pneg %p74
      %p152 = pneg %p103
      %p153 = pneg %p100
      %p154 = scmp.lt.s32.totalorder %s14, 1
      %s155 = scalar_select %p154, %s14, 1
      %s156 = smul.addr %s155, 8
      %s157 = scalar_lea.vmem %s3, %s156
      %p158 = scmp.lt.s32.totalorder %s14, 1
      %s159 = scalar_select %p158, %s14, 1
      %s160 = smul.addr %s159, 8
      %s161 = scalar_lea.vmem %s0, %s160
      %p162 = scmp.lt.s32.totalorder %s14, 1
      %s163 = scalar_select %p162, %s14, 1
      %s164 = smul.addr %s163, 8
      %s165 = scalar_lea.vmem %s3, %s164
      %v166 = vld [vmem:[%s161] sm:$0xff]
      %v167 = vld [vmem:[%s1] sm:$0xff]
      %v168 = vld [vmem:[%s1 + $0x8] sm:$0xff]
      %v169 = vld [vmem:[%s1 + $0x10] sm:$0xff]
      %v170 = vld [vmem:[%s1 + $0x18] sm:$0xff]
      %v171 = vld [vmem:[%s2] sm:$0x1]
      %v173 = vlaneseq
      %v174 = vshrl.u32 %v173, 7
      %v175 = vsub.s32 0, %v174
      %v176 = vrot.slane %v171, %v175
      %vm178 = vcmask 261120
      %v180 = vsel %vm178, %v166, 0
      %182 = vmatprep.subr.mxu0 0.0
      %183 = vmatpush1.msra.mxu0 %v167
      %184 = vmatprep.subr.mxu0 0.0
      %185 = vmatpush1.msra.mxu0 %v168
      %186 = vmatprep.subr.mxu0 0.0
      %187 = vmatpush1.msra.mxu0 %v169
      %188 = vmatprep.subr.mxu0 0.0
      %189 = vmatpush1.msra.mxu0 %v170
      %190 = vmatprep.subr.mxu0 0.0
      %191 = vmatpush1.msra.mxu0 0.0
      %192 = vmatprep.subr.mxu0 0.0
      %193 = vmatpush1.msra.mxu0 0.0
      %194 = vmatprep.subr.mxu0 0.0
      %195 = vmatpush1.msra.mxu0 0.0
      %196 = vmatprep.subr.mxu0 0.0
      %197 = vmatpush1.msra.mxu0 0.0
      %198 = vmatprep.subr.mxu0 0.0
      %199 = vmatpush1.msra.mxu0 0.0
      %200 = vmatprep.subr.mxu0 0.0
      %201 = vmatpush1.msra.mxu0 0.0
      %202 = vmatprep.subr.mxu0 0.0
      %203 = vmatpush1.msra.mxu0 0.0
      %204 = vmatprep.subr.mxu0 0.0
      %205 = vmatpush1.msra.mxu0 0.0
      %206 = vmatprep.subr.mxu0 0.0
      %207 = vmatpush1.msra.mxu0 0.0
      %208 = vmatprep.subr.mxu0 0.0
      %209 = vmatpush1.msra.mxu0 0.0
      %210 = vmatprep.subr.mxu0 0.0
      %211 = vmatpush1.msra.mxu0 0.0
      %212 = vmatprep.subr.mxu0 0.0
      %213 = vmatpush1.msra.mxu0 0.0
      %214 = vmatprep.subr.mxu0 0.0
      %215 = vmatpush1.msra.mxu0 0.0
      %216 = vmatprep.subr.mxu0 0.0
      %217 = vmatpush1.msra.mxu0 0.0
      %218 = vmatprep.subr.mxu0 0.0
      %219 = vmatpush1.msra.mxu0 0.0
      %220 = vmatprep.subr.mxu0 0.0
      %221 = vmatpush1.msra.mxu0 0.0
      %222 = vmatprep.subr.mxu0 0.0
      %223 = vmatpush1.msra.mxu0 0.0
      %224 = vmatprep.subr.mxu0 0.0
      %225 = vmatpush1.msra.mxu0 0.0
      %226 = vmatprep.subr.mxu0 0.0
      %227 = vmatpush1.msra.mxu0 0.0
      %228 = vmatprep.subr.mxu0 0.0
      %229 = vmatpush1.msra.mxu0 0.0
      %230 = vmatprep.subr.mxu0 0.0
      %231 = vmatpush1.msra.mxu0 0.0
      %232 = vmatprep.subr.mxu0 0.0
      %233 = vmatpush1.msra.mxu0 0.0
      %234 = vmatprep.subr.mxu0 0.0
      %235 = vmatpush1.msra.mxu0 0.0
      %236 = vmatprep.subr.mxu0 0.0
      %237 = vmatpush1.msra.mxu0 0.0
      %238 = vmatprep.subr.mxu0 0.0
      %239 = vmatpush1.msra.mxu0 0.0
      %240 = vmatprep.subr.mxu0 0.0
      %241 = vmatpush1.msra.mxu0 0.0
      %242 = vmatprep.subr.mxu0 0.0
      %243 = vmatpush1.msra.mxu0 0.0
      %244 = vmatprep.subr.mxu0 0.0
      %245 = vmatpush1.msra.mxu0 0.0
      %246 = vmatprep.mubr.f32.mxu0 0.0
      %247 = vmatmul.mubr.f32.gmra.mrb[0].mxu0 %v180
      %v248 = vpop.f32.mrb[0].mxu0
      %v249 = vadd.f32 %v176, %v248
      %v250 = vpop.f32.mrb[0].mxu0
      %251 = vdwg.mxu0
      %vm252 = vcmask 785408
      %253 = vst.msk [vmem:[%s165] sm:$0xff] %vm252, %v249
      %p254 = scmp.lt.s32.totalorder %s14, 1
      %s255 = scalar_select %p254, %s14, 1
      %s256 = smul.addr %s255, 8
      %s257 = scalar_lea.vmem %s3, %s256
      // Predicated region
      $region33: #{_forward_dense.9} parent=31 // pred_check
        %p258 = pneg %p100
      $region34: #{_forward_dense.9} parent=31 // pred_check_branch
        %260 = sbr.rel (%p258) target = $region36
      $region35: #{_forward_dense.9} parent=31 // pred_region
        _
      $region36: #{_forward_dense.9} parent=31 // pred_fallthru
        _
    $region32: #{_forward_dense.9} parent=5 // pred_fallthru
      _
    %p261 = scmp.le.s32.totalorder 2, %s9
    // Predicated region
    $region37: #{_forward_dense.9} parent=5 // pred_check
      %p262 = pneg %p261
    $region38: #{_forward_dense.9} parent=5 // pred_check_branch
      %264 = sbr.rel (%p262) target = $region40
    $region39: #{_forward_dense.9} parent=5 // pred_region
      %s265 = ssub.s32 %s9, 2
      // Predicated region
      $region41: #{_forward_dense.9} parent=39 // pred_check
        %p266 = pneg %p106
      $region42: #{_forward_dense.9} parent=39 // pred_check_branch
        %268 = sbr.rel (%p266) target = $region44
      $region43: #{_forward_dense.9} parent=39 // pred_region
        %p269 = scmp.lt.s32.totalorder %s15, 1
        %s270 = scalar_select %p269, %s15, 1
        %s271 = smul.addr %s270, 8
        %s272 = scalar_lea.vmem %s3, %s271
      $region44: #{_forward_dense.9} parent=39 // pred_fallthru
        _
    $region40: #{_forward_dense.9} parent=5 // pred_fallthru
      _
  $region6: #{_forward_dense.9} parent=0 // loop_footer
    %s13 = sadd.s32 1, %s9
  $region7: #{_forward_dense.9} parent=0 // loop_footer_branch
    %8 = sbr.rel target = $region3
  $region8: #{_forward_dense.9} parent=0 // loop_exit
    _

// kernel: _forward_dense.13
$region0: #{_forward_dense.13}
  #allocation0 [shape = 'u32[]', space=smem, size = 0x4, offset = 0x4, fixed_abs, tag = 'smem constant byte address 0x4 - core index']
  #allocation1 [shape = 'u32[144,128]{1,0:T(1,128)}', space=vmem, size = 0x12000, scoped, tag = 'internal scratch']
  %s0 = inlined_call_operand.vmem [shape: f32[16,32], index: 0, kind: input, shape index: {}]
  %s1 = inlined_call_operand.vmem [shape: f32[32,32], index: 1, kind: input, shape index: {}]
  %s2 = inlined_call_operand.vmem [shape: f32[1,32], index: 2, kind: input, shape index: {}]
  %s3 = inlined_call_operand.vmem [shape: f32[32,8], index: 3, kind: input, shape index: {}]
  %s4 = inlined_call_operand.vmem [shape: f32[1,8], index: 4, kind: input, shape index: {}]
  %s5 = inlined_call_operand.vmem [shape: f32[16,8], index: 5, kind: output, shape index: {}]
  %s6 = sld [smem:[#allocation0]]
  $region53: #{_forward_dense.13} parent=0
    _
  %s8 = ssub.s32 1, %s6
  %s9 = scalar_select 0, %s8, %s6
  loop: start=0, step=1, limit=4
  $region2: #{_forward_dense.13} parent=0 // loop_pre_header
    _
  $region3: #{_forward_dense.13} parent=0 // loop_header
    %s11 = sphi 0, %s15
    %p12 = scmp.ge.s32.totalorder %s11, 4
    %s21 = sphi 0, %s23
    %s24 = sphi 0, %s21
    %s25 = sphi 0, %s24
    %s41 = sphi 0, %s25
    %s45 = sphi 0, %s45
    %s47 = sphi 0, %s45
    %s48 = sphi 0, %s47
    %s62 = sphi 0, %s48
    %s66 = sphi 0, %s66
    %s68 = sphi 0, %s66
    %s69 = sphi 0, %s68
    %s83 = sphi 0, %s69
    %s87 = sphi 0, %s87
    %s89 = sphi 0, %s87
    %s90 = sphi 0, %s89
    %s104 = sphi 0, %s90
    %s108 = sphi 0, %s108
    %s110 = sphi 0, %s108
    %s111 = sphi 0, %s110
    %s125 = sphi 0, %s111
    %s131 = sphi 0, %s133
    %s134 = sphi 0, %s131
    %s135 = sphi 0, %s134
    %s151 = sphi 0, %s135
  $region4: #{_forward_dense.13} parent=0 // loop_header_branch
    %14 = sbr.rel (%p12) target = $region8
  $region5: #{_forward_dense.13} parent=0 // loop_body
    %s16 = ssub.s32 %s11, 1
    %s17 = ssub.s32 %s11, 2
    %s18 = sadd.s32 %s11, 1
    %s19 = ssub.s32 %s11, %s18
    %p20 = scmp.eq.s32.totalorder %s19, 0
    %s22 = sadd.s32 %s21, 1
    %s23 = scalar_select %p20, %s21, %s22
    %p26 = pneg %p20
    %p27 = scmp.eq.s32.totalorder %s11, 1
    %p28 = por %p26, %p27
    %p29 = scmp.ne.s32.totalorder %s21, %s24
    %p30 = scmp.eq.s32.totalorder %s11, 0
    %p31 = por %p29, %p30
    %p32 = scmp.ne.s32.totalorder %s21, %s24
    %p33 = scmp.eq.s32.totalorder %s16, 1
    %p34 = por %p32, %p33
    %p35 = scmp.ne.s32.totalorder %s24, %s25
    %p36 = scmp.eq.s32.totalorder %s16, 0
    %p37 = por %p35, %p36
    %p38 = scmp.ne.s32.totalorder %s24, %s25
    %p39 = scmp.eq.s32.totalorder %s17, 1
    %p40 = por %p38, %p39
    %p42 = scmp.ne.s32.totalorder %s25, %s41
    %p43 = scmp.eq.s32.totalorder %s17, 0
    %p44 = por %p42, %p43
    %s46 = sadd.s32 %s45, 1
    %p49 = scmp.eq.s32.totalorder %s11, 1
    %p50 = scmp.ne.s32.totalorder %s45, %s47
    %p51 = scmp.eq.s32.totalorder %s11, 0
    %p52 = por %p50, %p51
    %p53 = scmp.ne.s32.totalorder %s45, %s47
    %p54 = scmp.eq.s32.totalorder %s16, 1
    %p55 = por %p53, %p54
    %p56 = scmp.ne.s32.totalorder %s47, %s48
    %p57 = scmp.eq.s32.totalorder %s16, 0
    %p58 = por %p56, %p57
    %p59 = scmp.ne.s32.totalorder %s47, %s48
    %p60 = scmp.eq.s32.totalorder %s17, 1
    %p61 = por %p59, %p60
    %p63 = scmp.ne.s32.totalorder %s48, %s62
    %p64 = scmp.eq.s32.totalorder %s17, 0
    %p65 = por %p63, %p64
    %s67 = sadd.s32 %s66, 1
    %p70 = scmp.eq.s32.totalorder %s11, 1
    %p71 = scmp.ne.s32.totalorder %s66, %s68
    %p72 = scmp.eq.s32.totalorder %s11, 0
    %p73 = por %p71, %p72
    %p74 = scmp.ne.s32.totalorder %s66, %s68
    %p75 = scmp.eq.s32.totalorder %s16, 1
    %p76 = por %p74, %p75
    %p77 = scmp.ne.s32.totalorder %s68, %s69
    %p78 = scmp.eq.s32.totalorder %s16, 0
    %p79 = por %p77, %p78
    %p80 = scmp.ne.s32.totalorder %s68, %s69
    %p81 = scmp.eq.s32.totalorder %s17, 1
    %p82 = por %p80, %p81
    %p84 = scmp.ne.s32.totalorder %s69, %s83
    %p85 = scmp.eq.s32.totalorder %s17, 0
    %p86 = por %p84, %p85
    %s88 = sadd.s32 %s87, 1
    %p91 = scmp.eq.s32.totalorder %s11, 1
    %p92 = scmp.ne.s32.totalorder %s87, %s89
    %p93 = scmp.eq.s32.totalorder %s11, 0
    %p94 = por %p92, %p93
    %p95 = scmp.ne.s32.totalorder %s87, %s89
    %p96 = scmp.eq.s32.totalorder %s16, 1
    %p97 = por %p95, %p96
    %p98 = scmp.ne.s32.totalorder %s89, %s90
    %p99 = scmp.eq.s32.totalorder %s16, 0
    %p100 = por %p98, %p99
    %p101 = scmp.ne.s32.totalorder %s89, %s90
    %p102 = scmp.eq.s32.totalorder %s17, 1
    %p103 = por %p101, %p102
    %p105 = scmp.ne.s32.totalorder %s90, %s104
    %p106 = scmp.eq.s32.totalorder %s17, 0
    %p107 = por %p105, %p106
    %s109 = sadd.s32 %s108, 1
    %p112 = scmp.eq.s32.totalorder %s11, 1
    %p113 = scmp.ne.s32.totalorder %s108, %s110
    %p114 = scmp.eq.s32.totalorder %s11, 0
    %p115 = por %p113, %p114
    %p116 = scmp.ne.s32.totalorder %s108, %s110
    %p117 = scmp.eq.s32.totalorder %s16, 1
    %p118 = por %p116, %p117
    %p119 = scmp.ne.s32.totalorder %s110, %s111
    %p120 = scmp.eq.s32.totalorder %s16, 0
    %p121 = por %p119, %p120
    %p122 = scmp.ne.s32.totalorder %s110, %s111
    %p123 = scmp.eq.s32.totalorder %s17, 1
    %p124 = por %p122, %p123
    %p126 = scmp.ne.s32.totalorder %s111, %s125
    %p127 = scmp.eq.s32.totalorder %s17, 0
    %p128 = por %p126, %p127
    %s129 = ssub.s32 %s11, %s18
    %p130 = scmp.eq.s32.totalorder %s129, 0
    %s132 = sadd.s32 %s131, 1
    %s133 = scalar_select %p130, %s131, %s132
    %p136 = pneg %p130
    %p137 = scmp.eq.s32.totalorder %s11, 1
    %p138 = por %p136, %p137
    %p139 = scmp.ne.s32.totalorder %s131, %s134
    %p140 = scmp.eq.s32.totalorder %s11, 0
    %p141 = por %p139, %p140
    %p142 = scmp.ne.s32.totalorder %s131, %s134
    %p143 = scmp.eq.s32.totalorder %s16, 1
    %p144 = por %p142, %p143
    %p145 = scmp.ne.s32.totalorder %s134, %s135
    %p146 = scmp.eq.s32.totalorder %s16, 0
    %p147 = por %p145, %p146
    %p148 = scmp.ne.s32.totalorder %s134, %s135
    %p149 = scmp.eq.s32.totalorder %s17, 1
    %p150 = por %p148, %p149
    %p152 = scmp.ne.s32.totalorder %s135, %s151
    %p153 = scmp.eq.s32.totalorder %s17, 0
    %p154 = por %p152, %p153
    %p155 = scmp.le.s32.totalorder 1, %s11
    %p156 = scmp.lt.s32.totalorder %s11, 3
    %p157 = pnand %p155, %p156
    %p158 = pneg %p157
    // Predicated region
    $region9: #{_forward_dense.13} parent=5 // pred_check
      _
    $region10: #{_forward_dense.13} parent=5 // pred_check_branch
      %160 = sbr.rel (%p157) target = $region12
    $region11: #{_forward_dense.13} parent=5 // pred_region
      %s161 = ssub.s32 %s11, 1
      // Predicated region
      $region13: #{_forward_dense.13} parent=11 // pred_check
        %p162 = pneg %p58
      $region14: #{_forward_dense.13} parent=11 // pred_check_branch
        %164 = sbr.rel (%p162) target = $region16
      $region15: #{_forward_dense.13} parent=11 // pred_region
        _
      $region16: #{_forward_dense.13} parent=11 // pred_fallthru
        _
      // Predicated region
      $region17: #{_forward_dense.13} parent=11 // pred_check
        %p165 = pneg %p79
      $region18: #{_forward_dense.13} parent=11 // pred_check_branch
        %167 = sbr.rel (%p165) target = $region20
      $region19: #{_forward_dense.13} parent=11 // pred_region
        _
      $region20: #{_forward_dense.13} parent=11 // pred_fallthru
        _
      // Predicated region
      $region21: #{_forward_dense.13} parent=11 // pred_check
        %p168 = pneg %p100
      $region22: #{_forward_dense.13} parent=11 // pred_check_branch
        %170 = sbr.rel (%p168) target = $region24
      $region23: #{_forward_dense.13} parent=11 // pred_region
        _
      $region24: #{_forward_dense.13} parent=11 // pred_fallthru
        _
      // Predicated region
      $region25: #{_forward_dense.13} parent=11 // pred_check
        %p171 = pneg %p121
      $region26: #{_forward_dense.13} parent=11 // pred_check_branch
        %173 = sbr.rel (%p171) target = $region28
      $region27: #{_forward_dense.13} parent=11 // pred_region
        _
      $region28: #{_forward_dense.13} parent=11 // pred_fallthru
        _
    $region12: #{_forward_dense.13} parent=5 // pred_fallthru
      _
    %p174 = scmp.lt.s32.totalorder %s11, 2
    // Predicated region
    $region29: #{_forward_dense.13} parent=5 // pred_check
      %p175 = pneg %p174
    $region30: #{_forward_dense.13} parent=5 // pred_check_branch
      %177 = sbr.rel (%p175) target = $region32
    $region31: #{_forward_dense.13} parent=5 // pred_region
      // Predicated region
      $region33: #{_forward_dense.13} parent=31 // pred_check
        %p178 = pneg %p31
      $region34: #{_forward_dense.13} parent=31 // pred_check_branch
        %180 = sbr.rel (%p178) target = $region36
      $region35: #{_forward_dense.13} parent=31 // pred_region
        %p181 = scmp.lt.s32.totalorder %s11, 1
        %s182 = scalar_select %p181, %s11, 1
        %s183 = smul.addr %s182, 8
        %s184 = scalar_lea.vmem %s0, %s183
      $region36: #{_forward_dense.13} parent=31 // pred_fallthru
        _
    $region32: #{_forward_dense.13} parent=5 // pred_fallthru
      _
    %p185 = scmp.le.s32.totalorder 1, %s11
    %p186 = scmp.lt.s32.totalorder %s11, 3
    %p187 = pnand %p185, %p186
    %p188 = pneg %p187
    // Predicated region
    $region37: #{_forward_dense.13} parent=5 // pred_check
      _
    $region38: #{_forward_dense.13} parent=5 // pred_check_branch
      %190 = sbr.rel (%p187) target = $region40
    $region39: #{_forward_dense.13} parent=5 // pred_region
      %s191 = ssub.s32 %s11, 1
      %p192 = scmp.lt.s32.totalorder %s16, 1
      %s193 = scalar_select %p192, %s16, 1
      %s194 = smul.addr %s193, 8
      %s195 = scalar_lea.vmem %s0, %s194
      %p196 = pneg %p37
      %p197 = pneg %p34
      %p198 = pneg %p58
      %p199 = pneg %p55
      %p200 = pneg %p79
      %p201 = pneg %p76
      %p202 = pneg %p100
      %p203 = pneg %p97
      %p204 = pneg %p121
      %p205 = pneg %p118
      %p206 = pneg %p147
      %p207 = pneg %p144
      %p208 = scmp.lt.s32.totalorder %s16, 1
      %s209 = scalar_select %p208, %s16, 1
      %s210 = smul.addr %s209, 8
      %s211 = scalar_lea.vmem %s5, %s210
      %p212 = scmp.lt.s32.totalorder %s16, 1
      %s213 = scalar_select %p212, %s16, 1
      %s214 = smul.addr %s213, 8
      %s215 = scalar_lea.vmem %s0, %s214
      %p216 = scmp.lt.s32.totalorder %s16, 1
      %s217 = scalar_select %p216, %s16, 1
      %s218 = smul.addr %s217, 8
      %s219 = scalar_lea.vmem %s5, %s218
      %v220 = vld [vmem:[%s215] sm:$0xff]
      %v221 = vld [vmem:[%s1] sm:$0xff]
      %v222 = vld [vmem:[%s1 + $0x8] sm:$0xff]
      %v223 = vld [vmem:[%s1 + $0x10] sm:$0xff]
      %v224 = vld [vmem:[%s1 + $0x18] sm:$0xff]
      %v225 = vld [vmem:[%s2] sm:$0x1]
      %v227 = vlaneseq
      %v228 = vshrl.u32 %v227, 7
      %v229 = vsub.s32 0, %v228
      %v230 = vrot.slane %v225, %v229
      %vm232 = vcmask 261120
      %v234 = vsel %vm232, %v220, 0
      %236 = vmatprep.subr.mxu0 0.0
      %237 = vmatpush1.msra.mxu0 %v221
      %238 = vmatprep.subr.mxu0 0.0
      %239 = vmatpush1.msra.mxu0 %v222
      %240 = vmatprep.subr.mxu0 0.0
      %241 = vmatpush1.msra.mxu0 %v223
      %242 = vmatprep.subr.mxu0 0.0
      %243 = vmatpush1.msra.mxu0 %v224
      %244 = vmatprep.subr.mxu0 0.0
      %245 = vmatpush1.msra.mxu0 0.0
      %246 = vmatprep.subr.mxu0 0.0
      %247 = vmatpush1.msra.mxu0 0.0
      %248 = vmatprep.subr.mxu0 0.0
      %249 = vmatpush1.msra.mxu0 0.0
      %250 = vmatprep.subr.mxu0 0.0
      %251 = vmatpush1.msra.mxu0 0.0
      %252 = vmatprep.subr.mxu0 0.0
      %253 = vmatpush1.msra.mxu0 0.0
      %254 = vmatprep.subr.mxu0 0.0
      %255 = vmatpush1.msra.mxu0 0.0
      %256 = vmatprep.subr.mxu0 0.0
      %257 = vmatpush1.msra.mxu0 0.0
      %258 = vmatprep.subr.mxu0 0.0
      %259 = vmatpush1.msra.mxu0 0.0
      %260 = vmatprep.subr.mxu0 0.0
      %261 = vmatpush1.msra.mxu0 0.0
      %262 = vmatprep.subr.mxu0 0.0
      %263 = vmatpush1.msra.mxu0 0.0
      %264 = vmatprep.subr.mxu0 0.0
      %265 = vmatpush1.msra.mxu0 0.0
      %266 = vmatprep.subr.mxu0 0.0
      %267 = vmatpush1.msra.mxu0 0.0
      %268 = vmatprep.subr.mxu0 0.0
      %269 = vmatpush1.msra.mxu0 0.0
      %270 = vmatprep.subr.mxu0 0.0
      %271 = vmatpush1.msra.mxu0 0.0
      %272 = vmatprep.subr.mxu0 0.0
      %273 = vmatpush1.msra.mxu0 0.0
      %274 = vmatprep.subr.mxu0 0.0
      %275 = vmatpush1.msra.mxu0 0.0
      %276 = vmatprep.subr.mxu0 0.0
      %277 = vmatpush1.msra.mxu0 0.0
      %278 = vmatprep.subr.mxu0 0.0
      %279 = vmatpush1.msra.mxu0 0.0
      %280 = vmatprep.subr.mxu0 0.0
      %281 = vmatpush1.msra.mxu0 0.0
      %282 = vmatprep.subr.mxu0 0.0
      %283 = vmatpush1.msra.mxu0 0.0
      %284 = vmatprep.subr.mxu0 0.0
      %285 = vmatpush1.msra.mxu0 0.0
      %286 = vmatprep.subr.mxu0 0.0
      %287 = vmatpush1.msra.mxu0 0.0
      %288 = vmatprep.subr.mxu0 0.0
      %289 = vmatpush1.msra.mxu0 0.0
      %290 = vmatprep.subr.mxu0 0.0
      %291 = vmatpush1.msra.mxu0 0.0
      %292 = vmatprep.subr.mxu0 0.0
      %293 = vmatpush1.msra.mxu0 0.0
      %294 = vmatprep.subr.mxu0 0.0
      %295 = vmatpush1.msra.mxu0 0.0
      %296 = vmatprep.subr.mxu0 0.0
      %297 = vmatpush1.msra.mxu0 0.0
      %298 = vmatprep.subr.mxu0 0.0
      %299 = vmatpush1.msra.mxu0 0.0
      %300 = vmatprep.mubr.f32.mxu0 0.0
      %301 = vmatmul.mubr.f32.gmra.mrb[0].mxu0 %v234
      %v302 = vpop.f32.mrb[0].mxu0
      %v303 = vadd.f32 %v230, %v302
      %v304 = vpop.f32.mrb[0].mxu0
      %305 = vdwg.mxu0
      %v306 = vmax.f32 %v303, 0.0
      %v307 = vld [vmem:[%s3] sm:$0xff]
      %v308 = vld [vmem:[%s3 + $0x8] sm:$0xff]
      %v309 = vld [vmem:[%s3 + $0x10] sm:$0xff]
      %v310 = vld [vmem:[%s3 + $0x18] sm:$0xff]
      %v311 = vld [vmem:[%s4] sm:$0x1]
      %v313 = vlaneseq
      %v314 = vshrl.u32 %v313, 7
      %v315 = vsub.s32 0, %v314
      %v316 = vrot.slane %v311, %v315
      %v319 = vsel %vm232, %v306, 0
      %321 = vmatprep.subr.mxu0 0.0
      %322 = vmatpush1.msra.mxu0 %v307
      %323 = vmatprep.subr.mxu0 0.0
      %324 = vmatpush1.msra.mxu0 %v308
      %325 = vmatprep.subr.mxu0 0.0
      %326 = vmatpush1.msra.mxu0 %v309
      %327 = vmatprep.subr.mxu0 0.0
      %328 = vmatpush1.msra.mxu0 %v310
      %329 = vmatprep.subr.mxu0 0.0
      %330 = vmatpush1.msra.mxu0 0.0
      %331 = vmatprep.subr.mxu0 0.0
      %332 = vmatpush1.msra.mxu0 0.0
      %333 = vmatprep.subr.mxu0 0.0
      %334 = vmatpush1.msra.mxu0 0.0
      %335 = vmatprep.subr.mxu0 0.0
      %336 = vmatpush1.msra.mxu0 0.0
      %337 = vmatprep.subr.mxu0 0.0
      %338 = vmatpush1.msra.mxu0 0.0
      %339 = vmatprep.subr.mxu0 0.0
      %340 = vmatpush1.msra.mxu0 0.0
      %341 = vmatprep.subr.mxu0 0.0
      %342 = vmatpush1.msra.mxu0 0.0
      %343 = vmatprep.subr.mxu0 0.0
      %344 = vmatpush1.msra.mxu0 0.0
      %345 = vmatprep.subr.mxu0 0.0
      %346 = vmatpush1.msra.mxu0 0.0
      %347 = vmatprep.subr.mxu0 0.0
      %348 = vmatpush1.msra.mxu0 0.0
      %349 = vmatprep.subr.mxu0 0.0
      %350 = vmatpush1.msra.mxu0 0.0
      %351 = vmatprep.subr.mxu0 0.0
      %352 = vmatpush1.msra.mxu0 0.0
      %353 = vmatprep.subr.mxu0 0.0
      %354 = vmatpush1.msra.mxu0 0.0
      %355 = vmatprep.subr.mxu0 0.0
      %356 = vmatpush1.msra.mxu0 0.0
      %357 = vmatprep.subr.mxu0 0.0
      %358 = vmatpush1.msra.mxu0 0.0
      %359 = vmatprep.subr.mxu0 0.0
      %360 = vmatpush1.msra.mxu0 0.0
      %361 = vmatprep.subr.mxu0 0.0
      %362 = vmatpush1.msra.mxu0 0.0
      %363 = vmatprep.subr.mxu0 0.0
      %364 = vmatpush1.msra.mxu0 0.0
      %365 = vmatprep.subr.mxu0 0.0
      %366 = vmatpush1.msra.mxu0 0.0
      %367 = vmatprep.subr.mxu0 0.0
      %368 = vmatpush1.msra.mxu0 0.0
      %369 = vmatprep.subr.mxu0 0.0
      %370 = vmatpush1.msra.mxu0 0.0
      %371 = vmatprep.subr.mxu0 0.0
      %372 = vmatpush1.msra.mxu0 0.0
      %373 = vmatprep.subr.mxu0 0.0
      %374 = vmatpush1.msra.mxu0 0.0
      %375 = vmatprep.subr.mxu0 0.0
      %376 = vmatpush1.msra.mxu0 0.0
      %377 = vmatprep.subr.mxu0 0.0
      %378 = vmatpush1.msra.mxu0 0.0
      %379 = vmatprep.subr.mxu0 0.0
      %380 = vmatpush1.msra.mxu0 0.0
      %381 = vmatprep.subr.mxu0 0.0
      %382 = vmatpush1.msra.mxu0 0.0
      %383 = vmatprep.subr.mxu0 0.0
      %384 = vmatpush1.msra.mxu0 0.0
      %385 = vmatprep.mubr.f32.mxu0 0.0
      %386 = vmatmul.mubr.f32.gmra.mrb[0].mxu0 %v319
      %v387 = vpop.f32.mrb[0].mxu0
      %v388 = vadd.f32 %v316, %v387
      %v389 = vpop.f32.mrb[0].mxu0
      %390 = vdwg.mxu0
      %vm391 = vcmask 64512
      %392 = vst.msk [vmem:[%s219] sm:$0xff] %vm391, %v388
      %p393 = scmp.lt.s32.totalorder %s16, 1
      %s394 = scalar_select %p393, %s16, 1
      %s395 = smul.addr %s394, 8
      %s396 = scalar_lea.vmem %s5, %s395
      // Predicated region
      $region41: #{_forward_dense.13} parent=39 // pred_check
        %p397 = pneg %p144
      $region42: #{_forward_dense.13} parent=39 // pred_check_branch
        %399 = sbr.rel (%p397) target = $region44
      $region43: #{_forward_dense.13} parent=39 // pred_region
        _
      $region44: #{_forward_dense.13} parent=39 // pred_fallthru
        _
    $region40: #{_forward_dense.13} parent=5 // pred_fallthru
      _
    %p400 = scmp.le.s32.totalorder 2, %s11
    // Predicated region
    $region45: #{_forward_dense.13} parent=5 // pred_check
      %p401 = pneg %p400
    $region46: #{_forward_dense.13} parent=5 // pred_check_branch
      %403 = sbr.rel (%p401) target = $region48
    $region47: #{_forward_dense.13} parent=5 // pred_region
      %s404 = ssub.s32 %s11, 2
      // Predicated region
      $region49: #{_forward_dense.13} parent=47 // pred_check
        %p405 = pneg %p150
      $region50: #{_forward_dense.13} parent=47 // pred_check_branch
        %407 = sbr.rel (%p405) target = $region52
      $region51: #{_forward_dense.13} parent=47 // pred_region
        %p408 = scmp.lt.s32.totalorder %s17, 1
        %s409 = scalar_select %p408, %s17, 1
        %s410 = smul.addr %s409, 8
        %s411 = scalar_lea.vmem %s5, %s410
      $region52: #{_forward_dense.13} parent=47 // pred_fallthru
        _
    $region48: #{_forward_dense.13} parent=5 // pred_fallthru
      _
  $region6: #{_forward_dense.13} parent=0 // loop_footer
    %s15 = sadd.s32 1, %s11
  $region7: #{_forward_dense.13} parent=0 // loop_footer_branch
    %10 = sbr.rel target = $region3
  $region8: #{_forward_dense.13} parent=0 // loop_exit
    _

// kernel: _forward_dense.12
$region0: #{_forward_dense.12}
  #allocation0 [shape = 'u32[]', space=smem, size = 0x4, offset = 0x4, fixed_abs, tag = 'smem constant byte address 0x4 - core index']
  #allocation1 [shape = 'u32[144,128]{1,0:T(1,128)}', space=vmem, size = 0x12000, scoped, tag = 'internal scratch']
  %s0 = inlined_call_operand.vmem [shape: f32[2,8,96], index: 0, kind: input, shape index: {}, may-alias: {0,1}]
  %s1 = inlined_call_operand.vmem [shape: f32[2,8,96], index: 1, kind: input, shape index: {}, may-alias: {0,1}]
  %s2 = inlined_call_operand.vmem [shape: f32[2,8,8,16], index: 2, kind: input, shape index: {}]
  %s3 = inlined_call_operand.vmem [shape: f32[2,8,32], index: 3, kind: input, shape index: {}]
  %s4 = inlined_call_operand.vmem [shape: f32[2,1,8], index: 4, kind: input, shape index: {}]
  %s5 = inlined_call_operand.vmem [shape: f32[2,8,1], index: 5, kind: input, shape index: {}]
  %s6 = inlined_call_operand.vmem [shape: f32[2,1,128], index: 6, kind: input, shape index: {}]
  %s7 = inlined_call_operand.vmem [shape: f32[16,64], index: 7, kind: input, shape index: {}]
  %s8 = inlined_call_operand.vmem [shape: f32[1,64], index: 8, kind: input, shape index: {}]
  %s9 = inlined_call_operand.vmem [shape: f32[32,16], index: 9, kind: input, shape index: {}]
  %s10 = inlined_call_operand.vmem [shape: f32[1,16], index: 10, kind: input, shape index: {}]
  %s11 = inlined_call_operand.vmem [shape: f32[32,32], index: 11, kind: input, shape index: {}]
  %s12 = inlined_call_operand.vmem [shape: f32[1,32], index: 12, kind: input, shape index: {}]
  %s13 = inlined_call_operand.vmem [shape: f32[32,64], index: 13, kind: input, shape index: {}]
  %s14 = inlined_call_operand.vmem [shape: f32[1,64], index: 14, kind: input, shape index: {}]
  %s15 = inlined_call_operand.vmem [shape: f32[64,32], index: 15, kind: input, shape index: {}]
  %s16 = inlined_call_operand.vmem [shape: f32[1,32], index: 16, kind: input, shape index: {}]
  %s17 = inlined_call_operand.vmem [shape: f32[16,32], index: 17, kind: input, shape index: {}]
  %s18 = inlined_call_operand.vmem [shape: f32[1,32], index: 18, kind: input, shape index: {}]
  %s19 = inlined_call_operand.vmem [shape: f32[32,16], index: 19, kind: input, shape index: {}]
  %s20 = inlined_call_operand.vmem [shape: f32[1,16], index: 20, kind: input, shape index: {}]
  %s21 = inlined_call_operand.vmem [shape: f32[4,32], index: 21, kind: input, shape index: {}]
  %s22 = inlined_call_operand.vmem [shape: f32[4,16], index: 22, kind: input, shape index: {}]
  %s23 = inlined_call_operand.vmem [shape: f32[2,8,32], index: 23, kind: output, shape index: {0}]
  %s24 = inlined_call_operand.hbm [shape: f32[2,8,8,16], index: 24, kind: output, shape index: {1}]
  %25 = xla_tuple %s23, %s24
  %s26 = sld [smem:[#allocation0]]
  $region133: #{_forward_dense.12} parent=0
    _
  %s28 = ssub.s32 1, %s26
  %s29 = scalar_select 0, %s28, %s26
  $region1: #{_forward_dense.12} parent=0
    #allocation2 [shape = 'u8[65536]{0}', space=vmem, size = 0x10000, scoped, tag = 'output window, operand 1']
    #allocation3 [shape = 's32[2]{0}', space=sflag, size = 0x8, scoped, tag = 'scoped memory for _forward_dense.12']
    %30 = vsyncpa [#allocation3], 0
    %s31 = scalar_lea.sflag [#allocation3], 1
    %32 = vsyncpa %s31, 0
    loop: start=0, step=1, limit=4
    $region2: #{_forward_dense.12} parent=1 // loop_pre_header
      _
    $region3: #{_forward_dense.12} parent=1 // loop_header
      %s34 = sphi 0, %s38
      %p35 = scmp.ge.s32.totalorder %s34, 4
      %s41 = sphi 0, %s53
      %s42 = sphi 0, %s49
      %s43 = sphi 0, %s41
      %s44 = sphi 0, %s42
      %s45 = sphi 0, %s43
      %s46 = sphi 0, %s44
      %s58 = sphi 0, %s60
      %s61 = sphi 0, %s58
      %s62 = sphi 0, %s61
      %s78 = sphi 0, %s62
      %s84 = sphi 0, %s86
      %s87 = sphi 0, %s84
      %s88 = sphi 0, %s87
      %s104 = sphi 0, %s88
      %s112 = sphi 0, %s114
      %s115 = sphi 0, %s112
      %s116 = sphi 0, %s115
      %s132 = sphi 0, %s116
      %s140 = sphi 0, %s142
      %s143 = sphi 0, %s140
      %s144 = sphi 0, %s143
      %s160 = sphi 0, %s144
      %s166 = sphi 0, %s168
      %s169 = sphi 0, %s166
      %s170 = sphi 0, %s169
      %s186 = sphi 0, %s170
      %s194 = sphi 0, %s196
      %s197 = sphi 0, %s194
      %s198 = sphi 0, %s197
      %s214 = sphi 0, %s198
      %s220 = sphi 0, %s222
      %s223 = sphi 0, %s220
      %s224 = sphi 0, %s223
      %s240 = sphi 0, %s224
      %s244 = sphi 0, %s244
      %s246 = sphi 0, %s244
      %s247 = sphi 0, %s246
      %s261 = sphi 0, %s247
      %s265 = sphi 0, %s265
      %s267 = sphi 0, %s265
      %s268 = sphi 0, %s267
      %s282 = sphi 0, %s268
      %s286 = sphi 0, %s286
      %s288 = sphi 0, %s286
      %s289 = sphi 0, %s288
      %s303 = sphi 0, %s289
      %s307 = sphi 0, %s307
      %s309 = sphi 0, %s307
      %s310 = sphi 0, %s309
      %s324 = sphi 0, %s310
      %s328 = sphi 0, %s328
      %s330 = sphi 0, %s328
      %s331 = sphi 0, %s330
      %s345 = sphi 0, %s331
      %s349 = sphi 0, %s349
      %s351 = sphi 0, %s349
      %s352 = sphi 0, %s351
      %s366 = sphi 0, %s352
      %s370 = sphi 0, %s370
      %s372 = sphi 0, %s370
      %s373 = sphi 0, %s372
      %s387 = sphi 0, %s373
      %s391 = sphi 0, %s391
      %s393 = sphi 0, %s391
      %s394 = sphi 0, %s393
      %s408 = sphi 0, %s394
      %s412 = sphi 0, %s412
      %s414 = sphi 0, %s412
      %s415 = sphi 0, %s414
      %s429 = sphi 0, %s415
      %s433 = sphi 0, %s433
      %s435 = sphi 0, %s433
      %s436 = sphi 0, %s435
      %s450 = sphi 0, %s436
      %s454 = sphi 0, %s454
      %s456 = sphi 0, %s454
      %s457 = sphi 0, %s456
      %s471 = sphi 0, %s457
      %s475 = sphi 0, %s475
      %s477 = sphi 0, %s475
      %s478 = sphi 0, %s477
      %s492 = sphi 0, %s478
      %s496 = sphi 0, %s496
      %s498 = sphi 0, %s496
      %s499 = sphi 0, %s498
      %s513 = sphi 0, %s499
      %s517 = sphi 0, %s517
      %s519 = sphi 0, %s517
      %s520 = sphi 0, %s519
      %s534 = sphi 0, %s520
      %s538 = sphi 0, %s538
      %s540 = sphi 0, %s538
      %s541 = sphi 0, %s540
      %s555 = sphi 0, %s541
      %s559 = sphi 0, %s559
      %s561 = sphi 0, %s559
      %s562 = sphi 0, %s561
      %s576 = sphi 0, %s562
      %s584 = sphi 0, %s586
      %s587 = sphi 0, %s584
      %s588 = sphi 0, %s587
      %s604 = sphi 0, %s588
      %s612 = sphi 0, %s614
      %s615 = sphi 0, %s612
      %s616 = sphi 0, %s615
      %s632 = sphi 0, %s616
    $region4: #{_forward_dense.12} parent=1 // loop_header_branch
      %37 = sbr.rel (%p35) target = $region8
    $region5: #{_forward_dense.12} parent=1 // loop_body
      %s39 = ssub.s32 %s34, 1
      %s40 = ssub.s32 %s34, 2
      %s47 = sadd.s32 1, %s42
      %p48 = scmp.ge.s32.totalorder %s47, 1
      %s49 = scalar_select %p48, 0, %s47
      %s50 = sadd.s32 1, %s41
      %s51 = scalar_select %p48, %s50, %s41
      %p52 = scmp.ge.s32.totalorder %s51, 2
      %s53 = scalar_select %p52, 0, %s51
      %s54 = ssub.s32 %s41, %s53
      %s55 = ssub.s32 %s42, %s49
      %s56 = sor.u32 %s54, %s55
      %p57 = scmp.eq.s32.totalorder %s56, 0
      %s59 = sadd.s32 %s58, 1
      %s60 = scalar_select %p57, %s58, %s59
      %p63 = pneg %p57
      %p64 = scmp.eq.s32.totalorder %s34, 1
      %p65 = por %p63, %p64
      %p66 = scmp.ne.s32.totalorder %s58, %s61
      %p67 = scmp.eq.s32.totalorder %s34, 0
      %p68 = por %p66, %p67
      %p69 = scmp.ne.s32.totalorder %s58, %s61
      %p70 = scmp.eq.s32.totalorder %s39, 1
      %p71 = por %p69, %p70
      %p72 = scmp.ne.s32.totalorder %s61, %s62
      %p73 = scmp.eq.s32.totalorder %s39, 0
      %p74 = por %p72, %p73
      %p75 = scmp.ne.s32.totalorder %s61, %s62
      %p76 = scmp.eq.s32.totalorder %s40, 1
      %p77 = por %p75, %p76
      %p79 = scmp.ne.s32.totalorder %s62, %s78
      %p80 = scmp.eq.s32.totalorder %s40, 0
      %p81 = por %p79, %p80
      %s82 = ssub.s32 %s41, %s53
      %p83 = scmp.eq.s32.totalorder %s82, 0
      %s85 = sadd.s32 %s84, 1
      %s86 = scalar_select %p83, %s84, %s85
      %p89 = pneg %p83
      %p90 = scmp.eq.s32.totalorder %s34, 1
      %p91 = por %p89, %p90
      %p92 = scmp.ne.s32.totalorder %s84, %s87
      %p93 = scmp.eq.s32.totalorder %s34, 0
      %p94 = por %p92, %p93
      %p95 = scmp.ne.s32.totalorder %s84, %s87
      %p96 = scmp.eq.s32.totalorder %s39, 1
      %p97 = por %p95, %p96
      %p98 = scmp.ne.s32.totalorder %s87, %s88
      %p99 = scmp.eq.s32.totalorder %s39, 0
      %p100 = por %p98, %p99
      %p101 = scmp.ne.s32.totalorder %s87, %s88
      %p102 = scmp.eq.s32.totalorder %s40, 1
      %p103 = por %p101, %p102
      %p105 = scmp.ne.s32.totalorder %s88, %s104
      %p106 = scmp.eq.s32.totalorder %s40, 0
      %p107 = por %p105, %p106
      %s108 = ssub.s32 %s41, %s53
      %s109 = ssub.s32 %s42, %s49
      %s110 = sor.u32 %s108, %s109
      %p111 = scmp.eq.s32.totalorder %s110, 0
      %s113 = sadd.s32 %s112, 1
      %s114 = scalar_select %p111, %s112, %s113
      %p117 = pneg %p111
      %p118 = scmp.eq.s32.totalorder %s34, 1
      %p119 = por %p117, %p118
      %p120 = scmp.ne.s32.totalorder %s112, %s115
      %p121 = scmp.eq.s32.totalorder %s34, 0
      %p122 = por %p120, %p121
      %p123 = scmp.ne.s32.totalorder %s112, %s115
      %p124 = scmp.eq.s32.totalorder %s39, 1
      %p125 = por %p123, %p124
      %p126 = scmp.ne.s32.totalorder %s115, %s116
      %p127 = scmp.eq.s32.totalorder %s39, 0
      %p128 = por %p126, %p127
      %p129 = scmp.ne.s32.totalorder %s115, %s116
      %p130 = scmp.eq.s32.totalorder %s40, 1
      %p131 = por %p129, %p130
      %p133 = scmp.ne.s32.totalorder %s116, %s132
      %p134 = scmp.eq.s32.totalorder %s40, 0
      %p135 = por %p133, %p134
      %s136 = ssub.s32 %s41, %s53
      %s137 = ssub.s32 %s42, %s49
      %s138 = sor.u32 %s136, %s137
      %p139 = scmp.eq.s32.totalorder %s138, 0
      %s141 = sadd.s32 %s140, 1
      %s142 = scalar_select %p139, %s140, %s141
      %p145 = pneg %p139
      %p146 = scmp.eq.s32.totalorder %s34, 1
      %p147 = por %p145, %p146
      %p148 = scmp.ne.s32.totalorder %s140, %s143
      %p149 = scmp.eq.s32.totalorder %s34, 0
      %p150 = por %p148, %p149
      %p151 = scmp.ne.s32.totalorder %s140, %s143
      %p152 = scmp.eq.s32.totalorder %s39, 1
      %p153 = por %p151, %p152
      %p154 = scmp.ne.s32.totalorder %s143, %s144
      %p155 = scmp.eq.s32.totalorder %s39, 0
      %p156 = por %p154, %p155
      %p157 = scmp.ne.s32.totalorder %s143, %s144
      %p158 = scmp.eq.s32.totalorder %s40, 1
      %p159 = por %p157, %p158
      %p161 = scmp.ne.s32.totalorder %s144, %s160
      %p162 = scmp.eq.s32.totalorder %s40, 0
      %p163 = por %p161, %p162
      %s164 = ssub.s32 %s41, %s53
      %p165 = scmp.eq.s32.totalorder %s164, 0
      %s167 = sadd.s32 %s166, 1
      %s168 = scalar_select %p165, %s166, %s167
      %p171 = pneg %p165
      %p172 = scmp.eq.s32.totalorder %s34, 1
      %p173 = por %p171, %p172
      %p174 = scmp.ne.s32.totalorder %s166, %s169
      %p175 = scmp.eq.s32.totalorder %s34, 0
      %p176 = por %p174, %p175
      %p177 = scmp.ne.s32.totalorder %s166, %s169
      %p178 = scmp.eq.s32.totalorder %s39, 1
      %p179 = por %p177, %p178
      %p180 = scmp.ne.s32.totalorder %s169, %s170
      %p181 = scmp.eq.s32.totalorder %s39, 0
      %p182 = por %p180, %p181
      %p183 = scmp.ne.s32.totalorder %s169, %s170
      %p184 = scmp.eq.s32.totalorder %s40, 1
      %p185 = por %p183, %p184
      %p187 = scmp.ne.s32.totalorder %s170, %s186
      %p188 = scmp.eq.s32.totalorder %s40, 0
      %p189 = por %p187, %p188
      %s190 = ssub.s32 %s41, %s53
      %s191 = ssub.s32 %s42, %s49
      %s192 = sor.u32 %s190, %s191
      %p193 = scmp.eq.s32.totalorder %s192, 0
      %s195 = sadd.s32 %s194, 1
      %s196 = scalar_select %p193, %s194, %s195
      %p199 = pneg %p193
      %p200 = scmp.eq.s32.totalorder %s34, 1
      %p201 = por %p199, %p200
      %p202 = scmp.ne.s32.totalorder %s194, %s197
      %p203 = scmp.eq.s32.totalorder %s34, 0
      %p204 = por %p202, %p203
      %p205 = scmp.ne.s32.totalorder %s194, %s197
      %p206 = scmp.eq.s32.totalorder %s39, 1
      %p207 = por %p205, %p206
      %p208 = scmp.ne.s32.totalorder %s197, %s198
      %p209 = scmp.eq.s32.totalorder %s39, 0
      %p210 = por %p208, %p209
      %p211 = scmp.ne.s32.totalorder %s197, %s198
      %p212 = scmp.eq.s32.totalorder %s40, 1
      %p213 = por %p211, %p212
      %p215 = scmp.ne.s32.totalorder %s198, %s214
      %p216 = scmp.eq.s32.totalorder %s40, 0
      %p217 = por %p215, %p216
      %s218 = ssub.s32 %s41, %s53
      %p219 = scmp.eq.s32.totalorder %s218, 0
      %s221 = sadd.s32 %s220, 1
      %s222 = scalar_select %p219, %s220, %s221
      %p225 = pneg %p219
      %p226 = scmp.eq.s32.totalorder %s34, 1
      %p227 = por %p225, %p226
      %p228 = scmp.ne.s32.totalorder %s220, %s223
      %p229 = scmp.eq.s32.totalorder %s34, 0
      %p230 = por %p228, %p229
      %p231 = scmp.ne.s32.totalorder %s220, %s223
      %p232 = scmp.eq.s32.totalorder %s39, 1
      %p233 = por %p231, %p232
      %p234 = scmp.ne.s32.totalorder %s223, %s224
      %p235 = scmp.eq.s32.totalorder %s39, 0
      %p236 = por %p234, %p235
      %p237 = scmp.ne.s32.totalorder %s223, %s224
      %p238 = scmp.eq.s32.totalorder %s40, 1
      %p239 = por %p237, %p238
      %p241 = scmp.ne.s32.totalorder %s224, %s240
      %p242 = scmp.eq.s32.totalorder %s40, 0
      %p243 = por %p241, %p242
      %s245 = sadd.s32 %s244, 1
      %p248 = scmp.eq.s32.totalorder %s34, 1
      %p249 = scmp.ne.s32.totalorder %s244, %s246
      %p250 = scmp.eq.s32.totalorder %s34, 0
      %p251 = por %p249, %p250
      %p252 = scmp.ne.s32.totalorder %s244, %s246
      %p253 = scmp.eq.s32.totalorder %s39, 1
      %p254 = por %p252, %p253
      %p255 = scmp.ne.s32.totalorder %s246, %s247
      %p256 = scmp.eq.s32.totalorder %s39, 0
      %p257 = por %p255, %p256
      %p258 = scmp.ne.s32.totalorder %s246, %s247
      %p259 = scmp.eq.s32.totalorder %s40, 1
      %p260 = por %p258, %p259
      %p262 = scmp.ne.s32.totalorder %s247, %s261
      %p263 = scmp.eq.s32.totalorder %s40, 0
      %p264 = por %p262, %p263
      %s266 = sadd.s32 %s265, 1
      %p269 = scmp.eq.s32.totalorder %s34, 1
      %p270 = scmp.ne.s32.totalorder %s265, %s267
      %p271 = scmp.eq.s32.totalorder %s34, 0
      %p272 = por %p270, %p271
      %p273 = scmp.ne.s32.totalorder %s265, %s267
      %p274 = scmp.eq.s32.totalorder %s39, 1
      %p275 = por %p273, %p274
      %p276 = scmp.ne.s32.totalorder %s267, %s268
      %p277 = scmp.eq.s32.totalorder %s39, 0
      %p278 = por %p276, %p277
      %p279 = scmp.ne.s32.totalorder %s267, %s268
      %p280 = scmp.eq.s32.totalorder %s40, 1
      %p281 = por %p279, %p280
      %p283 = scmp.ne.s32.totalorder %s268, %s282
      %p284 = scmp.eq.s32.totalorder %s40, 0
      %p285 = por %p283, %p284
      %s287 = sadd.s32 %s286, 1
      %p290 = scmp.eq.s32.totalorder %s34, 1
      %p291 = scmp.ne.s32.totalorder %s286, %s288
      %p292 = scmp.eq.s32.totalorder %s34, 0
      %p293 = por %p291, %p292
      %p294 = scmp.ne.s32.totalorder %s286, %s288
      %p295 = scmp.eq.s32.totalorder %s39, 1
      %p296 = por %p294, %p295
      %p297 = scmp.ne.s32.totalorder %s288, %s289
      %p298 = scmp.eq.s32.totalorder %s39, 0
      %p299 = por %p297, %p298
      %p300 = scmp.ne.s32.totalorder %s288, %s289
      %p301 = scmp.eq.s32.totalorder %s40, 1
      %p302 = por %p300, %p301
      %p304 = scmp.ne.s32.totalorder %s289, %s303
      %p305 = scmp.eq.s32.totalorder %s40, 0
      %p306 = por %p304, %p305
      %s308 = sadd.s32 %s307, 1
      %p311 = scmp.eq.s32.totalorder %s34, 1
      %p312 = scmp.ne.s32.totalorder %s307, %s309
      %p313 = scmp.eq.s32.totalorder %s34, 0
      %p314 = por %p312, %p313
      %p315 = scmp.ne.s32.totalorder %s307, %s309
      %p316 = scmp.eq.s32.totalorder %s39, 1
      %p317 = por %p315, %p316
      %p318 = scmp.ne.s32.totalorder %s309, %s310
      %p319 = scmp.eq.s32.totalorder %s39, 0
      %p320 = por %p318, %p319
      %p321 = scmp.ne.s32.totalorder %s309, %s310
      %p322 = scmp.eq.s32.totalorder %s40, 1
      %p323 = por %p321, %p322
      %p325 = scmp.ne.s32.totalorder %s310, %s324
      %p326 = scmp.eq.s32.totalorder %s40, 0
      %p327 = por %p325, %p326
      %s329 = sadd.s32 %s328, 1
      %p332 = scmp.eq.s32.totalorder %s34, 1
      %p333 = scmp.ne.s32.totalorder %s328, %s330
      %p334 = scmp.eq.s32.totalorder %s34, 0
      %p335 = por %p333, %p334
      %p336 = scmp.ne.s32.totalorder %s328, %s330
      %p337 = scmp.eq.s32.totalorder %s39, 1
      %p338 = por %p336, %p337
      %p339 = scmp.ne.s32.totalorder %s330, %s331
      %p340 = scmp.eq.s32.totalorder %s39, 0
      %p341 = por %p339, %p340
      %p342 = scmp.ne.s32.totalorder %s330, %s331
      %p343 = scmp.eq.s32.totalorder %s40, 1
      %p344 = por %p342, %p343
      %p346 = scmp.ne.s32.totalorder %s331, %s345
      %p347 = scmp.eq.s32.totalorder %s40, 0
      %p348 = por %p346, %p347
      %s350 = sadd.s32 %s349, 1
      %p353 = scmp.eq.s32.totalorder %s34, 1
      %p354 = scmp.ne.s32.totalorder %s349, %s351
      %p355 = scmp.eq.s32.totalorder %s34, 0
      %p356 = por %p354, %p355
      %p357 = scmp.ne.s32.totalorder %s349, %s351
      %p358 = scmp.eq.s32.totalorder %s39, 1
      %p359 = por %p357, %p358
      %p360 = scmp.ne.s32.totalorder %s351, %s352
      %p361 = scmp.eq.s32.totalorder %s39, 0
      %p362 = por %p360, %p361
      %p363 = scmp.ne.s32.totalorder %s351, %s352
      %p364 = scmp.eq.s32.totalorder %s40, 1
      %p365 = por %p363, %p364
      %p367 = scmp.ne.s32.totalorder %s352, %s366
      %p368 = scmp.eq.s32.totalorder %s40, 0
      %p369 = por %p367, %p368
      %s371 = sadd.s32 %s370, 1
      %p374 = scmp.eq.s32.totalorder %s34, 1
      %p375 = scmp.ne.s32.totalorder %s370, %s372
      %p376 = scmp.eq.s32.totalorder %s34, 0
      %p377 = por %p375, %p376
      %p378 = scmp.ne.s32.totalorder %s370, %s372
      %p379 = scmp.eq.s32.totalorder %s39, 1
      %p380 = por %p378, %p379
      %p381 = scmp.ne.s32.totalorder %s372, %s373
      %p382 = scmp.eq.s32.totalorder %s39, 0
      %p383 = por %p381, %p382
      %p384 = scmp.ne.s32.totalorder %s372, %s373
      %p385 = scmp.eq.s32.totalorder %s40, 1
      %p386 = por %p384, %p385
      %p388 = scmp.ne.s32.totalorder %s373, %s387
      %p389 = scmp.eq.s32.totalorder %s40, 0
      %p390 = por %p388, %p389
      %s392 = sadd.s32 %s391, 1
      %p395 = scmp.eq.s32.totalorder %s34, 1
      %p396 = scmp.ne.s32.totalorder %s391, %s393
      %p397 = scmp.eq.s32.totalorder %s34, 0
      %p398 = por %p396, %p397
      %p399 = scmp.ne.s32.totalorder %s391, %s393
      %p400 = scmp.eq.s32.totalorder %s39, 1
      %p401 = por %p399, %p400
      %p402 = scmp.ne.s32.totalorder %s393, %s394
      %p403 = scmp.eq.s32.totalorder %s39, 0
      %p404 = por %p402, %p403
      %p405 = scmp.ne.s32.totalorder %s393, %s394
      %p406 = scmp.eq.s32.totalorder %s40, 1
      %p407 = por %p405, %p406
      %p409 = scmp.ne.s32.totalorder %s394, %s408
      %p410 = scmp.eq.s32.totalorder %s40, 0
      %p411 = por %p409, %p410
      %s413 = sadd.s32 %s412, 1
      %p416 = scmp.eq.s32.totalorder %s34, 1
      %p417 = scmp.ne.s32.totalorder %s412, %s414
      %p418 = scmp.eq.s32.totalorder %s34, 0
      %p419 = por %p417, %p418
      %p420 = scmp.ne.s32.totalorder %s412, %s414
      %p421 = scmp.eq.s32.totalorder %s39, 1
      %p422 = por %p420, %p421
      %p423 = scmp.ne.s32.totalorder %s414, %s415
      %p424 = scmp.eq.s32.totalorder %s39, 0
      %p425 = por %p423, %p424
      %p426 = scmp.ne.s32.totalorder %s414, %s415
      %p427 = scmp.eq.s32.totalorder %s40, 1
      %p428 = por %p426, %p427
      %p430 = scmp.ne.s32.totalorder %s415, %s429
      %p431 = scmp.eq.s32.totalorder %s40, 0
      %p432 = por %p430, %p431
      %s434 = sadd.s32 %s433, 1
      %p437 = scmp.eq.s32.totalorder %s34, 1
      %p438 = scmp.ne.s32.totalorder %s433, %s435
      %p439 = scmp.eq.s32.totalorder %s34, 0
      %p440 = por %p438, %p439
      %p441 = scmp.ne.s32.totalorder %s433, %s435
      %p442 = scmp.eq.s32.totalorder %s39, 1
      %p443 = por %p441, %p442
      %p444 = scmp.ne.s32.totalorder %s435, %s436
      %p445 = scmp.eq.s32.totalorder %s39, 0
      %p446 = por %p444, %p445
      %p447 = scmp.ne.s32.totalorder %s435, %s436
      %p448 = scmp.eq.s32.totalorder %s40, 1
      %p449 = por %p447, %p448
      %p451 = scmp.ne.s32.totalorder %s436, %s450
      %p452 = scmp.eq.s32.totalorder %s40, 0
      %p453 = por %p451, %p452
      %s455 = sadd.s32 %s454, 1
      %p458 = scmp.eq.s32.totalorder %s34, 1
      %p459 = scmp.ne.s32.totalorder %s454, %s456
      %p460 = scmp.eq.s32.totalorder %s34, 0
      %p461 = por %p459, %p460
      %p462 = scmp.ne.s32.totalorder %s454, %s456
      %p463 = scmp.eq.s32.totalorder %s39, 1
      %p464 = por %p462, %p463
      %p465 = scmp.ne.s32.totalorder %s456, %s457
      %p466 = scmp.eq.s32.totalorder %s39, 0
      %p467 = por %p465, %p466
      %p468 = scmp.ne.s32.totalorder %s456, %s457
      %p469 = scmp.eq.s32.totalorder %s40, 1
      %p470 = por %p468, %p469
      %p472 = scmp.ne.s32.totalorder %s457, %s471
      %p473 = scmp.eq.s32.totalorder %s40, 0
      %p474 = por %p472, %p473
      %s476 = sadd.s32 %s475, 1
      %p479 = scmp.eq.s32.totalorder %s34, 1
      %p480 = scmp.ne.s32.totalorder %s475, %s477
      %p481 = scmp.eq.s32.totalorder %s34, 0
      %p482 = por %p480, %p481
      %p483 = scmp.ne.s32.totalorder %s475, %s477
      %p484 = scmp.eq.s32.totalorder %s39, 1
      %p485 = por %p483, %p484
      %p486 = scmp.ne.s32.totalorder %s477, %s478
      %p487 = scmp.eq.s32.totalorder %s39, 0
      %p488 = por %p486, %p487
      %p489 = scmp.ne.s32.totalorder %s477, %s478
      %p490 = scmp.eq.s32.totalorder %s40, 1
      %p491 = por %p489, %p490
      %p493 = scmp.ne.s32.totalorder %s478, %s492
      %p494 = scmp.eq.s32.totalorder %s40, 0
      %p495 = por %p493, %p494
      %s497 = sadd.s32 %s496, 1
      %p500 = scmp.eq.s32.totalorder %s34, 1
      %p501 = scmp.ne.s32.totalorder %s496, %s498
      %p502 = scmp.eq.s32.totalorder %s34, 0
      %p503 = por %p501, %p502
      %p504 = scmp.ne.s32.totalorder %s496, %s498
      %p505 = scmp.eq.s32.totalorder %s39, 1
      %p506 = por %p504, %p505
      %p507 = scmp.ne.s32.totalorder %s498, %s499
      %p508 = scmp.eq.s32.totalorder %s39, 0
      %p509 = por %p507, %p508
      %p510 = scmp.ne.s32.totalorder %s498, %s499
      %p511 = scmp.eq.s32.totalorder %s40, 1
      %p512 = por %p510, %p511
      %p514 = scmp.ne.s32.totalorder %s499, %s513
      %p515 = scmp.eq.s32.totalorder %s40, 0
      %p516 = por %p514, %p515
      %s518 = sadd.s32 %s517, 1
      %p521 = scmp.eq.s32.totalorder %s34, 1
      %p522 = scmp.ne.s32.totalorder %s517, %s519
      %p523 = scmp.eq.s32.totalorder %s34, 0
      %p524 = por %p522, %p523
      %p525 = scmp.ne.s32.totalorder %s517, %s519
      %p526 = scmp.eq.s32.totalorder %s39, 1
      %p527 = por %p525, %p526
      %p528 = scmp.ne.s32.totalorder %s519, %s520
      %p529 = scmp.eq.s32.totalorder %s39, 0
      %p530 = por %p528, %p529
      %p531 = scmp.ne.s32.totalorder %s519, %s520
      %p532 = scmp.eq.s32.totalorder %s40, 1
      %p533 = por %p531, %p532
      %p535 = scmp.ne.s32.totalorder %s520, %s534
      %p536 = scmp.eq.s32.totalorder %s40, 0
      %p537 = por %p535, %p536
      %s539 = sadd.s32 %s538, 1
      %p542 = scmp.eq.s32.totalorder %s34, 1
      %p543 = scmp.ne.s32.totalorder %s538, %s540
      %p544 = scmp.eq.s32.totalorder %s34, 0
      %p545 = por %p543, %p544
      %p546 = scmp.ne.s32.totalorder %s538, %s540
      %p547 = scmp.eq.s32.totalorder %s39, 1
      %p548 = por %p546, %p547
      %p549 = scmp.ne.s32.totalorder %s540, %s541
      %p550 = scmp.eq.s32.totalorder %s39, 0
      %p551 = por %p549, %p550
      %p552 = scmp.ne.s32.totalorder %s540, %s541
      %p553 = scmp.eq.s32.totalorder %s40, 1
      %p554 = por %p552, %p553
      %p556 = scmp.ne.s32.totalorder %s541, %s555
      %p557 = scmp.eq.s32.totalorder %s40, 0
      %p558 = por %p556, %p557
      %s560 = sadd.s32 %s559, 1
      %p563 = scmp.eq.s32.totalorder %s34, 1
      %p564 = scmp.ne.s32.totalorder %s559, %s561
      %p565 = scmp.eq.s32.totalorder %s34, 0
      %p566 = por %p564, %p565
      %p567 = scmp.ne.s32.totalorder %s559, %s561
      %p568 = scmp.eq.s32.totalorder %s39, 1
      %p569 = por %p567, %p568
      %p570 = scmp.ne.s32.totalorder %s561, %s562
      %p571 = scmp.eq.s32.totalorder %s39, 0
      %p572 = por %p570, %p571
      %p573 = scmp.ne.s32.totalorder %s561, %s562
      %p574 = scmp.eq.s32.totalorder %s40, 1
      %p575 = por %p573, %p574
      %p577 = scmp.ne.s32.totalorder %s562, %s576
      %p578 = scmp.eq.s32.totalorder %s40, 0
      %p579 = por %p577, %p578
      %s580 = ssub.s32 %s41, %s53
      %s581 = ssub.s32 %s42, %s49
      %s582 = sor.u32 %s580, %s581
      %p583 = scmp.eq.s32.totalorder %s582, 0
      %s585 = sadd.s32 %s584, 1
      %s586 = scalar_select %p583, %s584, %s585
      %p589 = pneg %p583
      %p590 = scmp.eq.s32.totalorder %s34, 1
      %p591 = por %p589, %p590
      %p592 = scmp.ne.s32.totalorder %s584, %s587
      %p593 = scmp.eq.s32.totalorder %s34, 0
      %p594 = por %p592, %p593
      %p595 = scmp.ne.s32.totalorder %s584, %s587
      %p596 = scmp.eq.s32.totalorder %s39, 1
      %p597 = por %p595, %p596
      %p598 = scmp.ne.s32.totalorder %s587, %s588
      %p599 = scmp.eq.s32.totalorder %s39, 0
      %p600 = por %p598, %p599
      %p601 = scmp.ne.s32.totalorder %s587, %s588
      %p602 = scmp.eq.s32.totalorder %s40, 1
      %p603 = por %p601, %p602
      %p605 = scmp.ne.s32.totalorder %s588, %s604
      %p606 = scmp.eq.s32.totalorder %s40, 0
      %p607 = por %p605, %p606
      %s608 = ssub.s32 %s41, %s53
      %s609 = ssub.s32 %s42, %s49
      %s610 = sor.u32 %s608, %s609
      %p611 = scmp.eq.s32.totalorder %s610, 0
      %s613 = sadd.s32 %s612, 1
      %s614 = scalar_select %p611, %s612, %s613
      %p617 = pneg %p611
      %p618 = scmp.eq.s32.totalorder %s34, 1
      %p619 = por %p617, %p618
      %p620 = scmp.ne.s32.totalorder %s612, %s615
      %p621 = scmp.eq.s32.totalorder %s34, 0
      %p622 = por %p620, %p621
      %p623 = scmp.ne.s32.totalorder %s612, %s615
      %p624 = scmp.eq.s32.totalorder %s39, 1
      %p625 = por %p623, %p624
      %p626 = scmp.ne.s32.totalorder %s615, %s616
      %p627 = scmp.eq.s32.totalorder %s39, 0
      %p628 = por %p626, %p627
      %p629 = scmp.ne.s32.totalorder %s615, %s616
      %p630 = scmp.eq.s32.totalorder %s40, 1
      %p631 = por %p629, %p630
      %p633 = scmp.ne.s32.totalorder %s616, %s632
      %p634 = scmp.eq.s32.totalorder %s40, 0
      %p635 = por %p633, %p634
      %p636 = scmp.le.s32.totalorder 1, %s34
      %p637 = scmp.lt.s32.totalorder %s34, 3
      %p638 = pnand %p636, %p637
      %p639 = pneg %p638
      // Predicated region
      $region9: #{_forward_dense.12} parent=5 // pred_check
        _
      $region10: #{_forward_dense.12} parent=5 // pred_check_branch
        %641 = sbr.rel (%p638) target = $region12
      $region11: #{_forward_dense.12} parent=5 // pred_region
        %s642 = ssub.s32 %s34, 1
        // Predicated region
        $region13: #{_forward_dense.12} parent=11 // pred_check
          %p643 = pneg %p257
        $region14: #{_forward_dense.12} parent=11 // pred_check_branch
          %645 = sbr.rel (%p643) target = $region16
        $region15: #{_forward_dense.12} parent=11 // pred_region
          _
        $region16: #{_forward_dense.12} parent=11 // pred_fallthru
          _
        // Predicated region
        $region17: #{_forward_dense.12} parent=11 // pred_check
          %p646 = pneg %p278
        $region18: #{_forward_dense.12} parent=11 // pred_check_branch
          %648 = sbr.rel (%p646) target = $region20
        $region19: #{_forward_dense.12} parent=11 // pred_region
          _
        $region20: #{_forward_dense.12} parent=11 // pred_fallthru
          _
        // Predicated region
        $region21: #{_forward_dense.12} parent=11 // pred_check
          %p649 = pneg %p299
        $region22: #{_forward_dense.12} parent=11 // pred_check_branch
          %651 = sbr.rel (%p649) target = $region24
        $region23: #{_forward_dense.12} parent=11 // pred_region
          _
        $region24: #{_forward_dense.12} parent=11 // pred_fallthru
          _
        // Predicated region
        $region25: #{_forward_dense.12} parent=11 // pred_check
          %p652 = pneg %p320
        $region26: #{_forward_dense.12} parent=11 // pred_check_branch
          %654 = sbr.rel (%p652) target = $region28
        $region27: #{_forward_dense.12} parent=11 // pred_region
          _
        $region28: #{_forward_dense.12} parent=11 // pred_fallthru
          _
        // Predicated region
        $region29: #{_forward_dense.12} parent=11 // pred_check
          %p655 = pneg %p341
        $region30: #{_forward_dense.12} parent=11 // pred_check_branch
          %657 = sbr.rel (%p655) target = $region32
        $region31: #{_forward_dense.12} parent=11 // pred_region
          _
        $region32: #{_forward_dense.12} parent=11 // pred_fallthru
          _
        // Predicated region
        $region33: #{_forward_dense.12} parent=11 // pred_check
          %p658 = pneg %p362
        $region34: #{_forward_dense.12} parent=11 // pred_check_branch
          %660 = sbr.rel (%p658) target = $region36
        $region35: #{_forward_dense.12} parent=11 // pred_region
          _
        $region36: #{_forward_dense.12} parent=11 // pred_fallthru
          _
        // Predicated region
        $region37: #{_forward_dense.12} parent=11 // pred_check
          %p661 = pneg %p383
        $region38: #{_forward_dense.12} parent=11 // pred_check_branch
          %663 = sbr.rel (%p661) target = $region40
        $region39: #{_forward_dense.12} parent=11 // pred_region
          _
        $region40: #{_forward_dense.12} parent=11 // pred_fallthru
          _
        // Predicated region
        $region41: #{_forward_dense.12} parent=11 // pred_check
          %p664 = pneg %p404
        $region42: #{_forward_dense.12} parent=11 // pred_check_branch
          %666 = sbr.rel (%p664) target = $region44
        $region43: #{_forward_dense.12} parent=11 // pred_region
          _
        $region44: #{_forward_dense.12} parent=11 // pred_fallthru
          _
        // Predicated region
        $region45: #{_forward_dense.12} parent=11 // pred_check
          %p667 = pneg %p425
        $region46: #{_forward_dense.12} parent=11 // pred_check_branch
          %669 = sbr.rel (%p667) target = $region48
        $region47: #{_forward_dense.12} parent=11 // pred_region
          _
        $region48: #{_forward_dense.12} parent=11 // pred_fallthru
          _
        // Predicated region
        $region49: #{_forward_dense.12} parent=11 // pred_check
          %p670 = pneg %p446
        $region50: #{_forward_dense.12} parent=11 // pred_check_branch
          %672 = sbr.rel (%p670) target = $region52
        $region51: #{_forward_dense.12} parent=11 // pred_region
          _
        $region52: #{_forward_dense.12} parent=11 // pred_fallthru
          _
        // Predicated region
        $region53: #{_forward_dense.12} parent=11 // pred_check
          %p673 = pneg %p467
        $region54: #{_forward_dense.12} parent=11 // pred_check_branch
          %675 = sbr.rel (%p673) target = $region56
        $region55: #{_forward_dense.12} parent=11 // pred_region
          _
        $region56: #{_forward_dense.12} parent=11 // pred_fallthru
          _
        // Predicated region
        $region57: #{_forward_dense.12} parent=11 // pred_check
          %p676 = pneg %p488
        $region58: #{_forward_dense.12} parent=11 // pred_check_branch
          %678 = sbr.rel (%p676) target = $region60
        $region59: #{_forward_dense.12} parent=11 // pred_region
          _
        $region60: #{_forward_dense.12} parent=11 // pred_fallthru
          _
        // Predicated region
        $region61: #{_forward_dense.12} parent=11 // pred_check
          %p679 = pneg %p509
        $region62: #{_forward_dense.12} parent=11 // pred_check_branch
          %681 = sbr.rel (%p679) target = $region64
        $region63: #{_forward_dense.12} parent=11 // pred_region
          _
        $region64: #{_forward_dense.12} parent=11 // pred_fallthru
          _
        // Predicated region
        $region65: #{_forward_dense.12} parent=11 // pred_check
          %p682 = pneg %p530
        $region66: #{_forward_dense.12} parent=11 // pred_check_branch
          %684 = sbr.rel (%p682) target = $region68
        $region67: #{_forward_dense.12} parent=11 // pred_region
          _
        $region68: #{_forward_dense.12} parent=11 // pred_fallthru
          _
        // Predicated region
        $region69: #{_forward_dense.12} parent=11 // pred_check
          %p685 = pneg %p551
        $region70: #{_forward_dense.12} parent=11 // pred_check_branch
          %687 = sbr.rel (%p685) target = $region72
        $region71: #{_forward_dense.12} parent=11 // pred_region
          _
        $region72: #{_forward_dense.12} parent=11 // pred_fallthru
          _
        // Predicated region
        $region73: #{_forward_dense.12} parent=11 // pred_check
          %p688 = pneg %p572
        $region74: #{_forward_dense.12} parent=11 // pred_check_branch
          %690 = sbr.rel (%p688) target = $region76
        $region75: #{_forward_dense.12} parent=11 // pred_region
          _
        $region76: #{_forward_dense.12} parent=11 // pred_fallthru
          _
      $region12: #{_forward_dense.12} parent=5 // pred_fallthru
        _
      %p691 = scmp.lt.s32.totalorder %s34, 2
      // Predicated region
      $region77: #{_forward_dense.12} parent=5 // pred_check
        %p692 = pneg %p691
      $region78: #{_forward_dense.12} parent=5 // pred_check_branch
        %694 = sbr.rel (%p692) target = $region80
      $region79: #{_forward_dense.12} parent=5 // pred_region
        // Predicated region
        $region81: #{_forward_dense.12} parent=79 // pred_check
          %p695 = pneg %p68
        $region82: #{_forward_dense.12} parent=79 // pred_check_branch
          %697 = sbr.rel (%p695) target = $region84
        $region83: #{_forward_dense.12} parent=79 // pred_region
          %p698 = scmp.lt.s32.totalorder %s41, 1
          %s699 = scalar_select %p698, %s41, 1
          %p700 = scmp.lt.s32.totalorder %s42, 0
          %s701 = scalar_select %p700, %s42, 0
          %s702 = sadd.s32 %s701, %s699
          %s703 = smul.addr %s702, 8
          %s704 = scalar_lea.vmem %s0, %s703
        $region84: #{_forward_dense.12} parent=79 // pred_fallthru
          _
        // Predicated region
        $region85: #{_forward_dense.12} parent=79 // pred_check
          %p705 = pneg %p94
        $region86: #{_forward_dense.12} parent=79 // pred_check_branch
          %707 = sbr.rel (%p705) target = $region88
        $region87: #{_forward_dense.12} parent=79 // pred_region
          %p708 = scmp.lt.s32.totalorder %s41, 1
          %s709 = scalar_select %p708, %s41, 1
          %s710 = smul.addr %s709, 8
          %s711 = scalar_lea.vmem %s1, %s710
        $region88: #{_forward_dense.12} parent=79 // pred_fallthru
          _
        // Predicated region
        $region89: #{_forward_dense.12} parent=79 // pred_check
          %p712 = pneg %p122
        $region90: #{_forward_dense.12} parent=79 // pred_check_branch
          %714 = sbr.rel (%p712) target = $region92
        $region91: #{_forward_dense.12} parent=79 // pred_region
          %s715 = smul.u32 8, %s42
          %p716 = scmp.lt.s32.totalorder %s41, 1
          %s717 = scalar_select %p716, %s41, 1
          %p718 = scmp.lt.s32.totalorder %s715, 7
          %s719 = scalar_select %p718, %s715, 7
          %s720 = smul.addr %s717, 8
          %s721 = sadd.s32 %s719, %s720
          %s722 = smul.addr %s721, 8
          %s723 = scalar_lea.vmem %s2, %s722
          %s724 = smul.u32 8, %s42
        $region92: #{_forward_dense.12} parent=79 // pred_fallthru
          _
        // Predicated region
        $region93: #{_forward_dense.12} parent=79 // pred_check
          %p725 = pneg %p150
        $region94: #{_forward_dense.12} parent=79 // pred_check_branch
          %727 = sbr.rel (%p725) target = $region96
        $region95: #{_forward_dense.12} parent=79 // pred_region
          %p728 = scmp.lt.s32.totalorder %s41, 1
          %s729 = scalar_select %p728, %s41, 1
          %p730 = scmp.lt.s32.totalorder %s42, 0
          %s731 = scalar_select %p730, %s42, 0
          %s732 = sadd.s32 %s731, %s729
          %s733 = smul.addr %s732, 8
          %s734 = scalar_lea.vmem %s3, %s733
        $region96: #{_forward_dense.12} parent=79 // pred_fallthru
          _
        // Predicated region
        $region97: #{_forward_dense.12} parent=79 // pred_check
          %p735 = pneg %p176
        $region98: #{_forward_dense.12} parent=79 // pred_check_branch
          %737 = sbr.rel (%p735) target = $region100
        $region99: #{_forward_dense.12} parent=79 // pred_region
          %p738 = scmp.lt.s32.totalorder %s41, 1
          %s739 = scalar_select %p738, %s41, 1
          %s740 = scalar_lea.vmem %s4, %s739
        $region100: #{_forward_dense.12} parent=79 // pred_fallthru
          _
        // Predicated region
        $region101: #{_forward_dense.12} parent=79 // pred_check
          %p741 = pneg %p204
        $region102: #{_forward_dense.12} parent=79 // pred_check_branch
          %743 = sbr.rel (%p741) target = $region104
        $region103: #{_forward_dense.12} parent=79 // pred_region
          %p744 = scmp.lt.s32.totalorder %s41, 1
          %s745 = scalar_select %p744, %s41, 1
          %p746 = scmp.lt.s32.totalorder %s42, 0
          %s747 = scalar_select %p746, %s42, 0
          %s748 = sadd.s32 %s747, %s745
          %s749 = smul.addr %s748, 8
          %s750 = scalar_lea.vmem %s5, %s749
        $region104: #{_forward_dense.12} parent=79 // pred_fallthru
          _
        // Predicated region
        $region105: #{_forward_dense.12} parent=79 // pred_check
          %p751 = pneg %p230
        $region106: #{_forward_dense.12} parent=79 // pred_check_branch
          %753 = sbr.rel (%p751) target = $region108
        $region107: #{_forward_dense.12} parent=79 // pred_region
          %p754 = scmp.lt.s32.totalorder %s41, 1
          %s755 = scalar_select %p754, %s41, 1
          %s756 = scalar_lea.vmem %s6, %s755
        $region108: #{_forward_dense.12} parent=79 // pred_fallthru
          _
      $region80: #{_forward_dense.12} parent=5 // pred_fallthru
        _
      %p757 = scmp.le.s32.totalorder 1, %s34
      %p758 = scmp.lt.s32.totalorder %s34, 3
      %p759 = pnand %p757, %p758
      %p760 = pneg %p759
      // Predicated region
      $region109: #{_forward_dense.12} parent=5 // pred_check
        _
      $region110: #{_forward_dense.12} parent=5 // pred_check_branch
        %762 = sbr.rel (%p759) target = $region112
      $region111: #{_forward_dense.12} parent=5 // pred_region
        %s763 = ssub.s32 %s34, 1
        %p764 = scmp.lt.s32.totalorder %s43, 1
        %s765 = scalar_select %p764, %s43, 1
        %p766 = scmp.lt.s32.totalorder %s44, 0
        %s767 = scalar_select %p766, %s44, 0
        %s768 = sadd.s32 %s767, %s765
        %s769 = smul.addr %s768, 8
        %s770 = scalar_lea.vmem %s0, %s769
        %p771 = pneg %p74
        %p772 = pneg %p71
        %p773 = scmp.lt.s32.totalorder %s43, 1
        %s774 = scalar_select %p773, %s43, 1
        %s775 = smul.addr %s774, 8
        %s776 = scalar_lea.vmem %s1, %s775
        %p777 = pneg %p100
        %p778 = pneg %p97
        %s779 = smul.u32 8, %s44
        %p780 = scmp.lt.s32.totalorder %s43, 1
        %s781 = scalar_select %p780, %s43, 1
        %p782 = scmp.lt.s32.totalorder %s779, 7
        %s783 = scalar_select %p782, %s779, 7
        %s784 = smul.addr %s781, 8
        %s785 = sadd.s32 %s783, %s784
        %s786 = smul.addr %s785, 8
        %s787 = scalar_lea.vmem %s2, %s786
        %p788 = pneg %p128
        %p789 = pneg %p125
        %p790 = scmp.lt.s32.totalorder %s43, 1
        %s791 = scalar_select %p790, %s43, 1
        %p792 = scmp.lt.s32.totalorder %s44, 0
        %s793 = scalar_select %p792, %s44, 0
        %s794 = sadd.s32 %s793, %s791
        %s795 = smul.addr %s794, 8
        %s796 = scalar_lea.vmem %s3, %s795
        %p797 = pneg %p156
        %p798 = pneg %p153
        %p799 = scmp.lt.s32.totalorder %s43, 1
        %s800 = scalar_select %p799, %s43, 1
        %s801 = scalar_lea.vmem %s4, %s800
        %p802 = pneg %p182
        %p803 = pneg %p179
        %p804 = scmp.lt.s32.totalorder %s43, 1
        %s805 = scalar_select %p804, %s43, 1
        %p806 = scmp.lt.s32.totalorder %s44, 0
        %s807 = scalar_select %p806, %s44, 0
        %s808 = sadd.s32 %s807, %s805
        %s809 = smul.addr %s808, 8
        %s810 = scalar_lea.vmem %s5, %s809
        %p811 = pneg %p210
        %p812 = pneg %p207
        %p813 = scmp.lt.s32.totalorder %s43, 1
        %s814 = scalar_select %p813, %s43, 1
        %s815 = scalar_lea.vmem %s6, %s814
        %p816 = pneg %p236
        %p817 = pneg %p233
        %p818 = pneg %p257
        %p819 = pneg %p254
        %p820 = pneg %p278
        %p821 = pneg %p275
        %p822 = pneg %p299
        %p823 = pneg %p296
        %p824 = pneg %p320
        %p825 = pneg %p317
        %p826 = pneg %p341
        %p827 = pneg %p338
        %p828 = pneg %p362
        %p829 = pneg %p359
        %p830 = pneg %p383
        %p831 = pneg %p380
        %p832 = pneg %p404
        %p833 = pneg %p401
        %p834 = pneg %p425
        %p835 = pneg %p422
        %p836 = pneg %p446
        %p837 = pneg %p443
        %p838 = pneg %p467
        %p839 = pneg %p464
        %p840 = pneg %p488
        %p841 = pneg %p485
        %p842 = pneg %p509
        %p843 = pneg %p506
        %p844 = pneg %p530
        %p845 = pneg %p527
        %p846 = pneg %p551
        %p847 = pneg %p548
        %p848 = pneg %p572
        %p849 = pneg %p569
        %p850 = pneg %p600
        %p851 = pneg %p597
        %p852 = scmp.lt.s32.totalorder %s43, 1
        %s853 = scalar_select %p852, %s43, 1
        %p854 = scmp.lt.s32.totalorder %s44, 0
        %s855 = scalar_select %p854, %s44, 0
        %s856 = sadd.s32 %s855, %s853
        %s857 = smul.addr %s856, 8
        %s858 = scalar_lea.vmem %s23, %s857
        %p859 = pneg %p628
        %p860 = pneg %p625
        %s861 = sand.u32 %s615, 1
        %s862 = scalar_lea.sflag [#allocation3], %s861
        %s863 = sand.u32 %s615, 1
        %s864 = smul.addr %s863, 64
        %s865 = scalar_lea.vmem [#allocation2], %s864
        %p866 = scmp.lt.s32.totalorder %s43, 1
        %s867 = scalar_select %p866, %s43, 1
        %p868 = scmp.lt.s32.totalorder %s44, 0
        %s869 = scalar_select %p868, %s44, 0
        %s870 = sadd.s32 %s869, %s867
        %s871 = smul.addr %s870, 8
        %s872 = scalar_lea.vmem %s0, %s871
        %p873 = scmp.lt.s32.totalorder %s43, 1
        %s874 = scalar_select %p873, %s43, 1
        %s875 = smul.addr %s874, 8
        %s876 = scalar_lea.vmem %s1, %s875
        %s877 = smul.u32 8, %s44
        %p878 = scmp.lt.s32.totalorder %s43, 1
        %s879 = scalar_select %p878, %s43, 1
        %p880 = scmp.lt.s32.totalorder %s877, 7
        %s881 = scalar_select %p880, %s877, 7
        %s882 = smul.addr %s879, 8
        %s883 = sadd.s32 %s881, %s882
        %s884 = smul.addr %s883, 8
        %s885 = scalar_lea.vmem %s2, %s884
        %s886 = smul.u32 8, %s44
        %p887 = scmp.lt.s32.totalorder %s43, 1
        %s888 = scalar_select %p887, %s43, 1
        %p889 = scmp.lt.s32.totalorder %s44, 0
        %s890 = scalar_select %p889, %s44, 0
        %s891 = sadd.s32 %s890, %s888
        %s892 = smul.addr %s891, 8
        %s893 = scalar_lea.vmem %s3, %s892
        %p894 = scmp.lt.s32.totalorder %s43, 1
        %s895 = scalar_select %p894, %s43, 1
        %s896 = scalar_lea.vmem %s4, %s895
        %p897 = scmp.lt.s32.totalorder %s43, 1
        %s898 = scalar_select %p897, %s43, 1
        %p899 = scmp.lt.s32.totalorder %s44, 0
        %s900 = scalar_select %p899, %s44, 0
        %s901 = sadd.s32 %s900, %s898
        %s902 = smul.addr %s901, 8
        %s903 = scalar_lea.vmem %s5, %s902
        %p904 = scmp.lt.s32.totalorder %s43, 1
        %s905 = scalar_select %p904, %s43, 1
        %s906 = scalar_lea.vmem %s6, %s905
        %p907 = scmp.lt.s32.totalorder %s43, 1
        %s908 = scalar_select %p907, %s43, 1
        %p909 = scmp.lt.s32.totalorder %s44, 0
        %s910 = scalar_select %p909, %s44, 0
        %s911 = sadd.s32 %s910, %s908
        %s912 = smul.addr %s911, 8
        %s913 = scalar_lea.vmem %s23, %s912
        %s914 = smul.u32 8, %s44
        %v915 = vld [vmem:[%s872] sm:$0xff]
        %v916 = vld [vmem:[%s876] sm:$0xff]
        %v917 = vld [vmem:[%s885] sm:$0xff]
        %v918 = vld [vmem:[%s885 + $0x8] sm:$0xff]
        %v919 = vld [vmem:[%s885 + $0x10] sm:$0xff]
        %v920 = vld [vmem:[%s885 + $0x18] sm:$0xff]
        %v921 = vld [vmem:[%s885 + $0x20] sm:$0xff]
        %v922 = vld [vmem:[%s885 + $0x28] sm:$0xff]
        %v923 = vld [vmem:[%s885 + $0x30] sm:$0xff]
        %v924 = vld [vmem:[%s885 + $0x38] sm:$0xff]
        %v925 = vld [vmem:[%s896] sm:$0x1]
        %v926 = vld [vmem:[%s903] sm:$0xff]
        %v927 = vld [vmem:[%s906] sm:$0x1]
        %v928 = vld [vmem:[%s7] sm:$0xff]
        %v929 = vld [vmem:[%s7 + $0x8] sm:$0xff]
        %v930 = vld [vmem:[%s8] sm:$0x1]
        %v932 = vlaneseq
        %v933 = vshrl.u32 %v932, 7
        %v934 = vsub.s32 0, %v933
        %v935 = vrot.slane %v930, %v934
        %vm937 = vcmask 130048
        %v939 = vsel %vm937, %v917, 0
        %v942 = vsel %vm937, %v918, 0
        %v945 = vsel %vm937, %v919, 0
        %v948 = vsel %vm937, %v920, 0
        %v951 = vsel %vm937, %v921, 0
        %v954 = vsel %vm937, %v922, 0
        %v957 = vsel %vm937, %v923, 0
        %v960 = vsel %vm937, %v924, 0
        %962 = vmatprep.subr.mxu0 0.0
        %963 = vmatpush1.msra.mxu0 %v928
        %964 = vmatprep.subr.mxu0 0.0
        %965 = vmatpush1.msra.mxu0 %v929
        %966 = vmatprep.subr.mxu0 0.0
        %967 = vmatpush1.msra.mxu0 0.0
        %968 = vmatprep.subr.mxu0 0.0
        %969 = vmatpush1.msra.mxu0 0.0
        %970 = vmatprep.subr.mxu0 0.0
        %971 = vmatpush1.msra.mxu0 0.0
        %972 = vmatprep.subr.mxu0 0.0
        %973 = vmatpush1.msra.mxu0 0.0
        %974 = vmatprep.subr.mxu0 0.0
        %975 = vmatpush1.msra.mxu0 0.0
        %976 = vmatprep.subr.mxu0 0.0
        %977 = vmatpush1.msra.mxu0 0.0
        %978 = vmatprep.subr.mxu0 0.0
        %979 = vmatpush1.msra.mxu0 0.0
        %980 = vmatprep.subr.mxu0 0.0
        %981 = vmatpush1.msra.mxu0 0.0
        %982 = vmatprep.subr.mxu0 0.0
        %983 = vmatpush1.msra.mxu0 0.0
        %984 = vmatprep.subr.mxu0 0.0
        %985 = vmatpush1.msra.mxu0 0.0
        %986 = vmatprep.subr.mxu0 0.0
        %987 = vmatpush1.msra.mxu0 0.0
        %988 = vmatprep.subr.mxu0 0.0
        %989 = vmatpush1.msra.mxu0 0.0
        %990 = vmatprep.subr.mxu0 0.0
        %991 = vmatpush1.msra.mxu0 0.0
        %992 = vmatprep.subr.mxu0 0.0
        %993 = vmatpush1.msra.mxu0 0.0
        %994 = vmatprep.subr.mxu0 0.0
        %995 = vmatpush1.msra.mxu0 0.0
        %996 = vmatprep.subr.mxu0 0.0
        %997 = vmatpush1.msra.mxu0 0.0
        %998 = vmatprep.subr.mxu0 0.0
        %999 = vmatpush1.msra.mxu0 0.0
        %1000 = vmatprep.subr.mxu0 0.0
        %1001 = vmatpush1.msra.mxu0 0.0
        %1002 = vmatprep.subr.mxu0 0.0
        %1003 = vmatpush1.msra.mxu0 0.0
        %1004 = vmatprep.subr.mxu0 0.0
        %1005 = vmatpush1.msra.mxu0 0.0
        %1006 = vmatprep.subr.mxu0 0.0
        %1007 = vmatpush1.msra.mxu0 0.0
        %1008 = vmatprep.subr.mxu0 0.0
        %1009 = vmatpush1.msra.mxu0 0.0
        %1010 = vmatprep.subr.mxu0 0.0
        %1011 = vmatpush1.msra.mxu0 0.0
        %1012 = vmatprep.subr.mxu0 0.0
        %1013 = vmatpush1.msra.mxu0 0.0
        %1014 = vmatprep.subr.mxu0 0.0
        %1015 = vmatpush1.msra.mxu0 0.0
        %1016 = vmatprep.subr.mxu0 0.0
        %1017 = vmatpush1.msra.mxu0 0.0
        %1018 = vmatprep.subr.mxu0 0.0
        %1019 = vmatpush1.msra.mxu0 0.0
        %1020 = vmatprep.subr.mxu0 0.0
        %1021 = vmatpush1.msra.mxu0 0.0
        %1022 = vmatprep.subr.mxu0 0.0
        %1023 = vmatpush1.msra.mxu0 0.0
        %1024 = vmatprep.subr.mxu0 0.0
        %1025 = vmatpush1.msra.mxu0 0.0
        %1026 = vmatprep.mubr.f32.mxu0 0.0
        %1027 = vmatmul.mubr.f32.gmra.mrb[0].mxu0 %v939
        %v1028 = vpop.f32.mrb[0].mxu0
        %v1029 = vadd.f32 %v935, %v1028
        %v1030 = vpop.f32.mrb[0].mxu0
        %1031 = vmatprep.mubr.f32.mxu0 0.0
        %1032 = vmatmul.mubr.f32.gmra.mrb[0].mxu0 %v942
        %v1033 = vpop.f32.mrb[0].mxu0
        %v1034 = vadd.f32 %v935, %v1033
        %v1035 = vpop.f32.mrb[0].mxu0
        %1036 = vmatprep.mubr.f32.mxu0 0.0
        %1037 = vmatmul.mubr.f32.gmra.mrb[0].mxu0 %v945
        %v1038 = vpop.f32.mrb[0].mxu0
        %v1039 = vadd.f32 %v935, %v1038
        %v1040 = vpop.f32.mrb[0].mxu0
        %1041 = vmatprep.mubr.f32.mxu0 0.0
        %1042 = vmatmul.mubr.f32.gmra.mrb[0].mxu0 %v948
        %v1043 = vpop.f32.mrb[0].mxu0
        %v1044 = vadd.f32 %v935, %v1043
        %v1045 = vpop.f32.mrb[0].mxu0
        %1046 = vmatprep.mubr.f32.mxu0 0.0
        %1047 = vmatmul.mubr.f32.gmra.mrb[0].mxu0 %v951
        %v1048 = vpop.f32.mrb[0].mxu0
        %v1049 = vadd.f32 %v935, %v1048
        %v1050 = vpop.f32.mrb[0].mxu0
        %1051 = vmatprep.mubr.f32.mxu0 0.0
        %1052 = vmatmul.mubr.f32.gmra.mrb[0].mxu0 %v954
        %v1053 = vpop.f32.mrb[0].mxu0
        %v1054 = vadd.f32 %v935, %v1053
        %v1055 = vpop.f32.mrb[0].mxu0
        %1056 = vmatprep.mubr.f32.mxu0 0.0
        %1057 = vmatmul.mubr.f32.gmra.mrb[0].mxu0 %v957
        %v1058 = vpop.f32.mrb[0].mxu0
        %v1059 = vadd.f32 %v935, %v1058
        %v1060 = vpop.f32.mrb[0].mxu0
        %1061 = vmatprep.mubr.f32.mxu0 0.0
        %1062 = vmatmul.mubr.f32.gmra.mrb[0].mxu0 %v960
        %v1063 = vpop.f32.mrb[0].mxu0
        %v1064 = vadd.f32 %v935, %v1063
        %v1065 = vpop.f32.mrb[0].mxu0
        %1066 = vdwg.mxu0
        %v1068 = vcombine.high %v915, %v915
        %v1070 = vunpack.c.l.s4 1966171168
        %v1071 = vunpack.c.0.s8 %v1070
        %v1072 = vlaneseq
        %v1073 = vshrl.u32 %v1072, 7
        %v1074 = vsub.s32 %v1071, %v1073
        %v1075 = vrot.slane %v915, %v1074
        %v1077 = vunpack.c.l.s4 1966171168
        %v1078 = vunpack.c.0.s8 %v1077
        %v1079 = vlaneseq
        %v1080 = vshrl.u32 %v1079, 7
        %v1081 = vsub.s32 %v1078, %v1080
        %v1082 = vrot.slane %v1068, %v1081
        %v1083 = vcombine.high %v1075, %v1075
        %v1084 = vcombine.high %v1082, %v1082
        %v1086 = vunpack.c.l.s4 1966171168
        %v1087 = vunpack.c.0.s8 %v1086
        %v1088 = vlaneseq
        %v1089 = vshrl.u32 %v1088, 7
        %v1090 = vsub.s32 %v1087, %v1089
        %v1091 = vrot.slane %v1075, %v1090
        %v1093 = vunpack.c.l.s4 1966171168
        %v1094 = vunpack.c.0.s8 %v1093
        %v1095 = vlaneseq
        %v1096 = vshrl.u32 %v1095, 7
        %v1097 = vsub.s32 %v1094, %v1096
        %v1098 = vrot.slane %v1082, %v1097
        %v1100 = vunpack.c.l.s4 1966171168
        %v1101 = vunpack.c.0.s8 %v1100
        %v1102 = vlaneseq
        %v1103 = vshrl.u32 %v1102, 7
        %v1104 = vsub.s32 %v1101, %v1103
        %v1105 = vrot.slane %v1083, %v1104
        %v1107 = vunpack.c.l.s4 1966171168
        %v1108 = vunpack.c.0.s8 %v1107
        %v1109 = vlaneseq
        %v1110 = vshrl.u32 %v1109, 7
        %v1111 = vsub.s32 %v1108, %v1110
        %v1112 = vrot.slane %v1084, %v1111
        %v1113 = vcombine.high %v1091, %v1091
        %v1114 = vcombine.high %v1098, %v1098
        %v1115 = vcombine.high %v1105, %v1105
        %v1116 = vcombine.high %v1112, %v1112
        %v1117 = vlaneseq
        %v1118 = vshrl.u32 %v1117, 7
        %v1119 = vsub.s32 0, %v1118
        %v1120 = vrot.slane %v1091, %v1119
        %v1121 = vlaneseq
        %v1122 = vshrl.u32 %v1121, 7
        %v1123 = vsub.s32 0, %v1122
        %v1124 = vrot.slane %v1105, %v1123
        %v1125 = vlaneseq
        %v1126 = vshrl.u32 %v1125, 7
        %v1127 = vsub.s32 0, %v1126
        %v1128 = vrot.slane %v1113, %v1127
        %v1129 = vlaneseq
        %v1130 = vshrl.u32 %v1129, 7
        %v1131 = vsub.s32 0, %v1130
        %v1132 = vrot.slane %v1115, %v1131
        %v1133 = vlaneseq
        %v1134 = vshrl.u32 %v1133, 7
        %v1135 = vsub.s32 0, %v1134
        %v1136 = vrot.slane %v1098, %v1135
        %v1137 = vlaneseq
        %v1138 = vshrl.u32 %v1137, 7
        %v1139 = vsub.s32 0, %v1138
        %v1140 = vrot.slane %v1112, %v1139
        %v1141 = vlaneseq
        %v1142 = vshrl.u32 %v1141, 7
        %v1143 = vsub.s32 0, %v1142
        %v1144 = vrot.slane %v1114, %v1143
        %v1145 = vlaneseq
        %v1146 = vshrl.u32 %v1145, 7
        %v1147 = vsub.s32 0, %v1146
        %v1148 = vrot.slane %v1116, %v1147
        %1158 = vrot.lane.b32.xlu0 %v916, 96
        %v1159 = vpop.permute.xlu0 %1158
        %v1161 = vmul.f32 %v1120, %v1159
        %v1162 = vmul.f32 %v1124, %v1159
        %v1163 = vmul.f32 %v1128, %v1159
        %v1164 = vmul.f32 %v1132, %v1159
        %v1165 = vmul.f32 %v1136, %v1159
        %v1166 = vmul.f32 %v1140, %v1159
        %v1167 = vmul.f32 %v1144, %v1159
        %v1168 = vmul.f32 %v1148, %v1159
        %v1169 = vmul.f32 %v1161, 0.35355338
        %v1170 = vmul.f32 %v1162, 0.35355338
        %v1171 = vmul.f32 %v1163, 0.35355338
        %v1172 = vmul.f32 %v1164, 0.35355338
        %v1173 = vmul.f32 %v1165, 0.35355338
        %v1174 = vmul.f32 %v1166, 0.35355338
        %v1175 = vmul.f32 %v1167, 0.35355338
        %v1176 = vmul.f32 %v1168, 0.35355338
        %v1177 = vadd.f32 %v1029, 1.0
        %v1178 = vadd.f32 %v1034, 1.0
        %v1179 = vadd.f32 %v1039, 1.0
        %v1180 = vadd.f32 %v1044, 1.0
        %v1181 = vadd.f32 %v1049, 1.0
        %v1182 = vadd.f32 %v1054, 1.0
        %v1183 = vadd.f32 %v1059, 1.0
        %v1184 = vadd.f32 %v1064, 1.0
        %v1185 = vmul.f32 %v1169, %v1177
        %v1186 = vmul.f32 %v1170, %v1178
        %v1187 = vmul.f32 %v1171, %v1179
        %v1188 = vmul.f32 %v1172, %v1180
        %v1189 = vmul.f32 %v1173, %v1181
        %v1190 = vmul.f32 %v1174, %v1182
        %v1191 = vmul.f32 %v1175, %v1183
        %v1192 = vmul.f32 %v1176, %v1184
        %1201 = vrot.lane.b32.xlu0 %v1029, 96
        %v1202 = vpop.permute.xlu0 %1201
        %1203 = vrot.lane.b32.xlu0 %v1034, 96
        %v1204 = vpop.permute.xlu0 %1203
        %1205 = vrot.lane.b32.xlu0 %v1039, 96
        %v1206 = vpop.permute.xlu0 %1205
        %1207 = vrot.lane.b32.xlu0 %v1044, 96
        %v1208 = vpop.permute.xlu0 %1207
        %1209 = vrot.lane.b32.xlu0 %v1049, 96
        %v1210 = vpop.permute.xlu0 %1209
        %1211 = vrot.lane.b32.xlu0 %v1054, 96
        %v1212 = vpop.permute.xlu0 %1211
        %1213 = vrot.lane.b32.xlu0 %v1059, 96
        %v1214 = vpop.permute.xlu0 %1213
        %1215 = vrot.lane.b32.xlu0 %v1064, 96
        %v1216 = vpop.permute.xlu0 %1215
        %v1225 = vadd.f32 %v1185, %v1202
        %v1226 = vadd.f32 %v1186, %v1204
        %v1227 = vadd.f32 %v1187, %v1206
        %v1228 = vadd.f32 %v1188, %v1208
        %v1229 = vadd.f32 %v1189, %v1210
        %v1230 = vadd.f32 %v1190, %v1212
        %v1231 = vadd.f32 %v1191, %v1214
        %v1232 = vadd.f32 %v1192, %v1216
        %v1233 = vlaneseq
        %v1234 = vshrl.u32 %v1233, 7
        %v1235 = vsub.s32 0, %v1234
        %v1236 = vrot.slane %v925, %v1235
        %1238 = vbcast.lane.b32.xlu0 %v1236, 256
        %v1239 = vpop.permute.xlu0 %1238
        %vm1240 = vcmp.gt.f32.partialorder %v1239, 0.5
        %v1241 = vsel %vm1240, 1, 0
        %vm1242 = vcmp.eq.s32.totalorder %v1241, 1
        %v1243 = vsel %vm1242, %v1225, -1e+30
        %v1244 = vsel %vm1242, %v1226, -1e+30
        %v1245 = vsel %vm1242, %v1227, -1e+30
        %v1246 = vsel %vm1242, %v1228, -1e+30
        %v1247 = vsel %vm1242, %v1229, -1e+30
        %v1248 = vsel %vm1242, %v1230, -1e+30
        %v1249 = vsel %vm1242, %v1231, -1e+30
        %v1250 = vsel %vm1242, %v1232, -1e+30
        %vm1251 = vcmask 261120
        %v1252 = vsel %vm1251, %v1243, -inf
        %v1253 = vrot.slane %v1252, 4
        %v1254 = vmax.f32 %v1252, %v1253
        %v1255 = vrot.slane %v1254, 2
        %v1256 = vmax.f32 %v1254, %v1255
        %v1257 = vrot.slane %v1256, 1
        %v1258 = vmax.f32 %v1256, %v1257
        %v1259 = vsel %vm1251, %v1244, -inf
        %v1260 = vrot.slane %v1259, 4
        %v1261 = vmax.f32 %v1259, %v1260
        %v1262 = vrot.slane %v1261, 2
        %v1263 = vmax.f32 %v1261, %v1262
        %v1264 = vrot.slane %v1263, 1
        %v1265 = vmax.f32 %v1263, %v1264
        %v1266 = vsel %vm1251, %v1245, -inf
        %v1267 = vrot.slane %v1266, 4
        %v1268 = vmax.f32 %v1266, %v1267
        %v1269 = vrot.slane %v1268, 2
        %v1270 = vmax.f32 %v1268, %v1269
        %v1271 = vrot.slane %v1270, 1
        %v1272 = vmax.f32 %v1270, %v1271
        %v1273 = vsel %vm1251, %v1246, -inf
        %v1274 = vrot.slane %v1273, 4
        %v1275 = vmax.f32 %v1273, %v1274
        %v1276 = vrot.slane %v1275, 2
        %v1277 = vmax.f32 %v1275, %v1276
        %v1278 = vrot.slane %v1277, 1
        %v1279 = vmax.f32 %v1277, %v1278
        %v1280 = vsel %vm1251, %v1247, -inf
        %v1281 = vrot.slane %v1280, 4
        %v1282 = vmax.f32 %v1280, %v1281
        %v1283 = vrot.slane %v1282, 2
        %v1284 = vmax.f32 %v1282, %v1283
        %v1285 = vrot.slane %v1284, 1
        %v1286 = vmax.f32 %v1284, %v1285
        %v1287 = vsel %vm1251, %v1248, -inf
        %v1288 = vrot.slane %v1287, 4
        %v1289 = vmax.f32 %v1287, %v1288
        %v1290 = vrot.slane %v1289, 2
        %v1291 = vmax.f32 %v1289, %v1290
        %v1292 = vrot.slane %v1291, 1
        %v1293 = vmax.f32 %v1291, %v1292
        %v1294 = vsel %vm1251, %v1249, -inf
        %v1295 = vrot.slane %v1294, 4
        %v1296 = vmax.f32 %v1294, %v1295
        %v1297 = vrot.slane %v1296, 2
        %v1298 = vmax.f32 %v1296, %v1297
        %v1299 = vrot.slane %v1298, 1
        %v1300 = vmax.f32 %v1298, %v1299
        %v1301 = vsel %vm1251, %v1250, -inf
        %v1302 = vrot.slane %v1301, 4
        %v1303 = vmax.f32 %v1301, %v1302
        %v1304 = vrot.slane %v1303, 2
        %v1305 = vmax.f32 %v1303, %v1304
        %v1306 = vrot.slane %v1305, 1
        %v1307 = vmax.f32 %v1305, %v1306
        %v1308 = vsub.f32 %v1243, %v1258
        %v1309 = vsub.f32 %v1244, %v1265
        %v1310 = vsub.f32 %v1245, %v1272
        %v1311 = vsub.f32 %v1246, %v1279
        %v1312 = vsub.f32 %v1247, %v1286
        %v1313 = vsub.f32 %v1248, %v1293
        %v1314 = vsub.f32 %v1249, %v1300
        %v1315 = vsub.f32 %v1250, %v1307
        %v1316 = vmul.f32 %v1308, 1.442695
        %v1317 = vpow.pop %v1316
        %v1318 = vmul.f32 %v1309, 1.442695
        %v1319 = vpow.pop %v1318
        %v1320 = vmul.f32 %v1310, 1.442695
        %v1321 = vpow.pop %v1320
        %v1322 = vmul.f32 %v1311, 1.442695
        %v1323 = vpow.pop %v1322
        %v1324 = vmul.f32 %v1312, 1.442695
        %v1325 = vpow.pop %v1324
        %v1326 = vmul.f32 %v1313, 1.442695
        %v1327 = vpow.pop %v1326
        %v1328 = vmul.f32 %v1314, 1.442695
        %v1329 = vpow.pop %v1328
        %v1330 = vmul.f32 %v1315, 1.442695
        %v1331 = vpow.pop %v1330
        %v1332 = vsel %vm1251, %v1317, 0.0
        %v1333 = vrot.slane %v1332, 4
        %v1334 = vadd.f32 %v1332, %v1333
        %v1335 = vrot.slane %v1334, 2
        %v1336 = vadd.f32 %v1334, %v1335
        %v1337 = vrot.slane %v1336, 1
        %v1338 = vadd.f32 %v1336, %v1337
        %v1339 = vsel %vm1251, %v1319, 0.0
        %v1340 = vrot.slane %v1339, 4
        %v1341 = vadd.f32 %v1339, %v1340
        %v1342 = vrot.slane %v1341, 2
        %v1343 = vadd.f32 %v1341, %v1342
        %v1344 = vrot.slane %v1343, 1
        %v1345 = vadd.f32 %v1343, %v1344
        %v1346 = vsel %vm1251, %v1321, 0.0
        %v1347 = vrot.slane %v1346, 4
        %v1348 = vadd.f32 %v1346, %v1347
        %v1349 = vrot.slane %v1348, 2
        %v1350 = vadd.f32 %v1348, %v1349
        %v1351 = vrot.slane %v1350, 1
        %v1352 = vadd.f32 %v1350, %v1351
        %v1353 = vsel %vm1251, %v1323, 0.0
        %v1354 = vrot.slane %v1353, 4
        %v1355 = vadd.f32 %v1353, %v1354
        %v1356 = vrot.slane %v1355, 2
        %v1357 = vadd.f32 %v1355, %v1356
        %v1358 = vrot.slane %v1357, 1
        %v1359 = vadd.f32 %v1357, %v1358
        %v1360 = vsel %vm1251, %v1325, 0.0
        %v1361 = vrot.slane %v1360, 4
        %v1362 = vadd.f32 %v1360, %v1361
        %v1363 = vrot.slane %v1362, 2
        %v1364 = vadd.f32 %v1362, %v1363
        %v1365 = vrot.slane %v1364, 1
        %v1366 = vadd.f32 %v1364, %v1365
        %v1367 = vsel %vm1251, %v1327, 0.0
        %v1368 = vrot.slane %v1367, 4
        %v1369 = vadd.f32 %v1367, %v1368
        %v1370 = vrot.slane %v1369, 2
        %v1371 = vadd.f32 %v1369, %v1370
        %v1372 = vrot.slane %v1371, 1
        %v1373 = vadd.f32 %v1371, %v1372
        %v1374 = vsel %vm1251, %v1329, 0.0
        %v1375 = vrot.slane %v1374, 4
        %v1376 = vadd.f32 %v1374, %v1375
        %v1377 = vrot.slane %v1376, 2
        %v1378 = vadd.f32 %v1376, %v1377
        %v1379 = vrot.slane %v1378, 1
        %v1380 = vadd.f32 %v1378, %v1379
        %v1381 = vsel %vm1251, %v1331, 0.0
        %v1382 = vrot.slane %v1381, 4
        %v1383 = vadd.f32 %v1381, %v1382
        %v1384 = vrot.slane %v1383, 2
        %v1385 = vadd.f32 %v1383, %v1384
        %v1386 = vrot.slane %v1385, 1
        %v1387 = vadd.f32 %v1385, %v1386
        %1388 = vrot.lane.b32.xlu0 %v916, 64
        %v1389 = vpop.permute.xlu0 %1388
        %v1391 = vmul.f32 %v1317, %v1389
        %v1392 = vmul.f32 %v1319, %v1389
        %v1393 = vmul.f32 %v1321, %v1389
        %v1394 = vmul.f32 %v1323, %v1389
        %v1395 = vmul.f32 %v1325, %v1389
        %v1396 = vmul.f32 %v1327, %v1389
        %v1397 = vmul.f32 %v1329, %v1389
        %v1398 = vmul.f32 %v1331, %v1389
        %v1399 = vsel %vm1251, %v1391, 0.0
        %v1400 = vrot.slane %v1399, 4
        %v1401 = vadd.f32 %v1399, %v1400
        %v1402 = vrot.slane %v1401, 2
        %v1403 = vadd.f32 %v1401, %v1402
        %v1404 = vrot.slane %v1403, 1
        %v1405 = vadd.f32 %v1403, %v1404
        %v1406 = vsel %vm1251, %v1392, 0.0
        %v1407 = vrot.slane %v1406, 4
        %v1408 = vadd.f32 %v1406, %v1407
        %v1409 = vrot.slane %v1408, 2
        %v1410 = vadd.f32 %v1408, %v1409
        %v1411 = vrot.slane %v1410, 1
        %v1412 = vadd.f32 %v1410, %v1411
        %v1413 = vsel %vm1251, %v1393, 0.0
        %v1414 = vrot.slane %v1413, 4
        %v1415 = vadd.f32 %v1413, %v1414
        %v1416 = vrot.slane %v1415, 2
        %v1417 = vadd.f32 %v1415, %v1416
        %v1418 = vrot.slane %v1417, 1
        %v1419 = vadd.f32 %v1417, %v1418
        %v1420 = vsel %vm1251, %v1394, 0.0
        %v1421 = vrot.slane %v1420, 4
        %v1422 = vadd.f32 %v1420, %v1421
        %v1423 = vrot.slane %v1422, 2
        %v1424 = vadd.f32 %v1422, %v1423
        %v1425 = vrot.slane %v1424, 1
        %v1426 = vadd.f32 %v1424, %v1425
        %v1427 = vsel %vm1251, %v1395, 0.0
        %v1428 = vrot.slane %v1427, 4
        %v1429 = vadd.f32 %v1427, %v1428
        %v1430 = vrot.slane %v1429, 2
        %v1431 = vadd.f32 %v1429, %v1430
        %v1432 = vrot.slane %v1431, 1
        %v1433 = vadd.f32 %v1431, %v1432
        %v1434 = vsel %vm1251, %v1396, 0.0
        %v1435 = vrot.slane %v1434, 4
        %v1436 = vadd.f32 %v1434, %v1435
        %v1437 = vrot.slane %v1436, 2
        %v1438 = vadd.f32 %v1436, %v1437
        %v1439 = vrot.slane %v1438, 1
        %v1440 = vadd.f32 %v1438, %v1439
        %v1441 = vsel %vm1251, %v1397, 0.0
        %v1442 = vrot.slane %v1441, 4
        %v1443 = vadd.f32 %v1441, %v1442
        %v1444 = vrot.slane %v1443, 2
        %v1445 = vadd.f32 %v1443, %v1444
        %v1446 = vrot.slane %v1445, 1
        %v1447 = vadd.f32 %v1445, %v1446
        %v1448 = vsel %vm1251, %v1398, 0.0
        %v1449 = vrot.slane %v1448, 4
        %v1450 = vadd.f32 %v1448, %v1449
        %v1451 = vrot.slane %v1450, 2
        %v1452 = vadd.f32 %v1450, %v1451
        %v1453 = vrot.slane %v1452, 1
        %v1454 = vadd.f32 %v1452, %v1453
        %v1455 = vrcp.pop %v1338
        %v1456 = vmul.f32 %v1405, %v1455
        %v1457 = vrcp.pop %v1345
        %v1458 = vmul.f32 %v1412, %v1457
        %v1459 = vrcp.pop %v1352
        %v1460 = vmul.f32 %v1419, %v1459
        %v1461 = vrcp.pop %v1359
        %v1462 = vmul.f32 %v1426, %v1461
        %v1463 = vrcp.pop %v1366
        %v1464 = vmul.f32 %v1433, %v1463
        %v1465 = vrcp.pop %v1373
        %v1466 = vmul.f32 %v1440, %v1465
        %v1467 = vrcp.pop %v1380
        %v1468 = vmul.f32 %v1447, %v1467
        %v1469 = vrcp.pop %v1387
        %v1470 = vmul.f32 %v1454, %v1469
        %v1471 = vadd.f32 %v927, 1.0
        %v1473 = vlaneseq
        %v1474 = vshrl.u32 %v1473, 7
        %v1475 = vsub.s32 0, %v1474
        %v1476 = vrot.slane %v1471, %v1475
        %vm1486 = vcmask 1041409
        %v1487 = vsel %vm1486, %v1458, %v1456
        %vm1488 = vcmask 1042434
        %v1489 = vsel %vm1488, %v1460, %v1487
        %vm1490 = vcmask 1043459
        %v1491 = vsel %vm1490, %v1462, %v1489
        %vm1492 = vcmask 1044484
        %v1493 = vsel %vm1492, %v1464, %v1491
        %vm1494 = vcmask 1045509
        %v1495 = vsel %vm1494, %v1466, %v1493
        %vm1496 = vcmask 1046534
        %v1497 = vsel %vm1496, %v1468, %v1495
        %vm1498 = vcmask 1047559
        %v1499 = vsel %vm1498, %v1470, %v1497
        %1500 = vrot.lane.b32.xlu0 %v1499, 96
        %v1501 = vpop.permute.xlu0 %1500
        %v1503 = vmul.f32 %v1476, %v1501
        %v1505 = vlaneseq
        %v1506 = vshrl.u32 %v1505, 7
        %v1507 = vsub.s32 0, %v1506
        %v1508 = vrot.slane %v927, %v1507
        %1511 = vrot.lane.b32.xlu0 %v1503, 96
        %v1512 = vpop.permute.xlu0 %1511
        %v1514 = vadd.f32 %v1508, %v1512
        %v1515 = vld [vmem:[%s11] sm:$0xff]
        %v1516 = vld [vmem:[%s11 + $0x8] sm:$0xff]
        %v1517 = vld [vmem:[%s11 + $0x10] sm:$0xff]
        %v1518 = vld [vmem:[%s11 + $0x18] sm:$0xff]
        %v1519 = vld [vmem:[%s12] sm:$0x1]
        %v1521 = vlaneseq
        %v1522 = vshrl.u32 %v1521, 7
        %v1523 = vsub.s32 0, %v1522
        %v1524 = vrot.slane %v1519, %v1523
        %1527 = vrot.lane.b32.xlu0 %v1514, 64
        %v1528 = vpop.permute.xlu0 %1527
        %v1529 = vsel %vm1251, %v1528, 0
        %1531 = vmatprep.subr.mxu0 0.0
        %1532 = vmatpush1.msra.mxu0 %v1515
        %1533 = vmatprep.subr.mxu0 0.0
        %1534 = vmatpush1.msra.mxu0 %v1516
        %1535 = vmatprep.subr.mxu0 0.0
        %1536 = vmatpush1.msra.mxu0 %v1517
        %1537 = vmatprep.subr.mxu0 0.0
        %1538 = vmatpush1.msra.mxu0 %v1518
        %1539 = vmatprep.subr.mxu0 0.0
        %1540 = vmatpush1.msra.mxu0 0.0
        %1541 = vmatprep.subr.mxu0 0.0
        %1542 = vmatpush1.msra.mxu0 0.0
        %1543 = vmatprep.subr.mxu0 0.0
        %1544 = vmatpush1.msra.mxu0 0.0
        %1545 = vmatprep.subr.mxu0 0.0
        %1546 = vmatpush1.msra.mxu0 0.0
        %1547 = vmatprep.subr.mxu0 0.0
        %1548 = vmatpush1.msra.mxu0 0.0
        %1549 = vmatprep.subr.mxu0 0.0
        %1550 = vmatpush1.msra.mxu0 0.0
        %1551 = vmatprep.subr.mxu0 0.0
        %1552 = vmatpush1.msra.mxu0 0.0
        %1553 = vmatprep.subr.mxu0 0.0
        %1554 = vmatpush1.msra.mxu0 0.0
        %1555 = vmatprep.subr.mxu0 0.0
        %1556 = vmatpush1.msra.mxu0 0.0
        %1557 = vmatprep.subr.mxu0 0.0
        %1558 = vmatpush1.msra.mxu0 0.0
        %1559 = vmatprep.subr.mxu0 0.0
        %1560 = vmatpush1.msra.mxu0 0.0
        %1561 = vmatprep.subr.mxu0 0.0
        %1562 = vmatpush1.msra.mxu0 0.0
        %1563 = vmatprep.subr.mxu0 0.0
        %1564 = vmatpush1.msra.mxu0 0.0
        %1565 = vmatprep.subr.mxu0 0.0
        %1566 = vmatpush1.msra.mxu0 0.0
        %1567 = vmatprep.subr.mxu0 0.0
        %1568 = vmatpush1.msra.mxu0 0.0
        %1569 = vmatprep.subr.mxu0 0.0
        %1570 = vmatpush1.msra.mxu0 0.0
        %1571 = vmatprep.subr.mxu0 0.0
        %1572 = vmatpush1.msra.mxu0 0.0
        %1573 = vmatprep.subr.mxu0 0.0
        %1574 = vmatpush1.msra.mxu0 0.0
        %1575 = vmatprep.subr.mxu0 0.0
        %1576 = vmatpush1.msra.mxu0 0.0
        %1577 = vmatprep.subr.mxu0 0.0
        %1578 = vmatpush1.msra.mxu0 0.0
        %1579 = vmatprep.subr.mxu0 0.0
        %1580 = vmatpush1.msra.mxu0 0.0
        %1581 = vmatprep.subr.mxu0 0.0
        %1582 = vmatpush1.msra.mxu0 0.0
        %1583 = vmatprep.subr.mxu0 0.0
        %1584 = vmatpush1.msra.mxu0 0.0
        %1585 = vmatprep.subr.mxu0 0.0
        %1586 = vmatpush1.msra.mxu0 0.0
        %1587 = vmatprep.subr.mxu0 0.0
        %1588 = vmatpush1.msra.mxu0 0.0
        %1589 = vmatprep.subr.mxu0 0.0
        %1590 = vmatpush1.msra.mxu0 0.0
        %1591 = vmatprep.subr.mxu0 0.0
        %1592 = vmatpush1.msra.mxu0 0.0
        %1593 = vmatprep.subr.mxu0 0.0
        %1594 = vmatpush1.msra.mxu0 0.0
        %1595 = vmatprep.mubr.f32.mxu0 0.0
        %1596 = vmatmul.mubr.f32.gmra.mrb[0].mxu0 %v1529
        %v1597 = vpop.f32.mrb[0].mxu0
        %v1598 = vadd.f32 %v1524, %v1597
        %v1599 = vpop.f32.mrb[0].mxu0
        %1600 = vdwg.mxu0
        %1602 = vset.pattern.permute.xlu0 0
        %1603 = vperm.xlu0 %1602, %v926
        %v1604 = vpop.permute.xlu0 %1603
        %v1606 = vmul.f32 %v1598, %v1604
        %v1607 = vld [vmem:[%s893] sm:$0xff]
        %v1608 = vadd.f32 %v1607, %v1606
        %v1609 = vld [vmem:[%s21] sm:$0x1]
        %v1610 = vld [vmem:[%s21 + $0x1] sm:$0x1]
        %v1611 = vsel %vm1251, %v1608, 0.0
        %1612 = vadd.xlane.f32.xlu0 %v1611
        %v1613 = vpop.xlane.xlu0 %1612
        %v1614 = vrcp.pop 32.0
        %v1615 = vmul.f32 %v1613, %v1614
        %v1616 = vsub.f32 %v1608, %v1615
        %v1617 = vmul.f32 %v1616, %v1616
        %v1618 = vsel %vm1251, %v1617, 0.0
        %1619 = vadd.xlane.f32.xlu0 %v1618
        %v1620 = vpop.xlane.xlu0 %1619
        %v1621 = vmul.f32 %v1620, %v1614
        %v1622 = vadd.f32 %v1621, 1e-05
        %v1623 = vrsqrt.pop %v1622
        %v1624 = vmul.f32 %v1616, %v1623
        %v1625 = vlaneseq
        %v1626 = vshrl.u32 %v1625, 7
        %v1627 = vsub.s32 0, %v1626
        %v1628 = vrot.slane %v1609, %v1627
        %v1629 = vmul.f32 %v1624, %v1628
        %v1630 = vlaneseq
        %v1631 = vshrl.u32 %v1630, 7
        %v1632 = vsub.s32 0, %v1631
        %v1633 = vrot.slane %v1610, %v1632
        %v1634 = vadd.f32 %v1629, %v1633
        %v1635 = vld [vmem:[%s13] sm:$0xff]
        %v1636 = vld [vmem:[%s13 + $0x8] sm:$0xff]
        %v1637 = vld [vmem:[%s13 + $0x10] sm:$0xff]
        %v1638 = vld [vmem:[%s13 + $0x18] sm:$0xff]
        %v1639 = vld [vmem:[%s14] sm:$0x1]
        %v1641 = vlaneseq
        %v1642 = vshrl.u32 %v1641, 7
        %v1643 = vsub.s32 0, %v1642
        %v1644 = vrot.slane %v1639, %v1643
        %v1647 = vsel %vm1251, %v1634, 0
        %1649 = vmatprep.subr.mxu0 0.0
        %1650 = vmatpush1.msra.mxu0 %v1635
        %1651 = vmatprep.subr.mxu0 0.0
        %1652 = vmatpush1.msra.mxu0 %v1636
        %1653 = vmatprep.subr.mxu0 0.0
        %1654 = vmatpush1.msra.mxu0 %v1637
        %1655 = vmatprep.subr.mxu0 0.0
        %1656 = vmatpush1.msra.mxu0 %v1638
        %1657 = vmatprep.subr.mxu0 0.0
        %1658 = vmatpush1.msra.mxu0 0.0
        %1659 = vmatprep.subr.mxu0 0.0
        %1660 = vmatpush1.msra.mxu0 0.0
        %1661 = vmatprep.subr.mxu0 0.0
        %1662 = vmatpush1.msra.mxu0 0.0
        %1663 = vmatprep.subr.mxu0 0.0
        %1664 = vmatpush1.msra.mxu0 0.0
        %1665 = vmatprep.subr.mxu0 0.0
        %1666 = vmatpush1.msra.mxu0 0.0
        %1667 = vmatprep.subr.mxu0 0.0
        %1668 = vmatpush1.msra.mxu0 0.0
        %1669 = vmatprep.subr.mxu0 0.0
        %1670 = vmatpush1.msra.mxu0 0.0
        %1671 = vmatprep.subr.mxu0 0.0
        %1672 = vmatpush1.msra.mxu0 0.0
        %1673 = vmatprep.subr.mxu0 0.0
        %1674 = vmatpush1.msra.mxu0 0.0
        %1675 = vmatprep.subr.mxu0 0.0
        %1676 = vmatpush1.msra.mxu0 0.0
        %1677 = vmatprep.subr.mxu0 0.0
        %1678 = vmatpush1.msra.mxu0 0.0
        %1679 = vmatprep.subr.mxu0 0.0
        %1680 = vmatpush1.msra.mxu0 0.0
        %1681 = vmatprep.subr.mxu0 0.0
        %1682 = vmatpush1.msra.mxu0 0.0
        %1683 = vmatprep.subr.mxu0 0.0
        %1684 = vmatpush1.msra.mxu0 0.0
        %1685 = vmatprep.subr.mxu0 0.0
        %1686 = vmatpush1.msra.mxu0 0.0
        %1687 = vmatprep.subr.mxu0 0.0
        %1688 = vmatpush1.msra.mxu0 0.0
        %1689 = vmatprep.subr.mxu0 0.0
        %1690 = vmatpush1.msra.mxu0 0.0
        %1691 = vmatprep.subr.mxu0 0.0
        %1692 = vmatpush1.msra.mxu0 0.0
        %1693 = vmatprep.subr.mxu0 0.0
        %1694 = vmatpush1.msra.mxu0 0.0
        %1695 = vmatprep.subr.mxu0 0.0
        %1696 = vmatpush1.msra.mxu0 0.0
        %1697 = vmatprep.subr.mxu0 0.0
        %1698 = vmatpush1.msra.mxu0 0.0
        %1699 = vmatprep.subr.mxu0 0.0
        %1700 = vmatpush1.msra.mxu0 0.0
        %1701 = vmatprep.subr.mxu0 0.0
        %1702 = vmatpush1.msra.mxu0 0.0
        %1703 = vmatprep.subr.mxu0 0.0
        %1704 = vmatpush1.msra.mxu0 0.0
        %1705 = vmatprep.subr.mxu0 0.0
        %1706 = vmatpush1.msra.mxu0 0.0
        %1707 = vmatprep.subr.mxu0 0.0
        %1708 = vmatpush1.msra.mxu0 0.0
        %1709 = vmatprep.subr.mxu0 0.0
        %1710 = vmatpush1.msra.mxu0 0.0
        %1711 = vmatprep.subr.mxu0 0.0
        %1712 = vmatpush1.msra.mxu0 0.0
        %1713 = vmatprep.mubr.f32.mxu0 0.0
        %1714 = vmatmul.mubr.f32.gmra.mrb[0].mxu0 %v1647
        %v1715 = vpop.f32.mrb[0].mxu0
        %v1716 = vadd.f32 %v1644, %v1715
        %v1717 = vpop.f32.mrb[0].mxu0
        %1718 = vdwg.mxu0
        %v1719 = vmax.f32 %v1716, 0.0
        %v1720 = vld [vmem:[%s15] sm:$0xff]
        %v1721 = vld [vmem:[%s15 + $0x8] sm:$0xff]
        %v1722 = vld [vmem:[%s15 + $0x10] sm:$0xff]
        %v1723 = vld [vmem:[%s15 + $0x18] sm:$0xff]
        %v1724 = vld [vmem:[%s15 + $0x20] sm:$0xff]
        %v1725 = vld [vmem:[%s15 + $0x28] sm:$0xff]
        %v1726 = vld [vmem:[%s15 + $0x30] sm:$0xff]
        %v1727 = vld [vmem:[%s15 + $0x38] sm:$0xff]
        %v1728 = vld [vmem:[%s16] sm:$0x1]
        %v1730 = vlaneseq
        %v1731 = vshrl.u32 %v1730, 7
        %v1732 = vsub.s32 0, %v1731
        %v1733 = vrot.slane %v1728, %v1732
        %vm1735 = vcmask 523264
        %v1737 = vsel %vm1735, %v1719, 0
        %1739 = vmatprep.subr.mxu0 0.0
        %1740 = vmatpush1.msra.mxu0 %v1720
        %1741 = vmatprep.subr.mxu0 0.0
        %1742 = vmatpush1.msra.mxu0 %v1721
        %1743 = vmatprep.subr.mxu0 0.0
        %1744 = vmatpush1.msra.mxu0 %v1722
        %1745 = vmatprep.subr.mxu0 0.0
        %1746 = vmatpush1.msra.mxu0 %v1723
        %1747 = vmatprep.subr.mxu0 0.0
        %1748 = vmatpush1.msra.mxu0 %v1724
        %1749 = vmatprep.subr.mxu0 0.0
        %1750 = vmatpush1.msra.mxu0 %v1725
        %1751 = vmatprep.subr.mxu0 0.0
        %1752 = vmatpush1.msra.mxu0 %v1726
        %1753 = vmatprep.subr.mxu0 0.0
        %1754 = vmatpush1.msra.mxu0 %v1727
        %1755 = vmatprep.subr.mxu0 0.0
        %1756 = vmatpush1.msra.mxu0 0.0
        %1757 = vmatprep.subr.mxu0 0.0
        %1758 = vmatpush1.msra.mxu0 0.0
        %1759 = vmatprep.subr.mxu0 0.0
        %1760 = vmatpush1.msra.mxu0 0.0
        %1761 = vmatprep.subr.mxu0 0.0
        %1762 = vmatpush1.msra.mxu0 0.0
        %1763 = vmatprep.subr.mxu0 0.0
        %1764 = vmatpush1.msra.mxu0 0.0
        %1765 = vmatprep.subr.mxu0 0.0
        %1766 = vmatpush1.msra.mxu0 0.0
        %1767 = vmatprep.subr.mxu0 0.0
        %1768 = vmatpush1.msra.mxu0 0.0
        %1769 = vmatprep.subr.mxu0 0.0
        %1770 = vmatpush1.msra.mxu0 0.0
        %1771 = vmatprep.subr.mxu0 0.0
        %1772 = vmatpush1.msra.mxu0 0.0
        %1773 = vmatprep.subr.mxu0 0.0
        %1774 = vmatpush1.msra.mxu0 0.0
        %1775 = vmatprep.subr.mxu0 0.0
        %1776 = vmatpush1.msra.mxu0 0.0
        %1777 = vmatprep.subr.mxu0 0.0
        %1778 = vmatpush1.msra.mxu0 0.0
        %1779 = vmatprep.subr.mxu0 0.0
        %1780 = vmatpush1.msra.mxu0 0.0
        %1781 = vmatprep.subr.mxu0 0.0
        %1782 = vmatpush1.msra.mxu0 0.0
        %1783 = vmatprep.subr.mxu0 0.0
        %1784 = vmatpush1.msra.mxu0 0.0
        %1785 = vmatprep.subr.mxu0 0.0
        %1786 = vmatpush1.msra.mxu0 0.0
        %1787 = vmatprep.subr.mxu0 0.0
        %1788 = vmatpush1.msra.mxu0 0.0
        %1789 = vmatprep.subr.mxu0 0.0
        %1790 = vmatpush1.msra.mxu0 0.0
        %1791 = vmatprep.subr.mxu0 0.0
        %1792 = vmatpush1.msra.mxu0 0.0
        %1793 = vmatprep.subr.mxu0 0.0
        %1794 = vmatpush1.msra.mxu0 0.0
        %1795 = vmatprep.subr.mxu0 0.0
        %1796 = vmatpush1.msra.mxu0 0.0
        %1797 = vmatprep.subr.mxu0 0.0
        %1798 = vmatpush1.msra.mxu0 0.0
        %1799 = vmatprep.subr.mxu0 0.0
        %1800 = vmatpush1.msra.mxu0 0.0
        %1801 = vmatprep.subr.mxu0 0.0
        %1802 = vmatpush1.msra.mxu0 0.0
        %1803 = vmatprep.mubr.f32.mxu0 0.0
        %1804 = vmatmul.mubr.f32.gmra.mrb[0].mxu0 %v1737
        %v1805 = vpop.f32.mrb[0].mxu0
        %v1806 = vadd.f32 %v1733, %v1805
        %v1807 = vpop.f32.mrb[0].mxu0
        %1808 = vdwg.mxu0
        %v1809 = vadd.f32 %v1634, %v1806
        %v1810 = vld [vmem:[%s21 + $0x2] sm:$0x1]
        %v1811 = vld [vmem:[%s21 + $0x3] sm:$0x1]
        %v1812 = vsel %vm1251, %v1809, 0.0
        %1813 = vadd.xlane.f32.xlu0 %v1812
        %v1814 = vpop.xlane.xlu0 %1813
        %v1815 = vmul.f32 %v1814, %v1614
        %v1816 = vsub.f32 %v1809, %v1815
        %v1817 = vmul.f32 %v1816, %v1816
        %v1818 = vsel %vm1251, %v1817, 0.0
        %1819 = vadd.xlane.f32.xlu0 %v1818
        %v1820 = vpop.xlane.xlu0 %1819
        %v1821 = vmul.f32 %v1820, %v1614
        %v1822 = vadd.f32 %v1821, 1e-05
        %v1823 = vrsqrt.pop %v1822
        %v1824 = vmul.f32 %v1816, %v1823
        %v1825 = vlaneseq
        %v1826 = vshrl.u32 %v1825, 7
        %v1827 = vsub.s32 0, %v1826
        %v1828 = vrot.slane %v1810, %v1827
        %v1829 = vmul.f32 %v1824, %v1828
        %v1830 = vlaneseq
        %v1831 = vshrl.u32 %v1830, 7
        %v1832 = vsub.s32 0, %v1831
        %v1833 = vrot.slane %v1811, %v1832
        %v1834 = vadd.f32 %v1829, %v1833
        %1835 = vst.msk [vmem:[%s913] sm:$0xff] %vm1251, %v1834
        %1844 = vrot.lane.b32.xlu0 %v1225, 32
        %v1845 = vpop.permute.xlu0 %1844
        %1846 = vrot.lane.b32.xlu0 %v1226, 32
        %v1847 = vpop.permute.xlu0 %1846
        %1848 = vrot.lane.b32.xlu0 %v1227, 32
        %v1849 = vpop.permute.xlu0 %1848
        %1850 = vrot.lane.b32.xlu0 %v1228, 32
        %v1851 = vpop.permute.xlu0 %1850
        %1852 = vrot.lane.b32.xlu0 %v1229, 32
        %v1853 = vpop.permute.xlu0 %1852
        %1854 = vrot.lane.b32.xlu0 %v1230, 32
        %v1855 = vpop.permute.xlu0 %1854
        %1856 = vrot.lane.b32.xlu0 %v1231, 32
        %v1857 = vpop.permute.xlu0 %1856
        %1858 = vrot.lane.b32.xlu0 %v1232, 32
        %v1859 = vpop.permute.xlu0 %1858
        %v1868 = vmul.f32 %v1476, %v1845
        %v1869 = vmul.f32 %v1476, %v1847
        %v1870 = vmul.f32 %v1476, %v1849
        %v1871 = vmul.f32 %v1476, %v1851
        %v1872 = vmul.f32 %v1476, %v1853
        %v1873 = vmul.f32 %v1476, %v1855
        %v1874 = vmul.f32 %v1476, %v1857
        %v1875 = vmul.f32 %v1476, %v1859
        %1884 = vrot.lane.b32.xlu0 %v1868, 96
        %v1885 = vpop.permute.xlu0 %1884
        %1886 = vrot.lane.b32.xlu0 %v1869, 96
        %v1887 = vpop.permute.xlu0 %1886
        %1888 = vrot.lane.b32.xlu0 %v1870, 96
        %v1889 = vpop.permute.xlu0 %1888
        %1890 = vrot.lane.b32.xlu0 %v1871, 96
        %v1891 = vpop.permute.xlu0 %1890
        %1892 = vrot.lane.b32.xlu0 %v1872, 96
        %v1893 = vpop.permute.xlu0 %1892
        %1894 = vrot.lane.b32.xlu0 %v1873, 96
        %v1895 = vpop.permute.xlu0 %1894
        %1896 = vrot.lane.b32.xlu0 %v1874, 96
        %v1897 = vpop.permute.xlu0 %1896
        %1898 = vrot.lane.b32.xlu0 %v1875, 96
        %v1899 = vpop.permute.xlu0 %1898
        %v1908 = vadd.f32 %v1508, %v1885
        %v1909 = vadd.f32 %v1508, %v1887
        %v1910 = vadd.f32 %v1508, %v1889
        %v1911 = vadd.f32 %v1508, %v1891
        %v1912 = vadd.f32 %v1508, %v1893
        %v1913 = vadd.f32 %v1508, %v1895
        %v1914 = vadd.f32 %v1508, %v1897
        %v1915 = vadd.f32 %v1508, %v1899
        %v1916 = vld [vmem:[%s9] sm:$0xff]
        %v1917 = vld [vmem:[%s9 + $0x8] sm:$0xff]
        %v1918 = vld [vmem:[%s9 + $0x10] sm:$0xff]
        %v1919 = vld [vmem:[%s9 + $0x18] sm:$0xff]
        %v1920 = vld [vmem:[%s10] sm:$0x1]
        %v1922 = vlaneseq
        %v1923 = vshrl.u32 %v1922, 7
        %v1924 = vsub.s32 0, %v1923
        %v1925 = vrot.slane %v1920, %v1924
        %v1928 = vsel %vm1251, %v1908, 0
        %v1931 = vsel %vm1251, %v1909, 0
        %v1934 = vsel %vm1251, %v1910, 0
        %v1937 = vsel %vm1251, %v1911, 0
        %v1940 = vsel %vm1251, %v1912, 0
        %v1943 = vsel %vm1251, %v1913, 0
        %v1946 = vsel %vm1251, %v1914, 0
        %v1949 = vsel %vm1251, %v1915, 0
        %1951 = vmatprep.subr.mxu0 0.0
        %1952 = vmatpush1.msra.mxu0 %v1916
        %1953 = vmatprep.subr.mxu0 0.0
        %1954 = vmatpush1.msra.mxu0 %v1917
        %1955 = vmatprep.subr.mxu0 0.0
        %1956 = vmatpush1.msra.mxu0 %v1918
        %1957 = vmatprep.subr.mxu0 0.0
        %1958 = vmatpush1.msra.mxu0 %v1919
        %1959 = vmatprep.subr.mxu0 0.0
        %1960 = vmatpush1.msra.mxu0 0.0
        %1961 = vmatprep.subr.mxu0 0.0
        %1962 = vmatpush1.msra.mxu0 0.0
        %1963 = vmatprep.subr.mxu0 0.0
        %1964 = vmatpush1.msra.mxu0 0.0
        %1965 = vmatprep.subr.mxu0 0.0
        %1966 = vmatpush1.msra.mxu0 0.0
        %1967 = vmatprep.subr.mxu0 0.0
        %1968 = vmatpush1.msra.mxu0 0.0
        %1969 = vmatprep.subr.mxu0 0.0
        %1970 = vmatpush1.msra.mxu0 0.0
        %1971 = vmatprep.subr.mxu0 0.0
        %1972 = vmatpush1.msra.mxu0 0.0
        %1973 = vmatprep.subr.mxu0 0.0
        %1974 = vmatpush1.msra.mxu0 0.0
        %1975 = vmatprep.subr.mxu0 0.0
        %1976 = vmatpush1.msra.mxu0 0.0
        %1977 = vmatprep.subr.mxu0 0.0
        %1978 = vmatpush1.msra.mxu0 0.0
        %1979 = vmatprep.subr.mxu0 0.0
        %1980 = vmatpush1.msra.mxu0 0.0
        %1981 = vmatprep.subr.mxu0 0.0
        %1982 = vmatpush1.msra.mxu0 0.0
        %1983 = vmatprep.subr.mxu0 0.0
        %1984 = vmatpush1.msra.mxu0 0.0
        %1985 = vmatprep.subr.mxu0 0.0
        %1986 = vmatpush1.msra.mxu0 0.0
        %1987 = vmatprep.subr.mxu0 0.0
        %1988 = vmatpush1.msra.mxu0 0.0
        %1989 = vmatprep.subr.mxu0 0.0
        %1990 = vmatpush1.msra.mxu0 0.0
        %1991 = vmatprep.subr.mxu0 0.0
        %1992 = vmatpush1.msra.mxu0 0.0
        %1993 = vmatprep.subr.mxu0 0.0
        %1994 = vmatpush1.msra.mxu0 0.0
        %1995 = vmatprep.subr.mxu0 0.0
        %1996 = vmatpush1.msra.mxu0 0.0
        %1997 = vmatprep.subr.mxu0 0.0
        %1998 = vmatpush1.msra.mxu0 0.0
        %1999 = vmatprep.subr.mxu0 0.0
        %2000 = vmatpush1.msra.mxu0 0.0
        %2001 = vmatprep.subr.mxu0 0.0
        %2002 = vmatpush1.msra.mxu0 0.0
        %2003 = vmatprep.subr.mxu0 0.0
        %2004 = vmatpush1.msra.mxu0 0.0
        %2005 = vmatprep.subr.mxu0 0.0
        %2006 = vmatpush1.msra.mxu0 0.0
        %2007 = vmatprep.subr.mxu0 0.0
        %2008 = vmatpush1.msra.mxu0 0.0
        %2009 = vmatprep.subr.mxu0 0.0
        %2010 = vmatpush1.msra.mxu0 0.0
        %2011 = vmatprep.subr.mxu0 0.0
        %2012 = vmatpush1.msra.mxu0 0.0
        %2013 = vmatprep.subr.mxu0 0.0
        %2014 = vmatpush1.msra.mxu0 0.0
        %2015 = vmatprep.mubr.f32.mxu0 0.0
        %2016 = vmatmul.mubr.f32.gmra.mrb[0].mxu0 %v1928
        %v2017 = vpop.f32.mrb[0].mxu0
        %v2018 = vadd.f32 %v1925, %v2017
        %v2019 = vpop.f32.mrb[0].mxu0
        %2020 = vmatprep.mubr.f32.mxu0 0.0
        %2021 = vmatmul.mubr.f32.gmra.mrb[0].mxu0 %v1931
        %v2022 = vpop.f32.mrb[0].mxu0
        %v2023 = vadd.f32 %v1925, %v2022
        %v2024 = vpop.f32.mrb[0].mxu0
        %2025 = vmatprep.mubr.f32.mxu0 0.0
        %2026 = vmatmul.mubr.f32.gmra.mrb[0].mxu0 %v1934
        %v2027 = vpop.f32.mrb[0].mxu0
        %v2028 = vadd.f32 %v1925, %v2027
        %v2029 = vpop.f32.mrb[0].mxu0
        %2030 = vmatprep.mubr.f32.mxu0 0.0
        %2031 = vmatmul.mubr.f32.gmra.mrb[0].mxu0 %v1937
        %v2032 = vpop.f32.mrb[0].mxu0
        %v2033 = vadd.f32 %v1925, %v2032
        %v2034 = vpop.f32.mrb[0].mxu0
        %2035 = vmatprep.mubr.f32.mxu0 0.0
        %2036 = vmatmul.mubr.f32.gmra.mrb[0].mxu0 %v1940
        %v2037 = vpop.f32.mrb[0].mxu0
        %v2038 = vadd.f32 %v1925, %v2037
        %v2039 = vpop.f32.mrb[0].mxu0
        %2040 = vmatprep.mubr.f32.mxu0 0.0
        %2041 = vmatmul.mubr.f32.gmra.mrb[0].mxu0 %v1943
        %v2042 = vpop.f32.mrb[0].mxu0
        %v2043 = vadd.f32 %v1925, %v2042
        %v2044 = vpop.f32.mrb[0].mxu0
        %2045 = vmatprep.mubr.f32.mxu0 0.0
        %2046 = vmatmul.mubr.f32.gmra.mrb[0].mxu0 %v1946
        %v2047 = vpop.f32.mrb[0].mxu0
        %v2048 = vadd.f32 %v1925, %v2047
        %v2049 = vpop.f32.mrb[0].mxu0
        %2050 = vmatprep.mubr.f32.mxu0 0.0
        %2051 = vmatmul.mubr.f32.gmra.mrb[0].mxu0 %v1949
        %v2052 = vpop.f32.mrb[0].mxu0
        %v2053 = vadd.f32 %v1925, %v2052
        %v2054 = vpop.f32.mrb[0].mxu0
        %2055 = vdwg.mxu0
        %v2057 = vlaneseq
        %v2058 = vshrl.u32 %v2057, 7
        %v2059 = vsub.s32 0, %v2058
        %v2060 = vrot.slane %v925, %v2059
        %v2062 = vmul.f32 %v1604, %v2060
        %v2063 = vlaneseq
        %v2064 = vshrl.u32 %v2063, 7
        %v2065 = vsub.s32 0, %v2064
        %v2066 = vrot.slane %v2062, %v2065
        %2068 = vbcast.lane.b32.xlu0 %v2066, 256
        %v2069 = vpop.permute.xlu0 %2068
        %v2070 = vlaneseq
        %v2071 = vshrl.u32 %v2070, 7
        %v2072 = vsub.s32 1, %v2071
        %v2073 = vrot.slane %v2062, %v2072
        %2075 = vbcast.lane.b32.xlu0 %v2073, 256
        %v2076 = vpop.permute.xlu0 %2075
        %v2077 = vlaneseq
        %v2078 = vshrl.u32 %v2077, 7
        %v2079 = vsub.s32 2, %v2078
        %v2080 = vrot.slane %v2062, %v2079
        %2082 = vbcast.lane.b32.xlu0 %v2080, 256
        %v2083 = vpop.permute.xlu0 %2082
        %v2084 = vlaneseq
        %v2085 = vshrl.u32 %v2084, 7
        %v2086 = vsub.s32 3, %v2085
        %v2087 = vrot.slane %v2062, %v2086
        %2089 = vbcast.lane.b32.xlu0 %v2087, 256
        %v2090 = vpop.permute.xlu0 %2089
        %v2091 = vlaneseq
        %v2092 = vshrl.u32 %v2091, 7
        %v2093 = vsub.s32 4, %v2092
        %v2094 = vrot.slane %v2062, %v2093
        %2096 = vbcast.lane.b32.xlu0 %v2094, 256
        %v2097 = vpop.permute.xlu0 %2096
        %v2098 = vlaneseq
        %v2099 = vshrl.u32 %v2098, 7
        %v2100 = vsub.s32 5, %v2099
        %v2101 = vrot.slane %v2062, %v2100
        %2103 = vbcast.lane.b32.xlu0 %v2101, 256
        %v2104 = vpop.permute.xlu0 %2103
        %v2105 = vlaneseq
        %v2106 = vshrl.u32 %v2105, 7
        %v2107 = vsub.s32 6, %v2106
        %v2108 = vrot.slane %v2062, %v2107
        %2110 = vbcast.lane.b32.xlu0 %v2108, 256
        %v2111 = vpop.permute.xlu0 %2110
        %v2112 = vlaneseq
        %v2113 = vshrl.u32 %v2112, 7
        %v2114 = vsub.s32 7, %v2113
        %v2115 = vrot.slane %v2062, %v2114
        %2117 = vbcast.lane.b32.xlu0 %v2115, 256
        %v2118 = vpop.permute.xlu0 %2117
        %v2119 = vmul.f32 %v2018, %v2069
        %v2120 = vmul.f32 %v2023, %v2076
        %v2121 = vmul.f32 %v2028, %v2083
        %v2122 = vmul.f32 %v2033, %v2090
        %v2123 = vmul.f32 %v2038, %v2097
        %v2124 = vmul.f32 %v2043, %v2104
        %v2125 = vmul.f32 %v2048, %v2111
        %v2126 = vmul.f32 %v2053, %v2118
        %v2127 = vadd.f32 %v917, %v2119
        %v2128 = vadd.f32 %v918, %v2120
        %v2129 = vadd.f32 %v919, %v2121
        %v2130 = vadd.f32 %v920, %v2122
        %v2131 = vadd.f32 %v921, %v2123
        %v2132 = vadd.f32 %v922, %v2124
        %v2133 = vadd.f32 %v923, %v2125
        %v2134 = vadd.f32 %v924, %v2126
        %v2135 = vld [vmem:[%s22] sm:$0x1]
        %v2136 = vld [vmem:[%s22 + $0x1] sm:$0x1]
        %v2137 = vsel %vm937, %v2127, 0.0
        %2138 = vadd.xlane.f32.xlu0 %v2137
        %v2139 = vpop.xlane.xlu0 %2138
        %v2140 = vsel %vm937, %v2128, 0.0
        %2141 = vadd.xlane.f32.xlu0 %v2140
        %v2142 = vpop.xlane.xlu0 %2141
        %v2143 = vsel %vm937, %v2129, 0.0
        %2144 = vadd.xlane.f32.xlu0 %v2143
        %v2145 = vpop.xlane.xlu0 %2144
        %v2146 = vsel %vm937, %v2130, 0.0
        %2147 = vadd.xlane.f32.xlu0 %v2146
        %v2148 = vpop.xlane.xlu0 %2147
        %v2149 = vsel %vm937, %v2131, 0.0
        %2150 = vadd.xlane.f32.xlu0 %v2149
        %v2151 = vpop.xlane.xlu0 %2150
        %v2152 = vsel %vm937, %v2132, 0.0
        %2153 = vadd.xlane.f32.xlu0 %v2152
        %v2154 = vpop.xlane.xlu0 %2153
        %v2155 = vsel %vm937, %v2133, 0.0
        %2156 = vadd.xlane.f32.xlu0 %v2155
        %v2157 = vpop.xlane.xlu0 %2156
        %v2158 = vsel %vm937, %v2134, 0.0
        %2159 = vadd.xlane.f32.xlu0 %v2158
        %v2160 = vpop.xlane.xlu0 %2159
        %v2161 = vrcp.pop 16.0
        %v2162 = vmul.f32 %v2139, %v2161
        %v2163 = vmul.f32 %v2142, %v2161
        %v2164 = vmul.f32 %v2145, %v2161
        %v2165 = vmul.f32 %v2148, %v2161
        %v2166 = vmul.f32 %v2151, %v2161
        %v2167 = vmul.f32 %v2154, %v2161
        %v2168 = vmul.f32 %v2157, %v2161
        %v2169 = vmul.f32 %v2160, %v2161
        %v2170 = vsub.f32 %v2127, %v2162
        %v2171 = vsub.f32 %v2128, %v2163
        %v2172 = vsub.f32 %v2129, %v2164
        %v2173 = vsub.f32 %v2130, %v2165
        %v2174 = vsub.f32 %v2131, %v2166
        %v2175 = vsub.f32 %v2132, %v2167
        %v2176 = vsub.f32 %v2133, %v2168
        %v2177 = vsub.f32 %v2134, %v2169
        %v2178 = vmul.f32 %v2170, %v2170
        %v2179 = vmul.f32 %v2171, %v2171
        %v2180 = vmul.f32 %v2172, %v2172
        %v2181 = vmul.f32 %v2173, %v2173
        %v2182 = vmul.f32 %v2174, %v2174
        %v2183 = vmul.f32 %v2175, %v2175
        %v2184 = vmul.f32 %v2176, %v2176
        %v2185 = vmul.f32 %v2177, %v2177
        %v2186 = vsel %vm937, %v2178, 0.0
        %2187 = vadd.xlane.f32.xlu0 %v2186
        %v2188 = vpop.xlane.xlu0 %2187
        %v2189 = vsel %vm937, %v2179, 0.0
        %2190 = vadd.xlane.f32.xlu0 %v2189
        %v2191 = vpop.xlane.xlu0 %2190
        %v2192 = vsel %vm937, %v2180, 0.0
        %2193 = vadd.xlane.f32.xlu0 %v2192
        %v2194 = vpop.xlane.xlu0 %2193
        %v2195 = vsel %vm937, %v2181, 0.0
        %2196 = vadd.xlane.f32.xlu0 %v2195
        %v2197 = vpop.xlane.xlu0 %2196
        %v2198 = vsel %vm937, %v2182, 0.0
        %2199 = vadd.xlane.f32.xlu0 %v2198
        %v2200 = vpop.xlane.xlu0 %2199
        %v2201 = vsel %vm937, %v2183, 0.0
        %2202 = vadd.xlane.f32.xlu0 %v2201
        %v2203 = vpop.xlane.xlu0 %2202
        %v2204 = vsel %vm937, %v2184, 0.0
        %2205 = vadd.xlane.f32.xlu0 %v2204
        %v2206 = vpop.xlane.xlu0 %2205
        %v2207 = vsel %vm937, %v2185, 0.0
        %2208 = vadd.xlane.f32.xlu0 %v2207
        %v2209 = vpop.xlane.xlu0 %2208
        %v2210 = vmul.f32 %v2188, %v2161
        %v2211 = vmul.f32 %v2191, %v2161
        %v2212 = vmul.f32 %v2194, %v2161
        %v2213 = vmul.f32 %v2197, %v2161
        %v2214 = vmul.f32 %v2200, %v2161
        %v2215 = vmul.f32 %v2203, %v2161
        %v2216 = vmul.f32 %v2206, %v2161
        %v2217 = vmul.f32 %v2209, %v2161
        %v2218 = vadd.f32 %v2210, 1e-05
        %v2219 = vadd.f32 %v2211, 1e-05
        %v2220 = vadd.f32 %v2212, 1e-05
        %v2221 = vadd.f32 %v2213, 1e-05
        %v2222 = vadd.f32 %v2214, 1e-05
        %v2223 = vadd.f32 %v2215, 1e-05
        %v2224 = vadd.f32 %v2216, 1e-05
        %v2225 = vadd.f32 %v2217, 1e-05
        %v2226 = vrsqrt.pop %v2218
        %v2227 = vrsqrt.pop %v2219
        %v2228 = vrsqrt.pop %v2220
        %v2229 = vrsqrt.pop %v2221
        %v2230 = vrsqrt.pop %v2222
        %v2231 = vrsqrt.pop %v2223
        %v2232 = vrsqrt.pop %v2224
        %v2233 = vrsqrt.pop %v2225
        %v2234 = vmul.f32 %v2170, %v2226
        %v2235 = vmul.f32 %v2171, %v2227
        %v2236 = vmul.f32 %v2172, %v2228
        %v2237 = vmul.f32 %v2173, %v2229
        %v2238 = vmul.f32 %v2174, %v2230
        %v2239 = vmul.f32 %v2175, %v2231
        %v2240 = vmul.f32 %v2176, %v2232
        %v2241 = vmul.f32 %v2177, %v2233
        %v2242 = vlaneseq
        %v2243 = vshrl.u32 %v2242, 7
        %v2244 = vsub.s32 0, %v2243
        %v2245 = vrot.slane %v2135, %v2244
        %v2246 = vmul.f32 %v2234, %v2245
        %v2247 = vmul.f32 %v2235, %v2245
        %v2248 = vmul.f32 %v2236, %v2245
        %v2249 = vmul.f32 %v2237, %v2245
        %v2250 = vmul.f32 %v2238, %v2245
        %v2251 = vmul.f32 %v2239, %v2245
        %v2252 = vmul.f32 %v2240, %v2245
        %v2253 = vmul.f32 %v2241, %v2245
        %v2254 = vlaneseq
        %v2255 = vshrl.u32 %v2254, 7
        %v2256 = vsub.s32 0, %v2255
        %v2257 = vrot.slane %v2136, %v2256
        %v2258 = vadd.f32 %v2246, %v2257
        %v2259 = vadd.f32 %v2247, %v2257
        %v2260 = vadd.f32 %v2248, %v2257
        %v2261 = vadd.f32 %v2249, %v2257
        %v2262 = vadd.f32 %v2250, %v2257
        %v2263 = vadd.f32 %v2251, %v2257
        %v2264 = vadd.f32 %v2252, %v2257
        %v2265 = vadd.f32 %v2253, %v2257
        %v2266 = vld [vmem:[%s17] sm:$0xff]
        %v2267 = vld [vmem:[%s17 + $0x8] sm:$0xff]
        %v2268 = vld [vmem:[%s18] sm:$0x1]
        %v2270 = vlaneseq
        %v2271 = vshrl.u32 %v2270, 7
        %v2272 = vsub.s32 0, %v2271
        %v2273 = vrot.slane %v2268, %v2272
        %v2276 = vsel %vm937, %v2258, 0
        %v2279 = vsel %vm937, %v2259, 0
        %v2282 = vsel %vm937, %v2260, 0
        %v2285 = vsel %vm937, %v2261, 0
        %v2288 = vsel %vm937, %v2262, 0
        %v2291 = vsel %vm937, %v2263, 0
        %v2294 = vsel %vm937, %v2264, 0
        %v2297 = vsel %vm937, %v2265, 0
        %2299 = vmatprep.subr.mxu0 0.0
        %2300 = vmatpush1.msra.mxu0 %v2266
        %2301 = vmatprep.subr.mxu0 0.0
        %2302 = vmatpush1.msra.mxu0 %v2267
        %2303 = vmatprep.subr.mxu0 0.0
        %2304 = vmatpush1.msra.mxu0 0.0
        %2305 = vmatprep.subr.mxu0 0.0
        %2306 = vmatpush1.msra.mxu0 0.0
        %2307 = vmatprep.subr.mxu0 0.0
        %2308 = vmatpush1.msra.mxu0 0.0
        %2309 = vmatprep.subr.mxu0 0.0
        %2310 = vmatpush1.msra.mxu0 0.0
        %2311 = vmatprep.subr.mxu0 0.0
        %2312 = vmatpush1.msra.mxu0 0.0
        %2313 = vmatprep.subr.mxu0 0.0
        %2314 = vmatpush1.msra.mxu0 0.0
        %2315 = vmatprep.subr.mxu0 0.0
        %2316 = vmatpush1.msra.mxu0 0.0
        %2317 = vmatprep.subr.mxu0 0.0
        %2318 = vmatpush1.msra.mxu0 0.0
        %2319 = vmatprep.subr.mxu0 0.0
        %2320 = vmatpush1.msra.mxu0 0.0
        %2321 = vmatprep.subr.mxu0 0.0
        %2322 = vmatpush1.msra.mxu0 0.0
        %2323 = vmatprep.subr.mxu0 0.0
        %2324 = vmatpush1.msra.mxu0 0.0
        %2325 = vmatprep.subr.mxu0 0.0
        %2326 = vmatpush1.msra.mxu0 0.0
        %2327 = vmatprep.subr.mxu0 0.0
        %2328 = vmatpush1.msra.mxu0 0.0
        %2329 = vmatprep.subr.mxu0 0.0
        %2330 = vmatpush1.msra.mxu0 0.0
        %2331 = vmatprep.subr.mxu0 0.0
        %2332 = vmatpush1.msra.mxu0 0.0
        %2333 = vmatprep.subr.mxu0 0.0
        %2334 = vmatpush1.msra.mxu0 0.0
        %2335 = vmatprep.subr.mxu0 0.0
        %2336 = vmatpush1.msra.mxu0 0.0
        %2337 = vmatprep.subr.mxu0 0.0
        %2338 = vmatpush1.msra.mxu0 0.0
        %2339 = vmatprep.subr.mxu0 0.0
        %2340 = vmatpush1.msra.mxu0 0.0
        %2341 = vmatprep.subr.mxu0 0.0
        %2342 = vmatpush1.msra.mxu0 0.0
        %2343 = vmatprep.subr.mxu0 0.0
        %2344 = vmatpush1.msra.mxu0 0.0
        %2345 = vmatprep.subr.mxu0 0.0
        %2346 = vmatpush1.msra.mxu0 0.0
        %2347 = vmatprep.subr.mxu0 0.0
        %2348 = vmatpush1.msra.mxu0 0.0
        %2349 = vmatprep.subr.mxu0 0.0
        %2350 = vmatpush1.msra.mxu0 0.0
        %2351 = vmatprep.subr.mxu0 0.0
        %2352 = vmatpush1.msra.mxu0 0.0
        %2353 = vmatprep.subr.mxu0 0.0
        %2354 = vmatpush1.msra.mxu0 0.0
        %2355 = vmatprep.subr.mxu0 0.0
        %2356 = vmatpush1.msra.mxu0 0.0
        %2357 = vmatprep.subr.mxu0 0.0
        %2358 = vmatpush1.msra.mxu0 0.0
        %2359 = vmatprep.subr.mxu0 0.0
        %2360 = vmatpush1.msra.mxu0 0.0
        %2361 = vmatprep.subr.mxu0 0.0
        %2362 = vmatpush1.msra.mxu0 0.0
        %2363 = vmatprep.mubr.f32.mxu0 0.0
        %2364 = vmatmul.mubr.f32.gmra.mrb[0].mxu0 %v2276
        %v2365 = vpop.f32.mrb[0].mxu0
        %v2366 = vadd.f32 %v2273, %v2365
        %v2367 = vpop.f32.mrb[0].mxu0
        %2368 = vmatprep.mubr.f32.mxu0 0.0
        %2369 = vmatmul.mubr.f32.gmra.mrb[0].mxu0 %v2279
        %v2370 = vpop.f32.mrb[0].mxu0
        %v2371 = vadd.f32 %v2273, %v2370
        %v2372 = vpop.f32.mrb[0].mxu0
        %2373 = vmatprep.mubr.f32.mxu0 0.0
        %2374 = vmatmul.mubr.f32.gmra.mrb[0].mxu0 %v2282
        %v2375 = vpop.f32.mrb[0].mxu0
        %v2376 = vadd.f32 %v2273, %v2375
        %v2377 = vpop.f32.mrb[0].mxu0
        %2378 = vmatprep.mubr.f32.mxu0 0.0
        %2379 = vmatmul.mubr.f32.gmra.mrb[0].mxu0 %v2285
        %v2380 = vpop.f32.mrb[0].mxu0
        %v2381 = vadd.f32 %v2273, %v2380
        %v2382 = vpop.f32.mrb[0].mxu0
        %2383 = vmatprep.mubr.f32.mxu0 0.0
        %2384 = vmatmul.mubr.f32.gmra.mrb[0].mxu0 %v2288
        %v2385 = vpop.f32.mrb[0].mxu0
        %v2386 = vadd.f32 %v2273, %v2385
        %v2387 = vpop.f32.mrb[0].mxu0
        %2388 = vmatprep.mubr.f32.mxu0 0.0
        %2389 = vmatmul.mubr.f32.gmra.mrb[0].mxu0 %v2291
        %v2390 = vpop.f32.mrb[0].mxu0
        %v2391 = vadd.f32 %v2273, %v2390
        %v2392 = vpop.f32.mrb[0].mxu0
        %2393 = vmatprep.mubr.f32.mxu0 0.0
        %2394 = vmatmul.mubr.f32.gmra.mrb[0].mxu0 %v2294
        %v2395 = vpop.f32.mrb[0].mxu0
        %v2396 = vadd.f32 %v2273, %v2395
        %v2397 = vpop.f32.mrb[0].mxu0
        %2398 = vmatprep.mubr.f32.mxu0 0.0
        %2399 = vmatmul.mubr.f32.gmra.mrb[0].mxu0 %v2297
        %v2400 = vpop.f32.mrb[0].mxu0
        %v2401 = vadd.f32 %v2273, %v2400
        %v2402 = vpop.f32.mrb[0].mxu0
        %2403 = vdwg.mxu0
        %v2404 = vmax.f32 %v2366, 0.0
        %v2405 = vmax.f32 %v2371, 0.0
        %v2406 = vmax.f32 %v2376, 0.0
        %v2407 = vmax.f32 %v2381, 0.0
        %v2408 = vmax.f32 %v2386, 0.0
        %v2409 = vmax.f32 %v2391, 0.0
        %v2410 = vmax.f32 %v2396, 0.0
        %v2411 = vmax.f32 %v2401, 0.0
        %v2412 = vld [vmem:[%s19] sm:$0xff]
        %v2413 = vld [vmem:[%s19 + $0x8] sm:$0xff]
        %v2414 = vld [vmem:[%s19 + $0x10] sm:$0xff]
        %v2415 = vld [vmem:[%s19 + $0x18] sm:$0xff]
        %v2416 = vld [vmem:[%s20] sm:$0x1]
        %v2418 = vlaneseq
        %v2419 = vshrl.u32 %v2418, 7
        %v2420 = vsub.s32 0, %v2419
        %v2421 = vrot.slane %v2416, %v2420
        %v2424 = vsel %vm1251, %v2404, 0
        %v2427 = vsel %vm1251, %v2405, 0
        %v2430 = vsel %vm1251, %v2406, 0
        %v2433 = vsel %vm1251, %v2407, 0
        %v2436 = vsel %vm1251, %v2408, 0
        %v2439 = vsel %vm1251, %v2409, 0
        %v2442 = vsel %vm1251, %v2410, 0
        %v2445 = vsel %vm1251, %v2411, 0
        %2447 = vmatprep.subr.mxu0 0.0
        %2448 = vmatpush1.msra.mxu0 %v2412
        %2449 = vmatprep.subr.mxu0 0.0
        %2450 = vmatpush1.msra.mxu0 %v2413
        %2451 = vmatprep.subr.mxu0 0.0
        %2452 = vmatpush1.msra.mxu0 %v2414
        %2453 = vmatprep.subr.mxu0 0.0
        %2454 = vmatpush1.msra.mxu0 %v2415
        %2455 = vmatprep.subr.mxu0 0.0
        %2456 = vmatpush1.msra.mxu0 0.0
        %2457 = vmatprep.subr.mxu0 0.0
        %2458 = vmatpush1.msra.mxu0 0.0
        %2459 = vmatprep.subr.mxu0 0.0
        %2460 = vmatpush1.msra.mxu0 0.0
        %2461 = vmatprep.subr.mxu0 0.0
        %2462 = vmatpush1.msra.mxu0 0.0
        %2463 = vmatprep.subr.mxu0 0.0
        %2464 = vmatpush1.msra.mxu0 0.0
        %2465 = vmatprep.subr.mxu0 0.0
        %2466 = vmatpush1.msra.mxu0 0.0
        %2467 = vmatprep.subr.mxu0 0.0
        %2468 = vmatpush1.msra.mxu0 0.0
        %2469 = vmatprep.subr.mxu0 0.0
        %2470 = vmatpush1.msra.mxu0 0.0
        %2471 = vmatprep.subr.mxu0 0.0
        %2472 = vmatpush1.msra.mxu0 0.0
        %2473 = vmatprep.subr.mxu0 0.0
        %2474 = vmatpush1.msra.mxu0 0.0
        %2475 = vmatprep.subr.mxu0 0.0
        %2476 = vmatpush1.msra.mxu0 0.0
        %2477 = vmatprep.subr.mxu0 0.0
        %2478 = vmatpush1.msra.mxu0 0.0
        %2479 = vmatprep.subr.mxu0 0.0
        %2480 = vmatpush1.msra.mxu0 0.0
        %2481 = vmatprep.subr.mxu0 0.0
        %2482 = vmatpush1.msra.mxu0 0.0
        %2483 = vmatprep.subr.mxu0 0.0
        %2484 = vmatpush1.msra.mxu0 0.0
        %2485 = vmatprep.subr.mxu0 0.0
        %2486 = vmatpush1.msra.mxu0 0.0
        %2487 = vmatprep.subr.mxu0 0.0
        %2488 = vmatpush1.msra.mxu0 0.0
        %2489 = vmatprep.subr.mxu0 0.0
        %2490 = vmatpush1.msra.mxu0 0.0
        %2491 = vmatprep.subr.mxu0 0.0
        %2492 = vmatpush1.msra.mxu0 0.0
        %2493 = vmatprep.subr.mxu0 0.0
        %2494 = vmatpush1.msra.mxu0 0.0
        %2495 = vmatprep.subr.mxu0 0.0
        %2496 = vmatpush1.msra.mxu0 0.0
        %2497 = vmatprep.subr.mxu0 0.0
        %2498 = vmatpush1.msra.mxu0 0.0
        %2499 = vmatprep.subr.mxu0 0.0
        %2500 = vmatpush1.msra.mxu0 0.0
        %2501 = vmatprep.subr.mxu0 0.0
        %2502 = vmatpush1.msra.mxu0 0.0
        %2503 = vmatprep.subr.mxu0 0.0
        %2504 = vmatpush1.msra.mxu0 0.0
        %2505 = vmatprep.subr.mxu0 0.0
        %2506 = vmatpush1.msra.mxu0 0.0
        %2507 = vmatprep.subr.mxu0 0.0
        %2508 = vmatpush1.msra.mxu0 0.0
        %2509 = vmatprep.subr.mxu0 0.0
        %2510 = vmatpush1.msra.mxu0 0.0
        %2511 = vmatprep.mubr.f32.mxu0 0.0
        %2512 = vmatmul.mubr.f32.gmra.mrb[0].mxu0 %v2424
        %v2513 = vpop.f32.mrb[0].mxu0
        %v2514 = vadd.f32 %v2421, %v2513
        %v2515 = vpop.f32.mrb[0].mxu0
        %2516 = vmatprep.mubr.f32.mxu0 0.0
        %2517 = vmatmul.mubr.f32.gmra.mrb[0].mxu0 %v2427
        %v2518 = vpop.f32.mrb[0].mxu0
        %v2519 = vadd.f32 %v2421, %v2518
        %v2520 = vpop.f32.mrb[0].mxu0
        %2521 = vmatprep.mubr.f32.mxu0 0.0
        %2522 = vmatmul.mubr.f32.gmra.mrb[0].mxu0 %v2430
        %v2523 = vpop.f32.mrb[0].mxu0
        %v2524 = vadd.f32 %v2421, %v2523
        %v2525 = vpop.f32.mrb[0].mxu0
        %2526 = vmatprep.mubr.f32.mxu0 0.0
        %2527 = vmatmul.mubr.f32.gmra.mrb[0].mxu0 %v2433
        %v2528 = vpop.f32.mrb[0].mxu0
        %v2529 = vadd.f32 %v2421, %v2528
        %v2530 = vpop.f32.mrb[0].mxu0
        %2531 = vmatprep.mubr.f32.mxu0 0.0
        %2532 = vmatmul.mubr.f32.gmra.mrb[0].mxu0 %v2436
        %v2533 = vpop.f32.mrb[0].mxu0
        %v2534 = vadd.f32 %v2421, %v2533
        %v2535 = vpop.f32.mrb[0].mxu0
        %2536 = vmatprep.mubr.f32.mxu0 0.0
        %2537 = vmatmul.mubr.f32.gmra.mrb[0].mxu0 %v2439
        %v2538 = vpop.f32.mrb[0].mxu0
        %v2539 = vadd.f32 %v2421, %v2538
        %v2540 = vpop.f32.mrb[0].mxu0
        %2541 = vmatprep.mubr.f32.mxu0 0.0
        %2542 = vmatmul.mubr.f32.gmra.mrb[0].mxu0 %v2442
        %v2543 = vpop.f32.mrb[0].mxu0
        %v2544 = vadd.f32 %v2421, %v2543
        %v2545 = vpop.f32.mrb[0].mxu0
        %2546 = vmatprep.mubr.f32.mxu0 0.0
        %2547 = vmatmul.mubr.f32.gmra.mrb[0].mxu0 %v2445
        %v2548 = vpop.f32.mrb[0].mxu0
        %v2549 = vadd.f32 %v2421, %v2548
        %v2550 = vpop.f32.mrb[0].mxu0
        %2551 = vdwg.mxu0
        %v2552 = vadd.f32 %v2258, %v2514
        %v2553 = vadd.f32 %v2259, %v2519
        %v2554 = vadd.f32 %v2260, %v2524
        %v2555 = vadd.f32 %v2261, %v2529
        %v2556 = vadd.f32 %v2262, %v2534
        %v2557 = vadd.f32 %v2263, %v2539
        %v2558 = vadd.f32 %v2264, %v2544
        %v2559 = vadd.f32 %v2265, %v2549
        %v2560 = vld [vmem:[%s22 + $0x2] sm:$0x1]
        %v2561 = vld [vmem:[%s22 + $0x3] sm:$0x1]
        %v2562 = vsel %vm937, %v2552, 0.0
        %2563 = vadd.xlane.f32.xlu0 %v2562
        %v2564 = vpop.xlane.xlu0 %2563
        %v2565 = vsel %vm937, %v2553, 0.0
        %2566 = vadd.xlane.f32.xlu0 %v2565
        %v2567 = vpop.xlane.xlu0 %2566
        %v2568 = vsel %vm937, %v2554, 0.0
        %2569 = vadd.xlane.f32.xlu0 %v2568
        %v2570 = vpop.xlane.xlu0 %2569
        %v2571 = vsel %vm937, %v2555, 0.0
        %2572 = vadd.xlane.f32.xlu0 %v2571
        %v2573 = vpop.xlane.xlu0 %2572
        %v2574 = vsel %vm937, %v2556, 0.0
        %2575 = vadd.xlane.f32.xlu0 %v2574
        %v2576 = vpop.xlane.xlu0 %2575
        %v2577 = vsel %vm937, %v2557, 0.0
        %2578 = vadd.xlane.f32.xlu0 %v2577
        %v2579 = vpop.xlane.xlu0 %2578
        %v2580 = vsel %vm937, %v2558, 0.0
        %2581 = vadd.xlane.f32.xlu0 %v2580
        %v2582 = vpop.xlane.xlu0 %2581
        %v2583 = vsel %vm937, %v2559, 0.0
        %2584 = vadd.xlane.f32.xlu0 %v2583
        %v2585 = vpop.xlane.xlu0 %2584
        %v2586 = vmul.f32 %v2564, %v2161
        %v2587 = vmul.f32 %v2567, %v2161
        %v2588 = vmul.f32 %v2570, %v2161
        %v2589 = vmul.f32 %v2573, %v2161
        %v2590 = vmul.f32 %v2576, %v2161
        %v2591 = vmul.f32 %v2579, %v2161
        %v2592 = vmul.f32 %v2582, %v2161
        %v2593 = vmul.f32 %v2585, %v2161
        %v2594 = vsub.f32 %v2552, %v2586
        %v2595 = vsub.f32 %v2553, %v2587
        %v2596 = vsub.f32 %v2554, %v2588
        %v2597 = vsub.f32 %v2555, %v2589
        %v2598 = vsub.f32 %v2556, %v2590
        %v2599 = vsub.f32 %v2557, %v2591
        %v2600 = vsub.f32 %v2558, %v2592
        %v2601 = vsub.f32 %v2559, %v2593
        %v2602 = vmul.f32 %v2594, %v2594
        %v2603 = vmul.f32 %v2595, %v2595
        %v2604 = vmul.f32 %v2596, %v2596
        %v2605 = vmul.f32 %v2597, %v2597
        %v2606 = vmul.f32 %v2598, %v2598
        %v2607 = vmul.f32 %v2599, %v2599
        %v2608 = vmul.f32 %v2600, %v2600
        %v2609 = vmul.f32 %v2601, %v2601
        %v2610 = vsel %vm937, %v2602, 0.0
        %2611 = vadd.xlane.f32.xlu0 %v2610
        %v2612 = vpop.xlane.xlu0 %2611
        %v2613 = vsel %vm937, %v2603, 0.0
        %2614 = vadd.xlane.f32.xlu0 %v2613
        %v2615 = vpop.xlane.xlu0 %2614
        %v2616 = vsel %vm937, %v2604, 0.0
        %2617 = vadd.xlane.f32.xlu0 %v2616
        %v2618 = vpop.xlane.xlu0 %2617
        %v2619 = vsel %vm937, %v2605, 0.0
        %2620 = vadd.xlane.f32.xlu0 %v2619
        %v2621 = vpop.xlane.xlu0 %2620
        %v2622 = vsel %vm937, %v2606, 0.0
        %2623 = vadd.xlane.f32.xlu0 %v2622
        %v2624 = vpop.xlane.xlu0 %2623
        %v2625 = vsel %vm937, %v2607, 0.0
        %2626 = vadd.xlane.f32.xlu0 %v2625
        %v2627 = vpop.xlane.xlu0 %2626
        %v2628 = vsel %vm937, %v2608, 0.0
        %2629 = vadd.xlane.f32.xlu0 %v2628
        %v2630 = vpop.xlane.xlu0 %2629
        %v2631 = vsel %vm937, %v2609, 0.0
        %2632 = vadd.xlane.f32.xlu0 %v2631
        %v2633 = vpop.xlane.xlu0 %2632
        %v2634 = vmul.f32 %v2612, %v2161
        %v2635 = vmul.f32 %v2615, %v2161
        %v2636 = vmul.f32 %v2618, %v2161
        %v2637 = vmul.f32 %v2621, %v2161
        %v2638 = vmul.f32 %v2624, %v2161
        %v2639 = vmul.f32 %v2627, %v2161
        %v2640 = vmul.f32 %v2630, %v2161
        %v2641 = vmul.f32 %v2633, %v2161
        %v2642 = vadd.f32 %v2634, 1e-05
        %v2643 = vadd.f32 %v2635, 1e-05
        %v2644 = vadd.f32 %v2636, 1e-05
        %v2645 = vadd.f32 %v2637, 1e-05
        %v2646 = vadd.f32 %v2638, 1e-05
        %v2647 = vadd.f32 %v2639, 1e-05
        %v2648 = vadd.f32 %v2640, 1e-05
        %v2649 = vadd.f32 %v2641, 1e-05
        %v2650 = vrsqrt.pop %v2642
        %v2651 = vrsqrt.pop %v2643
        %v2652 = vrsqrt.pop %v2644
        %v2653 = vrsqrt.pop %v2645
        %v2654 = vrsqrt.pop %v2646
        %v2655 = vrsqrt.pop %v2647
        %v2656 = vrsqrt.pop %v2648
        %v2657 = vrsqrt.pop %v2649
        %v2658 = vmul.f32 %v2594, %v2650
        %v2659 = vmul.f32 %v2595, %v2651
        %v2660 = vmul.f32 %v2596, %v2652
        %v2661 = vmul.f32 %v2597, %v2653
        %v2662 = vmul.f32 %v2598, %v2654
        %v2663 = vmul.f32 %v2599, %v2655
        %v2664 = vmul.f32 %v2600, %v2656
        %v2665 = vmul.f32 %v2601, %v2657
        %v2666 = vlaneseq
        %v2667 = vshrl.u32 %v2666, 7
        %v2668 = vsub.s32 0, %v2667
        %v2669 = vrot.slane %v2560, %v2668
        %v2670 = vmul.f32 %v2658, %v2669
        %v2671 = vmul.f32 %v2659, %v2669
        %v2672 = vmul.f32 %v2660, %v2669
        %v2673 = vmul.f32 %v2661, %v2669
        %v2674 = vmul.f32 %v2662, %v2669
        %v2675 = vmul.f32 %v2663, %v2669
        %v2676 = vmul.f32 %v2664, %v2669
        %v2677 = vmul.f32 %v2665, %v2669
        %v2678 = vlaneseq
        %v2679 = vshrl.u32 %v2678, 7
        %v2680 = vsub.s32 0, %v2679
        %v2681 = vrot.slane %v2561, %v2680
        %v2682 = vadd.f32 %v2670, %v2681
        %v2683 = vadd.f32 %v2671, %v2681
        %v2684 = vadd.f32 %v2672, %v2681
        %v2685 = vadd.f32 %v2673, %v2681
        %v2686 = vadd.f32 %v2674, %v2681
        %v2687 = vadd.f32 %v2675, %v2681
        %v2688 = vadd.f32 %v2676, %v2681
        %v2689 = vadd.f32 %v2677, %v2681
        %2690 = vst.msk [vmem:[%s865] sm:$0xff] %vm937, %v2682
        %2691 = vst.msk [vmem:[%s865 + $0x8] sm:$0xff] %vm937, %v2683
        %2692 = vst.msk [vmem:[%s865 + $0x10] sm:$0xff] %vm937, %v2684
        %2693 = vst.msk [vmem:[%s865 + $0x18] sm:$0xff] %vm937, %v2685
        %2694 = vst.msk [vmem:[%s865 + $0x20] sm:$0xff] %vm937, %v2686
        %2695 = vst.msk [vmem:[%s865 + $0x28] sm:$0xff] %vm937, %v2687
        %2696 = vst.msk [vmem:[%s865 + $0x30] sm:$0xff] %vm937, %v2688
        %2697 = vst.msk [vmem:[%s865 + $0x38] sm:$0xff] %vm937, %v2689
        %p2698 = scmp.lt.s32.totalorder %s43, 1
        %s2699 = scalar_select %p2698, %s43, 1
        %p2700 = scmp.lt.s32.totalorder %s44, 0
        %s2701 = scalar_select %p2700, %s44, 0
        %s2702 = sadd.s32 %s2701, %s2699
        %s2703 = smul.addr %s2702, 8
        %s2704 = scalar_lea.vmem %s23, %s2703
        %s2705 = sand.u32 %s615, 1
        %s2706 = scalar_lea.sflag [#allocation3], %s2705
        %s2707 = sand.u32 %s615, 1
        %s2708 = smul.addr %s2707, 64
        %s2709 = scalar_lea.vmem [#allocation2], %s2708
        // Predicated region
        $region113: #{_forward_dense.12} parent=111 // pred_check
          %p2710 = pneg %p597
        $region114: #{_forward_dense.12} parent=111 // pred_check_branch
          %2712 = sbr.rel (%p2710) target = $region116
        $region115: #{_forward_dense.12} parent=111 // pred_region
          _
        $region116: #{_forward_dense.12} parent=111 // pred_fallthru
          _
        // Predicated region
        $region117: #{_forward_dense.12} parent=111 // pred_check
          %p2713 = pneg %p625
        $region118: #{_forward_dense.12} parent=111 // pred_check_branch
          %2715 = sbr.rel (%p2713) target = $region120
        $region119: #{_forward_dense.12} parent=111 // pred_region
          %s2716 = smul.u32 8, %s44
          %s2718 = ssub.s32 1024, 1024
          %2719 = vsyncadd %s2706, %s2718
          %s2720 = smul.addr %s43, 8
          %s2721 = sadd.s32 %s2716, %s2720
          %s2722 = smul.addr %s2721, 128
          %s2723 = scalar_lea.hbm %s24, %s2722
          %s2724 = sshll.u32 %s2709, 4
          %s2725 = int_to_ptr.vmem [resolvable:$true] %s2724
          %2730 = dma.vmem_to_hbm [thread:$0]  %s2725, 1024, %s2723, %s2706, 128, 128, 8
        $region120: #{_forward_dense.12} parent=111 // pred_fallthru
          _
      $region112: #{_forward_dense.12} parent=5 // pred_fallthru
        _
      %p2731 = scmp.le.s32.totalorder 2, %s34
      // Predicated region
      $region121: #{_forward_dense.12} parent=5 // pred_check
        %p2732 = pneg %p2731
      $region122: #{_forward_dense.12} parent=5 // pred_check_branch
        %2734 = sbr.rel (%p2732) target = $region124
      $region123: #{_forward_dense.12} parent=5 // pred_region
        %s2735 = ssub.s32 %s34, 2
        // Predicated region
        $region125: #{_forward_dense.12} parent=123 // pred_check
          %p2736 = pneg %p603
        $region126: #{_forward_dense.12} parent=123 // pred_check_branch
          %2738 = sbr.rel (%p2736) target = $region128
        $region127: #{_forward_dense.12} parent=123 // pred_region
          %p2739 = scmp.lt.s32.totalorder %s45, 1
          %s2740 = scalar_select %p2739, %s45, 1
          %p2741 = scmp.lt.s32.totalorder %s46, 0
          %s2742 = scalar_select %p2741, %s46, 0
          %s2743 = sadd.s32 %s2742, %s2740
          %s2744 = smul.addr %s2743, 8
          %s2745 = scalar_lea.vmem %s23, %s2744
        $region128: #{_forward_dense.12} parent=123 // pred_fallthru
          _
        // Predicated region
        $region129: #{_forward_dense.12} parent=123 // pred_check
          %p2746 = pneg %p631
        $region130: #{_forward_dense.12} parent=123 // pred_check_branch
          %2748 = sbr.rel (%p2746) target = $region132
        $region131: #{_forward_dense.12} parent=123 // pred_region
          %s2749 = sand.u32 %s616, 1
          %s2750 = scalar_lea.sflag [#allocation3], %s2749
          %s2751 = sand.u32 %s616, 1
          %s2752 = smul.addr %s2751, 64
          %s2753 = scalar_lea.vmem [#allocation2], %s2752
          %2754 = dma.done %s2750, 1024
        $region132: #{_forward_dense.12} parent=123 // pred_fallthru
          _
      $region124: #{_forward_dense.12} parent=5 // pred_fallthru
        _
    $region6: #{_forward_dense.12} parent=1 // loop_footer
      %s38 = sadd.s32 1, %s34
    $region7: #{_forward_dense.12} parent=1 // loop_footer_branch
      %33 = sbr.rel target = $region3
    $region8: #{_forward_dense.12} parent=1 // loop_exit
      _
    %2755 = vsyncpa [#allocation3], 1
    %s2756 = scalar_lea.sflag [#allocation3], 1
    %2757 = vsyncpa %s2756, 1

// kernel: _forward_dense.10
$region0: #{_forward_dense.10}
  #allocation0 [shape = 'u32[]', space=smem, size = 0x4, offset = 0x4, fixed_abs, tag = 'smem constant byte address 0x4 - core index']
  #allocation1 [shape = 'u32[144,128]{1,0:T(1,128)}', space=vmem, size = 0x12000, scoped, tag = 'internal scratch']
  %s0 = inlined_call_operand.vmem [shape: f32[2,8,96], index: 0, kind: input, shape index: {}, may-alias: {0,1}]
  %s1 = inlined_call_operand.vmem [shape: f32[2,8,96], index: 1, kind: input, shape index: {}, may-alias: {0,1}]
  %s2 = inlined_call_operand.vmem [shape: f32[2,8,8,16], index: 2, kind: input, shape index: {}]
  %s3 = inlined_call_operand.vmem [shape: f32[2,8,32], index: 3, kind: input, shape index: {}]
  %s4 = inlined_call_operand.vmem [shape: f32[2,1,8], index: 4, kind: input, shape index: {}]
  %s5 = inlined_call_operand.vmem [shape: f32[2,8,1], index: 5, kind: input, shape index: {}]
  %s6 = inlined_call_operand.vmem [shape: f32[2,1,128], index: 6, kind: input, shape index: {}]
  %s7 = inlined_call_operand.vmem [shape: f32[16,64], index: 7, kind: input, shape index: {}]
  %s8 = inlined_call_operand.vmem [shape: f32[1,64], index: 8, kind: input, shape index: {}]
  %s9 = inlined_call_operand.vmem [shape: f32[32,16], index: 9, kind: input, shape index: {}]
  %s10 = inlined_call_operand.vmem [shape: f32[1,16], index: 10, kind: input, shape index: {}]
  %s11 = inlined_call_operand.vmem [shape: f32[32,32], index: 11, kind: input, shape index: {}]
  %s12 = inlined_call_operand.vmem [shape: f32[1,32], index: 12, kind: input, shape index: {}]
  %s13 = inlined_call_operand.vmem [shape: f32[32,64], index: 13, kind: input, shape index: {}]
  %s14 = inlined_call_operand.vmem [shape: f32[1,64], index: 14, kind: input, shape index: {}]
  %s15 = inlined_call_operand.vmem [shape: f32[64,32], index: 15, kind: input, shape index: {}]
  %s16 = inlined_call_operand.vmem [shape: f32[1,32], index: 16, kind: input, shape index: {}]
  %s17 = inlined_call_operand.vmem [shape: f32[16,32], index: 17, kind: input, shape index: {}]
  %s18 = inlined_call_operand.vmem [shape: f32[1,32], index: 18, kind: input, shape index: {}]
  %s19 = inlined_call_operand.vmem [shape: f32[32,16], index: 19, kind: input, shape index: {}]
  %s20 = inlined_call_operand.vmem [shape: f32[1,16], index: 20, kind: input, shape index: {}]
  %s21 = inlined_call_operand.vmem [shape: f32[4,32], index: 21, kind: input, shape index: {}]
  %s22 = inlined_call_operand.vmem [shape: f32[4,16], index: 22, kind: input, shape index: {}]
  %s23 = inlined_call_operand.vmem [shape: f32[2,8,32], index: 23, kind: output, shape index: {0}]
  %s24 = inlined_call_operand.vmem [shape: f32[2,8,8,16], index: 24, kind: output, shape index: {1}]
  %25 = xla_tuple %s23, %s24
  %s26 = sld [smem:[#allocation0]]
  $region133: #{_forward_dense.10} parent=0
    _
  %s28 = ssub.s32 1, %s26
  %s29 = scalar_select 0, %s28, %s26
  loop: start=0, step=1, limit=4
  $region2: #{_forward_dense.10} parent=0 // loop_pre_header
    _
  $region3: #{_forward_dense.10} parent=0 // loop_header
    %s31 = sphi 0, %s35
    %p32 = scmp.ge.s32.totalorder %s31, 4
    %s38 = sphi 0, %s50
    %s39 = sphi 0, %s46
    %s40 = sphi 0, %s38
    %s41 = sphi 0, %s39
    %s42 = sphi 0, %s40
    %s43 = sphi 0, %s41
    %s55 = sphi 0, %s57
    %s58 = sphi 0, %s55
    %s59 = sphi 0, %s58
    %s75 = sphi 0, %s59
    %s81 = sphi 0, %s83
    %s84 = sphi 0, %s81
    %s85 = sphi 0, %s84
    %s101 = sphi 0, %s85
    %s109 = sphi 0, %s111
    %s112 = sphi 0, %s109
    %s113 = sphi 0, %s112
    %s129 = sphi 0, %s113
    %s137 = sphi 0, %s139
    %s140 = sphi 0, %s137
    %s141 = sphi 0, %s140
    %s157 = sphi 0, %s141
    %s163 = sphi 0, %s165
    %s166 = sphi 0, %s163
    %s167 = sphi 0, %s166
    %s183 = sphi 0, %s167
    %s191 = sphi 0, %s193
    %s194 = sphi 0, %s191
    %s195 = sphi 0, %s194
    %s211 = sphi 0, %s195
    %s217 = sphi 0, %s219
    %s220 = sphi 0, %s217
    %s221 = sphi 0, %s220
    %s237 = sphi 0, %s221
    %s241 = sphi 0, %s241
    %s243 = sphi 0, %s241
    %s244 = sphi 0, %s243
    %s258 = sphi 0, %s244
    %s262 = sphi 0, %s262
    %s264 = sphi 0, %s262
    %s265 = sphi 0, %s264
    %s279 = sphi 0, %s265
    %s283 = sphi 0, %s283
    %s285 = sphi 0, %s283
    %s286 = sphi 0, %s285
    %s300 = sphi 0, %s286
    %s304 = sphi 0, %s304
    %s306 = sphi 0, %s304
    %s307 = sphi 0, %s306
    %s321 = sphi 0, %s307
    %s325 = sphi 0, %s325
    %s327 = sphi 0, %s325
    %s328 = sphi 0, %s327
    %s342 = sphi 0, %s328
    %s346 = sphi 0, %s346
    %s348 = sphi 0, %s346
    %s349 = sphi 0, %s348
    %s363 = sphi 0, %s349
    %s367 = sphi 0, %s367
    %s369 = sphi 0, %s367
    %s370 = sphi 0, %s369
    %s384 = sphi 0, %s370
    %s388 = sphi 0, %s388
    %s390 = sphi 0, %s388
    %s391 = sphi 0, %s390
    %s405 = sphi 0, %s391
    %s409 = sphi 0, %s409
    %s411 = sphi 0, %s409
    %s412 = sphi 0, %s411
    %s426 = sphi 0, %s412
    %s430 = sphi 0, %s430
    %s432 = sphi 0, %s430
    %s433 = sphi 0, %s432
    %s447 = sphi 0, %s433
    %s451 = sphi 0, %s451
    %s453 = sphi 0, %s451
    %s454 = sphi 0, %s453
    %s468 = sphi 0, %s454
    %s472 = sphi 0, %s472
    %s474 = sphi 0, %s472
    %s475 = sphi 0, %s474
    %s489 = sphi 0, %s475
    %s493 = sphi 0, %s493
    %s495 = sphi 0, %s493
    %s496 = sphi 0, %s495
    %s510 = sphi 0, %s496
    %s514 = sphi 0, %s514
    %s516 = sphi 0, %s514
    %s517 = sphi 0, %s516
    %s531 = sphi 0, %s517
    %s535 = sphi 0, %s535
    %s537 = sphi 0, %s535
    %s538 = sphi 0, %s537
    %s552 = sphi 0, %s538
    %s556 = sphi 0, %s556
    %s558 = sphi 0, %s556
    %s559 = sphi 0, %s558
    %s573 = sphi 0, %s559
    %s581 = sphi 0, %s583
    %s584 = sphi 0, %s581
    %s585 = sphi 0, %s584
    %s601 = sphi 0, %s585
    %s609 = sphi 0, %s611
    %s612 = sphi 0, %s609
    %s613 = sphi 0, %s612
    %s629 = sphi 0, %s613
  $region4: #{_forward_dense.10} parent=0 // loop_header_branch
    %34 = sbr.rel (%p32) target = $region8
  $region5: #{_forward_dense.10} parent=0 // loop_body
    %s36 = ssub.s32 %s31, 1
    %s37 = ssub.s32 %s31, 2
    %s44 = sadd.s32 1, %s39
    %p45 = scmp.ge.s32.totalorder %s44, 1
    %s46 = scalar_select %p45, 0, %s44
    %s47 = sadd.s32 1, %s38
    %s48 = scalar_select %p45, %s47, %s38
    %p49 = scmp.ge.s32.totalorder %s48, 2
    %s50 = scalar_select %p49, 0, %s48
    %s51 = ssub.s32 %s38, %s50
    %s52 = ssub.s32 %s39, %s46
    %s53 = sor.u32 %s51, %s52
    %p54 = scmp.eq.s32.totalorder %s53, 0
    %s56 = sadd.s32 %s55, 1
    %s57 = scalar_select %p54, %s55, %s56
    %p60 = pneg %p54
    %p61 = scmp.eq.s32.totalorder %s31, 1
    %p62 = por %p60, %p61
    %p63 = scmp.ne.s32.totalorder %s55, %s58
    %p64 = scmp.eq.s32.totalorder %s31, 0
    %p65 = por %p63, %p64
    %p66 = scmp.ne.s32.totalorder %s55, %s58
    %p67 = scmp.eq.s32.totalorder %s36, 1
    %p68 = por %p66, %p67
    %p69 = scmp.ne.s32.totalorder %s58, %s59
    %p70 = scmp.eq.s32.totalorder %s36, 0
    %p71 = por %p69, %p70
    %p72 = scmp.ne.s32.totalorder %s58, %s59
    %p73 = scmp.eq.s32.totalorder %s37, 1
    %p74 = por %p72, %p73
    %p76 = scmp.ne.s32.totalorder %s59, %s75
    %p77 = scmp.eq.s32.totalorder %s37, 0
    %p78 = por %p76, %p77
    %s79 = ssub.s32 %s38, %s50
    %p80 = scmp.eq.s32.totalorder %s79, 0
    %s82 = sadd.s32 %s81, 1
    %s83 = scalar_select %p80, %s81, %s82
    %p86 = pneg %p80
    %p87 = scmp.eq.s32.totalorder %s31, 1
    %p88 = por %p86, %p87
    %p89 = scmp.ne.s32.totalorder %s81, %s84
    %p90 = scmp.eq.s32.totalorder %s31, 0
    %p91 = por %p89, %p90
    %p92 = scmp.ne.s32.totalorder %s81, %s84
    %p93 = scmp.eq.s32.totalorder %s36, 1
    %p94 = por %p92, %p93
    %p95 = scmp.ne.s32.totalorder %s84, %s85
    %p96 = scmp.eq.s32.totalorder %s36, 0
    %p97 = por %p95, %p96
    %p98 = scmp.ne.s32.totalorder %s84, %s85
    %p99 = scmp.eq.s32.totalorder %s37, 1
    %p100 = por %p98, %p99
    %p102 = scmp.ne.s32.totalorder %s85, %s101
    %p103 = scmp.eq.s32.totalorder %s37, 0
    %p104 = por %p102, %p103
    %s105 = ssub.s32 %s38, %s50
    %s106 = ssub.s32 %s39, %s46
    %s107 = sor.u32 %s105, %s106
    %p108 = scmp.eq.s32.totalorder %s107, 0
    %s110 = sadd.s32 %s109, 1
    %s111 = scalar_select %p108, %s109, %s110
    %p114 = pneg %p108
    %p115 = scmp.eq.s32.totalorder %s31, 1
    %p116 = por %p114, %p115
    %p117 = scmp.ne.s32.totalorder %s109, %s112
    %p118 = scmp.eq.s32.totalorder %s31, 0
    %p119 = por %p117, %p118
    %p120 = scmp.ne.s32.totalorder %s109, %s112
    %p121 = scmp.eq.s32.totalorder %s36, 1
    %p122 = por %p120, %p121
    %p123 = scmp.ne.s32.totalorder %s112, %s113
    %p124 = scmp.eq.s32.totalorder %s36, 0
    %p125 = por %p123, %p124
    %p126 = scmp.ne.s32.totalorder %s112, %s113
    %p127 = scmp.eq.s32.totalorder %s37, 1
    %p128 = por %p126, %p127
    %p130 = scmp.ne.s32.totalorder %s113, %s129
    %p131 = scmp.eq.s32.totalorder %s37, 0
    %p132 = por %p130, %p131
    %s133 = ssub.s32 %s38, %s50
    %s134 = ssub.s32 %s39, %s46
    %s135 = sor.u32 %s133, %s134
    %p136 = scmp.eq.s32.totalorder %s135, 0
    %s138 = sadd.s32 %s137, 1
    %s139 = scalar_select %p136, %s137, %s138
    %p142 = pneg %p136
    %p143 = scmp.eq.s32.totalorder %s31, 1
    %p144 = por %p142, %p143
    %p145 = scmp.ne.s32.totalorder %s137, %s140
    %p146 = scmp.eq.s32.totalorder %s31, 0
    %p147 = por %p145, %p146
    %p148 = scmp.ne.s32.totalorder %s137, %s140
    %p149 = scmp.eq.s32.totalorder %s36, 1
    %p150 = por %p148, %p149
    %p151 = scmp.ne.s32.totalorder %s140, %s141
    %p152 = scmp.eq.s32.totalorder %s36, 0
    %p153 = por %p151, %p152
    %p154 = scmp.ne.s32.totalorder %s140, %s141
    %p155 = scmp.eq.s32.totalorder %s37, 1
    %p156 = por %p154, %p155
    %p158 = scmp.ne.s32.totalorder %s141, %s157
    %p159 = scmp.eq.s32.totalorder %s37, 0
    %p160 = por %p158, %p159
    %s161 = ssub.s32 %s38, %s50
    %p162 = scmp.eq.s32.totalorder %s161, 0
    %s164 = sadd.s32 %s163, 1
    %s165 = scalar_select %p162, %s163, %s164
    %p168 = pneg %p162
    %p169 = scmp.eq.s32.totalorder %s31, 1
    %p170 = por %p168, %p169
    %p171 = scmp.ne.s32.totalorder %s163, %s166
    %p172 = scmp.eq.s32.totalorder %s31, 0
    %p173 = por %p171, %p172
    %p174 = scmp.ne.s32.totalorder %s163, %s166
    %p175 = scmp.eq.s32.totalorder %s36, 1
    %p176 = por %p174, %p175
    %p177 = scmp.ne.s32.totalorder %s166, %s167
    %p178 = scmp.eq.s32.totalorder %s36, 0
    %p179 = por %p177, %p178
    %p180 = scmp.ne.s32.totalorder %s166, %s167
    %p181 = scmp.eq.s32.totalorder %s37, 1
    %p182 = por %p180, %p181
    %p184 = scmp.ne.s32.totalorder %s167, %s183
    %p185 = scmp.eq.s32.totalorder %s37, 0
    %p186 = por %p184, %p185
    %s187 = ssub.s32 %s38, %s50
    %s188 = ssub.s32 %s39, %s46
    %s189 = sor.u32 %s187, %s188
    %p190 = scmp.eq.s32.totalorder %s189, 0
    %s192 = sadd.s32 %s191, 1
    %s193 = scalar_select %p190, %s191, %s192
    %p196 = pneg %p190
    %p197 = scmp.eq.s32.totalorder %s31, 1
    %p198 = por %p196, %p197
    %p199 = scmp.ne.s32.totalorder %s191, %s194
    %p200 = scmp.eq.s32.totalorder %s31, 0
    %p201 = por %p199, %p200
    %p202 = scmp.ne.s32.totalorder %s191, %s194
    %p203 = scmp.eq.s32.totalorder %s36, 1
    %p204 = por %p202, %p203
    %p205 = scmp.ne.s32.totalorder %s194, %s195
    %p206 = scmp.eq.s32.totalorder %s36, 0
    %p207 = por %p205, %p206
    %p208 = scmp.ne.s32.totalorder %s194, %s195
    %p209 = scmp.eq.s32.totalorder %s37, 1
    %p210 = por %p208, %p209
    %p212 = scmp.ne.s32.totalorder %s195, %s211
    %p213 = scmp.eq.s32.totalorder %s37, 0
    %p214 = por %p212, %p213
    %s215 = ssub.s32 %s38, %s50
    %p216 = scmp.eq.s32.totalorder %s215, 0
    %s218 = sadd.s32 %s217, 1
    %s219 = scalar_select %p216, %s217, %s218
    %p222 = pneg %p216
    %p223 = scmp.eq.s32.totalorder %s31, 1
    %p224 = por %p222, %p223
    %p225 = scmp.ne.s32.totalorder %s217, %s220
    %p226 = scmp.eq.s32.totalorder %s31, 0
    %p227 = por %p225, %p226
    %p228 = scmp.ne.s32.totalorder %s217, %s220
    %p229 = scmp.eq.s32.totalorder %s36, 1
    %p230 = por %p228, %p229
    %p231 = scmp.ne.s32.totalorder %s220, %s221
    %p232 = scmp.eq.s32.totalorder %s36, 0
    %p233 = por %p231, %p232
    %p234 = scmp.ne.s32.totalorder %s220, %s221
    %p235 = scmp.eq.s32.totalorder %s37, 1
    %p236 = por %p234, %p235
    %p238 = scmp.ne.s32.totalorder %s221, %s237
    %p239 = scmp.eq.s32.totalorder %s37, 0
    %p240 = por %p238, %p239
    %s242 = sadd.s32 %s241, 1
    %p245 = scmp.eq.s32.totalorder %s31, 1
    %p246 = scmp.ne.s32.totalorder %s241, %s243
    %p247 = scmp.eq.s32.totalorder %s31, 0
    %p248 = por %p246, %p247
    %p249 = scmp.ne.s32.totalorder %s241, %s243
    %p250 = scmp.eq.s32.totalorder %s36, 1
    %p251 = por %p249, %p250
    %p252 = scmp.ne.s32.totalorder %s243, %s244
    %p253 = scmp.eq.s32.totalorder %s36, 0
    %p254 = por %p252, %p253
    %p255 = scmp.ne.s32.totalorder %s243, %s244
    %p256 = scmp.eq.s32.totalorder %s37, 1
    %p257 = por %p255, %p256
    %p259 = scmp.ne.s32.totalorder %s244, %s258
    %p260 = scmp.eq.s32.totalorder %s37, 0
    %p261 = por %p259, %p260
    %s263 = sadd.s32 %s262, 1
    %p266 = scmp.eq.s32.totalorder %s31, 1
    %p267 = scmp.ne.s32.totalorder %s262, %s264
    %p268 = scmp.eq.s32.totalorder %s31, 0
    %p269 = por %p267, %p268
    %p270 = scmp.ne.s32.totalorder %s262, %s264
    %p271 = scmp.eq.s32.totalorder %s36, 1
    %p272 = por %p270, %p271
    %p273 = scmp.ne.s32.totalorder %s264, %s265
    %p274 = scmp.eq.s32.totalorder %s36, 0
    %p275 = por %p273, %p274
    %p276 = scmp.ne.s32.totalorder %s264, %s265
    %p277 = scmp.eq.s32.totalorder %s37, 1
    %p278 = por %p276, %p277
    %p280 = scmp.ne.s32.totalorder %s265, %s279
    %p281 = scmp.eq.s32.totalorder %s37, 0
    %p282 = por %p280, %p281
    %s284 = sadd.s32 %s283, 1
    %p287 = scmp.eq.s32.totalorder %s31, 1
    %p288 = scmp.ne.s32.totalorder %s283, %s285
    %p289 = scmp.eq.s32.totalorder %s31, 0
    %p290 = por %p288, %p289
    %p291 = scmp.ne.s32.totalorder %s283, %s285
    %p292 = scmp.eq.s32.totalorder %s36, 1
    %p293 = por %p291, %p292
    %p294 = scmp.ne.s32.totalorder %s285, %s286
    %p295 = scmp.eq.s32.totalorder %s36, 0
    %p296 = por %p294, %p295
    %p297 = scmp.ne.s32.totalorder %s285, %s286
    %p298 = scmp.eq.s32.totalorder %s37, 1
    %p299 = por %p297, %p298
    %p301 = scmp.ne.s32.totalorder %s286, %s300
    %p302 = scmp.eq.s32.totalorder %s37, 0
    %p303 = por %p301, %p302
    %s305 = sadd.s32 %s304, 1
    %p308 = scmp.eq.s32.totalorder %s31, 1
    %p309 = scmp.ne.s32.totalorder %s304, %s306
    %p310 = scmp.eq.s32.totalorder %s31, 0
    %p311 = por %p309, %p310
    %p312 = scmp.ne.s32.totalorder %s304, %s306
    %p313 = scmp.eq.s32.totalorder %s36, 1
    %p314 = por %p312, %p313
    %p315 = scmp.ne.s32.totalorder %s306, %s307
    %p316 = scmp.eq.s32.totalorder %s36, 0
    %p317 = por %p315, %p316
    %p318 = scmp.ne.s32.totalorder %s306, %s307
    %p319 = scmp.eq.s32.totalorder %s37, 1
    %p320 = por %p318, %p319
    %p322 = scmp.ne.s32.totalorder %s307, %s321
    %p323 = scmp.eq.s32.totalorder %s37, 0
    %p324 = por %p322, %p323
    %s326 = sadd.s32 %s325, 1
    %p329 = scmp.eq.s32.totalorder %s31, 1
    %p330 = scmp.ne.s32.totalorder %s325, %s327
    %p331 = scmp.eq.s32.totalorder %s31, 0
    %p332 = por %p330, %p331
    %p333 = scmp.ne.s32.totalorder %s325, %s327
    %p334 = scmp.eq.s32.totalorder %s36, 1
    %p335 = por %p333, %p334
    %p336 = scmp.ne.s32.totalorder %s327, %s328
    %p337 = scmp.eq.s32.totalorder %s36, 0
    %p338 = por %p336, %p337
    %p339 = scmp.ne.s32.totalorder %s327, %s328
    %p340 = scmp.eq.s32.totalorder %s37, 1
    %p341 = por %p339, %p340
    %p343 = scmp.ne.s32.totalorder %s328, %s342
    %p344 = scmp.eq.s32.totalorder %s37, 0
    %p345 = por %p343, %p344
    %s347 = sadd.s32 %s346, 1
    %p350 = scmp.eq.s32.totalorder %s31, 1
    %p351 = scmp.ne.s32.totalorder %s346, %s348
    %p352 = scmp.eq.s32.totalorder %s31, 0
    %p353 = por %p351, %p352
    %p354 = scmp.ne.s32.totalorder %s346, %s348
    %p355 = scmp.eq.s32.totalorder %s36, 1
    %p356 = por %p354, %p355
    %p357 = scmp.ne.s32.totalorder %s348, %s349
    %p358 = scmp.eq.s32.totalorder %s36, 0
    %p359 = por %p357, %p358
    %p360 = scmp.ne.s32.totalorder %s348, %s349
    %p361 = scmp.eq.s32.totalorder %s37, 1
    %p362 = por %p360, %p361
    %p364 = scmp.ne.s32.totalorder %s349, %s363
    %p365 = scmp.eq.s32.totalorder %s37, 0
    %p366 = por %p364, %p365
    %s368 = sadd.s32 %s367, 1
    %p371 = scmp.eq.s32.totalorder %s31, 1
    %p372 = scmp.ne.s32.totalorder %s367, %s369
    %p373 = scmp.eq.s32.totalorder %s31, 0
    %p374 = por %p372, %p373
    %p375 = scmp.ne.s32.totalorder %s367, %s369
    %p376 = scmp.eq.s32.totalorder %s36, 1
    %p377 = por %p375, %p376
    %p378 = scmp.ne.s32.totalorder %s369, %s370
    %p379 = scmp.eq.s32.totalorder %s36, 0
    %p380 = por %p378, %p379
    %p381 = scmp.ne.s32.totalorder %s369, %s370
    %p382 = scmp.eq.s32.totalorder %s37, 1
    %p383 = por %p381, %p382
    %p385 = scmp.ne.s32.totalorder %s370, %s384
    %p386 = scmp.eq.s32.totalorder %s37, 0
    %p387 = por %p385, %p386
    %s389 = sadd.s32 %s388, 1
    %p392 = scmp.eq.s32.totalorder %s31, 1
    %p393 = scmp.ne.s32.totalorder %s388, %s390
    %p394 = scmp.eq.s32.totalorder %s31, 0
    %p395 = por %p393, %p394
    %p396 = scmp.ne.s32.totalorder %s388, %s390
    %p397 = scmp.eq.s32.totalorder %s36, 1
    %p398 = por %p396, %p397
    %p399 = scmp.ne.s32.totalorder %s390, %s391
    %p400 = scmp.eq.s32.totalorder %s36, 0
    %p401 = por %p399, %p400
    %p402 = scmp.ne.s32.totalorder %s390, %s391
    %p403 = scmp.eq.s32.totalorder %s37, 1
    %p404 = por %p402, %p403
    %p406 = scmp.ne.s32.totalorder %s391, %s405
    %p407 = scmp.eq.s32.totalorder %s37, 0
    %p408 = por %p406, %p407
    %s410 = sadd.s32 %s409, 1
    %p413 = scmp.eq.s32.totalorder %s31, 1
    %p414 = scmp.ne.s32.totalorder %s409, %s411
    %p415 = scmp.eq.s32.totalorder %s31, 0
    %p416 = por %p414, %p415
    %p417 = scmp.ne.s32.totalorder %s409, %s411
    %p418 = scmp.eq.s32.totalorder %s36, 1
    %p419 = por %p417, %p418
    %p420 = scmp.ne.s32.totalorder %s411, %s412
    %p421 = scmp.eq.s32.totalorder %s36, 0
    %p422 = por %p420, %p421
    %p423 = scmp.ne.s32.totalorder %s411, %s412
    %p424 = scmp.eq.s32.totalorder %s37, 1
    %p425 = por %p423, %p424
    %p427 = scmp.ne.s32.totalorder %s412, %s426
    %p428 = scmp.eq.s32.totalorder %s37, 0
    %p429 = por %p427, %p428
    %s431 = sadd.s32 %s430, 1
    %p434 = scmp.eq.s32.totalorder %s31, 1
    %p435 = scmp.ne.s32.totalorder %s430, %s432
    %p436 = scmp.eq.s32.totalorder %s31, 0
    %p437 = por %p435, %p436
    %p438 = scmp.ne.s32.totalorder %s430, %s432
    %p439 = scmp.eq.s32.totalorder %s36, 1
    %p440 = por %p438, %p439
    %p441 = scmp.ne.s32.totalorder %s432, %s433
    %p442 = scmp.eq.s32.totalorder %s36, 0
    %p443 = por %p441, %p442
    %p444 = scmp.ne.s32.totalorder %s432, %s433
    %p445 = scmp.eq.s32.totalorder %s37, 1
    %p446 = por %p444, %p445
    %p448 = scmp.ne.s32.totalorder %s433, %s447
    %p449 = scmp.eq.s32.totalorder %s37, 0
    %p450 = por %p448, %p449
    %s452 = sadd.s32 %s451, 1
    %p455 = scmp.eq.s32.totalorder %s31, 1
    %p456 = scmp.ne.s32.totalorder %s451, %s453
    %p457 = scmp.eq.s32.totalorder %s31, 0
    %p458 = por %p456, %p457
    %p459 = scmp.ne.s32.totalorder %s451, %s453
    %p460 = scmp.eq.s32.totalorder %s36, 1
    %p461 = por %p459, %p460
    %p462 = scmp.ne.s32.totalorder %s453, %s454
    %p463 = scmp.eq.s32.totalorder %s36, 0
    %p464 = por %p462, %p463
    %p465 = scmp.ne.s32.totalorder %s453, %s454
    %p466 = scmp.eq.s32.totalorder %s37, 1
    %p467 = por %p465, %p466
    %p469 = scmp.ne.s32.totalorder %s454, %s468
    %p470 = scmp.eq.s32.totalorder %s37, 0
    %p471 = por %p469, %p470
    %s473 = sadd.s32 %s472, 1
    %p476 = scmp.eq.s32.totalorder %s31, 1
    %p477 = scmp.ne.s32.totalorder %s472, %s474
    %p478 = scmp.eq.s32.totalorder %s31, 0
    %p479 = por %p477, %p478
    %p480 = scmp.ne.s32.totalorder %s472, %s474
    %p481 = scmp.eq.s32.totalorder %s36, 1
    %p482 = por %p480, %p481
    %p483 = scmp.ne.s32.totalorder %s474, %s475
    %p484 = scmp.eq.s32.totalorder %s36, 0
    %p485 = por %p483, %p484
    %p486 = scmp.ne.s32.totalorder %s474, %s475
    %p487 = scmp.eq.s32.totalorder %s37, 1
    %p488 = por %p486, %p487
    %p490 = scmp.ne.s32.totalorder %s475, %s489
    %p491 = scmp.eq.s32.totalorder %s37, 0
    %p492 = por %p490, %p491
    %s494 = sadd.s32 %s493, 1
    %p497 = scmp.eq.s32.totalorder %s31, 1
    %p498 = scmp.ne.s32.totalorder %s493, %s495
    %p499 = scmp.eq.s32.totalorder %s31, 0
    %p500 = por %p498, %p499
    %p501 = scmp.ne.s32.totalorder %s493, %s495
    %p502 = scmp.eq.s32.totalorder %s36, 1
    %p503 = por %p501, %p502
    %p504 = scmp.ne.s32.totalorder %s495, %s496
    %p505 = scmp.eq.s32.totalorder %s36, 0
    %p506 = por %p504, %p505
    %p507 = scmp.ne.s32.totalorder %s495, %s496
    %p508 = scmp.eq.s32.totalorder %s37, 1
    %p509 = por %p507, %p508
    %p511 = scmp.ne.s32.totalorder %s496, %s510
    %p512 = scmp.eq.s32.totalorder %s37, 0
    %p513 = por %p511, %p512
    %s515 = sadd.s32 %s514, 1
    %p518 = scmp.eq.s32.totalorder %s31, 1
    %p519 = scmp.ne.s32.totalorder %s514, %s516
    %p520 = scmp.eq.s32.totalorder %s31, 0
    %p521 = por %p519, %p520
    %p522 = scmp.ne.s32.totalorder %s514, %s516
    %p523 = scmp.eq.s32.totalorder %s36, 1
    %p524 = por %p522, %p523
    %p525 = scmp.ne.s32.totalorder %s516, %s517
    %p526 = scmp.eq.s32.totalorder %s36, 0
    %p527 = por %p525, %p526
    %p528 = scmp.ne.s32.totalorder %s516, %s517
    %p529 = scmp.eq.s32.totalorder %s37, 1
    %p530 = por %p528, %p529
    %p532 = scmp.ne.s32.totalorder %s517, %s531
    %p533 = scmp.eq.s32.totalorder %s37, 0
    %p534 = por %p532, %p533
    %s536 = sadd.s32 %s535, 1
    %p539 = scmp.eq.s32.totalorder %s31, 1
    %p540 = scmp.ne.s32.totalorder %s535, %s537
    %p541 = scmp.eq.s32.totalorder %s31, 0
    %p542 = por %p540, %p541
    %p543 = scmp.ne.s32.totalorder %s535, %s537
    %p544 = scmp.eq.s32.totalorder %s36, 1
    %p545 = por %p543, %p544
    %p546 = scmp.ne.s32.totalorder %s537, %s538
    %p547 = scmp.eq.s32.totalorder %s36, 0
    %p548 = por %p546, %p547
    %p549 = scmp.ne.s32.totalorder %s537, %s538
    %p550 = scmp.eq.s32.totalorder %s37, 1
    %p551 = por %p549, %p550
    %p553 = scmp.ne.s32.totalorder %s538, %s552
    %p554 = scmp.eq.s32.totalorder %s37, 0
    %p555 = por %p553, %p554
    %s557 = sadd.s32 %s556, 1
    %p560 = scmp.eq.s32.totalorder %s31, 1
    %p561 = scmp.ne.s32.totalorder %s556, %s558
    %p562 = scmp.eq.s32.totalorder %s31, 0
    %p563 = por %p561, %p562
    %p564 = scmp.ne.s32.totalorder %s556, %s558
    %p565 = scmp.eq.s32.totalorder %s36, 1
    %p566 = por %p564, %p565
    %p567 = scmp.ne.s32.totalorder %s558, %s559
    %p568 = scmp.eq.s32.totalorder %s36, 0
    %p569 = por %p567, %p568
    %p570 = scmp.ne.s32.totalorder %s558, %s559
    %p571 = scmp.eq.s32.totalorder %s37, 1
    %p572 = por %p570, %p571
    %p574 = scmp.ne.s32.totalorder %s559, %s573
    %p575 = scmp.eq.s32.totalorder %s37, 0
    %p576 = por %p574, %p575
    %s577 = ssub.s32 %s38, %s50
    %s578 = ssub.s32 %s39, %s46
    %s579 = sor.u32 %s577, %s578
    %p580 = scmp.eq.s32.totalorder %s579, 0
    %s582 = sadd.s32 %s581, 1
    %s583 = scalar_select %p580, %s581, %s582
    %p586 = pneg %p580
    %p587 = scmp.eq.s32.totalorder %s31, 1
    %p588 = por %p586, %p587
    %p589 = scmp.ne.s32.totalorder %s581, %s584
    %p590 = scmp.eq.s32.totalorder %s31, 0
    %p591 = por %p589, %p590
    %p592 = scmp.ne.s32.totalorder %s581, %s584
    %p593 = scmp.eq.s32.totalorder %s36, 1
    %p594 = por %p592, %p593
    %p595 = scmp.ne.s32.totalorder %s584, %s585
    %p596 = scmp.eq.s32.totalorder %s36, 0
    %p597 = por %p595, %p596
    %p598 = scmp.ne.s32.totalorder %s584, %s585
    %p599 = scmp.eq.s32.totalorder %s37, 1
    %p600 = por %p598, %p599
    %p602 = scmp.ne.s32.totalorder %s585, %s601
    %p603 = scmp.eq.s32.totalorder %s37, 0
    %p604 = por %p602, %p603
    %s605 = ssub.s32 %s38, %s50
    %s606 = ssub.s32 %s39, %s46
    %s607 = sor.u32 %s605, %s606
    %p608 = scmp.eq.s32.totalorder %s607, 0
    %s610 = sadd.s32 %s609, 1
    %s611 = scalar_select %p608, %s609, %s610
    %p614 = pneg %p608
    %p615 = scmp.eq.s32.totalorder %s31, 1
    %p616 = por %p614, %p615
    %p617 = scmp.ne.s32.totalorder %s609, %s612
    %p618 = scmp.eq.s32.totalorder %s31, 0
    %p619 = por %p617, %p618
    %p620 = scmp.ne.s32.totalorder %s609, %s612
    %p621 = scmp.eq.s32.totalorder %s36, 1
    %p622 = por %p620, %p621
    %p623 = scmp.ne.s32.totalorder %s612, %s613
    %p624 = scmp.eq.s32.totalorder %s36, 0
    %p625 = por %p623, %p624
    %p626 = scmp.ne.s32.totalorder %s612, %s613
    %p627 = scmp.eq.s32.totalorder %s37, 1
    %p628 = por %p626, %p627
    %p630 = scmp.ne.s32.totalorder %s613, %s629
    %p631 = scmp.eq.s32.totalorder %s37, 0
    %p632 = por %p630, %p631
    %p633 = scmp.le.s32.totalorder 1, %s31
    %p634 = scmp.lt.s32.totalorder %s31, 3
    %p635 = pnand %p633, %p634
    %p636 = pneg %p635
    // Predicated region
    $region9: #{_forward_dense.10} parent=5 // pred_check
      _
    $region10: #{_forward_dense.10} parent=5 // pred_check_branch
      %638 = sbr.rel (%p635) target = $region12
    $region11: #{_forward_dense.10} parent=5 // pred_region
      %s639 = ssub.s32 %s31, 1
      // Predicated region
      $region13: #{_forward_dense.10} parent=11 // pred_check
        %p640 = pneg %p254
      $region14: #{_forward_dense.10} parent=11 // pred_check_branch
        %642 = sbr.rel (%p640) target = $region16
      $region15: #{_forward_dense.10} parent=11 // pred_region
        _
      $region16: #{_forward_dense.10} parent=11 // pred_fallthru
        _
      // Predicated region
      $region17: #{_forward_dense.10} parent=11 // pred_check
        %p643 = pneg %p275
      $region18: #{_forward_dense.10} parent=11 // pred_check_branch
        %645 = sbr.rel (%p643) target = $region20
      $region19: #{_forward_dense.10} parent=11 // pred_region
        _
      $region20: #{_forward_dense.10} parent=11 // pred_fallthru
        _
      // Predicated region
      $region21: #{_forward_dense.10} parent=11 // pred_check
        %p646 = pneg %p296
      $region22: #{_forward_dense.10} parent=11 // pred_check_branch
        %648 = sbr.rel (%p646) target = $region24
      $region23: #{_forward_dense.10} parent=11 // pred_region
        _
      $region24: #{_forward_dense.10} parent=11 // pred_fallthru
        _
      // Predicated region
      $region25: #{_forward_dense.10} parent=11 // pred_check
        %p649 = pneg %p317
      $region26: #{_forward_dense.10} parent=11 // pred_check_branch
        %651 = sbr.rel (%p649) target = $region28
      $region27: #{_forward_dense.10} parent=11 // pred_region
        _
      $region28: #{_forward_dense.10} parent=11 // pred_fallthru
        _
      // Predicated region
      $region29: #{_forward_dense.10} parent=11 // pred_check
        %p652 = pneg %p338
      $region30: #{_forward_dense.10} parent=11 // pred_check_branch
        %654 = sbr.rel (%p652) target = $region32
      $region31: #{_forward_dense.10} parent=11 // pred_region
        _
      $region32: #{_forward_dense.10} parent=11 // pred_fallthru
        _
      // Predicated region
      $region33: #{_forward_dense.10} parent=11 // pred_check
        %p655 = pneg %p359
      $region34: #{_forward_dense.10} parent=11 // pred_check_branch
        %657 = sbr.rel (%p655) target = $region36
      $region35: #{_forward_dense.10} parent=11 // pred_region
        _
      $region36: #{_forward_dense.10} parent=11 // pred_fallthru
        _
      // Predicated region
      $region37: #{_forward_dense.10} parent=11 // pred_check
        %p658 = pneg %p380
      $region38: #{_forward_dense.10} parent=11 // pred_check_branch
        %660 = sbr.rel (%p658) target = $region40
      $region39: #{_forward_dense.10} parent=11 // pred_region
        _
      $region40: #{_forward_dense.10} parent=11 // pred_fallthru
        _
      // Predicated region
      $region41: #{_forward_dense.10} parent=11 // pred_check
        %p661 = pneg %p401
      $region42: #{_forward_dense.10} parent=11 // pred_check_branch
        %663 = sbr.rel (%p661) target = $region44
      $region43: #{_forward_dense.10} parent=11 // pred_region
        _
      $region44: #{_forward_dense.10} parent=11 // pred_fallthru
        _
      // Predicated region
      $region45: #{_forward_dense.10} parent=11 // pred_check
        %p664 = pneg %p422
      $region46: #{_forward_dense.10} parent=11 // pred_check_branch
        %666 = sbr.rel (%p664) target = $region48
      $region47: #{_forward_dense.10} parent=11 // pred_region
        _
      $region48: #{_forward_dense.10} parent=11 // pred_fallthru
        _
      // Predicated region
      $region49: #{_forward_dense.10} parent=11 // pred_check
        %p667 = pneg %p443
      $region50: #{_forward_dense.10} parent=11 // pred_check_branch
        %669 = sbr.rel (%p667) target = $region52
      $region51: #{_forward_dense.10} parent=11 // pred_region
        _
      $region52: #{_forward_dense.10} parent=11 // pred_fallthru
        _
      // Predicated region
      $region53: #{_forward_dense.10} parent=11 // pred_check
        %p670 = pneg %p464
      $region54: #{_forward_dense.10} parent=11 // pred_check_branch
        %672 = sbr.rel (%p670) target = $region56
      $region55: #{_forward_dense.10} parent=11 // pred_region
        _
      $region56: #{_forward_dense.10} parent=11 // pred_fallthru
        _
      // Predicated region
      $region57: #{_forward_dense.10} parent=11 // pred_check
        %p673 = pneg %p485
      $region58: #{_forward_dense.10} parent=11 // pred_check_branch
        %675 = sbr.rel (%p673) target = $region60
      $region59: #{_forward_dense.10} parent=11 // pred_region
        _
      $region60: #{_forward_dense.10} parent=11 // pred_fallthru
        _
      // Predicated region
      $region61: #{_forward_dense.10} parent=11 // pred_check
        %p676 = pneg %p506
      $region62: #{_forward_dense.10} parent=11 // pred_check_branch
        %678 = sbr.rel (%p676) target = $region64
      $region63: #{_forward_dense.10} parent=11 // pred_region
        _
      $region64: #{_forward_dense.10} parent=11 // pred_fallthru
        _
      // Predicated region
      $region65: #{_forward_dense.10} parent=11 // pred_check
        %p679 = pneg %p527
      $region66: #{_forward_dense.10} parent=11 // pred_check_branch
        %681 = sbr.rel (%p679) target = $region68
      $region67: #{_forward_dense.10} parent=11 // pred_region
        _
      $region68: #{_forward_dense.10} parent=11 // pred_fallthru
        _
      // Predicated region
      $region69: #{_forward_dense.10} parent=11 // pred_check
        %p682 = pneg %p548
      $region70: #{_forward_dense.10} parent=11 // pred_check_branch
        %684 = sbr.rel (%p682) target = $region72
      $region71: #{_forward_dense.10} parent=11 // pred_region
        _
      $region72: #{_forward_dense.10} parent=11 // pred_fallthru
        _
      // Predicated region
      $region73: #{_forward_dense.10} parent=11 // pred_check
        %p685 = pneg %p569
      $region74: #{_forward_dense.10} parent=11 // pred_check_branch
        %687 = sbr.rel (%p685) target = $region76
      $region75: #{_forward_dense.10} parent=11 // pred_region
        _
      $region76: #{_forward_dense.10} parent=11 // pred_fallthru
        _
    $region12: #{_forward_dense.10} parent=5 // pred_fallthru
      _
    %p688 = scmp.lt.s32.totalorder %s31, 2
    // Predicated region
    $region77: #{_forward_dense.10} parent=5 // pred_check
      %p689 = pneg %p688
    $region78: #{_forward_dense.10} parent=5 // pred_check_branch
      %691 = sbr.rel (%p689) target = $region80
    $region79: #{_forward_dense.10} parent=5 // pred_region
      // Predicated region
      $region81: #{_forward_dense.10} parent=79 // pred_check
        %p692 = pneg %p65
      $region82: #{_forward_dense.10} parent=79 // pred_check_branch
        %694 = sbr.rel (%p692) target = $region84
      $region83: #{_forward_dense.10} parent=79 // pred_region
        %p695 = scmp.lt.s32.totalorder %s38, 1
        %s696 = scalar_select %p695, %s38, 1
        %p697 = scmp.lt.s32.totalorder %s39, 0
        %s698 = scalar_select %p697, %s39, 0
        %s699 = sadd.s32 %s698, %s696
        %s700 = smul.addr %s699, 8
        %s701 = scalar_lea.vmem %s0, %s700
      $region84: #{_forward_dense.10} parent=79 // pred_fallthru
        _
      // Predicated region
      $region85: #{_forward_dense.10} parent=79 // pred_check
        %p702 = pneg %p91
      $region86: #{_forward_dense.10} parent=79 // pred_check_branch
        %704 = sbr.rel (%p702) target = $region88
      $region87: #{_forward_dense.10} parent=79 // pred_region
        %p705 = scmp.lt.s32.totalorder %s38, 1
        %s706 = scalar_select %p705, %s38, 1
        %s707 = smul.addr %s706, 8
        %s708 = scalar_lea.vmem %s1, %s707
      $region88: #{_forward_dense.10} parent=79 // pred_fallthru
        _
      // Predicated region
      $region89: #{_forward_dense.10} parent=79 // pred_check
        %p709 = pneg %p119
      $region90: #{_forward_dense.10} parent=79 // pred_check_branch
        %711 = sbr.rel (%p709) target = $region92
      $region91: #{_forward_dense.10} parent=79 // pred_region
        %s712 = smul.u32 8, %s39
        %p713 = scmp.lt.s32.totalorder %s38, 1
        %s714 = scalar_select %p713, %s38, 1
        %p715 = scmp.lt.s32.totalorder %s712, 7
        %s716 = scalar_select %p715, %s712, 7
        %s717 = smul.addr %s714, 8
        %s718 = sadd.s32 %s716, %s717
        %s719 = smul.addr %s718, 8
        %s720 = scalar_lea.vmem %s2, %s719
        %s721 = smul.u32 8, %s39
      $region92: #{_forward_dense.10} parent=79 // pred_fallthru
        _
      // Predicated region
      $region93: #{_forward_dense.10} parent=79 // pred_check
        %p722 = pneg %p147
      $region94: #{_forward_dense.10} parent=79 // pred_check_branch
        %724 = sbr.rel (%p722) target = $region96
      $region95: #{_forward_dense.10} parent=79 // pred_region
        %p725 = scmp.lt.s32.totalorder %s38, 1
        %s726 = scalar_select %p725, %s38, 1
        %p727 = scmp.lt.s32.totalorder %s39, 0
        %s728 = scalar_select %p727, %s39, 0
        %s729 = sadd.s32 %s728, %s726
        %s730 = smul.addr %s729, 8
        %s731 = scalar_lea.vmem %s3, %s730
      $region96: #{_forward_dense.10} parent=79 // pred_fallthru
        _
      // Predicated region
      $region97: #{_forward_dense.10} parent=79 // pred_check
        %p732 = pneg %p173
      $region98: #{_forward_dense.10} parent=79 // pred_check_branch
        %734 = sbr.rel (%p732) target = $region100
      $region99: #{_forward_dense.10} parent=79 // pred_region
        %p735 = scmp.lt.s32.totalorder %s38, 1
        %s736 = scalar_select %p735, %s38, 1
        %s737 = scalar_lea.vmem %s4, %s736
      $region100: #{_forward_dense.10} parent=79 // pred_fallthru
        _
      // Predicated region
      $region101: #{_forward_dense.10} parent=79 // pred_check
        %p738 = pneg %p201
      $region102: #{_forward_dense.10} parent=79 // pred_check_branch
        %740 = sbr.rel (%p738) target = $region104
      $region103: #{_forward_dense.10} parent=79 // pred_region
        %p741 = scmp.lt.s32.totalorder %s38, 1
        %s742 = scalar_select %p741, %s38, 1
        %p743 = scmp.lt.s32.totalorder %s39, 0
        %s744 = scalar_select %p743, %s39, 0
        %s745 = sadd.s32 %s744, %s742
        %s746 = smul.addr %s745, 8
        %s747 = scalar_lea.vmem %s5, %s746
      $region104: #{_forward_dense.10} parent=79 // pred_fallthru
        _
      // Predicated region
      $region105: #{_forward_dense.10} parent=79 // pred_check
        %p748 = pneg %p227
      $region106: #{_forward_dense.10} parent=79 // pred_check_branch
        %750 = sbr.rel (%p748) target = $region108
      $region107: #{_forward_dense.10} parent=79 // pred_region
        %p751 = scmp.lt.s32.totalorder %s38, 1
        %s752 = scalar_select %p751, %s38, 1
        %s753 = scalar_lea.vmem %s6, %s752
      $region108: #{_forward_dense.10} parent=79 // pred_fallthru
        _
    $region80: #{_forward_dense.10} parent=5 // pred_fallthru
      _
    %p754 = scmp.le.s32.totalorder 1, %s31
    %p755 = scmp.lt.s32.totalorder %s31, 3
    %p756 = pnand %p754, %p755
    %p757 = pneg %p756
    // Predicated region
    $region109: #{_forward_dense.10} parent=5 // pred_check
      _
    $region110: #{_forward_dense.10} parent=5 // pred_check_branch
      %759 = sbr.rel (%p756) target = $region112
    $region111: #{_forward_dense.10} parent=5 // pred_region
      %s760 = ssub.s32 %s31, 1
      %p761 = scmp.lt.s32.totalorder %s40, 1
      %s762 = scalar_select %p761, %s40, 1
      %p763 = scmp.lt.s32.totalorder %s41, 0
      %s764 = scalar_select %p763, %s41, 0
      %s765 = sadd.s32 %s764, %s762
      %s766 = smul.addr %s765, 8
      %s767 = scalar_lea.vmem %s0, %s766
      %p768 = pneg %p71
      %p769 = pneg %p68
      %p770 = scmp.lt.s32.totalorder %s40, 1
      %s771 = scalar_select %p770, %s40, 1
      %s772 = smul.addr %s771, 8
      %s773 = scalar_lea.vmem %s1, %s772
      %p774 = pneg %p97
      %p775 = pneg %p94
      %s776 = smul.u32 8, %s41
      %p777 = scmp.lt.s32.totalorder %s40, 1
      %s778 = scalar_select %p777, %s40, 1
      %p779 = scmp.lt.s32.totalorder %s776, 7
      %s780 = scalar_select %p779, %s776, 7
      %s781 = smul.addr %s778, 8
      %s782 = sadd.s32 %s780, %s781
      %s783 = smul.addr %s782, 8
      %s784 = scalar_lea.vmem %s2, %s783
      %p785 = pneg %p125
      %p786 = pneg %p122
      %p787 = scmp.lt.s32.totalorder %s40, 1
      %s788 = scalar_select %p787, %s40, 1
      %p789 = scmp.lt.s32.totalorder %s41, 0
      %s790 = scalar_select %p789, %s41, 0
      %s791 = sadd.s32 %s790, %s788
      %s792 = smul.addr %s791, 8
      %s793 = scalar_lea.vmem %s3, %s792
      %p794 = pneg %p153
      %p795 = pneg %p150
      %p796 = scmp.lt.s32.totalorder %s40, 1
      %s797 = scalar_select %p796, %s40, 1
      %s798 = scalar_lea.vmem %s4, %s797
      %p799 = pneg %p179
      %p800 = pneg %p176
      %p801 = scmp.lt.s32.totalorder %s40, 1
      %s802 = scalar_select %p801, %s40, 1
      %p803 = scmp.lt.s32.totalorder %s41, 0
      %s804 = scalar_select %p803, %s41, 0
      %s805 = sadd.s32 %s804, %s802
      %s806 = smul.addr %s805, 8
      %s807 = scalar_lea.vmem %s5, %s806
      %p808 = pneg %p207
      %p809 = pneg %p204
      %p810 = scmp.lt.s32.totalorder %s40, 1
      %s811 = scalar_select %p810, %s40, 1
      %s812 = scalar_lea.vmem %s6, %s811
      %p813 = pneg %p233
      %p814 = pneg %p230
      %p815 = pneg %p254
      %p816 = pneg %p251
      %p817 = pneg %p275
      %p818 = pneg %p272
      %p819 = pneg %p296
      %p820 = pneg %p293
      %p821 = pneg %p317
      %p822 = pneg %p314
      %p823 = pneg %p338
      %p824 = pneg %p335
      %p825 = pneg %p359
      %p826 = pneg %p356
      %p827 = pneg %p380
      %p828 = pneg %p377
      %p829 = pneg %p401
      %p830 = pneg %p398
      %p831 = pneg %p422
      %p832 = pneg %p419
      %p833 = pneg %p443
      %p834 = pneg %p440
      %p835 = pneg %p464
      %p836 = pneg %p461
      %p837 = pneg %p485
      %p838 = pneg %p482
      %p839 = pneg %p506
      %p840 = pneg %p503
      %p841 = pneg %p527
      %p842 = pneg %p524
      %p843 = pneg %p548
      %p844 = pneg %p545
      %p845 = pneg %p569
      %p846 = pneg %p566
      %p847 = pneg %p597
      %p848 = pneg %p594
      %p849 = scmp.lt.s32.totalorder %s40, 1
      %s850 = scalar_select %p849, %s40, 1
      %p851 = scmp.lt.s32.totalorder %s41, 0
      %s852 = scalar_select %p851, %s41, 0
      %s853 = sadd.s32 %s852, %s850
      %s854 = smul.addr %s853, 8
      %s855 = scalar_lea.vmem %s23, %s854
      %p856 = pneg %p625
      %p857 = pneg %p622
      %s858 = smul.u32 8, %s41
      %p859 = scmp.lt.s32.totalorder %s40, 1
      %s860 = scalar_select %p859, %s40, 1
      %p861 = scmp.lt.s32.totalorder %s858, 7
      %s862 = scalar_select %p861, %s858, 7
      %s863 = smul.addr %s860, 8
      %s864 = sadd.s32 %s862, %s863
      %s865 = smul.addr %s864, 8
      %s866 = scalar_lea.vmem %s24, %s865
      %p867 = scmp.lt.s32.totalorder %s40, 1
      %s868 = scalar_select %p867, %s40, 1
      %p869 = scmp.lt.s32.totalorder %s41, 0
      %s870 = scalar_select %p869, %s41, 0
      %s871 = sadd.s32 %s870, %s868
      %s872 = smul.addr %s871, 8
      %s873 = scalar_lea.vmem %s0, %s872
      %p874 = scmp.lt.s32.totalorder %s40, 1
      %s875 = scalar_select %p874, %s40, 1
      %s876 = smul.addr %s875, 8
      %s877 = scalar_lea.vmem %s1, %s876
      %s878 = smul.u32 8, %s41
      %p879 = scmp.lt.s32.totalorder %s40, 1
      %s880 = scalar_select %p879, %s40, 1
      %p881 = scmp.lt.s32.totalorder %s878, 7
      %s882 = scalar_select %p881, %s878, 7
      %s883 = smul.addr %s880, 8
      %s884 = sadd.s32 %s882, %s883
      %s885 = smul.addr %s884, 8
      %s886 = scalar_lea.vmem %s2, %s885
      %s887 = smul.u32 8, %s41
      %p888 = scmp.lt.s32.totalorder %s40, 1
      %s889 = scalar_select %p888, %s40, 1
      %p890 = scmp.lt.s32.totalorder %s41, 0
      %s891 = scalar_select %p890, %s41, 0
      %s892 = sadd.s32 %s891, %s889
      %s893 = smul.addr %s892, 8
      %s894 = scalar_lea.vmem %s3, %s893
      %p895 = scmp.lt.s32.totalorder %s40, 1
      %s896 = scalar_select %p895, %s40, 1
      %s897 = scalar_lea.vmem %s4, %s896
      %p898 = scmp.lt.s32.totalorder %s40, 1
      %s899 = scalar_select %p898, %s40, 1
      %p900 = scmp.lt.s32.totalorder %s41, 0
      %s901 = scalar_select %p900, %s41, 0
      %s902 = sadd.s32 %s901, %s899
      %s903 = smul.addr %s902, 8
      %s904 = scalar_lea.vmem %s5, %s903
      %p905 = scmp.lt.s32.totalorder %s40, 1
      %s906 = scalar_select %p905, %s40, 1
      %s907 = scalar_lea.vmem %s6, %s906
      %p908 = scmp.lt.s32.totalorder %s40, 1
      %s909 = scalar_select %p908, %s40, 1
      %p910 = scmp.lt.s32.totalorder %s41, 0
      %s911 = scalar_select %p910, %s41, 0
      %s912 = sadd.s32 %s911, %s909
      %s913 = smul.addr %s912, 8
      %s914 = scalar_lea.vmem %s23, %s913
      %s915 = smul.u32 8, %s41
      %p916 = scmp.lt.s32.totalorder %s40, 1
      %s917 = scalar_select %p916, %s40, 1
      %p918 = scmp.lt.s32.totalorder %s915, 7
      %s919 = scalar_select %p918, %s915, 7
      %s920 = smul.addr %s917, 8
      %s921 = sadd.s32 %s919, %s920
      %s922 = smul.addr %s921, 8
      %s923 = scalar_lea.vmem %s24, %s922
      %s924 = smul.u32 8, %s41
      %v925 = vld [vmem:[%s873] sm:$0xff]
      %v926 = vld [vmem:[%s877] sm:$0xff]
      %v927 = vld [vmem:[%s886] sm:$0xff]
      %v928 = vld [vmem:[%s886 + $0x8] sm:$0xff]
      %v929 = vld [vmem:[%s886 + $0x10] sm:$0xff]
      %v930 = vld [vmem:[%s886 + $0x18] sm:$0xff]
      %v931 = vld [vmem:[%s886 + $0x20] sm:$0xff]
      %v932 = vld [vmem:[%s886 + $0x28] sm:$0xff]
      %v933 = vld [vmem:[%s886 + $0x30] sm:$0xff]
      %v934 = vld [vmem:[%s886 + $0x38] sm:$0xff]
      %v935 = vld [vmem:[%s897] sm:$0x1]
      %v936 = vld [vmem:[%s904] sm:$0xff]
      %v937 = vld [vmem:[%s907] sm:$0x1]
      %v938 = vld [vmem:[%s7] sm:$0xff]
      %v939 = vld [vmem:[%s7 + $0x8] sm:$0xff]
      %v940 = vld [vmem:[%s8] sm:$0x1]
      %v942 = vlaneseq
      %v943 = vshrl.u32 %v942, 7
      %v944 = vsub.s32 0, %v943
      %v945 = vrot.slane %v940, %v944
      %vm947 = vcmask 130048
      %v949 = vsel %vm947, %v927, 0
      %v952 = vsel %vm947, %v928, 0
      %v955 = vsel %vm947, %v929, 0
      %v958 = vsel %vm947, %v930, 0
      %v961 = vsel %vm947, %v931, 0
      %v964 = vsel %vm947, %v932, 0
      %v967 = vsel %vm947, %v933, 0
      %v970 = vsel %vm947, %v934, 0
      %972 = vmatprep.subr.mxu0 0.0
      %973 = vmatpush1.msra.mxu0 %v938
      %974 = vmatprep.subr.mxu0 0.0
      %975 = vmatpush1.msra.mxu0 %v939
      %976 = vmatprep.subr.mxu0 0.0
      %977 = vmatpush1.msra.mxu0 0.0
      %978 = vmatprep.subr.mxu0 0.0
      %979 = vmatpush1.msra.mxu0 0.0
      %980 = vmatprep.subr.mxu0 0.0
      %981 = vmatpush1.msra.mxu0 0.0
      %982 = vmatprep.subr.mxu0 0.0
      %983 = vmatpush1.msra.mxu0 0.0
      %984 = vmatprep.subr.mxu0 0.0
      %985 = vmatpush1.msra.mxu0 0.0
      %986 = vmatprep.subr.mxu0 0.0
      %987 = vmatpush1.msra.mxu0 0.0
      %988 = vmatprep.subr.mxu0 0.0
      %989 = vmatpush1.msra.mxu0 0.0
      %990 = vmatprep.subr.mxu0 0.0
      %991 = vmatpush1.msra.mxu0 0.0
      %992 = vmatprep.subr.mxu0 0.0
      %993 = vmatpush1.msra.mxu0 0.0
      %994 = vmatprep.subr.mxu0 0.0
      %995 = vmatpush1.msra.mxu0 0.0
      %996 = vmatprep.subr.mxu0 0.0
      %997 = vmatpush1.msra.mxu0 0.0
      %998 = vmatprep.subr.mxu0 0.0
      %999 = vmatpush1.msra.mxu0 0.0
      %1000 = vmatprep.subr.mxu0 0.0
      %1001 = vmatpush1.msra.mxu0 0.0
      %1002 = vmatprep.subr.mxu0 0.0
      %1003 = vmatpush1.msra.mxu0 0.0
      %1004 = vmatprep.subr.mxu0 0.0
      %1005 = vmatpush1.msra.mxu0 0.0
      %1006 = vmatprep.subr.mxu0 0.0
      %1007 = vmatpush1.msra.mxu0 0.0
      %1008 = vmatprep.subr.mxu0 0.0
      %1009 = vmatpush1.msra.mxu0 0.0
      %1010 = vmatprep.subr.mxu0 0.0
      %1011 = vmatpush1.msra.mxu0 0.0
      %1012 = vmatprep.subr.mxu0 0.0
      %1013 = vmatpush1.msra.mxu0 0.0
      %1014 = vmatprep.subr.mxu0 0.0
      %1015 = vmatpush1.msra.mxu0 0.0
      %1016 = vmatprep.subr.mxu0 0.0
      %1017 = vmatpush1.msra.mxu0 0.0
      %1018 = vmatprep.subr.mxu0 0.0
      %1019 = vmatpush1.msra.mxu0 0.0
      %1020 = vmatprep.subr.mxu0 0.0
      %1021 = vmatpush1.msra.mxu0 0.0
      %1022 = vmatprep.subr.mxu0 0.0
      %1023 = vmatpush1.msra.mxu0 0.0
      %1024 = vmatprep.subr.mxu0 0.0
      %1025 = vmatpush1.msra.mxu0 0.0
      %1026 = vmatprep.subr.mxu0 0.0
      %1027 = vmatpush1.msra.mxu0 0.0
      %1028 = vmatprep.subr.mxu0 0.0
      %1029 = vmatpush1.msra.mxu0 0.0
      %1030 = vmatprep.subr.mxu0 0.0
      %1031 = vmatpush1.msra.mxu0 0.0
      %1032 = vmatprep.subr.mxu0 0.0
      %1033 = vmatpush1.msra.mxu0 0.0
      %1034 = vmatprep.subr.mxu0 0.0
      %1035 = vmatpush1.msra.mxu0 0.0
      %1036 = vmatprep.mubr.f32.mxu0 0.0
      %1037 = vmatmul.mubr.f32.gmra.mrb[0].mxu0 %v949
      %v1038 = vpop.f32.mrb[0].mxu0
      %v1039 = vadd.f32 %v945, %v1038
      %v1040 = vpop.f32.mrb[0].mxu0
      %1041 = vmatprep.mubr.f32.mxu0 0.0
      %1042 = vmatmul.mubr.f32.gmra.mrb[0].mxu0 %v952
      %v1043 = vpop.f32.mrb[0].mxu0
      %v1044 = vadd.f32 %v945, %v1043
      %v1045 = vpop.f32.mrb[0].mxu0
      %1046 = vmatprep.mubr.f32.mxu0 0.0
      %1047 = vmatmul.mubr.f32.gmra.mrb[0].mxu0 %v955
      %v1048 = vpop.f32.mrb[0].mxu0
      %v1049 = vadd.f32 %v945, %v1048
      %v1050 = vpop.f32.mrb[0].mxu0
      %1051 = vmatprep.mubr.f32.mxu0 0.0
      %1052 = vmatmul.mubr.f32.gmra.mrb[0].mxu0 %v958
      %v1053 = vpop.f32.mrb[0].mxu0
      %v1054 = vadd.f32 %v945, %v1053
      %v1055 = vpop.f32.mrb[0].mxu0
      %1056 = vmatprep.mubr.f32.mxu0 0.0
      %1057 = vmatmul.mubr.f32.gmra.mrb[0].mxu0 %v961
      %v1058 = vpop.f32.mrb[0].mxu0
      %v1059 = vadd.f32 %v945, %v1058
      %v1060 = vpop.f32.mrb[0].mxu0
      %1061 = vmatprep.mubr.f32.mxu0 0.0
      %1062 = vmatmul.mubr.f32.gmra.mrb[0].mxu0 %v964
      %v1063 = vpop.f32.mrb[0].mxu0
      %v1064 = vadd.f32 %v945, %v1063
      %v1065 = vpop.f32.mrb[0].mxu0
      %1066 = vmatprep.mubr.f32.mxu0 0.0
      %1067 = vmatmul.mubr.f32.gmra.mrb[0].mxu0 %v967
      %v1068 = vpop.f32.mrb[0].mxu0
      %v1069 = vadd.f32 %v945, %v1068
      %v1070 = vpop.f32.mrb[0].mxu0
      %1071 = vmatprep.mubr.f32.mxu0 0.0
      %1072 = vmatmul.mubr.f32.gmra.mrb[0].mxu0 %v970
      %v1073 = vpop.f32.mrb[0].mxu0
      %v1074 = vadd.f32 %v945, %v1073
      %v1075 = vpop.f32.mrb[0].mxu0
      %1076 = vdwg.mxu0
      %v1078 = vcombine.high %v925, %v925
      %v1080 = vunpack.c.l.s4 1966171168
      %v1081 = vunpack.c.0.s8 %v1080
      %v1082 = vlaneseq
      %v1083 = vshrl.u32 %v1082, 7
      %v1084 = vsub.s32 %v1081, %v1083
      %v1085 = vrot.slane %v925, %v1084
      %v1087 = vunpack.c.l.s4 1966171168
      %v1088 = vunpack.c.0.s8 %v1087
      %v1089 = vlaneseq
      %v1090 = vshrl.u32 %v1089, 7
      %v1091 = vsub.s32 %v1088, %v1090
      %v1092 = vrot.slane %v1078, %v1091
      %v1093 = vcombine.high %v1085, %v1085
      %v1094 = vcombine.high %v1092, %v1092
      %v1096 = vunpack.c.l.s4 1966171168
      %v1097 = vunpack.c.0.s8 %v1096
      %v1098 = vlaneseq
      %v1099 = vshrl.u32 %v1098, 7
      %v1100 = vsub.s32 %v1097, %v1099
      %v1101 = vrot.slane %v1085, %v1100
      %v1103 = vunpack.c.l.s4 1966171168
      %v1104 = vunpack.c.0.s8 %v1103
      %v1105 = vlaneseq
      %v1106 = vshrl.u32 %v1105, 7
      %v1107 = vsub.s32 %v1104, %v1106
      %v1108 = vrot.slane %v1092, %v1107
      %v1110 = vunpack.c.l.s4 1966171168
      %v1111 = vunpack.c.0.s8 %v1110
      %v1112 = vlaneseq
      %v1113 = vshrl.u32 %v1112, 7
      %v1114 = vsub.s32 %v1111, %v1113
      %v1115 = vrot.slane %v1093, %v1114
      %v1117 = vunpack.c.l.s4 1966171168
      %v1118 = vunpack.c.0.s8 %v1117
      %v1119 = vlaneseq
      %v1120 = vshrl.u32 %v1119, 7
      %v1121 = vsub.s32 %v1118, %v1120
      %v1122 = vrot.slane %v1094, %v1121
      %v1123 = vcombine.high %v1101, %v1101
      %v1124 = vcombine.high %v1108, %v1108
      %v1125 = vcombine.high %v1115, %v1115
      %v1126 = vcombine.high %v1122, %v1122
      %v1127 = vlaneseq
      %v1128 = vshrl.u32 %v1127, 7
      %v1129 = vsub.s32 0, %v1128
      %v1130 = vrot.slane %v1101, %v1129
      %v1131 = vlaneseq
      %v1132 = vshrl.u32 %v1131, 7
      %v1133 = vsub.s32 0, %v1132
      %v1134 = vrot.slane %v1115, %v1133
      %v1135 = vlaneseq
      %v1136 = vshrl.u32 %v1135, 7
      %v1137 = vsub.s32 0, %v1136
      %v1138 = vrot.slane %v1123, %v1137
      %v1139 = vlaneseq
      %v1140 = vshrl.u32 %v1139, 7
      %v1141 = vsub.s32 0, %v1140
      %v1142 = vrot.slane %v1125, %v1141
      %v1143 = vlaneseq
      %v1144 = vshrl.u32 %v1143, 7
      %v1145 = vsub.s32 0, %v1144
      %v1146 = vrot.slane %v1108, %v1145
      %v1147 = vlaneseq
      %v1148 = vshrl.u32 %v1147, 7
      %v1149 = vsub.s32 0, %v1148
      %v1150 = vrot.slane %v1122, %v1149
      %v1151 = vlaneseq
      %v1152 = vshrl.u32 %v1151, 7
      %v1153 = vsub.s32 0, %v1152
      %v1154 = vrot.slane %v1124, %v1153
      %v1155 = vlaneseq
      %v1156 = vshrl.u32 %v1155, 7
      %v1157 = vsub.s32 0, %v1156
      %v1158 = vrot.slane %v1126, %v1157
      %1168 = vrot.lane.b32.xlu0 %v926, 96
      %v1169 = vpop.permute.xlu0 %1168
      %v1171 = vmul.f32 %v1130, %v1169
      %v1172 = vmul.f32 %v1134, %v1169
      %v1173 = vmul.f32 %v1138, %v1169
      %v1174 = vmul.f32 %v1142, %v1169
      %v1175 = vmul.f32 %v1146, %v1169
      %v1176 = vmul.f32 %v1150, %v1169
      %v1177 = vmul.f32 %v1154, %v1169
      %v1178 = vmul.f32 %v1158, %v1169
      %v1179 = vmul.f32 %v1171, 0.35355338
      %v1180 = vmul.f32 %v1172, 0.35355338
      %v1181 = vmul.f32 %v1173, 0.35355338
      %v1182 = vmul.f32 %v1174, 0.35355338
      %v1183 = vmul.f32 %v1175, 0.35355338
      %v1184 = vmul.f32 %v1176, 0.35355338
      %v1185 = vmul.f32 %v1177, 0.35355338
      %v1186 = vmul.f32 %v1178, 0.35355338
      %v1187 = vadd.f32 %v1039, 1.0
      %v1188 = vadd.f32 %v1044, 1.0
      %v1189 = vadd.f32 %v1049, 1.0
      %v1190 = vadd.f32 %v1054, 1.0
      %v1191 = vadd.f32 %v1059, 1.0
      %v1192 = vadd.f32 %v1064, 1.0
      %v1193 = vadd.f32 %v1069, 1.0
      %v1194 = vadd.f32 %v1074, 1.0
      %v1195 = vmul.f32 %v1179, %v1187
      %v1196 = vmul.f32 %v1180, %v1188
      %v1197 = vmul.f32 %v1181, %v1189
      %v1198 = vmul.f32 %v1182, %v1190
      %v1199 = vmul.f32 %v1183, %v1191
      %v1200 = vmul.f32 %v1184, %v1192
      %v1201 = vmul.f32 %v1185, %v1193
      %v1202 = vmul.f32 %v1186, %v1194
      %1211 = vrot.lane.b32.xlu0 %v1039, 96
      %v1212 = vpop.permute.xlu0 %1211
      %1213 = vrot.lane.b32.xlu0 %v1044, 96
      %v1214 = vpop.permute.xlu0 %1213
      %1215 = vrot.lane.b32.xlu0 %v1049, 96
      %v1216 = vpop.permute.xlu0 %1215
      %1217 = vrot.lane.b32.xlu0 %v1054, 96
      %v1218 = vpop.permute.xlu0 %1217
      %1219 = vrot.lane.b32.xlu0 %v1059, 96
      %v1220 = vpop.permute.xlu0 %1219
      %1221 = vrot.lane.b32.xlu0 %v1064, 96
      %v1222 = vpop.permute.xlu0 %1221
      %1223 = vrot.lane.b32.xlu0 %v1069, 96
      %v1224 = vpop.permute.xlu0 %1223
      %1225 = vrot.lane.b32.xlu0 %v1074, 96
      %v1226 = vpop.permute.xlu0 %1225
      %v1235 = vadd.f32 %v1195, %v1212
      %v1236 = vadd.f32 %v1196, %v1214
      %v1237 = vadd.f32 %v1197, %v1216
      %v1238 = vadd.f32 %v1198, %v1218
      %v1239 = vadd.f32 %v1199, %v1220
      %v1240 = vadd.f32 %v1200, %v1222
      %v1241 = vadd.f32 %v1201, %v1224
      %v1242 = vadd.f32 %v1202, %v1226
      %v1243 = vlaneseq
      %v1244 = vshrl.u32 %v1243, 7
      %v1245 = vsub.s32 0, %v1244
      %v1246 = vrot.slane %v935, %v1245
      %1248 = vbcast.lane.b32.xlu0 %v1246, 256
      %v1249 = vpop.permute.xlu0 %1248
      %vm1250 = vcmp.gt.f32.partialorder %v1249, 0.5
      %v1251 = vsel %vm1250, 1, 0
      %vm1252 = vcmp.eq.s32.totalorder %v1251, 1
      %v1253 = vsel %vm1252, %v1235, -1e+30
      %v1254 = vsel %vm1252, %v1236, -1e+30
      %v1255 = vsel %vm1252, %v1237, -1e+30
      %v1256 = vsel %vm1252, %v1238, -1e+30
      %v1257 = vsel %vm1252, %v1239, -1e+30
      %v1258 = vsel %vm1252, %v1240, -1e+30
      %v1259 = vsel %vm1252, %v1241, -1e+30
      %v1260 = vsel %vm1252, %v1242, -1e+30
      %vm1261 = vcmask 261120
      %v1262 = vsel %vm1261, %v1253, -inf
      %v1263 = vrot.slane %v1262, 4
      %v1264 = vmax.f32 %v1262, %v1263
      %v1265 = vrot.slane %v1264, 2
      %v1266 = vmax.f32 %v1264, %v1265
      %v1267 = vrot.slane %v1266, 1
      %v1268 = vmax.f32 %v1266, %v1267
      %v1269 = vsel %vm1261, %v1254, -inf
      %v1270 = vrot.slane %v1269, 4
      %v1271 = vmax.f32 %v1269, %v1270
      %v1272 = vrot.slane %v1271, 2
      %v1273 = vmax.f32 %v1271, %v1272
      %v1274 = vrot.slane %v1273, 1
      %v1275 = vmax.f32 %v1273, %v1274
      %v1276 = vsel %vm1261, %v1255, -inf
      %v1277 = vrot.slane %v1276, 4
      %v1278 = vmax.f32 %v1276, %v1277
      %v1279 = vrot.slane %v1278, 2
      %v1280 = vmax.f32 %v1278, %v1279
      %v1281 = vrot.slane %v1280, 1
      %v1282 = vmax.f32 %v1280, %v1281
      %v1283 = vsel %vm1261, %v1256, -inf
      %v1284 = vrot.slane %v1283, 4
      %v1285 = vmax.f32 %v1283, %v1284
      %v1286 = vrot.slane %v1285, 2
      %v1287 = vmax.f32 %v1285, %v1286
      %v1288 = vrot.slane %v1287, 1
      %v1289 = vmax.f32 %v1287, %v1288
      %v1290 = vsel %vm1261, %v1257, -inf
      %v1291 = vrot.slane %v1290, 4
      %v1292 = vmax.f32 %v1290, %v1291
      %v1293 = vrot.slane %v1292, 2
      %v1294 = vmax.f32 %v1292, %v1293
      %v1295 = vrot.slane %v1294, 1
      %v1296 = vmax.f32 %v1294, %v1295
      %v1297 = vsel %vm1261, %v1258, -inf
      %v1298 = vrot.slane %v1297, 4
      %v1299 = vmax.f32 %v1297, %v1298
      %v1300 = vrot.slane %v1299, 2
      %v1301 = vmax.f32 %v1299, %v1300
      %v1302 = vrot.slane %v1301, 1
      %v1303 = vmax.f32 %v1301, %v1302
      %v1304 = vsel %vm1261, %v1259, -inf
      %v1305 = vrot.slane %v1304, 4
      %v1306 = vmax.f32 %v1304, %v1305
      %v1307 = vrot.slane %v1306, 2
      %v1308 = vmax.f32 %v1306, %v1307
      %v1309 = vrot.slane %v1308, 1
      %v1310 = vmax.f32 %v1308, %v1309
      %v1311 = vsel %vm1261, %v1260, -inf
      %v1312 = vrot.slane %v1311, 4
      %v1313 = vmax.f32 %v1311, %v1312
      %v1314 = vrot.slane %v1313, 2
      %v1315 = vmax.f32 %v1313, %v1314
      %v1316 = vrot.slane %v1315, 1
      %v1317 = vmax.f32 %v1315, %v1316
      %v1318 = vsub.f32 %v1253, %v1268
      %v1319 = vsub.f32 %v1254, %v1275
      %v1320 = vsub.f32 %v1255, %v1282
      %v1321 = vsub.f32 %v1256, %v1289
      %v1322 = vsub.f32 %v1257, %v1296
      %v1323 = vsub.f32 %v1258, %v1303
      %v1324 = vsub.f32 %v1259, %v1310
      %v1325 = vsub.f32 %v1260, %v1317
      %v1326 = vmul.f32 %v1318, 1.442695
      %v1327 = vpow.pop %v1326
      %v1328 = vmul.f32 %v1319, 1.442695
      %v1329 = vpow.pop %v1328
      %v1330 = vmul.f32 %v1320, 1.442695
      %v1331 = vpow.pop %v1330
      %v1332 = vmul.f32 %v1321, 1.442695
      %v1333 = vpow.pop %v1332
      %v1334 = vmul.f32 %v1322, 1.442695
      %v1335 = vpow.pop %v1334
      %v1336 = vmul.f32 %v1323, 1.442695
      %v1337 = vpow.pop %v1336
      %v1338 = vmul.f32 %v1324, 1.442695
      %v1339 = vpow.pop %v1338
      %v1340 = vmul.f32 %v1325, 1.442695
      %v1341 = vpow.pop %v1340
      %v1342 = vsel %vm1261, %v1327, 0.0
      %v1343 = vrot.slane %v1342, 4
      %v1344 = vadd.f32 %v1342, %v1343
      %v1345 = vrot.slane %v1344, 2
      %v1346 = vadd.f32 %v1344, %v1345
      %v1347 = vrot.slane %v1346, 1
      %v1348 = vadd.f32 %v1346, %v1347
      %v1349 = vsel %vm1261, %v1329, 0.0
      %v1350 = vrot.slane %v1349, 4
      %v1351 = vadd.f32 %v1349, %v1350
      %v1352 = vrot.slane %v1351, 2
      %v1353 = vadd.f32 %v1351, %v1352
      %v1354 = vrot.slane %v1353, 1
      %v1355 = vadd.f32 %v1353, %v1354
      %v1356 = vsel %vm1261, %v1331, 0.0
      %v1357 = vrot.slane %v1356, 4
      %v1358 = vadd.f32 %v1356, %v1357
      %v1359 = vrot.slane %v1358, 2
      %v1360 = vadd.f32 %v1358, %v1359
      %v1361 = vrot.slane %v1360, 1
      %v1362 = vadd.f32 %v1360, %v1361
      %v1363 = vsel %vm1261, %v1333, 0.0
      %v1364 = vrot.slane %v1363, 4
      %v1365 = vadd.f32 %v1363, %v1364
      %v1366 = vrot.slane %v1365, 2
      %v1367 = vadd.f32 %v1365, %v1366
      %v1368 = vrot.slane %v1367, 1
      %v1369 = vadd.f32 %v1367, %v1368
      %v1370 = vsel %vm1261, %v1335, 0.0
      %v1371 = vrot.slane %v1370, 4
      %v1372 = vadd.f32 %v1370, %v1371
      %v1373 = vrot.slane %v1372, 2
      %v1374 = vadd.f32 %v1372, %v1373
      %v1375 = vrot.slane %v1374, 1
      %v1376 = vadd.f32 %v1374, %v1375
      %v1377 = vsel %vm1261, %v1337, 0.0
      %v1378 = vrot.slane %v1377, 4
      %v1379 = vadd.f32 %v1377, %v1378
      %v1380 = vrot.slane %v1379, 2
      %v1381 = vadd.f32 %v1379, %v1380
      %v1382 = vrot.slane %v1381, 1
      %v1383 = vadd.f32 %v1381, %v1382
      %v1384 = vsel %vm1261, %v1339, 0.0
      %v1385 = vrot.slane %v1384, 4
      %v1386 = vadd.f32 %v1384, %v1385
      %v1387 = vrot.slane %v1386, 2
      %v1388 = vadd.f32 %v1386, %v1387
      %v1389 = vrot.slane %v1388, 1
      %v1390 = vadd.f32 %v1388, %v1389
      %v1391 = vsel %vm1261, %v1341, 0.0
      %v1392 = vrot.slane %v1391, 4
      %v1393 = vadd.f32 %v1391, %v1392
      %v1394 = vrot.slane %v1393, 2
      %v1395 = vadd.f32 %v1393, %v1394
      %v1396 = vrot.slane %v1395, 1
      %v1397 = vadd.f32 %v1395, %v1396
      %1398 = vrot.lane.b32.xlu0 %v926, 64
      %v1399 = vpop.permute.xlu0 %1398
      %v1401 = vmul.f32 %v1327, %v1399
      %v1402 = vmul.f32 %v1329, %v1399
      %v1403 = vmul.f32 %v1331, %v1399
      %v1404 = vmul.f32 %v1333, %v1399
      %v1405 = vmul.f32 %v1335, %v1399
      %v1406 = vmul.f32 %v1337, %v1399
      %v1407 = vmul.f32 %v1339, %v1399
      %v1408 = vmul.f32 %v1341, %v1399
      %v1409 = vsel %vm1261, %v1401, 0.0
      %v1410 = vrot.slane %v1409, 4
      %v1411 = vadd.f32 %v1409, %v1410
      %v1412 = vrot.slane %v1411, 2
      %v1413 = vadd.f32 %v1411, %v1412
      %v1414 = vrot.slane %v1413, 1
      %v1415 = vadd.f32 %v1413, %v1414
      %v1416 = vsel %vm1261, %v1402, 0.0
      %v1417 = vrot.slane %v1416, 4
      %v1418 = vadd.f32 %v1416, %v1417
      %v1419 = vrot.slane %v1418, 2
      %v1420 = vadd.f32 %v1418, %v1419
      %v1421 = vrot.slane %v1420, 1
      %v1422 = vadd.f32 %v1420, %v1421
      %v1423 = vsel %vm1261, %v1403, 0.0
      %v1424 = vrot.slane %v1423, 4
      %v1425 = vadd.f32 %v1423, %v1424
      %v1426 = vrot.slane %v1425, 2
      %v1427 = vadd.f32 %v1425, %v1426
      %v1428 = vrot.slane %v1427, 1
      %v1429 = vadd.f32 %v1427, %v1428
      %v1430 = vsel %vm1261, %v1404, 0.0
      %v1431 = vrot.slane %v1430, 4
      %v1432 = vadd.f32 %v1430, %v1431
      %v1433 = vrot.slane %v1432, 2
      %v1434 = vadd.f32 %v1432, %v1433
      %v1435 = vrot.slane %v1434, 1
      %v1436 = vadd.f32 %v1434, %v1435
      %v1437 = vsel %vm1261, %v1405, 0.0
      %v1438 = vrot.slane %v1437, 4
      %v1439 = vadd.f32 %v1437, %v1438
      %v1440 = vrot.slane %v1439, 2
      %v1441 = vadd.f32 %v1439, %v1440
      %v1442 = vrot.slane %v1441, 1
      %v1443 = vadd.f32 %v1441, %v1442
      %v1444 = vsel %vm1261, %v1406, 0.0
      %v1445 = vrot.slane %v1444, 4
      %v1446 = vadd.f32 %v1444, %v1445
      %v1447 = vrot.slane %v1446, 2
      %v1448 = vadd.f32 %v1446, %v1447
      %v1449 = vrot.slane %v1448, 1
      %v1450 = vadd.f32 %v1448, %v1449
      %v1451 = vsel %vm1261, %v1407, 0.0
      %v1452 = vrot.slane %v1451, 4
      %v1453 = vadd.f32 %v1451, %v1452
      %v1454 = vrot.slane %v1453, 2
      %v1455 = vadd.f32 %v1453, %v1454
      %v1456 = vrot.slane %v1455, 1
      %v1457 = vadd.f32 %v1455, %v1456
      %v1458 = vsel %vm1261, %v1408, 0.0
      %v1459 = vrot.slane %v1458, 4
      %v1460 = vadd.f32 %v1458, %v1459
      %v1461 = vrot.slane %v1460, 2
      %v1462 = vadd.f32 %v1460, %v1461
      %v1463 = vrot.slane %v1462, 1
      %v1464 = vadd.f32 %v1462, %v1463
      %v1465 = vrcp.pop %v1348
      %v1466 = vmul.f32 %v1415, %v1465
      %v1467 = vrcp.pop %v1355
      %v1468 = vmul.f32 %v1422, %v1467
      %v1469 = vrcp.pop %v1362
      %v1470 = vmul.f32 %v1429, %v1469
      %v1471 = vrcp.pop %v1369
      %v1472 = vmul.f32 %v1436, %v1471
      %v1473 = vrcp.pop %v1376
      %v1474 = vmul.f32 %v1443, %v1473
      %v1475 = vrcp.pop %v1383
      %v1476 = vmul.f32 %v1450, %v1475
      %v1477 = vrcp.pop %v1390
      %v1478 = vmul.f32 %v1457, %v1477
      %v1479 = vrcp.pop %v1397
      %v1480 = vmul.f32 %v1464, %v1479
      %v1481 = vadd.f32 %v937, 1.0
      %v1483 = vlaneseq
      %v1484 = vshrl.u32 %v1483, 7
      %v1485 = vsub.s32 0, %v1484
      %v1486 = vrot.slane %v1481, %v1485
      %vm1496 = vcmask 1041409
      %v1497 = vsel %vm1496, %v1468, %v1466
      %vm1498 = vcmask 1042434
      %v1499 = vsel %vm1498, %v1470, %v1497
      %vm1500 = vcmask 1043459
      %v1501 = vsel %vm1500, %v1472, %v1499
      %vm1502 = vcmask 1044484
      %v1503 = vsel %vm1502, %v1474, %v1501
      %vm1504 = vcmask 1045509
      %v1505 = vsel %vm1504, %v1476, %v1503
      %vm1506 = vcmask 1046534
      %v1507 = vsel %vm1506, %v1478, %v1505
      %vm1508 = vcmask 1047559
      %v1509 = vsel %vm1508, %v1480, %v1507
      %1510 = vrot.lane.b32.xlu0 %v1509, 96
      %v1511 = vpop.permute.xlu0 %1510
      %v1513 = vmul.f32 %v1486, %v1511
      %v1515 = vlaneseq
      %v1516 = vshrl.u32 %v1515, 7
      %v1517 = vsub.s32 0, %v1516
      %v1518 = vrot.slane %v937, %v1517
      %1521 = vrot.lane.b32.xlu0 %v1513, 96
      %v1522 = vpop.permute.xlu0 %1521
      %v1524 = vadd.f32 %v1518, %v1522
      %v1525 = vld [vmem:[%s11] sm:$0xff]
      %v1526 = vld [vmem:[%s11 + $0x8] sm:$0xff]
      %v1527 = vld [vmem:[%s11 + $0x10] sm:$0xff]
      %v1528 = vld [vmem:[%s11 + $0x18] sm:$0xff]
      %v1529 = vld [vmem:[%s12] sm:$0x1]
      %v1531 = vlaneseq
      %v1532 = vshrl.u32 %v1531, 7
      %v1533 = vsub.s32 0, %v1532
      %v1534 = vrot.slane %v1529, %v1533
      %1537 = vrot.lane.b32.xlu0 %v1524, 64
      %v1538 = vpop.permute.xlu0 %1537
      %v1539 = vsel %vm1261, %v1538, 0
      %1541 = vmatprep.subr.mxu0 0.0
      %1542 = vmatpush1.msra.mxu0 %v1525
      %1543 = vmatprep.subr.mxu0 0.0
      %1544 = vmatpush1.msra.mxu0 %v1526
      %1545 = vmatprep.subr.mxu0 0.0
      %1546 = vmatpush1.msra.mxu0 %v1527
      %1547 = vmatprep.subr.mxu0 0.0
      %1548 = vmatpush1.msra.mxu0 %v1528
      %1549 = vmatprep.subr.mxu0 0.0
      %1550 = vmatpush1.msra.mxu0 0.0
      %1551 = vmatprep.subr.mxu0 0.0
      %1552 = vmatpush1.msra.mxu0 0.0
      %1553 = vmatprep.subr.mxu0 0.0
      %1554 = vmatpush1.msra.mxu0 0.0
      %1555 = vmatprep.subr.mxu0 0.0
      %1556 = vmatpush1.msra.mxu0 0.0
      %1557 = vmatprep.subr.mxu0 0.0
      %1558 = vmatpush1.msra.mxu0 0.0
      %1559 = vmatprep.subr.mxu0 0.0
      %1560 = vmatpush1.msra.mxu0 0.0
      %1561 = vmatprep.subr.mxu0 0.0
      %1562 = vmatpush1.msra.mxu0 0.0
      %1563 = vmatprep.subr.mxu0 0.0
      %1564 = vmatpush1.msra.mxu0 0.0
      %1565 = vmatprep.subr.mxu0 0.0
      %1566 = vmatpush1.msra.mxu0 0.0
      %1567 = vmatprep.subr.mxu0 0.0
      %1568 = vmatpush1.msra.mxu0 0.0
      %1569 = vmatprep.subr.mxu0 0.0
      %1570 = vmatpush1.msra.mxu0 0.0
      %1571 = vmatprep.subr.mxu0 0.0
      %1572 = vmatpush1.msra.mxu0 0.0
      %1573 = vmatprep.subr.mxu0 0.0
      %1574 = vmatpush1.msra.mxu0 0.0
      %1575 = vmatprep.subr.mxu0 0.0
      %1576 = vmatpush1.msra.mxu0 0.0
      %1577 = vmatprep.subr.mxu0 0.0
      %1578 = vmatpush1.msra.mxu0 0.0
      %1579 = vmatprep.subr.mxu0 0.0
      %1580 = vmatpush1.msra.mxu0 0.0
      %1581 = vmatprep.subr.mxu0 0.0
      %1582 = vmatpush1.msra.mxu0 0.0
      %1583 = vmatprep.subr.mxu0 0.0
      %1584 = vmatpush1.msra.mxu0 0.0
      %1585 = vmatprep.subr.mxu0 0.0
      %1586 = vmatpush1.msra.mxu0 0.0
      %1587 = vmatprep.subr.mxu0 0.0
      %1588 = vmatpush1.msra.mxu0 0.0
      %1589 = vmatprep.subr.mxu0 0.0
      %1590 = vmatpush1.msra.mxu0 0.0
      %1591 = vmatprep.subr.mxu0 0.0
      %1592 = vmatpush1.msra.mxu0 0.0
      %1593 = vmatprep.subr.mxu0 0.0
      %1594 = vmatpush1.msra.mxu0 0.0
      %1595 = vmatprep.subr.mxu0 0.0
      %1596 = vmatpush1.msra.mxu0 0.0
      %1597 = vmatprep.subr.mxu0 0.0
      %1598 = vmatpush1.msra.mxu0 0.0
      %1599 = vmatprep.subr.mxu0 0.0
      %1600 = vmatpush1.msra.mxu0 0.0
      %1601 = vmatprep.subr.mxu0 0.0
      %1602 = vmatpush1.msra.mxu0 0.0
      %1603 = vmatprep.subr.mxu0 0.0
      %1604 = vmatpush1.msra.mxu0 0.0
      %1605 = vmatprep.mubr.f32.mxu0 0.0
      %1606 = vmatmul.mubr.f32.gmra.mrb[0].mxu0 %v1539
      %v1607 = vpop.f32.mrb[0].mxu0
      %v1608 = vadd.f32 %v1534, %v1607
      %v1609 = vpop.f32.mrb[0].mxu0
      %1610 = vdwg.mxu0
      %1612 = vset.pattern.permute.xlu0 0
      %1613 = vperm.xlu0 %1612, %v936
      %v1614 = vpop.permute.xlu0 %1613
      %v1616 = vmul.f32 %v1608, %v1614
      %v1617 = vld [vmem:[%s894] sm:$0xff]
      %v1618 = vadd.f32 %v1617, %v1616
      %v1619 = vld [vmem:[%s21] sm:$0x1]
      %v1620 = vld [vmem:[%s21 + $0x1] sm:$0x1]
      %v1621 = vsel %vm1261, %v1618, 0.0
      %1622 = vadd.xlane.f32.xlu0 %v1621
      %v1623 = vpop.xlane.xlu0 %1622
      %v1624 = vrcp.pop 32.0
      %v1625 = vmul.f32 %v1623, %v1624
      %v1626 = vsub.f32 %v1618, %v1625
      %v1627 = vmul.f32 %v1626, %v1626
      %v1628 = vsel %vm1261, %v1627, 0.0
      %1629 = vadd.xlane.f32.xlu0 %v1628
      %v1630 = vpop.xlane.xlu0 %1629
      %v1631 = vmul.f32 %v1630, %v1624
      %v1632 = vadd.f32 %v1631, 1e-05
      %v1633 = vrsqrt.pop %v1632
      %v1634 = vmul.f32 %v1626, %v1633
      %v1635 = vlaneseq
      %v1636 = vshrl.u32 %v1635, 7
      %v1637 = vsub.s32 0, %v1636
      %v1638 = vrot.slane %v1619, %v1637
      %v1639 = vmul.f32 %v1634, %v1638
      %v1640 = vlaneseq
      %v1641 = vshrl.u32 %v1640, 7
      %v1642 = vsub.s32 0, %v1641
      %v1643 = vrot.slane %v1620, %v1642
      %v1644 = vadd.f32 %v1639, %v1643
      %v1645 = vld [vmem:[%s13] sm:$0xff]
      %v1646 = vld [vmem:[%s13 + $0x8] sm:$0xff]
      %v1647 = vld [vmem:[%s13 + $0x10] sm:$0xff]
      %v1648 = vld [vmem:[%s13 + $0x18] sm:$0xff]
      %v1649 = vld [vmem:[%s14] sm:$0x1]
      %v1651 = vlaneseq
      %v1652 = vshrl.u32 %v1651, 7
      %v1653 = vsub.s32 0, %v1652
      %v1654 = vrot.slane %v1649, %v1653
      %v1657 = vsel %vm1261, %v1644, 0
      %1659 = vmatprep.subr.mxu0 0.0
      %1660 = vmatpush1.msra.mxu0 %v1645
      %1661 = vmatprep.subr.mxu0 0.0
      %1662 = vmatpush1.msra.mxu0 %v1646
      %1663 = vmatprep.subr.mxu0 0.0
      %1664 = vmatpush1.msra.mxu0 %v1647
      %1665 = vmatprep.subr.mxu0 0.0
      %1666 = vmatpush1.msra.mxu0 %v1648
      %1667 = vmatprep.subr.mxu0 0.0
      %1668 = vmatpush1.msra.mxu0 0.0
      %1669 = vmatprep.subr.mxu0 0.0
      %1670 = vmatpush1.msra.mxu0 0.0
      %1671 = vmatprep.subr.mxu0 0.0
      %1672 = vmatpush1.msra.mxu0 0.0
      %1673 = vmatprep.subr.mxu0 0.0
      %1674 = vmatpush1.msra.mxu0 0.0
      %1675 = vmatprep.subr.mxu0 0.0
      %1676 = vmatpush1.msra.mxu0 0.0
      %1677 = vmatprep.subr.mxu0 0.0
      %1678 = vmatpush1.msra.mxu0 0.0
      %1679 = vmatprep.subr.mxu0 0.0
      %1680 = vmatpush1.msra.mxu0 0.0
      %1681 = vmatprep.subr.mxu0 0.0
      %1682 = vmatpush1.msra.mxu0 0.0
      %1683 = vmatprep.subr.mxu0 0.0
      %1684 = vmatpush1.msra.mxu0 0.0
      %1685 = vmatprep.subr.mxu0 0.0
      %1686 = vmatpush1.msra.mxu0 0.0
      %1687 = vmatprep.subr.mxu0 0.0
      %1688 = vmatpush1.msra.mxu0 0.0
      %1689 = vmatprep.subr.mxu0 0.0
      %1690 = vmatpush1.msra.mxu0 0.0
      %1691 = vmatprep.subr.mxu0 0.0
      %1692 = vmatpush1.msra.mxu0 0.0
      %1693 = vmatprep.subr.mxu0 0.0
      %1694 = vmatpush1.msra.mxu0 0.0
      %1695 = vmatprep.subr.mxu0 0.0
      %1696 = vmatpush1.msra.mxu0 0.0
      %1697 = vmatprep.subr.mxu0 0.0
      %1698 = vmatpush1.msra.mxu0 0.0
      %1699 = vmatprep.subr.mxu0 0.0
      %1700 = vmatpush1.msra.mxu0 0.0
      %1701 = vmatprep.subr.mxu0 0.0
      %1702 = vmatpush1.msra.mxu0 0.0
      %1703 = vmatprep.subr.mxu0 0.0
      %1704 = vmatpush1.msra.mxu0 0.0
      %1705 = vmatprep.subr.mxu0 0.0
      %1706 = vmatpush1.msra.mxu0 0.0
      %1707 = vmatprep.subr.mxu0 0.0
      %1708 = vmatpush1.msra.mxu0 0.0
      %1709 = vmatprep.subr.mxu0 0.0
      %1710 = vmatpush1.msra.mxu0 0.0
      %1711 = vmatprep.subr.mxu0 0.0
      %1712 = vmatpush1.msra.mxu0 0.0
      %1713 = vmatprep.subr.mxu0 0.0
      %1714 = vmatpush1.msra.mxu0 0.0
      %1715 = vmatprep.subr.mxu0 0.0
      %1716 = vmatpush1.msra.mxu0 0.0
      %1717 = vmatprep.subr.mxu0 0.0
      %1718 = vmatpush1.msra.mxu0 0.0
      %1719 = vmatprep.subr.mxu0 0.0
      %1720 = vmatpush1.msra.mxu0 0.0
      %1721 = vmatprep.subr.mxu0 0.0
      %1722 = vmatpush1.msra.mxu0 0.0
      %1723 = vmatprep.mubr.f32.mxu0 0.0
      %1724 = vmatmul.mubr.f32.gmra.mrb[0].mxu0 %v1657
      %v1725 = vpop.f32.mrb[0].mxu0
      %v1726 = vadd.f32 %v1654, %v1725
      %v1727 = vpop.f32.mrb[0].mxu0
      %1728 = vdwg.mxu0
      %v1729 = vmax.f32 %v1726, 0.0
      %v1730 = vld [vmem:[%s15] sm:$0xff]
      %v1731 = vld [vmem:[%s15 + $0x8] sm:$0xff]
      %v1732 = vld [vmem:[%s15 + $0x10] sm:$0xff]
      %v1733 = vld [vmem:[%s15 + $0x18] sm:$0xff]
      %v1734 = vld [vmem:[%s15 + $0x20] sm:$0xff]
      %v1735 = vld [vmem:[%s15 + $0x28] sm:$0xff]
      %v1736 = vld [vmem:[%s15 + $0x30] sm:$0xff]
      %v1737 = vld [vmem:[%s15 + $0x38] sm:$0xff]
      %v1738 = vld [vmem:[%s16] sm:$0x1]
      %v1740 = vlaneseq
      %v1741 = vshrl.u32 %v1740, 7
      %v1742 = vsub.s32 0, %v1741
      %v1743 = vrot.slane %v1738, %v1742
      %vm1745 = vcmask 523264
      %v1747 = vsel %vm1745, %v1729, 0
      %1749 = vmatprep.subr.mxu0 0.0
      %1750 = vmatpush1.msra.mxu0 %v1730
      %1751 = vmatprep.subr.mxu0 0.0
      %1752 = vmatpush1.msra.mxu0 %v1731
      %1753 = vmatprep.subr.mxu0 0.0
      %1754 = vmatpush1.msra.mxu0 %v1732
      %1755 = vmatprep.subr.mxu0 0.0
      %1756 = vmatpush1.msra.mxu0 %v1733
      %1757 = vmatprep.subr.mxu0 0.0
      %1758 = vmatpush1.msra.mxu0 %v1734
      %1759 = vmatprep.subr.mxu0 0.0
      %1760 = vmatpush1.msra.mxu0 %v1735
      %1761 = vmatprep.subr.mxu0 0.0
      %1762 = vmatpush1.msra.mxu0 %v1736
      %1763 = vmatprep.subr.mxu0 0.0
      %1764 = vmatpush1.msra.mxu0 %v1737
      %1765 = vmatprep.subr.mxu0 0.0
      %1766 = vmatpush1.msra.mxu0 0.0
      %1767 = vmatprep.subr.mxu0 0.0
      %1768 = vmatpush1.msra.mxu0 0.0
      %1769 = vmatprep.subr.mxu0 0.0
      %1770 = vmatpush1.msra.mxu0 0.0
      %1771 = vmatprep.subr.mxu0 0.0
      %1772 = vmatpush1.msra.mxu0 0.0
      %1773 = vmatprep.subr.mxu0 0.0
      %1774 = vmatpush1.msra.mxu0 0.0
      %1775 = vmatprep.subr.mxu0 0.0
      %1776 = vmatpush1.msra.mxu0 0.0
      %1777 = vmatprep.subr.mxu0 0.0
      %1778 = vmatpush1.msra.mxu0 0.0
      %1779 = vmatprep.subr.mxu0 0.0
      %1780 = vmatpush1.msra.mxu0 0.0
      %1781 = vmatprep.subr.mxu0 0.0
      %1782 = vmatpush1.msra.mxu0 0.0
      %1783 = vmatprep.subr.mxu0 0.0
      %1784 = vmatpush1.msra.mxu0 0.0
      %1785 = vmatprep.subr.mxu0 0.0
      %1786 = vmatpush1.msra.mxu0 0.0
      %1787 = vmatprep.subr.mxu0 0.0
      %1788 = vmatpush1.msra.mxu0 0.0
      %1789 = vmatprep.subr.mxu0 0.0
      %1790 = vmatpush1.msra.mxu0 0.0
      %1791 = vmatprep.subr.mxu0 0.0
      %1792 = vmatpush1.msra.mxu0 0.0
      %1793 = vmatprep.subr.mxu0 0.0
      %1794 = vmatpush1.msra.mxu0 0.0
      %1795 = vmatprep.subr.mxu0 0.0
      %1796 = vmatpush1.msra.mxu0 0.0
      %1797 = vmatprep.subr.mxu0 0.0
      %1798 = vmatpush1.msra.mxu0 0.0
      %1799 = vmatprep.subr.mxu0 0.0
      %1800 = vmatpush1.msra.mxu0 0.0
      %1801 = vmatprep.subr.mxu0 0.0
      %1802 = vmatpush1.msra.mxu0 0.0
      %1803 = vmatprep.subr.mxu0 0.0
      %1804 = vmatpush1.msra.mxu0 0.0
      %1805 = vmatprep.subr.mxu0 0.0
      %1806 = vmatpush1.msra.mxu0 0.0
      %1807 = vmatprep.subr.mxu0 0.0
      %1808 = vmatpush1.msra.mxu0 0.0
      %1809 = vmatprep.subr.mxu0 0.0
      %1810 = vmatpush1.msra.mxu0 0.0
      %1811 = vmatprep.subr.mxu0 0.0
      %1812 = vmatpush1.msra.mxu0 0.0
      %1813 = vmatprep.mubr.f32.mxu0 0.0
      %1814 = vmatmul.mubr.f32.gmra.mrb[0].mxu0 %v1747
      %v1815 = vpop.f32.mrb[0].mxu0
      %v1816 = vadd.f32 %v1743, %v1815
      %v1817 = vpop.f32.mrb[0].mxu0
      %1818 = vdwg.mxu0
      %v1819 = vadd.f32 %v1644, %v1816
      %v1820 = vld [vmem:[%s21 + $0x2] sm:$0x1]
      %v1821 = vld [vmem:[%s21 + $0x3] sm:$0x1]
      %v1822 = vsel %vm1261, %v1819, 0.0
      %1823 = vadd.xlane.f32.xlu0 %v1822
      %v1824 = vpop.xlane.xlu0 %1823
      %v1825 = vmul.f32 %v1824, %v1624
      %v1826 = vsub.f32 %v1819, %v1825
      %v1827 = vmul.f32 %v1826, %v1826
      %v1828 = vsel %vm1261, %v1827, 0.0
      %1829 = vadd.xlane.f32.xlu0 %v1828
      %v1830 = vpop.xlane.xlu0 %1829
      %v1831 = vmul.f32 %v1830, %v1624
      %v1832 = vadd.f32 %v1831, 1e-05
      %v1833 = vrsqrt.pop %v1832
      %v1834 = vmul.f32 %v1826, %v1833
      %v1835 = vlaneseq
      %v1836 = vshrl.u32 %v1835, 7
      %v1837 = vsub.s32 0, %v1836
      %v1838 = vrot.slane %v1820, %v1837
      %v1839 = vmul.f32 %v1834, %v1838
      %v1840 = vlaneseq
      %v1841 = vshrl.u32 %v1840, 7
      %v1842 = vsub.s32 0, %v1841
      %v1843 = vrot.slane %v1821, %v1842
      %v1844 = vadd.f32 %v1839, %v1843
      %1845 = vst.msk [vmem:[%s914] sm:$0xff] %vm1261, %v1844
      %1854 = vrot.lane.b32.xlu0 %v1235, 32
      %v1855 = vpop.permute.xlu0 %1854
      %1856 = vrot.lane.b32.xlu0 %v1236, 32
      %v1857 = vpop.permute.xlu0 %1856
      %1858 = vrot.lane.b32.xlu0 %v1237, 32
      %v1859 = vpop.permute.xlu0 %1858
      %1860 = vrot.lane.b32.xlu0 %v1238, 32
      %v1861 = vpop.permute.xlu0 %1860
      %1862 = vrot.lane.b32.xlu0 %v1239, 32
      %v1863 = vpop.permute.xlu0 %1862
      %1864 = vrot.lane.b32.xlu0 %v1240, 32
      %v1865 = vpop.permute.xlu0 %1864
      %1866 = vrot.lane.b32.xlu0 %v1241, 32
      %v1867 = vpop.permute.xlu0 %1866
      %1868 = vrot.lane.b32.xlu0 %v1242, 32
      %v1869 = vpop.permute.xlu0 %1868
      %v1878 = vmul.f32 %v1486, %v1855
      %v1879 = vmul.f32 %v1486, %v1857
      %v1880 = vmul.f32 %v1486, %v1859
      %v1881 = vmul.f32 %v1486, %v1861
      %v1882 = vmul.f32 %v1486, %v1863
      %v1883 = vmul.f32 %v1486, %v1865
      %v1884 = vmul.f32 %v1486, %v1867
      %v1885 = vmul.f32 %v1486, %v1869
      %1894 = vrot.lane.b32.xlu0 %v1878, 96
      %v1895 = vpop.permute.xlu0 %1894
      %1896 = vrot.lane.b32.xlu0 %v1879, 96
      %v1897 = vpop.permute.xlu0 %1896
      %1898 = vrot.lane.b32.xlu0 %v1880, 96
      %v1899 = vpop.permute.xlu0 %1898
      %1900 = vrot.lane.b32.xlu0 %v1881, 96
      %v1901 = vpop.permute.xlu0 %1900
      %1902 = vrot.lane.b32.xlu0 %v1882, 96
      %v1903 = vpop.permute.xlu0 %1902
      %1904 = vrot.lane.b32.xlu0 %v1883, 96
      %v1905 = vpop.permute.xlu0 %1904
      %1906 = vrot.lane.b32.xlu0 %v1884, 96
      %v1907 = vpop.permute.xlu0 %1906
      %1908 = vrot.lane.b32.xlu0 %v1885, 96
      %v1909 = vpop.permute.xlu0 %1908
      %v1918 = vadd.f32 %v1518, %v1895
      %v1919 = vadd.f32 %v1518, %v1897
      %v1920 = vadd.f32 %v1518, %v1899
      %v1921 = vadd.f32 %v1518, %v1901
      %v1922 = vadd.f32 %v1518, %v1903
      %v1923 = vadd.f32 %v1518, %v1905
      %v1924 = vadd.f32 %v1518, %v1907
      %v1925 = vadd.f32 %v1518, %v1909
      %v1926 = vld [vmem:[%s9] sm:$0xff]
      %v1927 = vld [vmem:[%s9 + $0x8] sm:$0xff]
      %v1928 = vld [vmem:[%s9 + $0x10] sm:$0xff]
      %v1929 = vld [vmem:[%s9 + $0x18] sm:$0xff]
      %v1930 = vld [vmem:[%s10] sm:$0x1]
      %v1932 = vlaneseq
      %v1933 = vshrl.u32 %v1932, 7
      %v1934 = vsub.s32 0, %v1933
      %v1935 = vrot.slane %v1930, %v1934
      %v1938 = vsel %vm1261, %v1918, 0
      %v1941 = vsel %vm1261, %v1919, 0
      %v1944 = vsel %vm1261, %v1920, 0
      %v1947 = vsel %vm1261, %v1921, 0
      %v1950 = vsel %vm1261, %v1922, 0
      %v1953 = vsel %vm1261, %v1923, 0
      %v1956 = vsel %vm1261, %v1924, 0
      %v1959 = vsel %vm1261, %v1925, 0
      %1961 = vmatprep.subr.mxu0 0.0
      %1962 = vmatpush1.msra.mxu0 %v1926
      %1963 = vmatprep.subr.mxu0 0.0
      %1964 = vmatpush1.msra.mxu0 %v1927
      %1965 = vmatprep.subr.mxu0 0.0
      %1966 = vmatpush1.msra.mxu0 %v1928
      %1967 = vmatprep.subr.mxu0 0.0
      %1968 = vmatpush1.msra.mxu0 %v1929
      %1969 = vmatprep.subr.mxu0 0.0
      %1970 = vmatpush1.msra.mxu0 0.0
      %1971 = vmatprep.subr.mxu0 0.0
      %1972 = vmatpush1.msra.mxu0 0.0
      %1973 = vmatprep.subr.mxu0 0.0
      %1974 = vmatpush1.msra.mxu0 0.0
      %1975 = vmatprep.subr.mxu0 0.0
      %1976 = vmatpush1.msra.mxu0 0.0
      %1977 = vmatprep.subr.mxu0 0.0
      %1978 = vmatpush1.msra.mxu0 0.0
      %1979 = vmatprep.subr.mxu0 0.0
      %1980 = vmatpush1.msra.mxu0 0.0
      %1981 = vmatprep.subr.mxu0 0.0
      %1982 = vmatpush1.msra.mxu0 0.0
      %1983 = vmatprep.subr.mxu0 0.0
      %1984 = vmatpush1.msra.mxu0 0.0
      %1985 = vmatprep.subr.mxu0 0.0
      %1986 = vmatpush1.msra.mxu0 0.0
      %1987 = vmatprep.subr.mxu0 0.0
      %1988 = vmatpush1.msra.mxu0 0.0
      %1989 = vmatprep.subr.mxu0 0.0
      %1990 = vmatpush1.msra.mxu0 0.0
      %1991 = vmatprep.subr.mxu0 0.0
      %1992 = vmatpush1.msra.mxu0 0.0
      %1993 = vmatprep.subr.mxu0 0.0
      %1994 = vmatpush1.msra.mxu0 0.0
      %1995 = vmatprep.subr.mxu0 0.0
      %1996 = vmatpush1.msra.mxu0 0.0
      %1997 = vmatprep.subr.mxu0 0.0
      %1998 = vmatpush1.msra.mxu0 0.0
      %1999 = vmatprep.subr.mxu0 0.0
      %2000 = vmatpush1.msra.mxu0 0.0
      %2001 = vmatprep.subr.mxu0 0.0
      %2002 = vmatpush1.msra.mxu0 0.0
      %2003 = vmatprep.subr.mxu0 0.0
      %2004 = vmatpush1.msra.mxu0 0.0
      %2005 = vmatprep.subr.mxu0 0.0
      %2006 = vmatpush1.msra.mxu0 0.0
      %2007 = vmatprep.subr.mxu0 0.0
      %2008 = vmatpush1.msra.mxu0 0.0
      %2009 = vmatprep.subr.mxu0 0.0
      %2010 = vmatpush1.msra.mxu0 0.0
      %2011 = vmatprep.subr.mxu0 0.0
      %2012 = vmatpush1.msra.mxu0 0.0
      %2013 = vmatprep.subr.mxu0 0.0
      %2014 = vmatpush1.msra.mxu0 0.0
      %2015 = vmatprep.subr.mxu0 0.0
      %2016 = vmatpush1.msra.mxu0 0.0
      %2017 = vmatprep.subr.mxu0 0.0
      %2018 = vmatpush1.msra.mxu0 0.0
      %2019 = vmatprep.subr.mxu0 0.0
      %2020 = vmatpush1.msra.mxu0 0.0
      %2021 = vmatprep.subr.mxu0 0.0
      %2022 = vmatpush1.msra.mxu0 0.0
      %2023 = vmatprep.subr.mxu0 0.0
      %2024 = vmatpush1.msra.mxu0 0.0
      %2025 = vmatprep.mubr.f32.mxu0 0.0
      %2026 = vmatmul.mubr.f32.gmra.mrb[0].mxu0 %v1938
      %v2027 = vpop.f32.mrb[0].mxu0
      %v2028 = vadd.f32 %v1935, %v2027
      %v2029 = vpop.f32.mrb[0].mxu0
      %2030 = vmatprep.mubr.f32.mxu0 0.0
      %2031 = vmatmul.mubr.f32.gmra.mrb[0].mxu0 %v1941
      %v2032 = vpop.f32.mrb[0].mxu0
      %v2033 = vadd.f32 %v1935, %v2032
      %v2034 = vpop.f32.mrb[0].mxu0
      %2035 = vmatprep.mubr.f32.mxu0 0.0
      %2036 = vmatmul.mubr.f32.gmra.mrb[0].mxu0 %v1944
      %v2037 = vpop.f32.mrb[0].mxu0
      %v2038 = vadd.f32 %v1935, %v2037
      %v2039 = vpop.f32.mrb[0].mxu0
      %2040 = vmatprep.mubr.f32.mxu0 0.0
      %2041 = vmatmul.mubr.f32.gmra.mrb[0].mxu0 %v1947
      %v2042 = vpop.f32.mrb[0].mxu0
      %v2043 = vadd.f32 %v1935, %v2042
      %v2044 = vpop.f32.mrb[0].mxu0
      %2045 = vmatprep.mubr.f32.mxu0 0.0
      %2046 = vmatmul.mubr.f32.gmra.mrb[0].mxu0 %v1950
      %v2047 = vpop.f32.mrb[0].mxu0
      %v2048 = vadd.f32 %v1935, %v2047
      %v2049 = vpop.f32.mrb[0].mxu0
      %2050 = vmatprep.mubr.f32.mxu0 0.0
      %2051 = vmatmul.mubr.f32.gmra.mrb[0].mxu0 %v1953
      %v2052 = vpop.f32.mrb[0].mxu0
      %v2053 = vadd.f32 %v1935, %v2052
      %v2054 = vpop.f32.mrb[0].mxu0
      %2055 = vmatprep.mubr.f32.mxu0 0.0
      %2056 = vmatmul.mubr.f32.gmra.mrb[0].mxu0 %v1956
      %v2057 = vpop.f32.mrb[0].mxu0
      %v2058 = vadd.f32 %v1935, %v2057
      %v2059 = vpop.f32.mrb[0].mxu0
      %2060 = vmatprep.mubr.f32.mxu0 0.0
      %2061 = vmatmul.mubr.f32.gmra.mrb[0].mxu0 %v1959
      %v2062 = vpop.f32.mrb[0].mxu0
      %v2063 = vadd.f32 %v1935, %v2062
      %v2064 = vpop.f32.mrb[0].mxu0
      %2065 = vdwg.mxu0
      %v2067 = vlaneseq
      %v2068 = vshrl.u32 %v2067, 7
      %v2069 = vsub.s32 0, %v2068
      %v2070 = vrot.slane %v935, %v2069
      %v2072 = vmul.f32 %v1614, %v2070
      %v2073 = vlaneseq
      %v2074 = vshrl.u32 %v2073, 7
      %v2075 = vsub.s32 0, %v2074
      %v2076 = vrot.slane %v2072, %v2075
      %2078 = vbcast.lane.b32.xlu0 %v2076, 256
      %v2079 = vpop.permute.xlu0 %2078
      %v2080 = vlaneseq
      %v2081 = vshrl.u32 %v2080, 7
      %v2082 = vsub.s32 1, %v2081
      %v2083 = vrot.slane %v2072, %v2082
      %2085 = vbcast.lane.b32.xlu0 %v2083, 256
      %v2086 = vpop.permute.xlu0 %2085
      %v2087 = vlaneseq
      %v2088 = vshrl.u32 %v2087, 7
      %v2089 = vsub.s32 2, %v2088
      %v2090 = vrot.slane %v2072, %v2089
      %2092 = vbcast.lane.b32.xlu0 %v2090, 256
      %v2093 = vpop.permute.xlu0 %2092
      %v2094 = vlaneseq
      %v2095 = vshrl.u32 %v2094, 7
      %v2096 = vsub.s32 3, %v2095
      %v2097 = vrot.slane %v2072, %v2096
      %2099 = vbcast.lane.b32.xlu0 %v2097, 256
      %v2100 = vpop.permute.xlu0 %2099
      %v2101 = vlaneseq
      %v2102 = vshrl.u32 %v2101, 7
      %v2103 = vsub.s32 4, %v2102
      %v2104 = vrot.slane %v2072, %v2103
      %2106 = vbcast.lane.b32.xlu0 %v2104, 256
      %v2107 = vpop.permute.xlu0 %2106
      %v2108 = vlaneseq
      %v2109 = vshrl.u32 %v2108, 7
      %v2110 = vsub.s32 5, %v2109
      %v2111 = vrot.slane %v2072, %v2110
      %2113 = vbcast.lane.b32.xlu0 %v2111, 256
      %v2114 = vpop.permute.xlu0 %2113
      %v2115 = vlaneseq
      %v2116 = vshrl.u32 %v2115, 7
      %v2117 = vsub.s32 6, %v2116
      %v2118 = vrot.slane %v2072, %v2117
      %2120 = vbcast.lane.b32.xlu0 %v2118, 256
      %v2121 = vpop.permute.xlu0 %2120
      %v2122 = vlaneseq
      %v2123 = vshrl.u32 %v2122, 7
      %v2124 = vsub.s32 7, %v2123
      %v2125 = vrot.slane %v2072, %v2124
      %2127 = vbcast.lane.b32.xlu0 %v2125, 256
      %v2128 = vpop.permute.xlu0 %2127
      %v2129 = vmul.f32 %v2028, %v2079
      %v2130 = vmul.f32 %v2033, %v2086
      %v2131 = vmul.f32 %v2038, %v2093
      %v2132 = vmul.f32 %v2043, %v2100
      %v2133 = vmul.f32 %v2048, %v2107
      %v2134 = vmul.f32 %v2053, %v2114
      %v2135 = vmul.f32 %v2058, %v2121
      %v2136 = vmul.f32 %v2063, %v2128
      %v2137 = vadd.f32 %v927, %v2129
      %v2138 = vadd.f32 %v928, %v2130
      %v2139 = vadd.f32 %v929, %v2131
      %v2140 = vadd.f32 %v930, %v2132
      %v2141 = vadd.f32 %v931, %v2133
      %v2142 = vadd.f32 %v932, %v2134
      %v2143 = vadd.f32 %v933, %v2135
      %v2144 = vadd.f32 %v934, %v2136
      %v2145 = vld [vmem:[%s22] sm:$0x1]
      %v2146 = vld [vmem:[%s22 + $0x1] sm:$0x1]
      %v2147 = vsel %vm947, %v2137, 0.0
      %2148 = vadd.xlane.f32.xlu0 %v2147
      %v2149 = vpop.xlane.xlu0 %2148
      %v2150 = vsel %vm947, %v2138, 0.0
      %2151 = vadd.xlane.f32.xlu0 %v2150
      %v2152 = vpop.xlane.xlu0 %2151
      %v2153 = vsel %vm947, %v2139, 0.0
      %2154 = vadd.xlane.f32.xlu0 %v2153
      %v2155 = vpop.xlane.xlu0 %2154
      %v2156 = vsel %vm947, %v2140, 0.0
      %2157 = vadd.xlane.f32.xlu0 %v2156
      %v2158 = vpop.xlane.xlu0 %2157
      %v2159 = vsel %vm947, %v2141, 0.0
      %2160 = vadd.xlane.f32.xlu0 %v2159
      %v2161 = vpop.xlane.xlu0 %2160
      %v2162 = vsel %vm947, %v2142, 0.0
      %2163 = vadd.xlane.f32.xlu0 %v2162
      %v2164 = vpop.xlane.xlu0 %2163
      %v2165 = vsel %vm947, %v2143, 0.0
      %2166 = vadd.xlane.f32.xlu0 %v2165
      %v2167 = vpop.xlane.xlu0 %2166
      %v2168 = vsel %vm947, %v2144, 0.0
      %2169 = vadd.xlane.f32.xlu0 %v2168
      %v2170 = vpop.xlane.xlu0 %2169
      %v2171 = vrcp.pop 16.0
      %v2172 = vmul.f32 %v2149, %v2171
      %v2173 = vmul.f32 %v2152, %v2171
      %v2174 = vmul.f32 %v2155, %v2171
      %v2175 = vmul.f32 %v2158, %v2171
      %v2176 = vmul.f32 %v2161, %v2171
      %v2177 = vmul.f32 %v2164, %v2171
      %v2178 = vmul.f32 %v2167, %v2171
      %v2179 = vmul.f32 %v2170, %v2171
      %v2180 = vsub.f32 %v2137, %v2172
      %v2181 = vsub.f32 %v2138, %v2173
      %v2182 = vsub.f32 %v2139, %v2174
      %v2183 = vsub.f32 %v2140, %v2175
      %v2184 = vsub.f32 %v2141, %v2176
      %v2185 = vsub.f32 %v2142, %v2177
      %v2186 = vsub.f32 %v2143, %v2178
      %v2187 = vsub.f32 %v2144, %v2179
      %v2188 = vmul.f32 %v2180, %v2180
      %v2189 = vmul.f32 %v2181, %v2181
      %v2190 = vmul.f32 %v2182, %v2182
      %v2191 = vmul.f32 %v2183, %v2183
      %v2192 = vmul.f32 %v2184, %v2184
      %v2193 = vmul.f32 %v2185, %v2185
      %v2194 = vmul.f32 %v2186, %v2186
      %v2195 = vmul.f32 %v2187, %v2187
      %v2196 = vsel %vm947, %v2188, 0.0
      %2197 = vadd.xlane.f32.xlu0 %v2196
      %v2198 = vpop.xlane.xlu0 %2197
      %v2199 = vsel %vm947, %v2189, 0.0
      %2200 = vadd.xlane.f32.xlu0 %v2199
      %v2201 = vpop.xlane.xlu0 %2200
      %v2202 = vsel %vm947, %v2190, 0.0
      %2203 = vadd.xlane.f32.xlu0 %v2202
      %v2204 = vpop.xlane.xlu0 %2203
      %v2205 = vsel %vm947, %v2191, 0.0
      %2206 = vadd.xlane.f32.xlu0 %v2205
      %v2207 = vpop.xlane.xlu0 %2206
      %v2208 = vsel %vm947, %v2192, 0.0
      %2209 = vadd.xlane.f32.xlu0 %v2208
      %v2210 = vpop.xlane.xlu0 %2209
      %v2211 = vsel %vm947, %v2193, 0.0
      %2212 = vadd.xlane.f32.xlu0 %v2211
      %v2213 = vpop.xlane.xlu0 %2212
      %v2214 = vsel %vm947, %v2194, 0.0
      %2215 = vadd.xlane.f32.xlu0 %v2214
      %v2216 = vpop.xlane.xlu0 %2215
      %v2217 = vsel %vm947, %v2195, 0.0
      %2218 = vadd.xlane.f32.xlu0 %v2217
      %v2219 = vpop.xlane.xlu0 %2218
      %v2220 = vmul.f32 %v2198, %v2171
      %v2221 = vmul.f32 %v2201, %v2171
      %v2222 = vmul.f32 %v2204, %v2171
      %v2223 = vmul.f32 %v2207, %v2171
      %v2224 = vmul.f32 %v2210, %v2171
      %v2225 = vmul.f32 %v2213, %v2171
      %v2226 = vmul.f32 %v2216, %v2171
      %v2227 = vmul.f32 %v2219, %v2171
      %v2228 = vadd.f32 %v2220, 1e-05
      %v2229 = vadd.f32 %v2221, 1e-05
      %v2230 = vadd.f32 %v2222, 1e-05
      %v2231 = vadd.f32 %v2223, 1e-05
      %v2232 = vadd.f32 %v2224, 1e-05
      %v2233 = vadd.f32 %v2225, 1e-05
      %v2234 = vadd.f32 %v2226, 1e-05
      %v2235 = vadd.f32 %v2227, 1e-05
      %v2236 = vrsqrt.pop %v2228
      %v2237 = vrsqrt.pop %v2229
      %v2238 = vrsqrt.pop %v2230
      %v2239 = vrsqrt.pop %v2231
      %v2240 = vrsqrt.pop %v2232
      %v2241 = vrsqrt.pop %v2233
      %v2242 = vrsqrt.pop %v2234
      %v2243 = vrsqrt.pop %v2235
      %v2244 = vmul.f32 %v2180, %v2236
      %v2245 = vmul.f32 %v2181, %v2237
      %v2246 = vmul.f32 %v2182, %v2238
      %v2247 = vmul.f32 %v2183, %v2239
      %v2248 = vmul.f32 %v2184, %v2240
      %v2249 = vmul.f32 %v2185, %v2241
      %v2250 = vmul.f32 %v2186, %v2242
      %v2251 = vmul.f32 %v2187, %v2243
      %v2252 = vlaneseq
      %v2253 = vshrl.u32 %v2252, 7
      %v2254 = vsub.s32 0, %v2253
      %v2255 = vrot.slane %v2145, %v2254
      %v2256 = vmul.f32 %v2244, %v2255
      %v2257 = vmul.f32 %v2245, %v2255
      %v2258 = vmul.f32 %v2246, %v2255
      %v2259 = vmul.f32 %v2247, %v2255
      %v2260 = vmul.f32 %v2248, %v2255
      %v2261 = vmul.f32 %v2249, %v2255
      %v2262 = vmul.f32 %v2250, %v2255
      %v2263 = vmul.f32 %v2251, %v2255
      %v2264 = vlaneseq
      %v2265 = vshrl.u32 %v2264, 7
      %v2266 = vsub.s32 0, %v2265
      %v2267 = vrot.slane %v2146, %v2266
      %v2268 = vadd.f32 %v2256, %v2267
      %v2269 = vadd.f32 %v2257, %v2267
      %v2270 = vadd.f32 %v2258, %v2267
      %v2271 = vadd.f32 %v2259, %v2267
      %v2272 = vadd.f32 %v2260, %v2267
      %v2273 = vadd.f32 %v2261, %v2267
      %v2274 = vadd.f32 %v2262, %v2267
      %v2275 = vadd.f32 %v2263, %v2267
      %v2276 = vld [vmem:[%s17] sm:$0xff]
      %v2277 = vld [vmem:[%s17 + $0x8] sm:$0xff]
      %v2278 = vld [vmem:[%s18] sm:$0x1]
      %v2280 = vlaneseq
      %v2281 = vshrl.u32 %v2280, 7
      %v2282 = vsub.s32 0, %v2281
      %v2283 = vrot.slane %v2278, %v2282
      %v2286 = vsel %vm947, %v2268, 0
      %v2289 = vsel %vm947, %v2269, 0
      %v2292 = vsel %vm947, %v2270, 0
      %v2295 = vsel %vm947, %v2271, 0
      %v2298 = vsel %vm947, %v2272, 0
      %v2301 = vsel %vm947, %v2273, 0
      %v2304 = vsel %vm947, %v2274, 0
      %v2307 = vsel %vm947, %v2275, 0
      %2309 = vmatprep.subr.mxu0 0.0
      %2310 = vmatpush1.msra.mxu0 %v2276
      %2311 = vmatprep.subr.mxu0 0.0
      %2312 = vmatpush1.msra.mxu0 %v2277
      %2313 = vmatprep.subr.mxu0 0.0
      %2314 = vmatpush1.msra.mxu0 0.0
      %2315 = vmatprep.subr.mxu0 0.0
      %2316 = vmatpush1.msra.mxu0 0.0
      %2317 = vmatprep.subr.mxu0 0.0
      %2318 = vmatpush1.msra.mxu0 0.0
      %2319 = vmatprep.subr.mxu0 0.0
      %2320 = vmatpush1.msra.mxu0 0.0
      %2321 = vmatprep.subr.mxu0 0.0
      %2322 = vmatpush1.msra.mxu0 0.0
      %2323 = vmatprep.subr.mxu0 0.0
      %2324 = vmatpush1.msra.mxu0 0.0
      %2325 = vmatprep.subr.mxu0 0.0
      %2326 = vmatpush1.msra.mxu0 0.0
      %2327 = vmatprep.subr.mxu0 0.0
      %2328 = vmatpush1.msra.mxu0 0.0
      %2329 = vmatprep.subr.mxu0 0.0
      %2330 = vmatpush1.msra.mxu0 0.0
      %2331 = vmatprep.subr.mxu0 0.0
      %2332 = vmatpush1.msra.mxu0 0.0
      %2333 = vmatprep.subr.mxu0 0.0
      %2334 = vmatpush1.msra.mxu0 0.0
      %2335 = vmatprep.subr.mxu0 0.0
      %2336 = vmatpush1.msra.mxu0 0.0
      %2337 = vmatprep.subr.mxu0 0.0
      %2338 = vmatpush1.msra.mxu0 0.0
      %2339 = vmatprep.subr.mxu0 0.0
      %2340 = vmatpush1.msra.mxu0 0.0
      %2341 = vmatprep.subr.mxu0 0.0
      %2342 = vmatpush1.msra.mxu0 0.0
      %2343 = vmatprep.subr.mxu0 0.0
      %2344 = vmatpush1.msra.mxu0 0.0
      %2345 = vmatprep.subr.mxu0 0.0
      %2346 = vmatpush1.msra.mxu0 0.0
      %2347 = vmatprep.subr.mxu0 0.0
      %2348 = vmatpush1.msra.mxu0 0.0
      %2349 = vmatprep.subr.mxu0 0.0
      %2350 = vmatpush1.msra.mxu0 0.0
      %2351 = vmatprep.subr.mxu0 0.0
      %2352 = vmatpush1.msra.mxu0 0.0
      %2353 = vmatprep.subr.mxu0 0.0
      %2354 = vmatpush1.msra.mxu0 0.0
      %2355 = vmatprep.subr.mxu0 0.0
      %2356 = vmatpush1.msra.mxu0 0.0
      %2357 = vmatprep.subr.mxu0 0.0
      %2358 = vmatpush1.msra.mxu0 0.0
      %2359 = vmatprep.subr.mxu0 0.0
      %2360 = vmatpush1.msra.mxu0 0.0
      %2361 = vmatprep.subr.mxu0 0.0
      %2362 = vmatpush1.msra.mxu0 0.0
      %2363 = vmatprep.subr.mxu0 0.0
      %2364 = vmatpush1.msra.mxu0 0.0
      %2365 = vmatprep.subr.mxu0 0.0
      %2366 = vmatpush1.msra.mxu0 0.0
      %2367 = vmatprep.subr.mxu0 0.0
      %2368 = vmatpush1.msra.mxu0 0.0
      %2369 = vmatprep.subr.mxu0 0.0
      %2370 = vmatpush1.msra.mxu0 0.0
      %2371 = vmatprep.subr.mxu0 0.0
      %2372 = vmatpush1.msra.mxu0 0.0
      %2373 = vmatprep.mubr.f32.mxu0 0.0
      %2374 = vmatmul.mubr.f32.gmra.mrb[0].mxu0 %v2286
      %v2375 = vpop.f32.mrb[0].mxu0
      %v2376 = vadd.f32 %v2283, %v2375
      %v2377 = vpop.f32.mrb[0].mxu0
      %2378 = vmatprep.mubr.f32.mxu0 0.0
      %2379 = vmatmul.mubr.f32.gmra.mrb[0].mxu0 %v2289
      %v2380 = vpop.f32.mrb[0].mxu0
      %v2381 = vadd.f32 %v2283, %v2380
      %v2382 = vpop.f32.mrb[0].mxu0
      %2383 = vmatprep.mubr.f32.mxu0 0.0
      %2384 = vmatmul.mubr.f32.gmra.mrb[0].mxu0 %v2292
      %v2385 = vpop.f32.mrb[0].mxu0
      %v2386 = vadd.f32 %v2283, %v2385
      %v2387 = vpop.f32.mrb[0].mxu0
      %2388 = vmatprep.mubr.f32.mxu0 0.0
      %2389 = vmatmul.mubr.f32.gmra.mrb[0].mxu0 %v2295
      %v2390 = vpop.f32.mrb[0].mxu0
      %v2391 = vadd.f32 %v2283, %v2390
      %v2392 = vpop.f32.mrb[0].mxu0
      %2393 = vmatprep.mubr.f32.mxu0 0.0
      %2394 = vmatmul.mubr.f32.gmra.mrb[0].mxu0 %v2298
      %v2395 = vpop.f32.mrb[0].mxu0
      %v2396 = vadd.f32 %v2283, %v2395
      %v2397 = vpop.f32.mrb[0].mxu0
      %2398 = vmatprep.mubr.f32.mxu0 0.0
      %2399 = vmatmul.mubr.f32.gmra.mrb[0].mxu0 %v2301
      %v2400 = vpop.f32.mrb[0].mxu0
      %v2401 = vadd.f32 %v2283, %v2400
      %v2402 = vpop.f32.mrb[0].mxu0
      %2403 = vmatprep.mubr.f32.mxu0 0.0
      %2404 = vmatmul.mubr.f32.gmra.mrb[0].mxu0 %v2304
      %v2405 = vpop.f32.mrb[0].mxu0
      %v2406 = vadd.f32 %v2283, %v2405
      %v2407 = vpop.f32.mrb[0].mxu0
      %2408 = vmatprep.mubr.f32.mxu0 0.0
      %2409 = vmatmul.mubr.f32.gmra.mrb[0].mxu0 %v2307
      %v2410 = vpop.f32.mrb[0].mxu0
      %v2411 = vadd.f32 %v2283, %v2410
      %v2412 = vpop.f32.mrb[0].mxu0
      %2413 = vdwg.mxu0
      %v2414 = vmax.f32 %v2376, 0.0
      %v2415 = vmax.f32 %v2381, 0.0
      %v2416 = vmax.f32 %v2386, 0.0
      %v2417 = vmax.f32 %v2391, 0.0
      %v2418 = vmax.f32 %v2396, 0.0
      %v2419 = vmax.f32 %v2401, 0.0
      %v2420 = vmax.f32 %v2406, 0.0
      %v2421 = vmax.f32 %v2411, 0.0
      %v2422 = vld [vmem:[%s19] sm:$0xff]
      %v2423 = vld [vmem:[%s19 + $0x8] sm:$0xff]
      %v2424 = vld [vmem:[%s19 + $0x10] sm:$0xff]
      %v2425 = vld [vmem:[%s19 + $0x18] sm:$0xff]
      %v2426 = vld [vmem:[%s20] sm:$0x1]
      %v2428 = vlaneseq
      %v2429 = vshrl.u32 %v2428, 7
      %v2430 = vsub.s32 0, %v2429
      %v2431 = vrot.slane %v2426, %v2430
      %v2434 = vsel %vm1261, %v2414, 0
      %v2437 = vsel %vm1261, %v2415, 0
      %v2440 = vsel %vm1261, %v2416, 0
      %v2443 = vsel %vm1261, %v2417, 0
      %v2446 = vsel %vm1261, %v2418, 0
      %v2449 = vsel %vm1261, %v2419, 0
      %v2452 = vsel %vm1261, %v2420, 0
      %v2455 = vsel %vm1261, %v2421, 0
      %2457 = vmatprep.subr.mxu0 0.0
      %2458 = vmatpush1.msra.mxu0 %v2422
      %2459 = vmatprep.subr.mxu0 0.0
      %2460 = vmatpush1.msra.mxu0 %v2423
      %2461 = vmatprep.subr.mxu0 0.0
      %2462 = vmatpush1.msra.mxu0 %v2424
      %2463 = vmatprep.subr.mxu0 0.0
      %2464 = vmatpush1.msra.mxu0 %v2425
      %2465 = vmatprep.subr.mxu0 0.0
      %2466 = vmatpush1.msra.mxu0 0.0
      %2467 = vmatprep.subr.mxu0 0.0
      %2468 = vmatpush1.msra.mxu0 0.0
      %2469 = vmatprep.subr.mxu0 0.0
      %2470 = vmatpush1.msra.mxu0 0.0
      %2471 = vmatprep.subr.mxu0 0.0
      %2472 = vmatpush1.msra.mxu0 0.0
      %2473 = vmatprep.subr.mxu0 0.0
      %2474 = vmatpush1.msra.mxu0 0.0
      %2475 = vmatprep.subr.mxu0 0.0
      %2476 = vmatpush1.msra.mxu0 0.0
      %2477 = vmatprep.subr.mxu0 0.0
      %2478 = vmatpush1.msra.mxu0 0.0
      %2479 = vmatprep.subr.mxu0 0.0
      %2480 = vmatpush1.msra.mxu0 0.0
      %2481 = vmatprep.subr.mxu0 0.0
      %2482 = vmatpush1.msra.mxu0 0.0
      %2483 = vmatprep.subr.mxu0 0.0
      %2484 = vmatpush1.msra.mxu0 0.0
      %2485 = vmatprep.subr.mxu0 0.0
      %2486 = vmatpush1.msra.mxu0 0.0
      %2487 = vmatprep.subr.mxu0 0.0
      %2488 = vmatpush1.msra.mxu0 0.0
      %2489 = vmatprep.subr.mxu0 0.0
      %2490 = vmatpush1.msra.mxu0 0.0
      %2491 = vmatprep.subr.mxu0 0.0
      %2492 = vmatpush1.msra.mxu0 0.0
      %2493 = vmatprep.subr.mxu0 0.0
      %2494 = vmatpush1.msra.mxu0 0.0
      %2495 = vmatprep.subr.mxu0 0.0
      %2496 = vmatpush1.msra.mxu0 0.0
      %2497 = vmatprep.subr.mxu0 0.0
      %2498 = vmatpush1.msra.mxu0 0.0
      %2499 = vmatprep.subr.mxu0 0.0
      %2500 = vmatpush1.msra.mxu0 0.0
      %2501 = vmatprep.subr.mxu0 0.0
      %2502 = vmatpush1.msra.mxu0 0.0
      %2503 = vmatprep.subr.mxu0 0.0
      %2504 = vmatpush1.msra.mxu0 0.0
      %2505 = vmatprep.subr.mxu0 0.0
      %2506 = vmatpush1.msra.mxu0 0.0
      %2507 = vmatprep.subr.mxu0 0.0
      %2508 = vmatpush1.msra.mxu0 0.0
      %2509 = vmatprep.subr.mxu0 0.0
      %2510 = vmatpush1.msra.mxu0 0.0
      %2511 = vmatprep.subr.mxu0 0.0
      %2512 = vmatpush1.msra.mxu0 0.0
      %2513 = vmatprep.subr.mxu0 0.0
      %2514 = vmatpush1.msra.mxu0 0.0
      %2515 = vmatprep.subr.mxu0 0.0
      %2516 = vmatpush1.msra.mxu0 0.0
      %2517 = vmatprep.subr.mxu0 0.0
      %2518 = vmatpush1.msra.mxu0 0.0
      %2519 = vmatprep.subr.mxu0 0.0
      %2520 = vmatpush1.msra.mxu0 0.0
      %2521 = vmatprep.mubr.f32.mxu0 0.0
      %2522 = vmatmul.mubr.f32.gmra.mrb[0].mxu0 %v2434
      %v2523 = vpop.f32.mrb[0].mxu0
      %v2524 = vadd.f32 %v2431, %v2523
      %v2525 = vpop.f32.mrb[0].mxu0
      %2526 = vmatprep.mubr.f32.mxu0 0.0
      %2527 = vmatmul.mubr.f32.gmra.mrb[0].mxu0 %v2437
      %v2528 = vpop.f32.mrb[0].mxu0
      %v2529 = vadd.f32 %v2431, %v2528
      %v2530 = vpop.f32.mrb[0].mxu0
      %2531 = vmatprep.mubr.f32.mxu0 0.0
      %2532 = vmatmul.mubr.f32.gmra.mrb[0].mxu0 %v2440
      %v2533 = vpop.f32.mrb[0].mxu0
      %v2534 = vadd.f32 %v2431, %v2533
      %v2535 = vpop.f32.mrb[0].mxu0
      %2536 = vmatprep.mubr.f32.mxu0 0.0
      %2537 = vmatmul.mubr.f32.gmra.mrb[0].mxu0 %v2443
      %v2538 = vpop.f32.mrb[0].mxu0
      %v2539 = vadd.f32 %v2431, %v2538
      %v2540 = vpop.f32.mrb[0].mxu0
      %2541 = vmatprep.mubr.f32.mxu0 0.0
      %2542 = vmatmul.mubr.f32.gmra.mrb[0].mxu0 %v2446
      %v2543 = vpop.f32.mrb[0].mxu0
      %v2544 = vadd.f32 %v2431, %v2543
      %v2545 = vpop.f32.mrb[0].mxu0
      %2546 = vmatprep.mubr.f32.mxu0 0.0
      %2547 = vmatmul.mubr.f32.gmra.mrb[0].mxu0 %v2449
      %v2548 = vpop.f32.mrb[0].mxu0
      %v2549 = vadd.f32 %v2431, %v2548
      %v2550 = vpop.f32.mrb[0].mxu0
      %2551 = vmatprep.mubr.f32.mxu0 0.0
      %2552 = vmatmul.mubr.f32.gmra.mrb[0].mxu0 %v2452
      %v2553 = vpop.f32.mrb[0].mxu0
      %v2554 = vadd.f32 %v2431, %v2553
      %v2555 = vpop.f32.mrb[0].mxu0
      %2556 = vmatprep.mubr.f32.mxu0 0.0
      %2557 = vmatmul.mubr.f32.gmra.mrb[0].mxu0 %v2455
      %v2558 = vpop.f32.mrb[0].mxu0
      %v2559 = vadd.f32 %v2431, %v2558
      %v2560 = vpop.f32.mrb[0].mxu0
      %2561 = vdwg.mxu0
      %v2562 = vadd.f32 %v2268, %v2524
      %v2563 = vadd.f32 %v2269, %v2529
      %v2564 = vadd.f32 %v2270, %v2534
      %v2565 = vadd.f32 %v2271, %v2539
      %v2566 = vadd.f32 %v2272, %v2544
      %v2567 = vadd.f32 %v2273, %v2549
      %v2568 = vadd.f32 %v2274, %v2554
      %v2569 = vadd.f32 %v2275, %v2559
      %v2570 = vld [vmem:[%s22 + $0x2] sm:$0x1]
      %v2571 = vld [vmem:[%s22 + $0x3] sm:$0x1]
      %v2572 = vsel %vm947, %v2562, 0.0
      %2573 = vadd.xlane.f32.xlu0 %v2572
      %v2574 = vpop.xlane.xlu0 %2573
      %v2575 = vsel %vm947, %v2563, 0.0
      %2576 = vadd.xlane.f32.xlu0 %v2575
      %v2577 = vpop.xlane.xlu0 %2576
      %v2578 = vsel %vm947, %v2564, 0.0
      %2579 = vadd.xlane.f32.xlu0 %v2578
      %v2580 = vpop.xlane.xlu0 %2579
      %v2581 = vsel %vm947, %v2565, 0.0
      %2582 = vadd.xlane.f32.xlu0 %v2581
      %v2583 = vpop.xlane.xlu0 %2582
      %v2584 = vsel %vm947, %v2566, 0.0
      %2585 = vadd.xlane.f32.xlu0 %v2584
      %v2586 = vpop.xlane.xlu0 %2585
      %v2587 = vsel %vm947, %v2567, 0.0
      %2588 = vadd.xlane.f32.xlu0 %v2587
      %v2589 = vpop.xlane.xlu0 %2588
      %v2590 = vsel %vm947, %v2568, 0.0
      %2591 = vadd.xlane.f32.xlu0 %v2590
      %v2592 = vpop.xlane.xlu0 %2591
      %v2593 = vsel %vm947, %v2569, 0.0
      %2594 = vadd.xlane.f32.xlu0 %v2593
      %v2595 = vpop.xlane.xlu0 %2594
      %v2596 = vmul.f32 %v2574, %v2171
      %v2597 = vmul.f32 %v2577, %v2171
      %v2598 = vmul.f32 %v2580, %v2171
      %v2599 = vmul.f32 %v2583, %v2171
      %v2600 = vmul.f32 %v2586, %v2171
      %v2601 = vmul.f32 %v2589, %v2171
      %v2602 = vmul.f32 %v2592, %v2171
      %v2603 = vmul.f32 %v2595, %v2171
      %v2604 = vsub.f32 %v2562, %v2596
      %v2605 = vsub.f32 %v2563, %v2597
      %v2606 = vsub.f32 %v2564, %v2598
      %v2607 = vsub.f32 %v2565, %v2599
      %v2608 = vsub.f32 %v2566, %v2600
      %v2609 = vsub.f32 %v2567, %v2601
      %v2610 = vsub.f32 %v2568, %v2602
      %v2611 = vsub.f32 %v2569, %v2603
      %v2612 = vmul.f32 %v2604, %v2604
      %v2613 = vmul.f32 %v2605, %v2605
      %v2614 = vmul.f32 %v2606, %v2606
      %v2615 = vmul.f32 %v2607, %v2607
      %v2616 = vmul.f32 %v2608, %v2608
      %v2617 = vmul.f32 %v2609, %v2609
      %v2618 = vmul.f32 %v2610, %v2610
      %v2619 = vmul.f32 %v2611, %v2611
      %v2620 = vsel %vm947, %v2612, 0.0
      %2621 = vadd.xlane.f32.xlu0 %v2620
      %v2622 = vpop.xlane.xlu0 %2621
      %v2623 = vsel %vm947, %v2613, 0.0
      %2624 = vadd.xlane.f32.xlu0 %v2623
      %v2625 = vpop.xlane.xlu0 %2624
      %v2626 = vsel %vm947, %v2614, 0.0
      %2627 = vadd.xlane.f32.xlu0 %v2626
      %v2628 = vpop.xlane.xlu0 %2627
      %v2629 = vsel %vm947, %v2615, 0.0
      %2630 = vadd.xlane.f32.xlu0 %v2629
      %v2631 = vpop.xlane.xlu0 %2630
      %v2632 = vsel %vm947, %v2616, 0.0
      %2633 = vadd.xlane.f32.xlu0 %v2632
      %v2634 = vpop.xlane.xlu0 %2633
      %v2635 = vsel %vm947, %v2617, 0.0
      %2636 = vadd.xlane.f32.xlu0 %v2635
      %v2637 = vpop.xlane.xlu0 %2636
      %v2638 = vsel %vm947, %v2618, 0.0
      %2639 = vadd.xlane.f32.xlu0 %v2638
      %v2640 = vpop.xlane.xlu0 %2639
      %v2641 = vsel %vm947, %v2619, 0.0
      %2642 = vadd.xlane.f32.xlu0 %v2641
      %v2643 = vpop.xlane.xlu0 %2642
      %v2644 = vmul.f32 %v2622, %v2171
      %v2645 = vmul.f32 %v2625, %v2171
      %v2646 = vmul.f32 %v2628, %v2171
      %v2647 = vmul.f32 %v2631, %v2171
      %v2648 = vmul.f32 %v2634, %v2171
      %v2649 = vmul.f32 %v2637, %v2171
      %v2650 = vmul.f32 %v2640, %v2171
      %v2651 = vmul.f32 %v2643, %v2171
      %v2652 = vadd.f32 %v2644, 1e-05
      %v2653 = vadd.f32 %v2645, 1e-05
      %v2654 = vadd.f32 %v2646, 1e-05
      %v2655 = vadd.f32 %v2647, 1e-05
      %v2656 = vadd.f32 %v2648, 1e-05
      %v2657 = vadd.f32 %v2649, 1e-05
      %v2658 = vadd.f32 %v2650, 1e-05
      %v2659 = vadd.f32 %v2651, 1e-05
      %v2660 = vrsqrt.pop %v2652
      %v2661 = vrsqrt.pop %v2653
      %v2662 = vrsqrt.pop %v2654
      %v2663 = vrsqrt.pop %v2655
      %v2664 = vrsqrt.pop %v2656
      %v2665 = vrsqrt.pop %v2657
      %v2666 = vrsqrt.pop %v2658
      %v2667 = vrsqrt.pop %v2659
      %v2668 = vmul.f32 %v2604, %v2660
      %v2669 = vmul.f32 %v2605, %v2661
      %v2670 = vmul.f32 %v2606, %v2662
      %v2671 = vmul.f32 %v2607, %v2663
      %v2672 = vmul.f32 %v2608, %v2664
      %v2673 = vmul.f32 %v2609, %v2665
      %v2674 = vmul.f32 %v2610, %v2666
      %v2675 = vmul.f32 %v2611, %v2667
      %v2676 = vlaneseq
      %v2677 = vshrl.u32 %v2676, 7
      %v2678 = vsub.s32 0, %v2677
      %v2679 = vrot.slane %v2570, %v2678
      %v2680 = vmul.f32 %v2668, %v2679
      %v2681 = vmul.f32 %v2669, %v2679
      %v2682 = vmul.f32 %v2670, %v2679
      %v2683 = vmul.f32 %v2671, %v2679
      %v2684 = vmul.f32 %v2672, %v2679
      %v2685 = vmul.f32 %v2673, %v2679
      %v2686 = vmul.f32 %v2674, %v2679
      %v2687 = vmul.f32 %v2675, %v2679
      %v2688 = vlaneseq
      %v2689 = vshrl.u32 %v2688, 7
      %v2690 = vsub.s32 0, %v2689
      %v2691 = vrot.slane %v2571, %v2690
      %v2692 = vadd.f32 %v2680, %v2691
      %v2693 = vadd.f32 %v2681, %v2691
      %v2694 = vadd.f32 %v2682, %v2691
      %v2695 = vadd.f32 %v2683, %v2691
      %v2696 = vadd.f32 %v2684, %v2691
      %v2697 = vadd.f32 %v2685, %v2691
      %v2698 = vadd.f32 %v2686, %v2691
      %v2699 = vadd.f32 %v2687, %v2691
      %2700 = vst.msk [vmem:[%s923] sm:$0xff] %vm947, %v2692
      %2701 = vst.msk [vmem:[%s923 + $0x8] sm:$0xff] %vm947, %v2693
      %2702 = vst.msk [vmem:[%s923 + $0x10] sm:$0xff] %vm947, %v2694
      %2703 = vst.msk [vmem:[%s923 + $0x18] sm:$0xff] %vm947, %v2695
      %2704 = vst.msk [vmem:[%s923 + $0x20] sm:$0xff] %vm947, %v2696
      %2705 = vst.msk [vmem:[%s923 + $0x28] sm:$0xff] %vm947, %v2697
      %2706 = vst.msk [vmem:[%s923 + $0x30] sm:$0xff] %vm947, %v2698
      %2707 = vst.msk [vmem:[%s923 + $0x38] sm:$0xff] %vm947, %v2699
      %p2708 = scmp.lt.s32.totalorder %s40, 1
      %s2709 = scalar_select %p2708, %s40, 1
      %p2710 = scmp.lt.s32.totalorder %s41, 0
      %s2711 = scalar_select %p2710, %s41, 0
      %s2712 = sadd.s32 %s2711, %s2709
      %s2713 = smul.addr %s2712, 8
      %s2714 = scalar_lea.vmem %s23, %s2713
      %s2715 = smul.u32 8, %s41
      %p2716 = scmp.lt.s32.totalorder %s40, 1
      %s2717 = scalar_select %p2716, %s40, 1
      %p2718 = scmp.lt.s32.totalorder %s2715, 7
      %s2719 = scalar_select %p2718, %s2715, 7
      %s2720 = smul.addr %s2717, 8
      %s2721 = sadd.s32 %s2719, %s2720
      %s2722 = smul.addr %s2721, 8
      %s2723 = scalar_lea.vmem %s24, %s2722
      // Predicated region
      $region113: #{_forward_dense.10} parent=111 // pred_check
        %p2724 = pneg %p594
      $region114: #{_forward_dense.10} parent=111 // pred_check_branch
        %2726 = sbr.rel (%p2724) target = $region116
      $region115: #{_forward_dense.10} parent=111 // pred_region
        _
      $region116: #{_forward_dense.10} parent=111 // pred_fallthru
        _
      // Predicated region
      $region117: #{_forward_dense.10} parent=111 // pred_check
        %p2727 = pneg %p622
      $region118: #{_forward_dense.10} parent=111 // pred_check_branch
        %2729 = sbr.rel (%p2727) target = $region120
      $region119: #{_forward_dense.10} parent=111 // pred_region
        %s2730 = smul.u32 8, %s41
      $region120: #{_forward_dense.10} parent=111 // pred_fallthru
        _
    $region112: #{_forward_dense.10} parent=5 // pred_fallthru
      _
    %p2731 = scmp.le.s32.totalorder 2, %s31
    // Predicated region
    $region121: #{_forward_dense.10} parent=5 // pred_check
      %p2732 = pneg %p2731
    $region122: #{_forward_dense.10} parent=5 // pred_check_branch
      %2734 = sbr.rel (%p2732) target = $region124
    $region123: #{_forward_dense.10} parent=5 // pred_region
      %s2735 = ssub.s32 %s31, 2
      // Predicated region
      $region125: #{_forward_dense.10} parent=123 // pred_check
        %p2736 = pneg %p600
      $region126: #{_forward_dense.10} parent=123 // pred_check_branch
        %2738 = sbr.rel (%p2736) target = $region128
      $region127: #{_forward_dense.10} parent=123 // pred_region
        %p2739 = scmp.lt.s32.totalorder %s42, 1
        %s2740 = scalar_select %p2739, %s42, 1
        %p2741 = scmp.lt.s32.totalorder %s43, 0
        %s2742 = scalar_select %p2741, %s43, 0
        %s2743 = sadd.s32 %s2742, %s2740
        %s2744 = smul.addr %s2743, 8
        %s2745 = scalar_lea.vmem %s23, %s2744
      $region128: #{_forward_dense.10} parent=123 // pred_fallthru
        _
      // Predicated region
      $region129: #{_forward_dense.10} parent=123 // pred_check
        %p2746 = pneg %p628
      $region130: #{_forward_dense.10} parent=123 // pred_check_branch
        %2748 = sbr.rel (%p2746) target = $region132
      $region131: #{_forward_dense.10} parent=123 // pred_region
        %s2749 = smul.u32 8, %s43
        %p2750 = scmp.lt.s32.totalorder %s42, 1
        %s2751 = scalar_select %p2750, %s42, 1
        %p2752 = scmp.lt.s32.totalorder %s2749, 7
        %s2753 = scalar_select %p2752, %s2749, 7
        %s2754 = smul.addr %s2751, 8
        %s2755 = sadd.s32 %s2753, %s2754
        %s2756 = smul.addr %s2755, 8
        %s2757 = scalar_lea.vmem %s24, %s2756
      $region132: #{_forward_dense.10} parent=123 // pred_fallthru
        _
    $region124: #{_forward_dense.10} parent=5 // pred_fallthru
      _
  $region6: #{_forward_dense.10} parent=0 // loop_footer
    %s35 = sadd.s32 1, %s31
  $region7: #{_forward_dense.10} parent=0 // loop_footer_branch
    %30 = sbr.rel target = $region3
  $region8: #{_forward_dense.10} parent=0 // loop_exit
    _

</llo_original>
